<compile_context>
chip_gen: v5e
topology: v5e:2x2
jax: 0.10.0
libtpu: 0.0.40
codegen_flags: <defaults>
</compile_context>

<pallas_src>
import jax
import jax.numpy as jnp
from jax import lax
from jax.experimental import pallas as pl
from jax.experimental.pallas import tpu as pltpu

BN_EPS = 1e-5
LANE = 128


def _round_up(x, m):
    return (x + m - 1) // m * m


def _basic_block_kernel(x_ref, w1_ref, w2_ref, s1_ref, b1_ref, s2_ref, b2_ref,
                        out_ref, xpad_ref, midpad_ref, acc_ref):
    # x_ref:               (1, H, W, Cp)    bf16  input block (also the residual)
    # w1_ref / w2_ref:     (3, Cp, 3*Cp)    bf16  dx-packed conv weights
    # s*/b*:               (1, Cp)          f32   folded BN scale / shift
    # out_ref:             (1, H, W, Cp)    bf16
    # xpad_ref/midpad_ref: (H+2, Wpad, Cp)  bf16  padded conv inputs (VMEM scratch)
    # acc_ref:             (H, W, Cp)       f32   conv accumulator (VMEM scratch)
    H, W, Cp = out_ref.shape[1], out_ref.shape[2], out_ref.shape[3]
    Wpad = xpad_ref.shape[1]
    M = H * Wpad

    zero_plane = jnp.zeros((Wpad, Cp), xpad_ref.dtype)
    zero_col = jnp.zeros((H, 1, Cp), xpad_ref.dtype)

    def stage(pad_ref, img):
        """Write image at rows 1..H / cols 1..W and zero the halo ring only.

        Columns >= W+2 are never read by the tap slices, so they may hold stale
        data; every cell that IS read gets written every step (safe under any
        megacore sharding of the batch grid axis).
        """
        pad_ref[0] = zero_plane                       # top halo row
        pad_ref[H + 1] = zero_plane                   # bottom halo row
        pad_ref[1:H + 1, 0:1, :] = zero_col           # left halo column
        pad_ref[1:H + 1, W + 1:W + 2, :] = zero_col   # right halo column
        pad_ref[1:H + 1, 1:W + 1, :] = img            # interior

    def conv3x3(pad_ref, wp_ref):
        """SAME 3x3 / stride-1 conv of a zero-padded bf16 VMEM buffer -> f32."""
        acc_ref[...] = jnp.zeros_like(acc_ref)
        for dy in range(3):
            # Contiguous row view over the full padded width (no gathered
            # copies); bf16 feeds the MXU directly, accumulation is f32.
            rows = pad_ref[dy:dy + H, :, :].reshape(M, Cp)
            # One matmul per kernel row: the 3 dx taps live in the N dimension.
            y = jnp.dot(rows, wp_ref[dy], preferred_element_type=jnp.float32)
            y3 = y.reshape(H, Wpad, 3 * Cp)
            # Realize the dx column shifts on the f32 result (lane slices are
            # 128-aligned); single aligned accumulator RMW per dy.
            acc_ref[...] += (y3[:, 0:W, 0:Cp]
                             + y3[:, 1:W + 1, Cp:2 * Cp]
                             + y3[:, 2:W + 2, 2 * Cp:3 * Cp])
        return acc_ref[...]

    x_bf = x_ref[0]                                   # (H, W, Cp) bf16

    # ---- conv1 + BN1 + ReLU -> padded bf16 intermediate (stays in VMEM) ------
    stage(xpad_ref, x_bf)
    a1 = conv3x3(xpad_ref, w1_ref)
    s1 = s1_ref[...].reshape(1, 1, Cp)
    b1 = b1_ref[...].reshape(1, 1, Cp)
    mid = jnp.maximum(a1 * s1 + b1, 0.0).astype(midpad_ref.dtype)
    stage(midpad_ref, mid)

    # ---- conv2 + BN2 + residual (x tile already in VMEM) + ReLU --------------
    a2 = conv3x3(midpad_ref, w2_ref)
    s2 = s2_ref[...].reshape(1, 1, Cp)
    b2 = b2_ref[...].reshape(1, 1, Cp)
    res = a2 * s2 + b2 + x_bf.astype(jnp.float32)
    out_ref[...] = jnp.maximum(res, 0.0).reshape(1, H, W, Cp).astype(out_ref.dtype)


def _fold_bn(gamma, beta, mean, var, conv_bias):
    scale = gamma / jnp.sqrt(var + BN_EPS)
    shift = beta + scale * (conv_bias - mean)
    return scale, shift


def _vmem_limit_bytes(footprint_bytes):
    cap = 128 * 1024 * 1024
    try:
        cap = int(pltpu.get_tpu_info().vmem_capacity_bytes)
    except Exception:
        pass  # fall back to the most conservative (largest-VMEM) assumption
    lim = max(2 * footprint_bytes, 32 * 1024 * 1024)
    return int(min(lim, (3 * cap) // 4))


def basic_block_forward(x_nchw, p):
    """Fused Pallas forward pass of Basic_Block (stride=1, downsample=None)."""
    N, C, H, W = x_nchw.shape
    Cout = p["w1"].shape[-1]
    assert Cout == C, "stride=1 / downsample=None path requires channels == outchannels"

    Cp = _round_up(max(C, LANE), LANE)      # lane-dense channels (multiple of 128)
    Hp = H + 2
    # bf16 sublane pack (16) so the in-kernel reshapes / row-slab stores stay
    # tile-aligned.  TODO(synk): pick spatial band widths so W+2 is already a
    # pack multiple to avoid wasted halo columns in the matmul M dim (v5e).
    Wpad = _round_up(W + 2, 16)

    # NCHW -> NHWC, zero-pad channels to Cp, cast activations to bf16.
    x = jnp.transpose(x_nchw, (0, 2, 3, 1))
    x = jnp.pad(x, ((0, 0), (0, 0), (0, 0), (0, Cp - C))).astype(jnp.bfloat16)

    def pack_w(w):
        ci, co = w.shape[2], w.shape[3]
        wpad = jnp.pad(w, ((0, 0), (0, 0), (0, Cp - ci), (0, Cp - co)))
        # (dy, dx, ci, co) -> (dy, ci, dx*Cp + co): the 3 dx taps stacked in N.
        return jnp.transpose(wpad, (0, 2, 1, 3)).reshape(3, Cp, 3 * Cp).astype(jnp.bfloat16)

    def pad_c(v):
        return jnp.pad(v, (0, Cp - v.shape[0])).reshape(1, Cp).astype(jnp.float32)

    sc1, sh1 = _fold_bn(p["gamma1"], p["beta1"], p["mean1"], p["var1"], p["b1"])
    sc2, sh2 = _fold_bn(p["gamma2"], p["beta2"], p["mean2"], p["var2"], p["b2"])
    w1, w2 = pack_w(p["w1"]), pack_w(p["w2"])
    sc1, sh1, sc2, sh2 = pad_c(sc1), pad_c(sh1), pad_c(sc2), pad_c(sh2)

    bf = 2  # bf16 bytes
    footprint = (2 * Hp * Wpad * Cp * bf             # padded bf16 scratch x2
                 + H * W * Cp * 4                    # f32 accumulator
                 + 2 * H * Wpad * 3 * Cp * 4         # headroom for spilled matmul results
                 + 2 * 2 * H * W * Cp * bf           # double-buffered x / out tiles
                 + 2 * 2 * 3 * Cp * 3 * Cp * bf)     # double-buffered packed weights

    flops = 2 * 2 * 9 * N * H * W * Cp * Cp
    bytes_accessed = (2 * N * H * W * Cp * bf        # x in + out
                      + 2 * 3 * Cp * 3 * Cp * bf     # packed weights
                      + 4 * Cp * 4)                  # folded BN scale/shift

    const_spec = pl.BlockSpec((1, Cp), lambda n: (0, 0))
    w_spec = pl.BlockSpec((3, Cp, 3 * Cp), lambda n: (0, 0, 0))

    out = pl.pallas_call(
        _basic_block_kernel,
        out_shape=jax.ShapeDtypeStruct((N, H, W, Cp), jnp.bfloat16),
        grid=(N,),
        in_specs=[
            pl.BlockSpec((1, H, W, Cp), lambda n: (n, 0, 0, 0)),
            w_spec, w_spec,
            const_spec, const_spec, const_spec, const_spec,
        ],
        out_specs=pl.BlockSpec((1, H, W, Cp), lambda n: (n, 0, 0, 0)),
        scratch_shapes=[
            pltpu.VMEM((Hp, Wpad, Cp), jnp.bfloat16),   # padded conv1 input
            pltpu.VMEM((Hp, Wpad, Cp), jnp.bfloat16),   # padded intermediate (conv2 in)
            pltpu.VMEM((H, W, Cp), jnp.float32),        # f32 accumulator
        ],
        compiler_params=pltpu.CompilerParams(
            dimension_semantics=("parallel",),
            vmem_limit_bytes=_vmem_limit_bytes(footprint)),
        cost_estimate=pl.CostEstimate(flops=flops, transcendentals=0,
                                      bytes_accessed=bytes_accessed),
    )(x, w1, w2, sc1, sh1, sc2, sh2)

    out = out[..., :C]                          # strip channel padding
    return jnp.transpose(out, (0, 3, 1, 2)).astype(jnp.float32)   # NHWC -> NCHW


def basic_block_reference(x_nchw, p):
    """Pure-JAX reference (inference-mode BN) with operands rounded to bf16 at
    the same points as the Pallas kernel (mixed-precision equivalence)."""
    f32 = jnp.float32

    def r(v):
        return v.astype(jnp.bfloat16).astype(f32)

    x = jnp.transpose(x_nchw, (0, 2, 3, 1))
    xr = r(x)

    def conv(xx, w, b):
        y = lax.conv_general_dilated(
            xx, w, window_strides=(1, 1), padding="SAME",
            dimension_numbers=("NHWC", "HWIO", "NHWC"))
        return y + b

    def bn(y, gamma, beta, mean, var):
        return gamma * (y - mean) / jnp.sqrt(var + BN_EPS) + beta

    out = conv(xr, r(p["w1"]), p["b1"])
    out = jax.nn.relu(bn(out, p["gamma1"], p["beta1"], p["mean1"], p["var1"]))
    out = conv(r(out), r(p["w2"]), p["b2"])
    out = bn(out, p["gamma2"], p["beta2"], p["mean2"], p["var2"])
    out = jax.nn.relu(out + xr)
    out = out.astype(jnp.bfloat16).astype(f32)   # kernel writes bf16 to HBM
    return jnp.transpose(out, (0, 3, 1, 2))


def init_params(key, channels, outchannels):
    ks = jax.random.split(key, 10)
    f = jnp.float32
    return {
        "w1": 0.1 * jax.random.normal(ks[0], (3, 3, channels, outchannels), f),
        "b1": 0.05 * jax.random.normal(ks[1], (outchannels,), f),
        "gamma1": 1.0 + 0.1 * jax.random.normal(ks[2], (outchannels,), f),
        "beta1": 0.05 * jax.random.normal(ks[3], (outchannels,), f),
        "mean1": 0.1 * jax.random.normal(ks[4], (outchannels,), f),
        "var1": 1.0 + 0.1 * jax.random.uniform(ks[5], (outchannels,), f),
        "w2": 0.1 * jax.random.normal(ks[6], (3, 3, outchannels, outchannels), f),
        "b2": 0.05 * jax.random.normal(ks[7], (outchannels,), f),
        "gamma2": 1.0 + 0.1 * jax.random.normal(ks[8], (outchannels,), f),
        "beta2": 0.05 * jax.random.normal(ks[9], (outchannels,), f),
        "mean2": 0.1 * jax.random.normal(ks[4], (outchannels,), f),
        "var2": 1.0 + 0.1 * jax.random.uniform(ks[5], (outchannels,), f),
    }


if __name__ == "__main__":
    key = jax.random.PRNGKey(0)
    kx, kp = jax.random.split(key)

    N, C, H, W = 2, 4, 16, 16    # channels == outchannels, stride=1, downsample=None
    x = jax.random.normal(kx, (N, C, H, W), jnp.float32)
    params = init_params(kp, C, C)

    out = jax.jit(basic_block_forward)(x, params)
    out = jax.block_until_ready(out)

    ref = basic_block_reference(x, params)
    assert out.shape == (N, C, H, W)
    max_err = float(jnp.max(jnp.abs(out - ref)))
    assert jnp.allclose(out, ref, atol=2e-2, rtol=2e-2), max_err

    print("KERNEL_OK")
</pallas_src>

<mosaic_0001>
module attributes {stable_mosaic.version = 11 : i64} {
  func.func @_basic_block_kernel(%arg0: i32, %arg1: memref<1x16x16x128xbf16, #tpu.memory_space<vmem>>, %arg2: memref<3x128x384xbf16, #tpu.memory_space<vmem>>, %arg3: memref<3x128x384xbf16, #tpu.memory_space<vmem>>, %arg4: memref<1x128xf32, #tpu.memory_space<vmem>>, %arg5: memref<1x128xf32, #tpu.memory_space<vmem>>, %arg6: memref<1x128xf32, #tpu.memory_space<vmem>>, %arg7: memref<1x128xf32, #tpu.memory_space<vmem>>, %arg8: memref<1x16x16x128xbf16, #tpu.memory_space<vmem>>, %arg9: memref<18x32x128xbf16, #tpu.memory_space<vmem>>, %arg10: memref<18x32x128xbf16, #tpu.memory_space<vmem>>, %arg11: memref<16x16x128xf32, #tpu.memory_space<vmem>>) attributes {dimension_semantics = [#tpu.dimension_semantics<parallel>], iteration_bounds = array<i64: 2>, scalar_prefetch = 0 : i64, scratch_operands = 3 : i64, tpu.core_type = #tpu.core_type<tc>, window_params = [{transform_indices = @transform_0, window_bounds = array<i64: 1, 16, 16, 128>}, {pipeline_mode = #tpu.pipeline_mode<synchronous>, transform_indices = @transform_1, window_bounds = array<i64: 3, 128, 384>}, {pipeline_mode = #tpu.pipeline_mode<synchronous>, transform_indices = @transform_2, window_bounds = array<i64: 3, 128, 384>}, {pipeline_mode = #tpu.pipeline_mode<synchronous>, transform_indices = @transform_3, window_bounds = array<i64: 1, 128>}, {pipeline_mode = #tpu.pipeline_mode<synchronous>, transform_indices = @transform_4, window_bounds = array<i64: 1, 128>}, {pipeline_mode = #tpu.pipeline_mode<synchronous>, transform_indices = @transform_5, window_bounds = array<i64: 1, 128>}, {pipeline_mode = #tpu.pipeline_mode<synchronous>, transform_indices = @transform_6, window_bounds = array<i64: 1, 128>}, {transform_indices = @transform_7, window_bounds = array<i64: 1, 16, 16, 128>}]} {
    %cst = arith.constant 0.000000e+00 : bf16
    %0 = vector.broadcast %cst : bf16 to vector<32x128xbf16>
    %cst_0 = arith.constant 0.000000e+00 : bf16
    %1 = vector.broadcast %cst_0 : bf16 to vector<16x1x128xbf16>
    %c0 = arith.constant 0 : index
    %c0_1 = arith.constant 0 : index
    %c0_2 = arith.constant 0 : index
    %c0_3 = arith.constant 0 : index
    %2 = vector.load %arg1[%c0, %c0_1, %c0_2, %c0_3] : memref<1x16x16x128xbf16, #tpu.memory_space<vmem>>, vector<1x16x16x128xbf16>
    %3 = vector.shape_cast %2 : vector<1x16x16x128xbf16> to vector<16x16x128xbf16>
    %c0_4 = arith.constant 0 : index
    %c0_5 = arith.constant 0 : index
    %c0_6 = arith.constant 0 : index
    %4 = vector.load %arg9[%c0_4, %c0_5, %c0_6] : memref<18x32x128xbf16, #tpu.memory_space<vmem>>, vector<1x32x128xbf16>
    %5 = vector.shape_cast %4 : vector<1x32x128xbf16> to vector<32x128xbf16>
    %6 = vector.shape_cast %0 : vector<32x128xbf16> to vector<1x32x128xbf16>
    tpu.vector_store %arg9[%c0_4, %c0_5, %c0_6], %6 {strides = array<i32>} : memref<18x32x128xbf16, #tpu.memory_space<vmem>>, vector<1x32x128xbf16>,
    %c17 = arith.constant 17 : index
    %c0_7 = arith.constant 0 : index
    %c0_8 = arith.constant 0 : index
    %7 = vector.load %arg9[%c17, %c0_7, %c0_8] : memref<18x32x128xbf16, #tpu.memory_space<vmem>>, vector<1x32x128xbf16>
    %8 = vector.shape_cast %7 : vector<1x32x128xbf16> to vector<32x128xbf16>
    %9 = vector.shape_cast %0 : vector<32x128xbf16> to vector<1x32x128xbf16>
    tpu.vector_store %arg9[%c17, %c0_7, %c0_8], %9 {strides = array<i32>} : memref<18x32x128xbf16, #tpu.memory_space<vmem>>, vector<1x32x128xbf16>,
    %c1 = arith.constant 1 : index
    %c0_9 = arith.constant 0 : index
    %c0_10 = arith.constant 0 : index
    %10 = vector.load %arg9[%c1, %c0_9, %c0_10] : memref<18x32x128xbf16, #tpu.memory_space<vmem>>, vector<16x1x128xbf16>
    tpu.vector_store %arg9[%c1, %c0_9, %c0_10], %1 {strides = array<i32>} : memref<18x32x128xbf16, #tpu.memory_space<vmem>>, vector<16x1x128xbf16>,
    %c1_11 = arith.constant 1 : index
    %c17_12 = arith.constant 17 : index
    %c0_13 = arith.constant 0 : index
    %11 = vector.load %arg9[%c1_11, %c17_12, %c0_13] : memref<18x32x128xbf16, #tpu.memory_space<vmem>>, vector<16x1x128xbf16>
    tpu.vector_store %arg9[%c1_11, %c17_12, %c0_13], %1 {strides = array<i32>} : memref<18x32x128xbf16, #tpu.memory_space<vmem>>, vector<16x1x128xbf16>,
    %c1_14 = arith.constant 1 : index
    %c1_15 = arith.constant 1 : index
    %c0_16 = arith.constant 0 : index
    %12 = vector.load %arg9[%c1_14, %c1_15, %c0_16] : memref<18x32x128xbf16, #tpu.memory_space<vmem>>, vector<16x16x128xbf16>
    tpu.vector_store %arg9[%c1_14, %c1_15, %c0_16], %3 {strides = array<i32>} : memref<18x32x128xbf16, #tpu.memory_space<vmem>>, vector<16x16x128xbf16>,
    %cst_17 = arith.constant 0.000000e+00 : f32
    %13 = vector.broadcast %cst_17 : f32 to vector<16x16x128xf32>
    %c0_18 = arith.constant 0 : index
    %c0_19 = arith.constant 0 : index
    %c0_20 = arith.constant 0 : index
    %14 = vector.load %arg11[%c0_18, %c0_19, %c0_20] : memref<16x16x128xf32, #tpu.memory_space<vmem>>, vector<16x16x128xf32>
    tpu.vector_store %arg11[%c0_18, %c0_19, %c0_20], %13 {strides = array<i32>} : memref<16x16x128xf32, #tpu.memory_space<vmem>>, vector<16x16x128xf32>,
    %c0_21 = arith.constant 0 : index
    %c0_22 = arith.constant 0 : index
    %c0_23 = arith.constant 0 : index
    %15 = vector.load %arg9[%c0_21, %c0_22, %c0_23] : memref<18x32x128xbf16, #tpu.memory_space<vmem>>, vector<16x32x128xbf16>
    %16 = vector.shape_cast %15 : vector<16x32x128xbf16> to vector<512x128xbf16>
    %c0_24 = arith.constant 0 : index
    %c0_25 = arith.constant 0 : index
    %c0_26 = arith.constant 0 : index
    %17 = vector.load %arg2[%c0_24, %c0_25, %c0_26] : memref<3x128x384xbf16, #tpu.memory_space<vmem>>, vector<1x128x384xbf16>
    %18 = vector.shape_cast %17 : vector<1x128x384xbf16> to vector<128x384xbf16>
    %cst_27 = arith.constant dense<0.000000e+00> : vector<512x384xf32>
    %19 = tpu.matmul %16, %18, %cst_27 {dimension_numbers = #tpu.dot_dimension_numbers<[1], [0], [0], [1], [0, 0, 1, 1], [], []>} : vector<512x128xbf16>, vector<128x384xbf16>, vector<512x384xf32> -> vector<512x384xf32>
    %20 = vector.shape_cast %19 : vector<512x384xf32> to vector<16x32x384xf32>
    %c0_28 = arith.constant 0 : index
    %c0_29 = arith.constant 0 : index
    %c0_30 = arith.constant 0 : index
    %21 = vector.load %arg11[%c0_28, %c0_29, %c0_30] : memref<16x16x128xf32, #tpu.memory_space<vmem>>, vector<16x16x128xf32>
    %22 = vector.extract_strided_slice %20 {offsets = [0, 0, 0], sizes = [16, 16, 128], strides = [1, 1, 1]} : vector<16x32x384xf32> to vector<16x16x128xf32>
    %23 = vector.extract_strided_slice %20 {offsets = [0, 1, 128], sizes = [16, 16, 128], strides = [1, 1, 1]} : vector<16x32x384xf32> to vector<16x16x128xf32>
    %24 = arith.addf %22, %23 : vector<16x16x128xf32>
    %25 = vector.extract_strided_slice %20 {offsets = [0, 2, 256], sizes = [16, 16, 128], strides = [1, 1, 1]} : vector<16x32x384xf32> to vector<16x16x128xf32>
    %26 = arith.addf %24, %25 : vector<16x16x128xf32>
    %27 = arith.addf %21, %26 : vector<16x16x128xf32>
    %c0_31 = arith.constant 0 : index
    %c0_32 = arith.constant 0 : index
    %c0_33 = arith.constant 0 : index
    %28 = vector.load %arg11[%c0_31, %c0_32, %c0_33] : memref<16x16x128xf32, #tpu.memory_space<vmem>>, vector<16x16x128xf32>
    tpu.vector_store %arg11[%c0_31, %c0_32, %c0_33], %27 {strides = array<i32>} : memref<16x16x128xf32, #tpu.memory_space<vmem>>, vector<16x16x128xf32>,
    %c1_34 = arith.constant 1 : index
    %c0_35 = arith.constant 0 : index
    %c0_36 = arith.constant 0 : index
    %29 = vector.load %arg9[%c1_34, %c0_35, %c0_36] : memref<18x32x128xbf16, #tpu.memory_space<vmem>>, vector<16x32x128xbf16>
    %30 = vector.shape_cast %29 : vector<16x32x128xbf16> to vector<512x128xbf16>
    %c1_37 = arith.constant 1 : index
    %c0_38 = arith.constant 0 : index
    %c0_39 = arith.constant 0 : index
    %31 = vector.load %arg2[%c1_37, %c0_38, %c0_39] : memref<3x128x384xbf16, #tpu.memory_space<vmem>>, vector<1x128x384xbf16>
    %32 = vector.shape_cast %31 : vector<1x128x384xbf16> to vector<128x384xbf16>
    %cst_40 = arith.constant dense<0.000000e+00> : vector<512x384xf32>
    %33 = tpu.matmul %30, %32, %cst_40 {dimension_numbers = #tpu.dot_dimension_numbers<[1], [0], [0], [1], [0, 0, 1, 1], [], []>} : vector<512x128xbf16>, vector<128x384xbf16>, vector<512x384xf32> -> vector<512x384xf32>
    %34 = vector.shape_cast %33 : vector<512x384xf32> to vector<16x32x384xf32>
    %c0_41 = arith.constant 0 : index
    %c0_42 = arith.constant 0 : index
    %c0_43 = arith.constant 0 : index
    %35 = vector.load %arg11[%c0_41, %c0_42, %c0_43] : memref<16x16x128xf32, #tpu.memory_space<vmem>>, vector<16x16x128xf32>
    %36 = vector.extract_strided_slice %34 {offsets = [0, 0, 0], sizes = [16, 16, 128], strides = [1, 1, 1]} : vector<16x32x384xf32> to vector<16x16x128xf32>
    %37 = vector.extract_strided_slice %34 {offsets = [0, 1, 128], sizes = [16, 16, 128], strides = [1, 1, 1]} : vector<16x32x384xf32> to vector<16x16x128xf32>
    %38 = arith.addf %36, %37 : vector<16x16x128xf32>
    %39 = vector.extract_strided_slice %34 {offsets = [0, 2, 256], sizes = [16, 16, 128], strides = [1, 1, 1]} : vector<16x32x384xf32> to vector<16x16x128xf32>
    %40 = arith.addf %38, %39 : vector<16x16x128xf32>
    %41 = arith.addf %35, %40 : vector<16x16x128xf32>
    %c0_44 = arith.constant 0 : index
    %c0_45 = arith.constant 0 : index
    %c0_46 = arith.constant 0 : index
    %42 = vector.load %arg11[%c0_44, %c0_45, %c0_46] : memref<16x16x128xf32, #tpu.memory_space<vmem>>, vector<16x16x128xf32>
    tpu.vector_store %arg11[%c0_44, %c0_45, %c0_46], %41 {strides = array<i32>} : memref<16x16x128xf32, #tpu.memory_space<vmem>>, vector<16x16x128xf32>,
    %c2 = arith.constant 2 : index
    %c0_47 = arith.constant 0 : index
    %c0_48 = arith.constant 0 : index
    %43 = vector.load %arg9[%c2, %c0_47, %c0_48] : memref<18x32x128xbf16, #tpu.memory_space<vmem>>, vector<16x32x128xbf16>
    %44 = vector.shape_cast %43 : vector<16x32x128xbf16> to vector<512x128xbf16>
    %c2_49 = arith.constant 2 : index
    %c0_50 = arith.constant 0 : index
    %c0_51 = arith.constant 0 : index
    %45 = vector.load %arg2[%c2_49, %c0_50, %c0_51] : memref<3x128x384xbf16, #tpu.memory_space<vmem>>, vector<1x128x384xbf16>
    %46 = vector.shape_cast %45 : vector<1x128x384xbf16> to vector<128x384xbf16>
    %cst_52 = arith.constant dense<0.000000e+00> : vector<512x384xf32>
    %47 = tpu.matmul %44, %46, %cst_52 {dimension_numbers = #tpu.dot_dimension_numbers<[1], [0], [0], [1], [0, 0, 1, 1], [], []>} : vector<512x128xbf16>, vector<128x384xbf16>, vector<512x384xf32> -> vector<512x384xf32>
    %48 = vector.shape_cast %47 : vector<512x384xf32> to vector<16x32x384xf32>
    %c0_53 = arith.constant 0 : index
    %c0_54 = arith.constant 0 : index
    %c0_55 = arith.constant 0 : index
    %49 = vector.load %arg11[%c0_53, %c0_54, %c0_55] : memref<16x16x128xf32, #tpu.memory_space<vmem>>, vector<16x16x128xf32>
    %50 = vector.extract_strided_slice %48 {offsets = [0, 0, 0], sizes = [16, 16, 128], strides = [1, 1, 1]} : vector<16x32x384xf32> to vector<16x16x128xf32>
    %51 = vector.extract_strided_slice %48 {offsets = [0, 1, 128], sizes = [16, 16, 128], strides = [1, 1, 1]} : vector<16x32x384xf32> to vector<16x16x128xf32>
    %52 = arith.addf %50, %51 : vector<16x16x128xf32>
    %53 = vector.extract_strided_slice %48 {offsets = [0, 2, 256], sizes = [16, 16, 128], strides = [1, 1, 1]} : vector<16x32x384xf32> to vector<16x16x128xf32>
    %54 = arith.addf %52, %53 : vector<16x16x128xf32>
    %55 = arith.addf %49, %54 : vector<16x16x128xf32>
    %c0_56 = arith.constant 0 : index
    %c0_57 = arith.constant 0 : index
    %c0_58 = arith.constant 0 : index
    %56 = vector.load %arg11[%c0_56, %c0_57, %c0_58] : memref<16x16x128xf32, #tpu.memory_space<vmem>>, vector<16x16x128xf32>
    tpu.vector_store %arg11[%c0_56, %c0_57, %c0_58], %55 {strides = array<i32>} : memref<16x16x128xf32, #tpu.memory_space<vmem>>, vector<16x16x128xf32>,
    %c0_59 = arith.constant 0 : index
    %c0_60 = arith.constant 0 : index
    %c0_61 = arith.constant 0 : index
    %57 = vector.load %arg11[%c0_59, %c0_60, %c0_61] : memref<16x16x128xf32, #tpu.memory_space<vmem>>, vector<16x16x128xf32>
    %c0_62 = arith.constant 0 : index
    %c0_63 = arith.constant 0 : index
    %58 = vector.load %arg4[%c0_62, %c0_63] : memref<1x128xf32, #tpu.memory_space<vmem>>, vector<1x128xf32>
    %59 = vector.shape_cast %58 : vector<1x128xf32> to vector<1x1x128xf32>
    %c0_64 = arith.constant 0 : index
    %c0_65 = arith.constant 0 : index
    %60 = vector.load %arg5[%c0_64, %c0_65] : memref<1x128xf32, #tpu.memory_space<vmem>>, vector<1x128xf32>
    %61 = vector.shape_cast %60 : vector<1x128xf32> to vector<1x1x128xf32>
    %62 = vector.broadcast %59 : vector<1x1x128xf32> to vector<16x16x128xf32>
    %63 = arith.mulf %57, %62 : vector<16x16x128xf32>
    %64 = vector.broadcast %61 : vector<1x1x128xf32> to vector<16x16x128xf32>
    %65 = arith.addf %63, %64 : vector<16x16x128xf32>
    %cst_66 = arith.constant 0.000000e+00 : f32
    %66 = vector.broadcast %cst_66 : f32 to vector<16x16x128xf32>
    %67 = arith.maximumf %65, %66 : vector<16x16x128xf32>
    %68 = arith.truncf %67 : vector<16x16x128xf32> to vector<16x16x128xbf16>
    %c0_67 = arith.constant 0 : index
    %c0_68 = arith.constant 0 : index
    %c0_69 = arith.constant 0 : index
    %69 = vector.load %arg10[%c0_67, %c0_68, %c0_69] : memref<18x32x128xbf16, #tpu.memory_space<vmem>>, vector<1x32x128xbf16>
    %70 = vector.shape_cast %69 : vector<1x32x128xbf16> to vector<32x128xbf16>
    %71 = vector.shape_cast %0 : vector<32x128xbf16> to vector<1x32x128xbf16>
    tpu.vector_store %arg10[%c0_67, %c0_68, %c0_69], %71 {strides = array<i32>} : memref<18x32x128xbf16, #tpu.memory_space<vmem>>, vector<1x32x128xbf16>,
    %c17_70 = arith.constant 17 : index
    %c0_71 = arith.constant 0 : index
    %c0_72 = arith.constant 0 : index
    %72 = vector.load %arg10[%c17_70, %c0_71, %c0_72] : memref<18x32x128xbf16, #tpu.memory_space<vmem>>, vector<1x32x128xbf16>
    %73 = vector.shape_cast %72 : vector<1x32x128xbf16> to vector<32x128xbf16>
    %74 = vector.shape_cast %0 : vector<32x128xbf16> to vector<1x32x128xbf16>
    tpu.vector_store %arg10[%c17_70, %c0_71, %c0_72], %74 {strides = array<i32>} : memref<18x32x128xbf16, #tpu.memory_space<vmem>>, vector<1x32x128xbf16>,
    %c1_73 = arith.constant 1 : index
    %c0_74 = arith.constant 0 : index
    %c0_75 = arith.constant 0 : index
    %75 = vector.load %arg10[%c1_73, %c0_74, %c0_75] : memref<18x32x128xbf16, #tpu.memory_space<vmem>>, vector<16x1x128xbf16>
    tpu.vector_store %arg10[%c1_73, %c0_74, %c0_75], %1 {strides = array<i32>} : memref<18x32x128xbf16, #tpu.memory_space<vmem>>, vector<16x1x128xbf16>,
    %c1_76 = arith.constant 1 : index
    %c17_77 = arith.constant 17 : index
    %c0_78 = arith.constant 0 : index
    %76 = vector.load %arg10[%c1_76, %c17_77, %c0_78] : memref<18x32x128xbf16, #tpu.memory_space<vmem>>, vector<16x1x128xbf16>
    tpu.vector_store %arg10[%c1_76, %c17_77, %c0_78], %1 {strides = array<i32>} : memref<18x32x128xbf16, #tpu.memory_space<vmem>>, vector<16x1x128xbf16>,
    %c1_79 = arith.constant 1 : index
    %c1_80 = arith.constant 1 : index
    %c0_81 = arith.constant 0 : index
    %77 = vector.load %arg10[%c1_79, %c1_80, %c0_81] : memref<18x32x128xbf16, #tpu.memory_space<vmem>>, vector<16x16x128xbf16>
    tpu.vector_store %arg10[%c1_79, %c1_80, %c0_81], %68 {strides = array<i32>} : memref<18x32x128xbf16, #tpu.memory_space<vmem>>, vector<16x16x128xbf16>,
    %cst_82 = arith.constant 0.000000e+00 : f32
    %78 = vector.broadcast %cst_82 : f32 to vector<16x16x128xf32>
    %c0_83 = arith.constant 0 : index
    %c0_84 = arith.constant 0 : index
    %c0_85 = arith.constant 0 : index
    %79 = vector.load %arg11[%c0_83, %c0_84, %c0_85] : memref<16x16x128xf32, #tpu.memory_space<vmem>>, vector<16x16x128xf32>
    tpu.vector_store %arg11[%c0_83, %c0_84, %c0_85], %78 {strides = array<i32>} : memref<16x16x128xf32, #tpu.memory_space<vmem>>, vector<16x16x128xf32>,
    %c0_86 = arith.constant 0 : index
    %c0_87 = arith.constant 0 : index
    %c0_88 = arith.constant 0 : index
    %80 = vector.load %arg10[%c0_86, %c0_87, %c0_88] : memref<18x32x128xbf16, #tpu.memory_space<vmem>>, vector<16x32x128xbf16>
    %81 = vector.shape_cast %80 : vector<16x32x128xbf16> to vector<512x128xbf16>
    %c0_89 = arith.constant 0 : index
    %c0_90 = arith.constant 0 : index
    %c0_91 = arith.constant 0 : index
    %82 = vector.load %arg3[%c0_89, %c0_90, %c0_91] : memref<3x128x384xbf16, #tpu.memory_space<vmem>>, vector<1x128x384xbf16>
    %83 = vector.shape_cast %82 : vector<1x128x384xbf16> to vector<128x384xbf16>
    %cst_92 = arith.constant dense<0.000000e+00> : vector<512x384xf32>
    %84 = tpu.matmul %81, %83, %cst_92 {dimension_numbers = #tpu.dot_dimension_numbers<[1], [0], [0], [1], [0, 0, 1, 1], [], []>} : vector<512x128xbf16>, vector<128x384xbf16>, vector<512x384xf32> -> vector<512x384xf32>
    %85 = vector.shape_cast %84 : vector<512x384xf32> to vector<16x32x384xf32>
    %c0_93 = arith.constant 0 : index
    %c0_94 = arith.constant 0 : index
    %c0_95 = arith.constant 0 : index
    %86 = vector.load %arg11[%c0_93, %c0_94, %c0_95] : memref<16x16x128xf32, #tpu.memory_space<vmem>>, vector<16x16x128xf32>
    %87 = vector.extract_strided_slice %85 {offsets = [0, 0, 0], sizes = [16, 16, 128], strides = [1, 1, 1]} : vector<16x32x384xf32> to vector<16x16x128xf32>
    %88 = vector.extract_strided_slice %85 {offsets = [0, 1, 128], sizes = [16, 16, 128], strides = [1, 1, 1]} : vector<16x32x384xf32> to vector<16x16x128xf32>
    %89 = arith.addf %87, %88 : vector<16x16x128xf32>
    %90 = vector.extract_strided_slice %85 {offsets = [0, 2, 256], sizes = [16, 16, 128], strides = [1, 1, 1]} : vector<16x32x384xf32> to vector<16x16x128xf32>
    %91 = arith.addf %89, %90 : vector<16x16x128xf32>
    %92 = arith.addf %86, %91 : vector<16x16x128xf32>
    %c0_96 = arith.constant 0 : index
    %c0_97 = arith.constant 0 : index
    %c0_98 = arith.constant 0 : index
    %93 = vector.load %arg11[%c0_96, %c0_97, %c0_98] : memref<16x16x128xf32, #tpu.memory_space<vmem>>, vector<16x16x128xf32>
    tpu.vector_store %arg11[%c0_96, %c0_97, %c0_98], %92 {strides = array<i32>} : memref<16x16x128xf32, #tpu.memory_space<vmem>>, vector<16x16x128xf32>,
    %c1_99 = arith.constant 1 : index
    %c0_100 = arith.constant 0 : index
    %c0_101 = arith.constant 0 : index
    %94 = vector.load %arg10[%c1_99, %c0_100, %c0_101] : memref<18x32x128xbf16, #tpu.memory_space<vmem>>, vector<16x32x128xbf16>
    %95 = vector.shape_cast %94 : vector<16x32x128xbf16> to vector<512x128xbf16>
    %c1_102 = arith.constant 1 : index
    %c0_103 = arith.constant 0 : index
    %c0_104 = arith.constant 0 : index
    %96 = vector.load %arg3[%c1_102, %c0_103, %c0_104] : memref<3x128x384xbf16, #tpu.memory_space<vmem>>, vector<1x128x384xbf16>
    %97 = vector.shape_cast %96 : vector<1x128x384xbf16> to vector<128x384xbf16>
    %cst_105 = arith.constant dense<0.000000e+00> : vector<512x384xf32>
    %98 = tpu.matmul %95, %97, %cst_105 {dimension_numbers = #tpu.dot_dimension_numbers<[1], [0], [0], [1], [0, 0, 1, 1], [], []>} : vector<512x128xbf16>, vector<128x384xbf16>, vector<512x384xf32> -> vector<512x384xf32>
    %99 = vector.shape_cast %98 : vector<512x384xf32> to vector<16x32x384xf32>
    %c0_106 = arith.constant 0 : index
    %c0_107 = arith.constant 0 : index
    %c0_108 = arith.constant 0 : index
    %100 = vector.load %arg11[%c0_106, %c0_107, %c0_108] : memref<16x16x128xf32, #tpu.memory_space<vmem>>, vector<16x16x128xf32>
    %101 = vector.extract_strided_slice %99 {offsets = [0, 0, 0], sizes = [16, 16, 128], strides = [1, 1, 1]} : vector<16x32x384xf32> to vector<16x16x128xf32>
    %102 = vector.extract_strided_slice %99 {offsets = [0, 1, 128], sizes = [16, 16, 128], strides = [1, 1, 1]} : vector<16x32x384xf32> to vector<16x16x128xf32>
    %103 = arith.addf %101, %102 : vector<16x16x128xf32>
    %104 = vector.extract_strided_slice %99 {offsets = [0, 2, 256], sizes = [16, 16, 128], strides = [1, 1, 1]} : vector<16x32x384xf32> to vector<16x16x128xf32>
    %105 = arith.addf %103, %104 : vector<16x16x128xf32>
    %106 = arith.addf %100, %105 : vector<16x16x128xf32>
    %c0_109 = arith.constant 0 : index
    %c0_110 = arith.constant 0 : index
    %c0_111 = arith.constant 0 : index
    %107 = vector.load %arg11[%c0_109, %c0_110, %c0_111] : memref<16x16x128xf32, #tpu.memory_space<vmem>>, vector<16x16x128xf32>
    tpu.vector_store %arg11[%c0_109, %c0_110, %c0_111], %106 {strides = array<i32>} : memref<16x16x128xf32, #tpu.memory_space<vmem>>, vector<16x16x128xf32>,
    %c2_112 = arith.constant 2 : index
    %c0_113 = arith.constant 0 : index
    %c0_114 = arith.constant 0 : index
    %108 = vector.load %arg10[%c2_112, %c0_113, %c0_114] : memref<18x32x128xbf16, #tpu.memory_space<vmem>>, vector<16x32x128xbf16>
    %109 = vector.shape_cast %108 : vector<16x32x128xbf16> to vector<512x128xbf16>
    %c2_115 = arith.constant 2 : index
    %c0_116 = arith.constant 0 : index
    %c0_117 = arith.constant 0 : index
    %110 = vector.load %arg3[%c2_115, %c0_116, %c0_117] : memref<3x128x384xbf16, #tpu.memory_space<vmem>>, vector<1x128x384xbf16>
    %111 = vector.shape_cast %110 : vector<1x128x384xbf16> to vector<128x384xbf16>
    %cst_118 = arith.constant dense<0.000000e+00> : vector<512x384xf32>
    %112 = tpu.matmul %109, %111, %cst_118 {dimension_numbers = #tpu.dot_dimension_numbers<[1], [0], [0], [1], [0, 0, 1, 1], [], []>} : vector<512x128xbf16>, vector<128x384xbf16>, vector<512x384xf32> -> vector<512x384xf32>
    %113 = vector.shape_cast %112 : vector<512x384xf32> to vector<16x32x384xf32>
    %c0_119 = arith.constant 0 : index
    %c0_120 = arith.constant 0 : index
    %c0_121 = arith.constant 0 : index
    %114 = vector.load %arg11[%c0_119, %c0_120, %c0_121] : memref<16x16x128xf32, #tpu.memory_space<vmem>>, vector<16x16x128xf32>
    %115 = vector.extract_strided_slice %113 {offsets = [0, 0, 0], sizes = [16, 16, 128], strides = [1, 1, 1]} : vector<16x32x384xf32> to vector<16x16x128xf32>
    %116 = vector.extract_strided_slice %113 {offsets = [0, 1, 128], sizes = [16, 16, 128], strides = [1, 1, 1]} : vector<16x32x384xf32> to vector<16x16x128xf32>
    %117 = arith.addf %115, %116 : vector<16x16x128xf32>
    %118 = vector.extract_strided_slice %113 {offsets = [0, 2, 256], sizes = [16, 16, 128], strides = [1, 1, 1]} : vector<16x32x384xf32> to vector<16x16x128xf32>
    %119 = arith.addf %117, %118 : vector<16x16x128xf32>
    %120 = arith.addf %114, %119 : vector<16x16x128xf32>
    %c0_122 = arith.constant 0 : index
    %c0_123 = arith.constant 0 : index
    %c0_124 = arith.constant 0 : index
    %121 = vector.load %arg11[%c0_122, %c0_123, %c0_124] : memref<16x16x128xf32, #tpu.memory_space<vmem>>, vector<16x16x128xf32>
    tpu.vector_store %arg11[%c0_122, %c0_123, %c0_124], %120 {strides = array<i32>} : memref<16x16x128xf32, #tpu.memory_space<vmem>>, vector<16x16x128xf32>,
    %c0_125 = arith.constant 0 : index
    %c0_126 = arith.constant 0 : index
    %c0_127 = arith.constant 0 : index
    %122 = vector.load %arg11[%c0_125, %c0_126, %c0_127] : memref<16x16x128xf32, #tpu.memory_space<vmem>>, vector<16x16x128xf32>
    %c0_128 = arith.constant 0 : index
    %c0_129 = arith.constant 0 : index
    %123 = vector.load %arg6[%c0_128, %c0_129] : memref<1x128xf32, #tpu.memory_space<vmem>>, vector<1x128xf32>
    %124 = vector.shape_cast %123 : vector<1x128xf32> to vector<1x1x128xf32>
    %c0_130 = arith.constant 0 : index
    %c0_131 = arith.constant 0 : index
    %125 = vector.load %arg7[%c0_130, %c0_131] : memref<1x128xf32, #tpu.memory_space<vmem>>, vector<1x128xf32>
    %126 = vector.shape_cast %125 : vector<1x128xf32> to vector<1x1x128xf32>
    %127 = vector.broadcast %124 : vector<1x1x128xf32> to vector<16x16x128xf32>
    %128 = arith.mulf %122, %127 : vector<16x16x128xf32>
    %129 = vector.broadcast %126 : vector<1x1x128xf32> to vector<16x16x128xf32>
    %130 = arith.addf %128, %129 : vector<16x16x128xf32>
    %131 = arith.extf %3 : vector<16x16x128xbf16> to vector<16x16x128xf32>
    %132 = arith.addf %130, %131 : vector<16x16x128xf32>
    %cst_132 = arith.constant 0.000000e+00 : f32
    %133 = vector.broadcast %cst_132 : f32 to vector<16x16x128xf32>
    %134 = arith.maximumf %132, %133 : vector<16x16x128xf32>
    %135 = vector.shape_cast %134 : vector<16x16x128xf32> to vector<1x16x16x128xf32>
    %136 = arith.truncf %135 : vector<1x16x16x128xf32> to vector<1x16x16x128xbf16>
    %c0_133 = arith.constant 0 : index
    %c0_134 = arith.constant 0 : index
    %c0_135 = arith.constant 0 : index
    %c0_136 = arith.constant 0 : index
    %137 = vector.load %arg8[%c0_133, %c0_134, %c0_135, %c0_136] : memref<1x16x16x128xbf16, #tpu.memory_space<vmem>>, vector<1x16x16x128xbf16>
    tpu.vector_store %arg8[%c0_133, %c0_134, %c0_135, %c0_136], %136 {strides = array<i32>} : memref<1x16x16x128xbf16, #tpu.memory_space<vmem>>, vector<1x16x16x128xbf16>,
    return
  }
  func.func @transform_0(%arg0: i32) -> (i32, i32, i32, i32) {
    %c0_i32 = arith.constant 0 : i32
    %c0_i32_0 = arith.constant 0 : i32
    %c0_i32_1 = arith.constant 0 : i32
    %c0_i32_2 = arith.constant 0 : i32
    return %arg0, %c0_i32, %c0_i32_0, %c0_i32_1 : i32, i32, i32, i32
  }
  func.func @transform_1(%arg0: i32) -> (i32, i32, i32) {
    %c0_i32 = arith.constant 0 : i32
    %c0_i32_0 = arith.constant 0 : i32
    %c0_i32_1 = arith.constant 0 : i32
    %c0_i32_2 = arith.constant 0 : i32
    return %c0_i32, %c0_i32_0, %c0_i32_1 : i32, i32, i32
  }
  func.func @transform_2(%arg0: i32) -> (i32, i32, i32) {
    %c0_i32 = arith.constant 0 : i32
    %c0_i32_0 = arith.constant 0 : i32
    %c0_i32_1 = arith.constant 0 : i32
    %c0_i32_2 = arith.constant 0 : i32
    return %c0_i32, %c0_i32_0, %c0_i32_1 : i32, i32, i32
  }
  func.func @transform_3(%arg0: i32) -> (i32, i32) {
    %c0_i32 = arith.constant 0 : i32
    %c0_i32_0 = arith.constant 0 : i32
    %c0_i32_1 = arith.constant 0 : i32
    return %c0_i32, %c0_i32_0 : i32, i32
  }
  func.func @transform_4(%arg0: i32) -> (i32, i32) {
    %c0_i32 = arith.constant 0 : i32
    %c0_i32_0 = arith.constant 0 : i32
    %c0_i32_1 = arith.constant 0 : i32
    return %c0_i32, %c0_i32_0 : i32, i32
  }
  func.func @transform_5(%arg0: i32) -> (i32, i32) {
    %c0_i32 = arith.constant 0 : i32
    %c0_i32_0 = arith.constant 0 : i32
    %c0_i32_1 = arith.constant 0 : i32
    return %c0_i32, %c0_i32_0 : i32, i32
  }
  func.func @transform_6(%arg0: i32) -> (i32, i32) {
    %c0_i32 = arith.constant 0 : i32
    %c0_i32_0 = arith.constant 0 : i32
    %c0_i32_1 = arith.constant 0 : i32
    return %c0_i32, %c0_i32_0 : i32, i32
  }
  func.func @transform_7(%arg0: i32) -> (i32, i32, i32, i32) {
    %c0_i32 = arith.constant 0 : i32
    %c0_i32_0 = arith.constant 0 : i32
    %c0_i32_1 = arith.constant 0 : i32
    %c0_i32_2 = arith.constant 0 : i32
    return %arg0, %c0_i32, %c0_i32_0, %c0_i32_1 : i32, i32, i32, i32
  }
}

</mosaic_0001>

<llo_original>
// kernel: basic_block_forward.1
$region0: #{basic_block_forward.1}
  #allocation0 [shape = 'u32[]', space=smem, size = 0x4, offset = 0x4, fixed_abs, tag = 'smem constant byte address 0x4 - core index']
  #allocation1 [shape = 'u32[72,128]{1,0:T(1,128)}', space=vmem, size = 0x9000, scoped, tag = 'internal scratch']
  #allocation2 [shape = 'bf16[18,32,128]{2,1,0:T(8,128)(2,1)}', space=vmem, size = 0x24000, scoped, tag = 'scratch operand']
  #allocation3 [shape = 'bf16[18,32,128]{2,1,0:T(8,128)(2,1)}', space=vmem, size = 0x24000, scoped, tag = 'scratch operand']
  #allocation4 [shape = 'f32[16,16,128]{2,1,0:T(8,128)}', space=vmem, size = 0x20000, scoped, tag = 'scratch operand']
  %s0 = inlined_call_operand.vmem [shape: bf16[2,16,16,128], index: 0, kind: input, shape index: {}]
  %s1 = inlined_call_operand.vmem [shape: bf16[3,128,384], index: 1, kind: input, shape index: {}]
  %s2 = inlined_call_operand.vmem [shape: bf16[3,128,384], index: 2, kind: input, shape index: {}]
  %s3 = inlined_call_operand.vmem [shape: f32[1,128], index: 3, kind: input, shape index: {}]
  %s4 = inlined_call_operand.vmem [shape: f32[1,128], index: 4, kind: input, shape index: {}]
  %s5 = inlined_call_operand.vmem [shape: f32[1,128], index: 5, kind: input, shape index: {}]
  %s6 = inlined_call_operand.vmem [shape: f32[1,128], index: 6, kind: input, shape index: {}]
  %s7 = inlined_call_operand.vmem [shape: bf16[2,16,16,128], index: 7, kind: output, shape index: {}]
  %s8 = sld [smem:[#allocation0]]
  $region61: #{basic_block_forward.1} parent=0
    _
  %s10 = ssub.s32 1, %s8
  %s11 = scalar_select 0, %s10, %s8
  loop: start=0, step=1, limit=4
  $region2: #{basic_block_forward.1} parent=0 // loop_pre_header
    _
  $region3: #{basic_block_forward.1} parent=0 // loop_header
    %s13 = sphi 0, %s17
    %p14 = scmp.ge.s32.totalorder %s13, 4
    %s23 = sphi 0, %s25
    %s26 = sphi 0, %s23
    %s27 = sphi 0, %s26
    %s43 = sphi 0, %s27
    %s47 = sphi 0, %s47
    %s49 = sphi 0, %s47
    %s50 = sphi 0, %s49
    %s64 = sphi 0, %s50
    %s68 = sphi 0, %s68
    %s70 = sphi 0, %s68
    %s71 = sphi 0, %s70
    %s85 = sphi 0, %s71
    %s89 = sphi 0, %s89
    %s91 = sphi 0, %s89
    %s92 = sphi 0, %s91
    %s106 = sphi 0, %s92
    %s110 = sphi 0, %s110
    %s112 = sphi 0, %s110
    %s113 = sphi 0, %s112
    %s127 = sphi 0, %s113
    %s131 = sphi 0, %s131
    %s133 = sphi 0, %s131
    %s134 = sphi 0, %s133
    %s148 = sphi 0, %s134
    %s152 = sphi 0, %s152
    %s154 = sphi 0, %s152
    %s155 = sphi 0, %s154
    %s169 = sphi 0, %s155
    %s175 = sphi 0, %s177
    %s178 = sphi 0, %s175
    %s179 = sphi 0, %s178
    %s195 = sphi 0, %s179
  $region4: #{basic_block_forward.1} parent=0 // loop_header_branch
    %16 = sbr.rel (%p14) target = $region8
  $region5: #{basic_block_forward.1} parent=0 // loop_body
    %s18 = ssub.s32 %s13, 1
    %s19 = ssub.s32 %s13, 2
    %s20 = sadd.s32 %s13, 1
    %s21 = ssub.s32 %s13, %s20
    %p22 = scmp.eq.s32.totalorder %s21, 0
    %s24 = sadd.s32 %s23, 1
    %s25 = scalar_select %p22, %s23, %s24
    %p28 = pneg %p22
    %p29 = scmp.eq.s32.totalorder %s13, 1
    %p30 = por %p28, %p29
    %p31 = scmp.ne.s32.totalorder %s23, %s26
    %p32 = scmp.eq.s32.totalorder %s13, 0
    %p33 = por %p31, %p32
    %p34 = scmp.ne.s32.totalorder %s23, %s26
    %p35 = scmp.eq.s32.totalorder %s18, 1
    %p36 = por %p34, %p35
    %p37 = scmp.ne.s32.totalorder %s26, %s27
    %p38 = scmp.eq.s32.totalorder %s18, 0
    %p39 = por %p37, %p38
    %p40 = scmp.ne.s32.totalorder %s26, %s27
    %p41 = scmp.eq.s32.totalorder %s19, 1
    %p42 = por %p40, %p41
    %p44 = scmp.ne.s32.totalorder %s27, %s43
    %p45 = scmp.eq.s32.totalorder %s19, 0
    %p46 = por %p44, %p45
    %s48 = sadd.s32 %s47, 1
    %p51 = scmp.eq.s32.totalorder %s13, 1
    %p52 = scmp.ne.s32.totalorder %s47, %s49
    %p53 = scmp.eq.s32.totalorder %s13, 0
    %p54 = por %p52, %p53
    %p55 = scmp.ne.s32.totalorder %s47, %s49
    %p56 = scmp.eq.s32.totalorder %s18, 1
    %p57 = por %p55, %p56
    %p58 = scmp.ne.s32.totalorder %s49, %s50
    %p59 = scmp.eq.s32.totalorder %s18, 0
    %p60 = por %p58, %p59
    %p61 = scmp.ne.s32.totalorder %s49, %s50
    %p62 = scmp.eq.s32.totalorder %s19, 1
    %p63 = por %p61, %p62
    %p65 = scmp.ne.s32.totalorder %s50, %s64
    %p66 = scmp.eq.s32.totalorder %s19, 0
    %p67 = por %p65, %p66
    %s69 = sadd.s32 %s68, 1
    %p72 = scmp.eq.s32.totalorder %s13, 1
    %p73 = scmp.ne.s32.totalorder %s68, %s70
    %p74 = scmp.eq.s32.totalorder %s13, 0
    %p75 = por %p73, %p74
    %p76 = scmp.ne.s32.totalorder %s68, %s70
    %p77 = scmp.eq.s32.totalorder %s18, 1
    %p78 = por %p76, %p77
    %p79 = scmp.ne.s32.totalorder %s70, %s71
    %p80 = scmp.eq.s32.totalorder %s18, 0
    %p81 = por %p79, %p80
    %p82 = scmp.ne.s32.totalorder %s70, %s71
    %p83 = scmp.eq.s32.totalorder %s19, 1
    %p84 = por %p82, %p83
    %p86 = scmp.ne.s32.totalorder %s71, %s85
    %p87 = scmp.eq.s32.totalorder %s19, 0
    %p88 = por %p86, %p87
    %s90 = sadd.s32 %s89, 1
    %p93 = scmp.eq.s32.totalorder %s13, 1
    %p94 = scmp.ne.s32.totalorder %s89, %s91
    %p95 = scmp.eq.s32.totalorder %s13, 0
    %p96 = por %p94, %p95
    %p97 = scmp.ne.s32.totalorder %s89, %s91
    %p98 = scmp.eq.s32.totalorder %s18, 1
    %p99 = por %p97, %p98
    %p100 = scmp.ne.s32.totalorder %s91, %s92
    %p101 = scmp.eq.s32.totalorder %s18, 0
    %p102 = por %p100, %p101
    %p103 = scmp.ne.s32.totalorder %s91, %s92
    %p104 = scmp.eq.s32.totalorder %s19, 1
    %p105 = por %p103, %p104
    %p107 = scmp.ne.s32.totalorder %s92, %s106
    %p108 = scmp.eq.s32.totalorder %s19, 0
    %p109 = por %p107, %p108
    %s111 = sadd.s32 %s110, 1
    %p114 = scmp.eq.s32.totalorder %s13, 1
    %p115 = scmp.ne.s32.totalorder %s110, %s112
    %p116 = scmp.eq.s32.totalorder %s13, 0
    %p117 = por %p115, %p116
    %p118 = scmp.ne.s32.totalorder %s110, %s112
    %p119 = scmp.eq.s32.totalorder %s18, 1
    %p120 = por %p118, %p119
    %p121 = scmp.ne.s32.totalorder %s112, %s113
    %p122 = scmp.eq.s32.totalorder %s18, 0
    %p123 = por %p121, %p122
    %p124 = scmp.ne.s32.totalorder %s112, %s113
    %p125 = scmp.eq.s32.totalorder %s19, 1
    %p126 = por %p124, %p125
    %p128 = scmp.ne.s32.totalorder %s113, %s127
    %p129 = scmp.eq.s32.totalorder %s19, 0
    %p130 = por %p128, %p129
    %s132 = sadd.s32 %s131, 1
    %p135 = scmp.eq.s32.totalorder %s13, 1
    %p136 = scmp.ne.s32.totalorder %s131, %s133
    %p137 = scmp.eq.s32.totalorder %s13, 0
    %p138 = por %p136, %p137
    %p139 = scmp.ne.s32.totalorder %s131, %s133
    %p140 = scmp.eq.s32.totalorder %s18, 1
    %p141 = por %p139, %p140
    %p142 = scmp.ne.s32.totalorder %s133, %s134
    %p143 = scmp.eq.s32.totalorder %s18, 0
    %p144 = por %p142, %p143
    %p145 = scmp.ne.s32.totalorder %s133, %s134
    %p146 = scmp.eq.s32.totalorder %s19, 1
    %p147 = por %p145, %p146
    %p149 = scmp.ne.s32.totalorder %s134, %s148
    %p150 = scmp.eq.s32.totalorder %s19, 0
    %p151 = por %p149, %p150
    %s153 = sadd.s32 %s152, 1
    %p156 = scmp.eq.s32.totalorder %s13, 1
    %p157 = scmp.ne.s32.totalorder %s152, %s154
    %p158 = scmp.eq.s32.totalorder %s13, 0
    %p159 = por %p157, %p158
    %p160 = scmp.ne.s32.totalorder %s152, %s154
    %p161 = scmp.eq.s32.totalorder %s18, 1
    %p162 = por %p160, %p161
    %p163 = scmp.ne.s32.totalorder %s154, %s155
    %p164 = scmp.eq.s32.totalorder %s18, 0
    %p165 = por %p163, %p164
    %p166 = scmp.ne.s32.totalorder %s154, %s155
    %p167 = scmp.eq.s32.totalorder %s19, 1
    %p168 = por %p166, %p167
    %p170 = scmp.ne.s32.totalorder %s155, %s169
    %p171 = scmp.eq.s32.totalorder %s19, 0
    %p172 = por %p170, %p171
    %s173 = ssub.s32 %s13, %s20
    %p174 = scmp.eq.s32.totalorder %s173, 0
    %s176 = sadd.s32 %s175, 1
    %s177 = scalar_select %p174, %s175, %s176
    %p180 = pneg %p174
    %p181 = scmp.eq.s32.totalorder %s13, 1
    %p182 = por %p180, %p181
    %p183 = scmp.ne.s32.totalorder %s175, %s178
    %p184 = scmp.eq.s32.totalorder %s13, 0
    %p185 = por %p183, %p184
    %p186 = scmp.ne.s32.totalorder %s175, %s178
    %p187 = scmp.eq.s32.totalorder %s18, 1
    %p188 = por %p186, %p187
    %p189 = scmp.ne.s32.totalorder %s178, %s179
    %p190 = scmp.eq.s32.totalorder %s18, 0
    %p191 = por %p189, %p190
    %p192 = scmp.ne.s32.totalorder %s178, %s179
    %p193 = scmp.eq.s32.totalorder %s19, 1
    %p194 = por %p192, %p193
    %p196 = scmp.ne.s32.totalorder %s179, %s195
    %p197 = scmp.eq.s32.totalorder %s19, 0
    %p198 = por %p196, %p197
    %p199 = scmp.le.s32.totalorder 1, %s13
    %p200 = scmp.lt.s32.totalorder %s13, 3
    %p201 = pnand %p199, %p200
    %p202 = pneg %p201
    // Predicated region
    $region9: #{basic_block_forward.1} parent=5 // pred_check
      _
    $region10: #{basic_block_forward.1} parent=5 // pred_check_branch
      %204 = sbr.rel (%p201) target = $region12
    $region11: #{basic_block_forward.1} parent=5 // pred_region
      %s205 = ssub.s32 %s13, 1
      // Predicated region
      $region13: #{basic_block_forward.1} parent=11 // pred_check
        %p206 = pneg %p60
      $region14: #{basic_block_forward.1} parent=11 // pred_check_branch
        %208 = sbr.rel (%p206) target = $region16
      $region15: #{basic_block_forward.1} parent=11 // pred_region
        _
      $region16: #{basic_block_forward.1} parent=11 // pred_fallthru
        _
      // Predicated region
      $region17: #{basic_block_forward.1} parent=11 // pred_check
        %p209 = pneg %p81
      $region18: #{basic_block_forward.1} parent=11 // pred_check_branch
        %211 = sbr.rel (%p209) target = $region20
      $region19: #{basic_block_forward.1} parent=11 // pred_region
        _
      $region20: #{basic_block_forward.1} parent=11 // pred_fallthru
        _
      // Predicated region
      $region21: #{basic_block_forward.1} parent=11 // pred_check
        %p212 = pneg %p102
      $region22: #{basic_block_forward.1} parent=11 // pred_check_branch
        %214 = sbr.rel (%p212) target = $region24
      $region23: #{basic_block_forward.1} parent=11 // pred_region
        _
      $region24: #{basic_block_forward.1} parent=11 // pred_fallthru
        _
      // Predicated region
      $region25: #{basic_block_forward.1} parent=11 // pred_check
        %p215 = pneg %p123
      $region26: #{basic_block_forward.1} parent=11 // pred_check_branch
        %217 = sbr.rel (%p215) target = $region28
      $region27: #{basic_block_forward.1} parent=11 // pred_region
        _
      $region28: #{basic_block_forward.1} parent=11 // pred_fallthru
        _
      // Predicated region
      $region29: #{basic_block_forward.1} parent=11 // pred_check
        %p218 = pneg %p144
      $region30: #{basic_block_forward.1} parent=11 // pred_check_branch
        %220 = sbr.rel (%p218) target = $region32
      $region31: #{basic_block_forward.1} parent=11 // pred_region
        _
      $region32: #{basic_block_forward.1} parent=11 // pred_fallthru
        _
      // Predicated region
      $region33: #{basic_block_forward.1} parent=11 // pred_check
        %p221 = pneg %p165
      $region34: #{basic_block_forward.1} parent=11 // pred_check_branch
        %223 = sbr.rel (%p221) target = $region36
      $region35: #{basic_block_forward.1} parent=11 // pred_region
        _
      $region36: #{basic_block_forward.1} parent=11 // pred_fallthru
        _
    $region12: #{basic_block_forward.1} parent=5 // pred_fallthru
      _
    %p224 = scmp.lt.s32.totalorder %s13, 2
    // Predicated region
    $region37: #{basic_block_forward.1} parent=5 // pred_check
      %p225 = pneg %p224
    $region38: #{basic_block_forward.1} parent=5 // pred_check_branch
      %227 = sbr.rel (%p225) target = $region40
    $region39: #{basic_block_forward.1} parent=5 // pred_region
      // Predicated region
      $region41: #{basic_block_forward.1} parent=39 // pred_check
        %p228 = pneg %p33
      $region42: #{basic_block_forward.1} parent=39 // pred_check_branch
        %230 = sbr.rel (%p228) target = $region44
      $region43: #{basic_block_forward.1} parent=39 // pred_region
        %p231 = scmp.lt.s32.totalorder %s13, 1
        %s232 = scalar_select %p231, %s13, 1
        %s233 = smul.addr %s232, 32
        %s234 = smul.addr %s233, 4
        %s235 = scalar_lea.vmem %s0, %s234
      $region44: #{basic_block_forward.1} parent=39 // pred_fallthru
        _
    $region40: #{basic_block_forward.1} parent=5 // pred_fallthru
      _
    %p236 = scmp.le.s32.totalorder 1, %s13
    %p237 = scmp.lt.s32.totalorder %s13, 3
    %p238 = pnand %p236, %p237
    %p239 = pneg %p238
    // Predicated region
    $region45: #{basic_block_forward.1} parent=5 // pred_check
      _
    $region46: #{basic_block_forward.1} parent=5 // pred_check_branch
      %241 = sbr.rel (%p238) target = $region48
    $region47: #{basic_block_forward.1} parent=5 // pred_region
      %s242 = ssub.s32 %s13, 1
      %p243 = scmp.lt.s32.totalorder %s18, 1
      %s244 = scalar_select %p243, %s18, 1
      %s245 = smul.addr %s244, 32
      %s246 = smul.addr %s245, 4
      %s247 = scalar_lea.vmem %s0, %s246
      %p248 = pneg %p39
      %p249 = pneg %p36
      %p250 = pneg %p60
      %p251 = pneg %p57
      %p252 = pneg %p81
      %p253 = pneg %p78
      %p254 = pneg %p102
      %p255 = pneg %p99
      %p256 = pneg %p123
      %p257 = pneg %p120
      %p258 = pneg %p144
      %p259 = pneg %p141
      %p260 = pneg %p165
      %p261 = pneg %p162
      %p262 = pneg %p191
      %p263 = pneg %p188
      %p264 = scmp.lt.s32.totalorder %s18, 1
      %s265 = scalar_select %p264, %s18, 1
      %s266 = smul.addr %s265, 32
      %s267 = smul.addr %s266, 4
      %s268 = scalar_lea.vmem %s7, %s267
      %p269 = scmp.lt.s32.totalorder %s18, 1
      %s270 = scalar_select %p269, %s18, 1
      %s271 = smul.addr %s270, 32
      %s272 = smul.addr %s271, 4
      %s273 = scalar_lea.vmem %s0, %s272
      %p274 = scmp.lt.s32.totalorder %s18, 1
      %s275 = scalar_select %p274, %s18, 1
      %s276 = smul.addr %s275, 32
      %s277 = smul.addr %s276, 4
      %s278 = scalar_lea.vmem %s7, %s277
      %v280 = vld [vmem:[%s273] sm:$0xf]
      %v281 = vld [vmem:[%s273 + $0x4] sm:$0xf]
      %v282 = vld [vmem:[%s273 + $0x8] sm:$0xf]
      %v283 = vld [vmem:[%s273 + $0xc] sm:$0xf]
      %v284 = vld [vmem:[%s273 + $0x10] sm:$0xf]
      %v285 = vld [vmem:[%s273 + $0x14] sm:$0xf]
      %v286 = vld [vmem:[%s273 + $0x18] sm:$0xf]
      %v287 = vld [vmem:[%s273 + $0x1c] sm:$0xf]
      %v288 = vld [vmem:[%s273 + $0x20] sm:$0xf]
      %v289 = vld [vmem:[%s273 + $0x24] sm:$0xf]
      %v290 = vld [vmem:[%s273 + $0x28] sm:$0xf]
      %v291 = vld [vmem:[%s273 + $0x2c] sm:$0xf]
      %v292 = vld [vmem:[%s273 + $0x30] sm:$0xf]
      %v293 = vld [vmem:[%s273 + $0x34] sm:$0xf]
      %v294 = vld [vmem:[%s273 + $0x38] sm:$0xf]
      %v295 = vld [vmem:[%s273 + $0x3c] sm:$0xf]
      %v296 = vld [vmem:[%s273 + $0x40] sm:$0xf]
      %v297 = vld [vmem:[%s273 + $0x44] sm:$0xf]
      %v298 = vld [vmem:[%s273 + $0x48] sm:$0xf]
      %v299 = vld [vmem:[%s273 + $0x4c] sm:$0xf]
      %v300 = vld [vmem:[%s273 + $0x50] sm:$0xf]
      %v301 = vld [vmem:[%s273 + $0x54] sm:$0xf]
      %v302 = vld [vmem:[%s273 + $0x58] sm:$0xf]
      %v303 = vld [vmem:[%s273 + $0x5c] sm:$0xf]
      %v304 = vld [vmem:[%s273 + $0x60] sm:$0xf]
      %v305 = vld [vmem:[%s273 + $0x64] sm:$0xf]
      %v306 = vld [vmem:[%s273 + $0x68] sm:$0xf]
      %v307 = vld [vmem:[%s273 + $0x6c] sm:$0xf]
      %v308 = vld [vmem:[%s273 + $0x70] sm:$0xf]
      %v309 = vld [vmem:[%s273 + $0x74] sm:$0xf]
      %v310 = vld [vmem:[%s273 + $0x78] sm:$0xf]
      %v311 = vld [vmem:[%s273 + $0x7c] sm:$0xf]
      %312 = vst [vmem:[#allocation2] sm:$0xf] 0
      %313 = vst [vmem:[#allocation2 + $0x4] sm:$0xf] 0
      %314 = vst [vmem:[#allocation2 + $0x8] sm:$0xf] 0
      %315 = vst [vmem:[#allocation2 + $0xc] sm:$0xf] 0
      %s316 = scalar_lea.vmem [#allocation2], 272
      %317 = vst [vmem:[%s316] sm:$0xf] 0
      %318 = vst [vmem:[%s316 + $0x4] sm:$0xf] 0
      %319 = vst [vmem:[%s316 + $0x8] sm:$0xf] 0
      %320 = vst [vmem:[%s316 + $0xc] sm:$0xf] 0
      %s321 = scalar_lea.vmem [#allocation2], 16
      %vm322 = vcmask 1040384
      %vm323 = vsmask.f32 256
      %vm324 = vmand %vm322, %vm323
      %v325 = vld [vmem:[%s321] sm:$0x1]
      %v326 = vsel %vm324, 0, %v325
      %327 = vst [vmem:[%s321] sm:$0x1] %v326
      %v328 = vld [vmem:[%s321 + $0x10] sm:$0x1]
      %v329 = vsel %vm324, 0, %v328
      %330 = vst [vmem:[%s321 + $0x10] sm:$0x1] %v329
      %v331 = vld [vmem:[%s321 + $0x20] sm:$0x1]
      %v332 = vsel %vm324, 0, %v331
      %333 = vst [vmem:[%s321 + $0x20] sm:$0x1] %v332
      %v334 = vld [vmem:[%s321 + $0x30] sm:$0x1]
      %v335 = vsel %vm324, 0, %v334
      %336 = vst [vmem:[%s321 + $0x30] sm:$0x1] %v335
      %v337 = vld [vmem:[%s321 + $0x40] sm:$0x1]
      %v338 = vsel %vm324, 0, %v337
      %339 = vst [vmem:[%s321 + $0x40] sm:$0x1] %v338
      %v340 = vld [vmem:[%s321 + $0x50] sm:$0x1]
      %v341 = vsel %vm324, 0, %v340
      %342 = vst [vmem:[%s321 + $0x50] sm:$0x1] %v341
      %v343 = vld [vmem:[%s321 + $0x60] sm:$0x1]
      %v344 = vsel %vm324, 0, %v343
      %345 = vst [vmem:[%s321 + $0x60] sm:$0x1] %v344
      %v346 = vld [vmem:[%s321 + $0x70] sm:$0x1]
      %v347 = vsel %vm324, 0, %v346
      %348 = vst [vmem:[%s321 + $0x70] sm:$0x1] %v347
      %v349 = vld [vmem:[%s321 + $0x80] sm:$0x1]
      %v350 = vsel %vm324, 0, %v349
      %351 = vst [vmem:[%s321 + $0x80] sm:$0x1] %v350
      %v352 = vld [vmem:[%s321 + $0x90] sm:$0x1]
      %v353 = vsel %vm324, 0, %v352
      %354 = vst [vmem:[%s321 + $0x90] sm:$0x1] %v353
      %v355 = vld [vmem:[%s321 + $0xa0] sm:$0x1]
      %v356 = vsel %vm324, 0, %v355
      %357 = vst [vmem:[%s321 + $0xa0] sm:$0x1] %v356
      %v358 = vld [vmem:[%s321 + $0xb0] sm:$0x1]
      %v359 = vsel %vm324, 0, %v358
      %360 = vst [vmem:[%s321 + $0xb0] sm:$0x1] %v359
      %v361 = vld [vmem:[%s321 + $0xc0] sm:$0x1]
      %v362 = vsel %vm324, 0, %v361
      %363 = vst [vmem:[%s321 + $0xc0] sm:$0x1] %v362
      %v364 = vld [vmem:[%s321 + $0xd0] sm:$0x1]
      %v365 = vsel %vm324, 0, %v364
      %366 = vst [vmem:[%s321 + $0xd0] sm:$0x1] %v365
      %v367 = vld [vmem:[%s321 + $0xe0] sm:$0x1]
      %v368 = vsel %vm324, 0, %v367
      %369 = vst [vmem:[%s321 + $0xe0] sm:$0x1] %v368
      %v370 = vld [vmem:[%s321 + $0xf0] sm:$0x1]
      %v371 = vsel %vm324, 0, %v370
      %372 = vst [vmem:[%s321 + $0xf0] sm:$0x1] %v371
      %vm373 = vsmask.f32 7938
      %vm374 = vmand %vm322, %vm373
      %v375 = vld [vmem:[%s321 + $0x8] sm:$0x1]
      %v376 = vsel %vm374, 0, %v375
      %377 = vst [vmem:[%s321 + $0x8] sm:$0x1] %v376
      %v378 = vld [vmem:[%s321 + $0x18] sm:$0x1]
      %v379 = vsel %vm374, 0, %v378
      %380 = vst [vmem:[%s321 + $0x18] sm:$0x1] %v379
      %v381 = vld [vmem:[%s321 + $0x28] sm:$0x1]
      %v382 = vsel %vm374, 0, %v381
      %383 = vst [vmem:[%s321 + $0x28] sm:$0x1] %v382
      %v384 = vld [vmem:[%s321 + $0x38] sm:$0x1]
      %v385 = vsel %vm374, 0, %v384
      %386 = vst [vmem:[%s321 + $0x38] sm:$0x1] %v385
      %v387 = vld [vmem:[%s321 + $0x48] sm:$0x1]
      %v388 = vsel %vm374, 0, %v387
      %389 = vst [vmem:[%s321 + $0x48] sm:$0x1] %v388
      %v390 = vld [vmem:[%s321 + $0x58] sm:$0x1]
      %v391 = vsel %vm374, 0, %v390
      %392 = vst [vmem:[%s321 + $0x58] sm:$0x1] %v391
      %v393 = vld [vmem:[%s321 + $0x68] sm:$0x1]
      %v394 = vsel %vm374, 0, %v393
      %395 = vst [vmem:[%s321 + $0x68] sm:$0x1] %v394
      %v396 = vld [vmem:[%s321 + $0x78] sm:$0x1]
      %v397 = vsel %vm374, 0, %v396
      %398 = vst [vmem:[%s321 + $0x78] sm:$0x1] %v397
      %v399 = vld [vmem:[%s321 + $0x88] sm:$0x1]
      %v400 = vsel %vm374, 0, %v399
      %401 = vst [vmem:[%s321 + $0x88] sm:$0x1] %v400
      %v402 = vld [vmem:[%s321 + $0x98] sm:$0x1]
      %v403 = vsel %vm374, 0, %v402
      %404 = vst [vmem:[%s321 + $0x98] sm:$0x1] %v403
      %v405 = vld [vmem:[%s321 + $0xa8] sm:$0x1]
      %v406 = vsel %vm374, 0, %v405
      %407 = vst [vmem:[%s321 + $0xa8] sm:$0x1] %v406
      %v408 = vld [vmem:[%s321 + $0xb8] sm:$0x1]
      %v409 = vsel %vm374, 0, %v408
      %410 = vst [vmem:[%s321 + $0xb8] sm:$0x1] %v409
      %v411 = vld [vmem:[%s321 + $0xc8] sm:$0x1]
      %v412 = vsel %vm374, 0, %v411
      %413 = vst [vmem:[%s321 + $0xc8] sm:$0x1] %v412
      %v414 = vld [vmem:[%s321 + $0xd8] sm:$0x1]
      %v415 = vsel %vm374, 0, %v414
      %416 = vst [vmem:[%s321 + $0xd8] sm:$0x1] %v415
      %v417 = vld [vmem:[%s321 + $0xe8] sm:$0x1]
      %v418 = vsel %vm374, 0, %v417
      %419 = vst [vmem:[%s321 + $0xe8] sm:$0x1] %v418
      %v420 = vld [vmem:[%s321 + $0xf8] sm:$0x1]
      %v421 = vsel %vm374, 0, %v420
      %422 = vst [vmem:[%s321 + $0xf8] sm:$0x1] %v421
      %vm423 = vsmask.f32 4368
      %vm424 = vmor %vm323, %vm423
      %v426 = vshrl.u32 %v280, 16
      %v428 = vrot.slane %v426, 7
      %v429 = vshll.u32 %v280, 16
      %v431 = vor.u32 %v428, %v429
      %v432 = vrot.slane %v428, 4
      %v434 = vshrl.u32 %v281, 16
      %v436 = vrot.slane %v434, 7
      %v437 = vshll.u32 %v281, 16
      %v439 = vor.u32 %v436, %v437
      %v440 = vsel %vm424, %v432, %v439
      %v441 = vrot.slane %v436, 4
      %v443 = vshrl.u32 %v282, 16
      %v445 = vrot.slane %v443, 7
      %v446 = vshll.u32 %v282, 16
      %v448 = vor.u32 %v445, %v446
      %v449 = vrot.slane %v445, 4
      %v451 = vshrl.u32 %v283, 16
      %v453 = vrot.slane %v451, 7
      %v454 = vshll.u32 %v283, 16
      %v456 = vor.u32 %v453, %v454
      %v457 = vsel %vm424, %v449, %v456
      %v458 = vrot.slane %v453, 4
      %v460 = vshrl.u32 %v284, 16
      %v462 = vrot.slane %v460, 7
      %v463 = vshll.u32 %v284, 16
      %v465 = vor.u32 %v462, %v463
      %v466 = vrot.slane %v462, 4
      %v468 = vshrl.u32 %v285, 16
      %v470 = vrot.slane %v468, 7
      %v471 = vshll.u32 %v285, 16
      %v473 = vor.u32 %v470, %v471
      %v474 = vsel %vm424, %v466, %v473
      %v475 = vrot.slane %v470, 4
      %v477 = vshrl.u32 %v286, 16
      %v479 = vrot.slane %v477, 7
      %v480 = vshll.u32 %v286, 16
      %v482 = vor.u32 %v479, %v480
      %v483 = vrot.slane %v479, 4
      %v485 = vshrl.u32 %v287, 16
      %v487 = vrot.slane %v485, 7
      %v488 = vshll.u32 %v287, 16
      %v490 = vor.u32 %v487, %v488
      %v491 = vsel %vm424, %v483, %v490
      %v492 = vrot.slane %v487, 4
      %v494 = vshrl.u32 %v288, 16
      %v496 = vrot.slane %v494, 7
      %v497 = vshll.u32 %v288, 16
      %v499 = vor.u32 %v496, %v497
      %v500 = vrot.slane %v496, 4
      %v502 = vshrl.u32 %v289, 16
      %v504 = vrot.slane %v502, 7
      %v505 = vshll.u32 %v289, 16
      %v507 = vor.u32 %v504, %v505
      %v508 = vsel %vm424, %v500, %v507
      %v509 = vrot.slane %v504, 4
      %v511 = vshrl.u32 %v290, 16
      %v513 = vrot.slane %v511, 7
      %v514 = vshll.u32 %v290, 16
      %v516 = vor.u32 %v513, %v514
      %v517 = vrot.slane %v513, 4
      %v519 = vshrl.u32 %v291, 16
      %v521 = vrot.slane %v519, 7
      %v522 = vshll.u32 %v291, 16
      %v524 = vor.u32 %v521, %v522
      %v525 = vsel %vm424, %v517, %v524
      %v526 = vrot.slane %v521, 4
      %v528 = vshrl.u32 %v292, 16
      %v530 = vrot.slane %v528, 7
      %v531 = vshll.u32 %v292, 16
      %v533 = vor.u32 %v530, %v531
      %v534 = vrot.slane %v530, 4
      %v536 = vshrl.u32 %v293, 16
      %v538 = vrot.slane %v536, 7
      %v539 = vshll.u32 %v293, 16
      %v541 = vor.u32 %v538, %v539
      %v542 = vsel %vm424, %v534, %v541
      %v543 = vrot.slane %v538, 4
      %v545 = vshrl.u32 %v294, 16
      %v547 = vrot.slane %v545, 7
      %v548 = vshll.u32 %v294, 16
      %v550 = vor.u32 %v547, %v548
      %v551 = vrot.slane %v547, 4
      %v553 = vshrl.u32 %v295, 16
      %v555 = vrot.slane %v553, 7
      %v556 = vshll.u32 %v295, 16
      %v558 = vor.u32 %v555, %v556
      %v559 = vsel %vm424, %v551, %v558
      %v560 = vrot.slane %v555, 4
      %v562 = vshrl.u32 %v296, 16
      %v564 = vrot.slane %v562, 7
      %v565 = vshll.u32 %v296, 16
      %v567 = vor.u32 %v564, %v565
      %v568 = vrot.slane %v564, 4
      %v570 = vshrl.u32 %v297, 16
      %v572 = vrot.slane %v570, 7
      %v573 = vshll.u32 %v297, 16
      %v575 = vor.u32 %v572, %v573
      %v576 = vsel %vm424, %v568, %v575
      %v577 = vrot.slane %v572, 4
      %v579 = vshrl.u32 %v298, 16
      %v581 = vrot.slane %v579, 7
      %v582 = vshll.u32 %v298, 16
      %v584 = vor.u32 %v581, %v582
      %v585 = vrot.slane %v581, 4
      %v587 = vshrl.u32 %v299, 16
      %v589 = vrot.slane %v587, 7
      %v590 = vshll.u32 %v299, 16
      %v592 = vor.u32 %v589, %v590
      %v593 = vsel %vm424, %v585, %v592
      %v594 = vrot.slane %v589, 4
      %v596 = vshrl.u32 %v300, 16
      %v598 = vrot.slane %v596, 7
      %v599 = vshll.u32 %v300, 16
      %v601 = vor.u32 %v598, %v599
      %v602 = vrot.slane %v598, 4
      %v604 = vshrl.u32 %v301, 16
      %v606 = vrot.slane %v604, 7
      %v607 = vshll.u32 %v301, 16
      %v609 = vor.u32 %v606, %v607
      %v610 = vsel %vm424, %v602, %v609
      %v611 = vrot.slane %v606, 4
      %v613 = vshrl.u32 %v302, 16
      %v615 = vrot.slane %v613, 7
      %v616 = vshll.u32 %v302, 16
      %v618 = vor.u32 %v615, %v616
      %v619 = vrot.slane %v615, 4
      %v621 = vshrl.u32 %v303, 16
      %v623 = vrot.slane %v621, 7
      %v624 = vshll.u32 %v303, 16
      %v626 = vor.u32 %v623, %v624
      %v627 = vsel %vm424, %v619, %v626
      %v628 = vrot.slane %v623, 4
      %v630 = vshrl.u32 %v304, 16
      %v632 = vrot.slane %v630, 7
      %v633 = vshll.u32 %v304, 16
      %v635 = vor.u32 %v632, %v633
      %v636 = vrot.slane %v632, 4
      %v638 = vshrl.u32 %v305, 16
      %v640 = vrot.slane %v638, 7
      %v641 = vshll.u32 %v305, 16
      %v643 = vor.u32 %v640, %v641
      %v644 = vsel %vm424, %v636, %v643
      %v645 = vrot.slane %v640, 4
      %v647 = vshrl.u32 %v306, 16
      %v649 = vrot.slane %v647, 7
      %v650 = vshll.u32 %v306, 16
      %v652 = vor.u32 %v649, %v650
      %v653 = vrot.slane %v649, 4
      %v655 = vshrl.u32 %v307, 16
      %v657 = vrot.slane %v655, 7
      %v658 = vshll.u32 %v307, 16
      %v660 = vor.u32 %v657, %v658
      %v661 = vsel %vm424, %v653, %v660
      %v662 = vrot.slane %v657, 4
      %v664 = vshrl.u32 %v308, 16
      %v666 = vrot.slane %v664, 7
      %v667 = vshll.u32 %v308, 16
      %v669 = vor.u32 %v666, %v667
      %v670 = vrot.slane %v666, 4
      %v672 = vshrl.u32 %v309, 16
      %v674 = vrot.slane %v672, 7
      %v675 = vshll.u32 %v309, 16
      %v677 = vor.u32 %v674, %v675
      %v678 = vsel %vm424, %v670, %v677
      %v679 = vrot.slane %v674, 4
      %v681 = vshrl.u32 %v310, 16
      %v683 = vrot.slane %v681, 7
      %v684 = vshll.u32 %v310, 16
      %v686 = vor.u32 %v683, %v684
      %v687 = vrot.slane %v683, 4
      %v689 = vshrl.u32 %v311, 16
      %v691 = vrot.slane %v689, 7
      %v692 = vshll.u32 %v311, 16
      %v694 = vor.u32 %v691, %v692
      %v695 = vsel %vm424, %v687, %v694
      %v696 = vrot.slane %v691, 4
      %vm745 = vcmask 1043456
      %vm746 = vmand %vm745, %vm373
      %v747 = vld [vmem:[%s321] sm:$0xf]
      %v748 = vsel %vm746, %v431, %v747
      %749 = vst [vmem:[%s321] sm:$0xf] %v748
      %750 = vst [vmem:[%s321 + $0x4] sm:$0xf] %v440
      %v751 = vld [vmem:[%s321 + $0x8] sm:$0x1]
      %v752 = vsel %vm324, %v441, %v751
      %753 = vst [vmem:[%s321 + $0x8] sm:$0x1] %v752
      %v754 = vld [vmem:[%s321 + $0x10] sm:$0xf]
      %v755 = vsel %vm746, %v448, %v754
      %756 = vst [vmem:[%s321 + $0x10] sm:$0xf] %v755
      %757 = vst [vmem:[%s321 + $0x14] sm:$0xf] %v457
      %v758 = vld [vmem:[%s321 + $0x18] sm:$0x1]
      %v759 = vsel %vm324, %v458, %v758
      %760 = vst [vmem:[%s321 + $0x18] sm:$0x1] %v759
      %v761 = vld [vmem:[%s321 + $0x20] sm:$0xf]
      %v762 = vsel %vm746, %v465, %v761
      %763 = vst [vmem:[%s321 + $0x20] sm:$0xf] %v762
      %764 = vst [vmem:[%s321 + $0x24] sm:$0xf] %v474
      %v765 = vld [vmem:[%s321 + $0x28] sm:$0x1]
      %v766 = vsel %vm324, %v475, %v765
      %767 = vst [vmem:[%s321 + $0x28] sm:$0x1] %v766
      %v768 = vld [vmem:[%s321 + $0x30] sm:$0xf]
      %v769 = vsel %vm746, %v482, %v768
      %770 = vst [vmem:[%s321 + $0x30] sm:$0xf] %v769
      %771 = vst [vmem:[%s321 + $0x34] sm:$0xf] %v491
      %v772 = vld [vmem:[%s321 + $0x38] sm:$0x1]
      %v773 = vsel %vm324, %v492, %v772
      %774 = vst [vmem:[%s321 + $0x38] sm:$0x1] %v773
      %v775 = vld [vmem:[%s321 + $0x40] sm:$0xf]
      %v776 = vsel %vm746, %v499, %v775
      %777 = vst [vmem:[%s321 + $0x40] sm:$0xf] %v776
      %778 = vst [vmem:[%s321 + $0x44] sm:$0xf] %v508
      %v779 = vld [vmem:[%s321 + $0x48] sm:$0x1]
      %v780 = vsel %vm324, %v509, %v779
      %781 = vst [vmem:[%s321 + $0x48] sm:$0x1] %v780
      %v782 = vld [vmem:[%s321 + $0x50] sm:$0xf]
      %v783 = vsel %vm746, %v516, %v782
      %784 = vst [vmem:[%s321 + $0x50] sm:$0xf] %v783
      %785 = vst [vmem:[%s321 + $0x54] sm:$0xf] %v525
      %v786 = vld [vmem:[%s321 + $0x58] sm:$0x1]
      %v787 = vsel %vm324, %v526, %v786
      %788 = vst [vmem:[%s321 + $0x58] sm:$0x1] %v787
      %v789 = vld [vmem:[%s321 + $0x60] sm:$0xf]
      %v790 = vsel %vm746, %v533, %v789
      %791 = vst [vmem:[%s321 + $0x60] sm:$0xf] %v790
      %792 = vst [vmem:[%s321 + $0x64] sm:$0xf] %v542
      %v793 = vld [vmem:[%s321 + $0x68] sm:$0x1]
      %v794 = vsel %vm324, %v543, %v793
      %795 = vst [vmem:[%s321 + $0x68] sm:$0x1] %v794
      %v796 = vld [vmem:[%s321 + $0x70] sm:$0xf]
      %v797 = vsel %vm746, %v550, %v796
      %798 = vst [vmem:[%s321 + $0x70] sm:$0xf] %v797
      %799 = vst [vmem:[%s321 + $0x74] sm:$0xf] %v559
      %v800 = vld [vmem:[%s321 + $0x78] sm:$0x1]
      %v801 = vsel %vm324, %v560, %v800
      %802 = vst [vmem:[%s321 + $0x78] sm:$0x1] %v801
      %v803 = vld [vmem:[%s321 + $0x80] sm:$0xf]
      %v804 = vsel %vm746, %v567, %v803
      %805 = vst [vmem:[%s321 + $0x80] sm:$0xf] %v804
      %806 = vst [vmem:[%s321 + $0x84] sm:$0xf] %v576
      %v807 = vld [vmem:[%s321 + $0x88] sm:$0x1]
      %v808 = vsel %vm324, %v577, %v807
      %809 = vst [vmem:[%s321 + $0x88] sm:$0x1] %v808
      %v810 = vld [vmem:[%s321 + $0x90] sm:$0xf]
      %v811 = vsel %vm746, %v584, %v810
      %812 = vst [vmem:[%s321 + $0x90] sm:$0xf] %v811
      %813 = vst [vmem:[%s321 + $0x94] sm:$0xf] %v593
      %v814 = vld [vmem:[%s321 + $0x98] sm:$0x1]
      %v815 = vsel %vm324, %v594, %v814
      %816 = vst [vmem:[%s321 + $0x98] sm:$0x1] %v815
      %v817 = vld [vmem:[%s321 + $0xa0] sm:$0xf]
      %v818 = vsel %vm746, %v601, %v817
      %819 = vst [vmem:[%s321 + $0xa0] sm:$0xf] %v818
      %820 = vst [vmem:[%s321 + $0xa4] sm:$0xf] %v610
      %v821 = vld [vmem:[%s321 + $0xa8] sm:$0x1]
      %v822 = vsel %vm324, %v611, %v821
      %823 = vst [vmem:[%s321 + $0xa8] sm:$0x1] %v822
      %v824 = vld [vmem:[%s321 + $0xb0] sm:$0xf]
      %v825 = vsel %vm746, %v618, %v824
      %826 = vst [vmem:[%s321 + $0xb0] sm:$0xf] %v825
      %827 = vst [vmem:[%s321 + $0xb4] sm:$0xf] %v627
      %v828 = vld [vmem:[%s321 + $0xb8] sm:$0x1]
      %v829 = vsel %vm324, %v628, %v828
      %830 = vst [vmem:[%s321 + $0xb8] sm:$0x1] %v829
      %v831 = vld [vmem:[%s321 + $0xc0] sm:$0xf]
      %v832 = vsel %vm746, %v635, %v831
      %833 = vst [vmem:[%s321 + $0xc0] sm:$0xf] %v832
      %834 = vst [vmem:[%s321 + $0xc4] sm:$0xf] %v644
      %v835 = vld [vmem:[%s321 + $0xc8] sm:$0x1]
      %v836 = vsel %vm324, %v645, %v835
      %837 = vst [vmem:[%s321 + $0xc8] sm:$0x1] %v836
      %v838 = vld [vmem:[%s321 + $0xd0] sm:$0xf]
      %v839 = vsel %vm746, %v652, %v838
      %840 = vst [vmem:[%s321 + $0xd0] sm:$0xf] %v839
      %841 = vst [vmem:[%s321 + $0xd4] sm:$0xf] %v661
      %v842 = vld [vmem:[%s321 + $0xd8] sm:$0x1]
      %v843 = vsel %vm324, %v662, %v842
      %844 = vst [vmem:[%s321 + $0xd8] sm:$0x1] %v843
      %v845 = vld [vmem:[%s321 + $0xe0] sm:$0xf]
      %v846 = vsel %vm746, %v669, %v845
      %847 = vst [vmem:[%s321 + $0xe0] sm:$0xf] %v846
      %848 = vst [vmem:[%s321 + $0xe4] sm:$0xf] %v678
      %v849 = vld [vmem:[%s321 + $0xe8] sm:$0x1]
      %v850 = vsel %vm324, %v679, %v849
      %851 = vst [vmem:[%s321 + $0xe8] sm:$0x1] %v850
      %v852 = vld [vmem:[%s321 + $0xf0] sm:$0xf]
      %v853 = vsel %vm746, %v686, %v852
      %854 = vst [vmem:[%s321 + $0xf0] sm:$0xf] %v853
      %855 = vst [vmem:[%s321 + $0xf4] sm:$0xf] %v695
      %v856 = vld [vmem:[%s321 + $0xf8] sm:$0x1]
      %v857 = vsel %vm324, %v696, %v856
      %858 = vst [vmem:[%s321 + $0xf8] sm:$0x1] %v857
      %859 = vst [vmem:[#allocation4] sm:$0xff] 0.0
      %860 = vst [vmem:[#allocation4 + $0x8] sm:$0xff] 0.0
      %861 = vst [vmem:[#allocation4 + $0x10] sm:$0xff] 0.0
      %862 = vst [vmem:[#allocation4 + $0x18] sm:$0xff] 0.0
      %863 = vst [vmem:[#allocation4 + $0x20] sm:$0xff] 0.0
      %864 = vst [vmem:[#allocation4 + $0x28] sm:$0xff] 0.0
      %865 = vst [vmem:[#allocation4 + $0x30] sm:$0xff] 0.0
      %866 = vst [vmem:[#allocation4 + $0x38] sm:$0xff] 0.0
      %867 = vst [vmem:[#allocation4 + $0x40] sm:$0xff] 0.0
      %868 = vst [vmem:[#allocation4 + $0x48] sm:$0xff] 0.0
      %869 = vst [vmem:[#allocation4 + $0x50] sm:$0xff] 0.0
      %870 = vst [vmem:[#allocation4 + $0x58] sm:$0xff] 0.0
      %871 = vst [vmem:[#allocation4 + $0x60] sm:$0xff] 0.0
      %872 = vst [vmem:[#allocation4 + $0x68] sm:$0xff] 0.0
      %873 = vst [vmem:[#allocation4 + $0x70] sm:$0xff] 0.0
      %874 = vst [vmem:[#allocation4 + $0x78] sm:$0xff] 0.0
      %875 = vst [vmem:[#allocation4 + $0x80] sm:$0xff] 0.0
      %876 = vst [vmem:[#allocation4 + $0x88] sm:$0xff] 0.0
      %877 = vst [vmem:[#allocation4 + $0x90] sm:$0xff] 0.0
      %878 = vst [vmem:[#allocation4 + $0x98] sm:$0xff] 0.0
      %879 = vst [vmem:[#allocation4 + $0xa0] sm:$0xff] 0.0
      %880 = vst [vmem:[#allocation4 + $0xa8] sm:$0xff] 0.0
      %881 = vst [vmem:[#allocation4 + $0xb0] sm:$0xff] 0.0
      %882 = vst [vmem:[#allocation4 + $0xb8] sm:$0xff] 0.0
      %883 = vst [vmem:[#allocation4 + $0xc0] sm:$0xff] 0.0
      %884 = vst [vmem:[#allocation4 + $0xc8] sm:$0xff] 0.0
      %885 = vst [vmem:[#allocation4 + $0xd0] sm:$0xff] 0.0
      %886 = vst [vmem:[#allocation4 + $0xd8] sm:$0xff] 0.0
      %887 = vst [vmem:[#allocation4 + $0xe0] sm:$0xff] 0.0
      %888 = vst [vmem:[#allocation4 + $0xe8] sm:$0xff] 0.0
      %889 = vst [vmem:[#allocation4 + $0xf0] sm:$0xff] 0.0
      %890 = vst [vmem:[#allocation4 + $0xf8] sm:$0xff] 0.0
      %v891 = vld [vmem:[#allocation2] sm:$0xf]
      %v892 = vld [vmem:[#allocation2 + $0x4] sm:$0xf]
      %v893 = vld [vmem:[#allocation2 + $0x8] sm:$0xf]
      %v894 = vld [vmem:[#allocation2 + $0xc] sm:$0xf]
      %v895 = vld [vmem:[#allocation2 + $0x10] sm:$0xf]
      %v896 = vld [vmem:[#allocation2 + $0x14] sm:$0xf]
      %v897 = vld [vmem:[#allocation2 + $0x18] sm:$0xf]
      %v898 = vld [vmem:[#allocation2 + $0x1c] sm:$0xf]
      %v899 = vld [vmem:[#allocation2 + $0x20] sm:$0xf]
      %v900 = vld [vmem:[#allocation2 + $0x24] sm:$0xf]
      %v901 = vld [vmem:[#allocation2 + $0x28] sm:$0xf]
      %v902 = vld [vmem:[#allocation2 + $0x2c] sm:$0xf]
      %v903 = vld [vmem:[#allocation2 + $0x30] sm:$0xf]
      %v904 = vld [vmem:[#allocation2 + $0x34] sm:$0xf]
      %v905 = vld [vmem:[#allocation2 + $0x38] sm:$0xf]
      %v906 = vld [vmem:[#allocation2 + $0x3c] sm:$0xf]
      %v907 = vld [vmem:[#allocation2 + $0x40] sm:$0xf]
      %v908 = vld [vmem:[#allocation2 + $0x44] sm:$0xf]
      %v909 = vld [vmem:[#allocation2 + $0x48] sm:$0xf]
      %v910 = vld [vmem:[#allocation2 + $0x4c] sm:$0xf]
      %v911 = vld [vmem:[#allocation2 + $0x50] sm:$0xf]
      %v912 = vld [vmem:[#allocation2 + $0x54] sm:$0xf]
      %v913 = vld [vmem:[#allocation2 + $0x58] sm:$0xf]
      %v914 = vld [vmem:[#allocation2 + $0x5c] sm:$0xf]
      %v915 = vld [vmem:[#allocation2 + $0x60] sm:$0xf]
      %v916 = vld [vmem:[#allocation2 + $0x64] sm:$0xf]
      %v917 = vld [vmem:[#allocation2 + $0x68] sm:$0xf]
      %v918 = vld [vmem:[#allocation2 + $0x6c] sm:$0xf]
      %v919 = vld [vmem:[#allocation2 + $0x70] sm:$0xf]
      %v920 = vld [vmem:[#allocation2 + $0x74] sm:$0xf]
      %v921 = vld [vmem:[#allocation2 + $0x78] sm:$0xf]
      %v922 = vld [vmem:[#allocation2 + $0x7c] sm:$0xf]
      %v923 = vld [vmem:[#allocation2 + $0x80] sm:$0xf]
      %v924 = vld [vmem:[#allocation2 + $0x84] sm:$0xf]
      %v925 = vld [vmem:[#allocation2 + $0x88] sm:$0xf]
      %v926 = vld [vmem:[#allocation2 + $0x8c] sm:$0xf]
      %v927 = vld [vmem:[#allocation2 + $0x90] sm:$0xf]
      %v928 = vld [vmem:[#allocation2 + $0x94] sm:$0xf]
      %v929 = vld [vmem:[#allocation2 + $0x98] sm:$0xf]
      %v930 = vld [vmem:[#allocation2 + $0x9c] sm:$0xf]
      %v931 = vld [vmem:[#allocation2 + $0xa0] sm:$0xf]
      %v932 = vld [vmem:[#allocation2 + $0xa4] sm:$0xf]
      %v933 = vld [vmem:[#allocation2 + $0xa8] sm:$0xf]
      %v934 = vld [vmem:[#allocation2 + $0xac] sm:$0xf]
      %v935 = vld [vmem:[#allocation2 + $0xb0] sm:$0xf]
      %v936 = vld [vmem:[#allocation2 + $0xb4] sm:$0xf]
      %v937 = vld [vmem:[#allocation2 + $0xb8] sm:$0xf]
      %v938 = vld [vmem:[#allocation2 + $0xbc] sm:$0xf]
      %v939 = vld [vmem:[#allocation2 + $0xc0] sm:$0xf]
      %v940 = vld [vmem:[#allocation2 + $0xc4] sm:$0xf]
      %v941 = vld [vmem:[#allocation2 + $0xc8] sm:$0xf]
      %v942 = vld [vmem:[#allocation2 + $0xcc] sm:$0xf]
      %v943 = vld [vmem:[#allocation2 + $0xd0] sm:$0xf]
      %v944 = vld [vmem:[#allocation2 + $0xd4] sm:$0xf]
      %v945 = vld [vmem:[#allocation2 + $0xd8] sm:$0xf]
      %v946 = vld [vmem:[#allocation2 + $0xdc] sm:$0xf]
      %v947 = vld [vmem:[#allocation2 + $0xe0] sm:$0xf]
      %v948 = vld [vmem:[#allocation2 + $0xe4] sm:$0xf]
      %v949 = vld [vmem:[#allocation2 + $0xe8] sm:$0xf]
      %v950 = vld [vmem:[#allocation2 + $0xec] sm:$0xf]
      %v951 = vld [vmem:[#allocation2 + $0xf0] sm:$0xf]
      %v952 = vld [vmem:[#allocation2 + $0xf4] sm:$0xf]
      %v953 = vld [vmem:[#allocation2 + $0xf8] sm:$0xf]
      %v954 = vld [vmem:[#allocation2 + $0xfc] sm:$0xf]
      %v955 = vld [vmem:[%s1] sm:$0xff]
      %v956 = vld [vmem:[%s1 + $0x8] sm:$0xf]
      %v957 = vld [vmem:[%s1 + $0xc] sm:$0xff]
      %v958 = vld [vmem:[%s1 + $0x14] sm:$0xf]
      %v959 = vld [vmem:[%s1 + $0x18] sm:$0xff]
      %v960 = vld [vmem:[%s1 + $0x20] sm:$0xf]
      %v961 = vld [vmem:[%s1 + $0x24] sm:$0xff]
      %v962 = vld [vmem:[%s1 + $0x2c] sm:$0xf]
      %v963 = vld [vmem:[%s1 + $0x30] sm:$0xff]
      %v964 = vld [vmem:[%s1 + $0x38] sm:$0xf]
      %v965 = vld [vmem:[%s1 + $0x3c] sm:$0xff]
      %v966 = vld [vmem:[%s1 + $0x44] sm:$0xf]
      %v967 = vld [vmem:[%s1 + $0x48] sm:$0xff]
      %v968 = vld [vmem:[%s1 + $0x50] sm:$0xf]
      %v969 = vld [vmem:[%s1 + $0x54] sm:$0xff]
      %v970 = vld [vmem:[%s1 + $0x5c] sm:$0xf]
      %v971 = vld [vmem:[%s1 + $0x60] sm:$0xff]
      %v972 = vld [vmem:[%s1 + $0x68] sm:$0xf]
      %v973 = vld [vmem:[%s1 + $0x6c] sm:$0xff]
      %v974 = vld [vmem:[%s1 + $0x74] sm:$0xf]
      %v975 = vld [vmem:[%s1 + $0x78] sm:$0xff]
      %v976 = vld [vmem:[%s1 + $0x80] sm:$0xf]
      %v977 = vld [vmem:[%s1 + $0x84] sm:$0xff]
      %v978 = vld [vmem:[%s1 + $0x8c] sm:$0xf]
      %v979 = vld [vmem:[%s1 + $0x90] sm:$0xff]
      %v980 = vld [vmem:[%s1 + $0x98] sm:$0xf]
      %v981 = vld [vmem:[%s1 + $0x9c] sm:$0xff]
      %v982 = vld [vmem:[%s1 + $0xa4] sm:$0xf]
      %v983 = vld [vmem:[%s1 + $0xa8] sm:$0xff]
      %v984 = vld [vmem:[%s1 + $0xb0] sm:$0xf]
      %v985 = vld [vmem:[%s1 + $0xb4] sm:$0xff]
      %v986 = vld [vmem:[%s1 + $0xbc] sm:$0xf]
      %v1051 = vunpack.c.l.b16 %v891
      %v1052 = vunpack.c.l.b16 %v892
      %v1053 = vunpack.c.l.b16 %v893
      %v1054 = vunpack.c.l.b16 %v894
      %v1055 = vunpack.c.l.b16 %v895
      %v1056 = vunpack.c.l.b16 %v896
      %v1057 = vunpack.c.l.b16 %v897
      %v1058 = vunpack.c.l.b16 %v898
      %v1059 = vunpack.c.l.b16 %v899
      %v1060 = vunpack.c.l.b16 %v900
      %v1061 = vunpack.c.l.b16 %v901
      %v1062 = vunpack.c.l.b16 %v902
      %v1063 = vunpack.c.l.b16 %v903
      %v1064 = vunpack.c.l.b16 %v904
      %v1065 = vunpack.c.l.b16 %v905
      %v1066 = vunpack.c.l.b16 %v906
      %v1067 = vunpack.c.l.b16 %v907
      %v1068 = vunpack.c.l.b16 %v908
      %v1069 = vunpack.c.l.b16 %v909
      %v1070 = vunpack.c.l.b16 %v910
      %v1071 = vunpack.c.l.b16 %v911
      %v1072 = vunpack.c.l.b16 %v912
      %v1073 = vunpack.c.l.b16 %v913
      %v1074 = vunpack.c.l.b16 %v914
      %v1075 = vunpack.c.l.b16 %v915
      %v1076 = vunpack.c.l.b16 %v916
      %v1077 = vunpack.c.l.b16 %v917
      %v1078 = vunpack.c.l.b16 %v918
      %v1079 = vunpack.c.l.b16 %v919
      %v1080 = vunpack.c.l.b16 %v920
      %v1081 = vunpack.c.l.b16 %v921
      %v1082 = vunpack.c.l.b16 %v922
      %v1083 = vunpack.c.l.b16 %v923
      %v1084 = vunpack.c.l.b16 %v924
      %v1085 = vunpack.c.l.b16 %v925
      %v1086 = vunpack.c.l.b16 %v926
      %v1087 = vunpack.c.l.b16 %v927
      %v1088 = vunpack.c.l.b16 %v928
      %v1089 = vunpack.c.l.b16 %v929
      %v1090 = vunpack.c.l.b16 %v930
      %v1091 = vunpack.c.l.b16 %v931
      %v1092 = vunpack.c.l.b16 %v932
      %v1093 = vunpack.c.l.b16 %v933
      %v1094 = vunpack.c.l.b16 %v934
      %v1095 = vunpack.c.l.b16 %v935
      %v1096 = vunpack.c.l.b16 %v936
      %v1097 = vunpack.c.l.b16 %v937
      %v1098 = vunpack.c.l.b16 %v938
      %v1099 = vunpack.c.l.b16 %v939
      %v1100 = vunpack.c.l.b16 %v940
      %v1101 = vunpack.c.l.b16 %v941
      %v1102 = vunpack.c.l.b16 %v942
      %v1103 = vunpack.c.l.b16 %v943
      %v1104 = vunpack.c.l.b16 %v944
      %v1105 = vunpack.c.l.b16 %v945
      %v1106 = vunpack.c.l.b16 %v946
      %v1107 = vunpack.c.l.b16 %v947
      %v1108 = vunpack.c.l.b16 %v948
      %v1109 = vunpack.c.l.b16 %v949
      %v1110 = vunpack.c.l.b16 %v950
      %v1111 = vunpack.c.l.b16 %v951
      %v1112 = vunpack.c.l.b16 %v952
      %v1113 = vunpack.c.l.b16 %v953
      %v1114 = vunpack.c.l.b16 %v954
      %v1115 = vpack.c.b16 %v1052, %v1051
      %v1116 = vpack.c.b16 %v1054, %v1053
      %v1117 = vpack.c.b16 %v1056, %v1055
      %v1118 = vpack.c.b16 %v1058, %v1057
      %v1119 = vpack.c.b16 %v1060, %v1059
      %v1120 = vpack.c.b16 %v1062, %v1061
      %v1121 = vpack.c.b16 %v1064, %v1063
      %v1122 = vpack.c.b16 %v1066, %v1065
      %v1123 = vpack.c.b16 %v1068, %v1067
      %v1124 = vpack.c.b16 %v1070, %v1069
      %v1125 = vpack.c.b16 %v1072, %v1071
      %v1126 = vpack.c.b16 %v1074, %v1073
      %v1127 = vpack.c.b16 %v1076, %v1075
      %v1128 = vpack.c.b16 %v1078, %v1077
      %v1129 = vpack.c.b16 %v1080, %v1079
      %v1130 = vpack.c.b16 %v1082, %v1081
      %v1131 = vpack.c.b16 %v1084, %v1083
      %v1132 = vpack.c.b16 %v1086, %v1085
      %v1133 = vpack.c.b16 %v1088, %v1087
      %v1134 = vpack.c.b16 %v1090, %v1089
      %v1135 = vpack.c.b16 %v1092, %v1091
      %v1136 = vpack.c.b16 %v1094, %v1093
      %v1137 = vpack.c.b16 %v1096, %v1095
      %v1138 = vpack.c.b16 %v1098, %v1097
      %v1139 = vpack.c.b16 %v1100, %v1099
      %v1140 = vpack.c.b16 %v1102, %v1101
      %v1141 = vpack.c.b16 %v1104, %v1103
      %v1142 = vpack.c.b16 %v1106, %v1105
      %v1143 = vpack.c.b16 %v1108, %v1107
      %v1144 = vpack.c.b16 %v1110, %v1109
      %v1145 = vpack.c.b16 %v1112, %v1111
      %v1146 = vpack.c.b16 %v1114, %v1113
      %v1211 = vunpack.c.l.b16 %v955
      %v1212 = vunpack.c.h.b16 %v955
      %v1213 = vunpack.c.l.b16 %v956
      %v1214 = vunpack.c.l.b16 %v957
      %v1215 = vunpack.c.h.b16 %v957
      %v1216 = vunpack.c.l.b16 %v958
      %v1217 = vunpack.c.l.b16 %v959
      %v1218 = vunpack.c.h.b16 %v959
      %v1219 = vunpack.c.l.b16 %v960
      %v1220 = vunpack.c.l.b16 %v961
      %v1221 = vunpack.c.h.b16 %v961
      %v1222 = vunpack.c.l.b16 %v962
      %v1223 = vunpack.c.l.b16 %v963
      %v1224 = vunpack.c.h.b16 %v963
      %v1225 = vunpack.c.l.b16 %v964
      %v1226 = vunpack.c.l.b16 %v965
      %v1227 = vunpack.c.h.b16 %v965
      %v1228 = vunpack.c.l.b16 %v966
      %v1229 = vunpack.c.l.b16 %v967
      %v1230 = vunpack.c.h.b16 %v967
      %v1231 = vunpack.c.l.b16 %v968
      %v1232 = vunpack.c.l.b16 %v969
      %v1233 = vunpack.c.h.b16 %v969
      %v1234 = vunpack.c.l.b16 %v970
      %v1235 = vunpack.c.l.b16 %v971
      %v1236 = vunpack.c.h.b16 %v971
      %v1237 = vunpack.c.l.b16 %v972
      %v1238 = vunpack.c.l.b16 %v973
      %v1239 = vunpack.c.h.b16 %v973
      %v1240 = vunpack.c.l.b16 %v974
      %v1241 = vunpack.c.l.b16 %v975
      %v1242 = vunpack.c.h.b16 %v975
      %v1243 = vunpack.c.l.b16 %v976
      %v1244 = vunpack.c.l.b16 %v977
      %v1245 = vunpack.c.h.b16 %v977
      %v1246 = vunpack.c.l.b16 %v978
      %v1247 = vunpack.c.l.b16 %v979
      %v1248 = vunpack.c.h.b16 %v979
      %v1249 = vunpack.c.l.b16 %v980
      %v1250 = vunpack.c.l.b16 %v981
      %v1251 = vunpack.c.h.b16 %v981
      %v1252 = vunpack.c.l.b16 %v982
      %v1253 = vunpack.c.l.b16 %v983
      %v1254 = vunpack.c.h.b16 %v983
      %v1255 = vunpack.c.l.b16 %v984
      %v1256 = vunpack.c.l.b16 %v985
      %v1257 = vunpack.c.h.b16 %v985
      %v1258 = vunpack.c.l.b16 %v986
      %v1259 = vpack.c.b16 %v1214, %v1211
      %v1260 = vpack.c.b16 %v1215, %v1212
      %v1261 = vpack.c.b16 %v1216, %v1213
      %v1262 = vpack.c.b16 %v1220, %v1217
      %v1263 = vpack.c.b16 %v1221, %v1218
      %v1264 = vpack.c.b16 %v1222, %v1219
      %v1265 = vpack.c.b16 %v1226, %v1223
      %v1266 = vpack.c.b16 %v1227, %v1224
      %v1267 = vpack.c.b16 %v1228, %v1225
      %v1268 = vpack.c.b16 %v1232, %v1229
      %v1269 = vpack.c.b16 %v1233, %v1230
      %v1270 = vpack.c.b16 %v1234, %v1231
      %v1271 = vpack.c.b16 %v1238, %v1235
      %v1272 = vpack.c.b16 %v1239, %v1236
      %v1273 = vpack.c.b16 %v1240, %v1237
      %v1274 = vpack.c.b16 %v1244, %v1241
      %v1275 = vpack.c.b16 %v1245, %v1242
      %v1276 = vpack.c.b16 %v1246, %v1243
      %v1277 = vpack.c.b16 %v1250, %v1247
      %v1278 = vpack.c.b16 %v1251, %v1248
      %v1279 = vpack.c.b16 %v1252, %v1249
      %v1280 = vpack.c.b16 %v1256, %v1253
      %v1281 = vpack.c.b16 %v1257, %v1254
      %v1282 = vpack.c.b16 %v1258, %v1255
      %1307 = vmatpush.bf16.msra.mxu0 %v1280
      %1308 = vmatpush.bf16.msra.mxu0 %v1277
      %1309 = vmatpush.bf16.msra.mxu0 %v1274
      %1310 = vmatpush.bf16.msra.mxu0 %v1271
      %1311 = vmatpush.bf16.msra.mxu0 %v1268
      %1312 = vmatpush.bf16.msra.mxu0 %v1265
      %1313 = vmatpush.bf16.msra.mxu0 %v1262
      %1314 = vmatpush.bf16.msra.mxu0 %v1259
      %1315 = vmatmul.bf16.gmra.mxu0 %v1115
      %v1316 = vpop.f32.mrf.mxu0
      %v1317 = vadd.f32 0.0, %v1316
      %v1318 = vpop.f32.mrf.mxu0
      %v1319 = vadd.f32 0.0, %v1318
      %1320 = vmatmul.bf16.gmra.mxu0 %v1116
      %v1321 = vpop.f32.mrf.mxu0
      %v1322 = vpop.f32.mrf.mxu0
      %1323 = vmatmul.bf16.gmra.mxu0 %v1117
      %v1324 = vpop.f32.mrf.mxu0
      %v1325 = vadd.f32 0.0, %v1324
      %v1326 = vpop.f32.mrf.mxu0
      %v1327 = vadd.f32 0.0, %v1326
      %1328 = vmatmul.bf16.gmra.mxu0 %v1118
      %v1329 = vpop.f32.mrf.mxu0
      %v1330 = vpop.f32.mrf.mxu0
      %1331 = vmatmul.bf16.gmra.mxu0 %v1119
      %v1332 = vpop.f32.mrf.mxu0
      %v1333 = vadd.f32 0.0, %v1332
      %v1334 = vpop.f32.mrf.mxu0
      %v1335 = vadd.f32 0.0, %v1334
      %1336 = vmatmul.bf16.gmra.mxu0 %v1120
      %v1337 = vpop.f32.mrf.mxu0
      %v1338 = vpop.f32.mrf.mxu0
      %1339 = vmatmul.bf16.gmra.mxu0 %v1121
      %v1340 = vpop.f32.mrf.mxu0
      %v1341 = vadd.f32 0.0, %v1340
      %v1342 = vpop.f32.mrf.mxu0
      %v1343 = vadd.f32 0.0, %v1342
      %1344 = vmatmul.bf16.gmra.mxu0 %v1122
      %v1345 = vpop.f32.mrf.mxu0
      %v1346 = vpop.f32.mrf.mxu0
      %1347 = vmatmul.bf16.gmra.mxu0 %v1123
      %v1348 = vpop.f32.mrf.mxu0
      %v1349 = vadd.f32 0.0, %v1348
      %v1350 = vpop.f32.mrf.mxu0
      %v1351 = vadd.f32 0.0, %v1350
      %1352 = vmatmul.bf16.gmra.mxu0 %v1124
      %v1353 = vpop.f32.mrf.mxu0
      %v1354 = vpop.f32.mrf.mxu0
      %1355 = vmatmul.bf16.gmra.mxu0 %v1125
      %v1356 = vpop.f32.mrf.mxu0
      %v1357 = vadd.f32 0.0, %v1356
      %v1358 = vpop.f32.mrf.mxu0
      %v1359 = vadd.f32 0.0, %v1358
      %1360 = vmatmul.bf16.gmra.mxu0 %v1126
      %v1361 = vpop.f32.mrf.mxu0
      %v1362 = vpop.f32.mrf.mxu0
      %1363 = vmatmul.bf16.gmra.mxu0 %v1127
      %v1364 = vpop.f32.mrf.mxu0
      %v1365 = vadd.f32 0.0, %v1364
      %v1366 = vpop.f32.mrf.mxu0
      %v1367 = vadd.f32 0.0, %v1366
      %1368 = vmatmul.bf16.gmra.mxu0 %v1128
      %v1369 = vpop.f32.mrf.mxu0
      %v1370 = vpop.f32.mrf.mxu0
      %1371 = vmatmul.bf16.gmra.mxu0 %v1129
      %v1372 = vpop.f32.mrf.mxu0
      %v1373 = vadd.f32 0.0, %v1372
      %v1374 = vpop.f32.mrf.mxu0
      %v1375 = vadd.f32 0.0, %v1374
      %1376 = vmatmul.bf16.gmra.mxu0 %v1130
      %v1377 = vpop.f32.mrf.mxu0
      %v1378 = vpop.f32.mrf.mxu0
      %1379 = vmatmul.bf16.gmra.mxu0 %v1131
      %v1380 = vpop.f32.mrf.mxu0
      %v1381 = vadd.f32 0.0, %v1380
      %v1382 = vpop.f32.mrf.mxu0
      %v1383 = vadd.f32 0.0, %v1382
      %1384 = vmatmul.bf16.gmra.mxu0 %v1132
      %v1385 = vpop.f32.mrf.mxu0
      %v1386 = vpop.f32.mrf.mxu0
      %1387 = vmatmul.bf16.gmra.mxu0 %v1133
      %v1388 = vpop.f32.mrf.mxu0
      %v1389 = vadd.f32 0.0, %v1388
      %v1390 = vpop.f32.mrf.mxu0
      %v1391 = vadd.f32 0.0, %v1390
      %1392 = vmatmul.bf16.gmra.mxu0 %v1134
      %v1393 = vpop.f32.mrf.mxu0
      %v1394 = vpop.f32.mrf.mxu0
      %1395 = vmatmul.bf16.gmra.mxu0 %v1135
      %v1396 = vpop.f32.mrf.mxu0
      %v1397 = vadd.f32 0.0, %v1396
      %v1398 = vpop.f32.mrf.mxu0
      %v1399 = vadd.f32 0.0, %v1398
      %1400 = vmatmul.bf16.gmra.mxu0 %v1136
      %v1401 = vpop.f32.mrf.mxu0
      %v1402 = vpop.f32.mrf.mxu0
      %1403 = vmatmul.bf16.gmra.mxu0 %v1137
      %v1404 = vpop.f32.mrf.mxu0
      %v1405 = vadd.f32 0.0, %v1404
      %v1406 = vpop.f32.mrf.mxu0
      %v1407 = vadd.f32 0.0, %v1406
      %1408 = vmatmul.bf16.gmra.mxu0 %v1138
      %v1409 = vpop.f32.mrf.mxu0
      %v1410 = vpop.f32.mrf.mxu0
      %1411 = vmatmul.bf16.gmra.mxu0 %v1139
      %v1412 = vpop.f32.mrf.mxu0
      %v1413 = vadd.f32 0.0, %v1412
      %v1414 = vpop.f32.mrf.mxu0
      %v1415 = vadd.f32 0.0, %v1414
      %1416 = vmatmul.bf16.gmra.mxu0 %v1140
      %v1417 = vpop.f32.mrf.mxu0
      %v1418 = vpop.f32.mrf.mxu0
      %1419 = vmatmul.bf16.gmra.mxu0 %v1141
      %v1420 = vpop.f32.mrf.mxu0
      %v1421 = vadd.f32 0.0, %v1420
      %v1422 = vpop.f32.mrf.mxu0
      %v1423 = vadd.f32 0.0, %v1422
      %1424 = vmatmul.bf16.gmra.mxu0 %v1142
      %v1425 = vpop.f32.mrf.mxu0
      %v1426 = vpop.f32.mrf.mxu0
      %1427 = vmatmul.bf16.gmra.mxu0 %v1143
      %v1428 = vpop.f32.mrf.mxu0
      %v1429 = vadd.f32 0.0, %v1428
      %v1430 = vpop.f32.mrf.mxu0
      %v1431 = vadd.f32 0.0, %v1430
      %1432 = vmatmul.bf16.gmra.mxu0 %v1144
      %v1433 = vpop.f32.mrf.mxu0
      %v1434 = vpop.f32.mrf.mxu0
      %1435 = vmatmul.bf16.gmra.mxu0 %v1145
      %v1436 = vpop.f32.mrf.mxu0
      %v1437 = vadd.f32 0.0, %v1436
      %v1438 = vpop.f32.mrf.mxu0
      %v1439 = vadd.f32 0.0, %v1438
      %1440 = vmatmul.bf16.gmra.mxu0 %v1146
      %v1441 = vpop.f32.mrf.mxu0
      %v1442 = vpop.f32.mrf.mxu0
      %1443 = vdwg.mxu0
      %1444 = vmatpush.bf16.msra.mxu0 %v1281
      %1445 = vmatpush.bf16.msra.mxu0 %v1278
      %1446 = vmatpush.bf16.msra.mxu0 %v1275
      %1447 = vmatpush.bf16.msra.mxu0 %v1272
      %1448 = vmatpush.bf16.msra.mxu0 %v1269
      %1449 = vmatpush.bf16.msra.mxu0 %v1266
      %1450 = vmatpush.bf16.msra.mxu0 %v1263
      %1451 = vmatpush.bf16.msra.mxu0 %v1260
      %1452 = vmatmul.bf16.gmra.mxu0 %v1115
      %v1453 = vpop.f32.mrf.mxu0
      %v1454 = vadd.f32 0.0, %v1453
      %v1455 = vpop.f32.mrf.mxu0
      %v1456 = vadd.f32 0.0, %v1455
      %1457 = vmatmul.bf16.gmra.mxu0 %v1116
      %v1458 = vpop.f32.mrf.mxu0
      %v1459 = vadd.f32 0.0, %v1458
      %v1460 = vpop.f32.mrf.mxu0
      %1461 = vmatmul.bf16.gmra.mxu0 %v1117
      %v1462 = vpop.f32.mrf.mxu0
      %v1463 = vadd.f32 0.0, %v1462
      %v1464 = vpop.f32.mrf.mxu0
      %v1465 = vadd.f32 0.0, %v1464
      %1466 = vmatmul.bf16.gmra.mxu0 %v1118
      %v1467 = vpop.f32.mrf.mxu0
      %v1468 = vadd.f32 0.0, %v1467
      %v1469 = vpop.f32.mrf.mxu0
      %1470 = vmatmul.bf16.gmra.mxu0 %v1119
      %v1471 = vpop.f32.mrf.mxu0
      %v1472 = vadd.f32 0.0, %v1471
      %v1473 = vpop.f32.mrf.mxu0
      %v1474 = vadd.f32 0.0, %v1473
      %1475 = vmatmul.bf16.gmra.mxu0 %v1120
      %v1476 = vpop.f32.mrf.mxu0
      %v1477 = vadd.f32 0.0, %v1476
      %v1478 = vpop.f32.mrf.mxu0
      %1479 = vmatmul.bf16.gmra.mxu0 %v1121
      %v1480 = vpop.f32.mrf.mxu0
      %v1481 = vadd.f32 0.0, %v1480
      %v1482 = vpop.f32.mrf.mxu0
      %v1483 = vadd.f32 0.0, %v1482
      %1484 = vmatmul.bf16.gmra.mxu0 %v1122
      %v1485 = vpop.f32.mrf.mxu0
      %v1486 = vadd.f32 0.0, %v1485
      %v1487 = vpop.f32.mrf.mxu0
      %1488 = vmatmul.bf16.gmra.mxu0 %v1123
      %v1489 = vpop.f32.mrf.mxu0
      %v1490 = vadd.f32 0.0, %v1489
      %v1491 = vpop.f32.mrf.mxu0
      %v1492 = vadd.f32 0.0, %v1491
      %1493 = vmatmul.bf16.gmra.mxu0 %v1124
      %v1494 = vpop.f32.mrf.mxu0
      %v1495 = vadd.f32 0.0, %v1494
      %v1496 = vpop.f32.mrf.mxu0
      %1497 = vmatmul.bf16.gmra.mxu0 %v1125
      %v1498 = vpop.f32.mrf.mxu0
      %v1499 = vadd.f32 0.0, %v1498
      %v1500 = vpop.f32.mrf.mxu0
      %v1501 = vadd.f32 0.0, %v1500
      %1502 = vmatmul.bf16.gmra.mxu0 %v1126
      %v1503 = vpop.f32.mrf.mxu0
      %v1504 = vadd.f32 0.0, %v1503
      %v1505 = vpop.f32.mrf.mxu0
      %1506 = vmatmul.bf16.gmra.mxu0 %v1127
      %v1507 = vpop.f32.mrf.mxu0
      %v1508 = vadd.f32 0.0, %v1507
      %v1509 = vpop.f32.mrf.mxu0
      %v1510 = vadd.f32 0.0, %v1509
      %1511 = vmatmul.bf16.gmra.mxu0 %v1128
      %v1512 = vpop.f32.mrf.mxu0
      %v1513 = vadd.f32 0.0, %v1512
      %v1514 = vpop.f32.mrf.mxu0
      %1515 = vmatmul.bf16.gmra.mxu0 %v1129
      %v1516 = vpop.f32.mrf.mxu0
      %v1517 = vadd.f32 0.0, %v1516
      %v1518 = vpop.f32.mrf.mxu0
      %v1519 = vadd.f32 0.0, %v1518
      %1520 = vmatmul.bf16.gmra.mxu0 %v1130
      %v1521 = vpop.f32.mrf.mxu0
      %v1522 = vadd.f32 0.0, %v1521
      %v1523 = vpop.f32.mrf.mxu0
      %1524 = vmatmul.bf16.gmra.mxu0 %v1131
      %v1525 = vpop.f32.mrf.mxu0
      %v1526 = vadd.f32 0.0, %v1525
      %v1527 = vpop.f32.mrf.mxu0
      %v1528 = vadd.f32 0.0, %v1527
      %1529 = vmatmul.bf16.gmra.mxu0 %v1132
      %v1530 = vpop.f32.mrf.mxu0
      %v1531 = vadd.f32 0.0, %v1530
      %v1532 = vpop.f32.mrf.mxu0
      %1533 = vmatmul.bf16.gmra.mxu0 %v1133
      %v1534 = vpop.f32.mrf.mxu0
      %v1535 = vadd.f32 0.0, %v1534
      %v1536 = vpop.f32.mrf.mxu0
      %v1537 = vadd.f32 0.0, %v1536
      %1538 = vmatmul.bf16.gmra.mxu0 %v1134
      %v1539 = vpop.f32.mrf.mxu0
      %v1540 = vadd.f32 0.0, %v1539
      %v1541 = vpop.f32.mrf.mxu0
      %1542 = vmatmul.bf16.gmra.mxu0 %v1135
      %v1543 = vpop.f32.mrf.mxu0
      %v1544 = vadd.f32 0.0, %v1543
      %v1545 = vpop.f32.mrf.mxu0
      %v1546 = vadd.f32 0.0, %v1545
      %1547 = vmatmul.bf16.gmra.mxu0 %v1136
      %v1548 = vpop.f32.mrf.mxu0
      %v1549 = vadd.f32 0.0, %v1548
      %v1550 = vpop.f32.mrf.mxu0
      %1551 = vmatmul.bf16.gmra.mxu0 %v1137
      %v1552 = vpop.f32.mrf.mxu0
      %v1553 = vadd.f32 0.0, %v1552
      %v1554 = vpop.f32.mrf.mxu0
      %v1555 = vadd.f32 0.0, %v1554
      %1556 = vmatmul.bf16.gmra.mxu0 %v1138
      %v1557 = vpop.f32.mrf.mxu0
      %v1558 = vadd.f32 0.0, %v1557
      %v1559 = vpop.f32.mrf.mxu0
      %1560 = vmatmul.bf16.gmra.mxu0 %v1139
      %v1561 = vpop.f32.mrf.mxu0
      %v1562 = vadd.f32 0.0, %v1561
      %v1563 = vpop.f32.mrf.mxu0
      %v1564 = vadd.f32 0.0, %v1563
      %1565 = vmatmul.bf16.gmra.mxu0 %v1140
      %v1566 = vpop.f32.mrf.mxu0
      %v1567 = vadd.f32 0.0, %v1566
      %v1568 = vpop.f32.mrf.mxu0
      %1569 = vmatmul.bf16.gmra.mxu0 %v1141
      %v1570 = vpop.f32.mrf.mxu0
      %v1571 = vadd.f32 0.0, %v1570
      %v1572 = vpop.f32.mrf.mxu0
      %v1573 = vadd.f32 0.0, %v1572
      %1574 = vmatmul.bf16.gmra.mxu0 %v1142
      %v1575 = vpop.f32.mrf.mxu0
      %v1576 = vadd.f32 0.0, %v1575
      %v1577 = vpop.f32.mrf.mxu0
      %1578 = vmatmul.bf16.gmra.mxu0 %v1143
      %v1579 = vpop.f32.mrf.mxu0
      %v1580 = vadd.f32 0.0, %v1579
      %v1581 = vpop.f32.mrf.mxu0
      %v1582 = vadd.f32 0.0, %v1581
      %1583 = vmatmul.bf16.gmra.mxu0 %v1144
      %v1584 = vpop.f32.mrf.mxu0
      %v1585 = vadd.f32 0.0, %v1584
      %v1586 = vpop.f32.mrf.mxu0
      %1587 = vmatmul.bf16.gmra.mxu0 %v1145
      %v1588 = vpop.f32.mrf.mxu0
      %v1589 = vadd.f32 0.0, %v1588
      %v1590 = vpop.f32.mrf.mxu0
      %v1591 = vadd.f32 0.0, %v1590
      %1592 = vmatmul.bf16.gmra.mxu0 %v1146
      %v1593 = vpop.f32.mrf.mxu0
      %v1594 = vadd.f32 0.0, %v1593
      %v1595 = vpop.f32.mrf.mxu0
      %1596 = vdwg.mxu0
      %1597 = vmatpush.bf16.msra.mxu0 %v1282
      %1598 = vmatpush.bf16.msra.mxu0 %v1279
      %1599 = vmatpush.bf16.msra.mxu0 %v1276
      %1600 = vmatpush.bf16.msra.mxu0 %v1273
      %1601 = vmatpush.bf16.msra.mxu0 %v1270
      %1602 = vmatpush.bf16.msra.mxu0 %v1267
      %1603 = vmatpush.bf16.msra.mxu0 %v1264
      %1604 = vmatpush.bf16.msra.mxu0 %v1261
      %1605 = vmatmul.bf16.gmra.mxu0 %v1115
      %v1606 = vpop.f32.mrf.mxu0
      %v1607 = vadd.f32 0.0, %v1606
      %v1608 = vpop.f32.mrf.mxu0
      %v1609 = vadd.f32 0.0, %v1608
      %1610 = vmatmul.bf16.gmra.mxu0 %v1116
      %v1611 = vpop.f32.mrf.mxu0
      %v1612 = vadd.f32 0.0, %v1611
      %v1613 = vpop.f32.mrf.mxu0
      %1614 = vmatmul.bf16.gmra.mxu0 %v1117
      %v1615 = vpop.f32.mrf.mxu0
      %v1616 = vadd.f32 0.0, %v1615
      %v1617 = vpop.f32.mrf.mxu0
      %v1618 = vadd.f32 0.0, %v1617
      %1619 = vmatmul.bf16.gmra.mxu0 %v1118
      %v1620 = vpop.f32.mrf.mxu0
      %v1621 = vadd.f32 0.0, %v1620
      %v1622 = vpop.f32.mrf.mxu0
      %1623 = vmatmul.bf16.gmra.mxu0 %v1119
      %v1624 = vpop.f32.mrf.mxu0
      %v1625 = vadd.f32 0.0, %v1624
      %v1626 = vpop.f32.mrf.mxu0
      %v1627 = vadd.f32 0.0, %v1626
      %1628 = vmatmul.bf16.gmra.mxu0 %v1120
      %v1629 = vpop.f32.mrf.mxu0
      %v1630 = vadd.f32 0.0, %v1629
      %v1631 = vpop.f32.mrf.mxu0
      %1632 = vmatmul.bf16.gmra.mxu0 %v1121
      %v1633 = vpop.f32.mrf.mxu0
      %v1634 = vadd.f32 0.0, %v1633
      %v1635 = vpop.f32.mrf.mxu0
      %v1636 = vadd.f32 0.0, %v1635
      %1637 = vmatmul.bf16.gmra.mxu0 %v1122
      %v1638 = vpop.f32.mrf.mxu0
      %v1639 = vadd.f32 0.0, %v1638
      %v1640 = vpop.f32.mrf.mxu0
      %1641 = vmatmul.bf16.gmra.mxu0 %v1123
      %v1642 = vpop.f32.mrf.mxu0
      %v1643 = vadd.f32 0.0, %v1642
      %v1644 = vpop.f32.mrf.mxu0
      %v1645 = vadd.f32 0.0, %v1644
      %1646 = vmatmul.bf16.gmra.mxu0 %v1124
      %v1647 = vpop.f32.mrf.mxu0
      %v1648 = vadd.f32 0.0, %v1647
      %v1649 = vpop.f32.mrf.mxu0
      %1650 = vmatmul.bf16.gmra.mxu0 %v1125
      %v1651 = vpop.f32.mrf.mxu0
      %v1652 = vadd.f32 0.0, %v1651
      %v1653 = vpop.f32.mrf.mxu0
      %v1654 = vadd.f32 0.0, %v1653
      %1655 = vmatmul.bf16.gmra.mxu0 %v1126
      %v1656 = vpop.f32.mrf.mxu0
      %v1657 = vadd.f32 0.0, %v1656
      %v1658 = vpop.f32.mrf.mxu0
      %1659 = vmatmul.bf16.gmra.mxu0 %v1127
      %v1660 = vpop.f32.mrf.mxu0
      %v1661 = vadd.f32 0.0, %v1660
      %v1662 = vpop.f32.mrf.mxu0
      %v1663 = vadd.f32 0.0, %v1662
      %1664 = vmatmul.bf16.gmra.mxu0 %v1128
      %v1665 = vpop.f32.mrf.mxu0
      %v1666 = vadd.f32 0.0, %v1665
      %v1667 = vpop.f32.mrf.mxu0
      %1668 = vmatmul.bf16.gmra.mxu0 %v1129
      %v1669 = vpop.f32.mrf.mxu0
      %v1670 = vadd.f32 0.0, %v1669
      %v1671 = vpop.f32.mrf.mxu0
      %v1672 = vadd.f32 0.0, %v1671
      %1673 = vmatmul.bf16.gmra.mxu0 %v1130
      %v1674 = vpop.f32.mrf.mxu0
      %v1675 = vadd.f32 0.0, %v1674
      %v1676 = vpop.f32.mrf.mxu0
      %1677 = vmatmul.bf16.gmra.mxu0 %v1131
      %v1678 = vpop.f32.mrf.mxu0
      %v1679 = vadd.f32 0.0, %v1678
      %v1680 = vpop.f32.mrf.mxu0
      %v1681 = vadd.f32 0.0, %v1680
      %1682 = vmatmul.bf16.gmra.mxu0 %v1132
      %v1683 = vpop.f32.mrf.mxu0
      %v1684 = vadd.f32 0.0, %v1683
      %v1685 = vpop.f32.mrf.mxu0
      %1686 = vmatmul.bf16.gmra.mxu0 %v1133
      %v1687 = vpop.f32.mrf.mxu0
      %v1688 = vadd.f32 0.0, %v1687
      %v1689 = vpop.f32.mrf.mxu0
      %v1690 = vadd.f32 0.0, %v1689
      %1691 = vmatmul.bf16.gmra.mxu0 %v1134
      %v1692 = vpop.f32.mrf.mxu0
      %v1693 = vadd.f32 0.0, %v1692
      %v1694 = vpop.f32.mrf.mxu0
      %1695 = vmatmul.bf16.gmra.mxu0 %v1135
      %v1696 = vpop.f32.mrf.mxu0
      %v1697 = vadd.f32 0.0, %v1696
      %v1698 = vpop.f32.mrf.mxu0
      %v1699 = vadd.f32 0.0, %v1698
      %1700 = vmatmul.bf16.gmra.mxu0 %v1136
      %v1701 = vpop.f32.mrf.mxu0
      %v1702 = vadd.f32 0.0, %v1701
      %v1703 = vpop.f32.mrf.mxu0
      %1704 = vmatmul.bf16.gmra.mxu0 %v1137
      %v1705 = vpop.f32.mrf.mxu0
      %v1706 = vadd.f32 0.0, %v1705
      %v1707 = vpop.f32.mrf.mxu0
      %v1708 = vadd.f32 0.0, %v1707
      %1709 = vmatmul.bf16.gmra.mxu0 %v1138
      %v1710 = vpop.f32.mrf.mxu0
      %v1711 = vadd.f32 0.0, %v1710
      %v1712 = vpop.f32.mrf.mxu0
      %1713 = vmatmul.bf16.gmra.mxu0 %v1139
      %v1714 = vpop.f32.mrf.mxu0
      %v1715 = vadd.f32 0.0, %v1714
      %v1716 = vpop.f32.mrf.mxu0
      %v1717 = vadd.f32 0.0, %v1716
      %1718 = vmatmul.bf16.gmra.mxu0 %v1140
      %v1719 = vpop.f32.mrf.mxu0
      %v1720 = vadd.f32 0.0, %v1719
      %v1721 = vpop.f32.mrf.mxu0
      %1722 = vmatmul.bf16.gmra.mxu0 %v1141
      %v1723 = vpop.f32.mrf.mxu0
      %v1724 = vadd.f32 0.0, %v1723
      %v1725 = vpop.f32.mrf.mxu0
      %v1726 = vadd.f32 0.0, %v1725
      %1727 = vmatmul.bf16.gmra.mxu0 %v1142
      %v1728 = vpop.f32.mrf.mxu0
      %v1729 = vadd.f32 0.0, %v1728
      %v1730 = vpop.f32.mrf.mxu0
      %1731 = vmatmul.bf16.gmra.mxu0 %v1143
      %v1732 = vpop.f32.mrf.mxu0
      %v1733 = vadd.f32 0.0, %v1732
      %v1734 = vpop.f32.mrf.mxu0
      %v1735 = vadd.f32 0.0, %v1734
      %1736 = vmatmul.bf16.gmra.mxu0 %v1144
      %v1737 = vpop.f32.mrf.mxu0
      %v1738 = vadd.f32 0.0, %v1737
      %v1739 = vpop.f32.mrf.mxu0
      %1740 = vmatmul.bf16.gmra.mxu0 %v1145
      %v1741 = vpop.f32.mrf.mxu0
      %v1742 = vadd.f32 0.0, %v1741
      %v1743 = vpop.f32.mrf.mxu0
      %v1744 = vadd.f32 0.0, %v1743
      %1745 = vmatmul.bf16.gmra.mxu0 %v1146
      %v1746 = vpop.f32.mrf.mxu0
      %v1747 = vadd.f32 0.0, %v1746
      %v1748 = vpop.f32.mrf.mxu0
      %1749 = vdwg.mxu0
      %v1750 = vld [vmem:[#allocation4] sm:$0xff]
      %v1751 = vld [vmem:[#allocation4 + $0x8] sm:$0xff]
      %v1752 = vld [vmem:[#allocation4 + $0x10] sm:$0xff]
      %v1753 = vld [vmem:[#allocation4 + $0x18] sm:$0xff]
      %v1754 = vld [vmem:[#allocation4 + $0x20] sm:$0xff]
      %v1755 = vld [vmem:[#allocation4 + $0x28] sm:$0xff]
      %v1756 = vld [vmem:[#allocation4 + $0x30] sm:$0xff]
      %v1757 = vld [vmem:[#allocation4 + $0x38] sm:$0xff]
      %v1758 = vld [vmem:[#allocation4 + $0x40] sm:$0xff]
      %v1759 = vld [vmem:[#allocation4 + $0x48] sm:$0xff]
      %v1760 = vld [vmem:[#allocation4 + $0x50] sm:$0xff]
      %v1761 = vld [vmem:[#allocation4 + $0x58] sm:$0xff]
      %v1762 = vld [vmem:[#allocation4 + $0x60] sm:$0xff]
      %v1763 = vld [vmem:[#allocation4 + $0x68] sm:$0xff]
      %v1764 = vld [vmem:[#allocation4 + $0x70] sm:$0xff]
      %v1765 = vld [vmem:[#allocation4 + $0x78] sm:$0xff]
      %v1766 = vld [vmem:[#allocation4 + $0x80] sm:$0xff]
      %v1767 = vld [vmem:[#allocation4 + $0x88] sm:$0xff]
      %v1768 = vld [vmem:[#allocation4 + $0x90] sm:$0xff]
      %v1769 = vld [vmem:[#allocation4 + $0x98] sm:$0xff]
      %v1770 = vld [vmem:[#allocation4 + $0xa0] sm:$0xff]
      %v1771 = vld [vmem:[#allocation4 + $0xa8] sm:$0xff]
      %v1772 = vld [vmem:[#allocation4 + $0xb0] sm:$0xff]
      %v1773 = vld [vmem:[#allocation4 + $0xb8] sm:$0xff]
      %v1774 = vld [vmem:[#allocation4 + $0xc0] sm:$0xff]
      %v1775 = vld [vmem:[#allocation4 + $0xc8] sm:$0xff]
      %v1776 = vld [vmem:[#allocation4 + $0xd0] sm:$0xff]
      %v1777 = vld [vmem:[#allocation4 + $0xd8] sm:$0xff]
      %v1778 = vld [vmem:[#allocation4 + $0xe0] sm:$0xff]
      %v1779 = vld [vmem:[#allocation4 + $0xe8] sm:$0xff]
      %v1780 = vld [vmem:[#allocation4 + $0xf0] sm:$0xff]
      %v1781 = vld [vmem:[#allocation4 + $0xf8] sm:$0xff]
      %vm1830 = vcmask 1046528
      %v1831 = vrot.slane %v1454, 1
      %v1832 = vrot.slane %v1456, 1
      %v1833 = vsel %vm1830, %v1831, %v1832
      %v1834 = vrot.slane %v1459, 1
      %v1835 = vsel %vm1830, %v1832, %v1834
      %v1836 = vrot.slane %v1463, 1
      %v1837 = vrot.slane %v1465, 1
      %v1838 = vsel %vm1830, %v1836, %v1837
      %v1839 = vrot.slane %v1468, 1
      %v1840 = vsel %vm1830, %v1837, %v1839
      %v1841 = vrot.slane %v1472, 1
      %v1842 = vrot.slane %v1474, 1
      %v1843 = vsel %vm1830, %v1841, %v1842
      %v1844 = vrot.slane %v1477, 1
      %v1845 = vsel %vm1830, %v1842, %v1844
      %v1846 = vrot.slane %v1481, 1
      %v1847 = vrot.slane %v1483, 1
      %v1848 = vsel %vm1830, %v1846, %v1847
      %v1849 = vrot.slane %v1486, 1
      %v1850 = vsel %vm1830, %v1847, %v1849
      %v1851 = vrot.slane %v1490, 1
      %v1852 = vrot.slane %v1492, 1
      %v1853 = vsel %vm1830, %v1851, %v1852
      %v1854 = vrot.slane %v1495, 1
      %v1855 = vsel %vm1830, %v1852, %v1854
      %v1856 = vrot.slane %v1499, 1
      %v1857 = vrot.slane %v1501, 1
      %v1858 = vsel %vm1830, %v1856, %v1857
      %v1859 = vrot.slane %v1504, 1
      %v1860 = vsel %vm1830, %v1857, %v1859
      %v1861 = vrot.slane %v1508, 1
      %v1862 = vrot.slane %v1510, 1
      %v1863 = vsel %vm1830, %v1861, %v1862
      %v1864 = vrot.slane %v1513, 1
      %v1865 = vsel %vm1830, %v1862, %v1864
      %v1866 = vrot.slane %v1517, 1
      %v1867 = vrot.slane %v1519, 1
      %v1868 = vsel %vm1830, %v1866, %v1867
      %v1869 = vrot.slane %v1522, 1
      %v1870 = vsel %vm1830, %v1867, %v1869
      %v1871 = vrot.slane %v1526, 1
      %v1872 = vrot.slane %v1528, 1
      %v1873 = vsel %vm1830, %v1871, %v1872
      %v1874 = vrot.slane %v1531, 1
      %v1875 = vsel %vm1830, %v1872, %v1874
      %v1876 = vrot.slane %v1535, 1
      %v1877 = vrot.slane %v1537, 1
      %v1878 = vsel %vm1830, %v1876, %v1877
      %v1879 = vrot.slane %v1540, 1
      %v1880 = vsel %vm1830, %v1877, %v1879
      %v1881 = vrot.slane %v1544, 1
      %v1882 = vrot.slane %v1546, 1
      %v1883 = vsel %vm1830, %v1881, %v1882
      %v1884 = vrot.slane %v1549, 1
      %v1885 = vsel %vm1830, %v1882, %v1884
      %v1886 = vrot.slane %v1553, 1
      %v1887 = vrot.slane %v1555, 1
      %v1888 = vsel %vm1830, %v1886, %v1887
      %v1889 = vrot.slane %v1558, 1
      %v1890 = vsel %vm1830, %v1887, %v1889
      %v1891 = vrot.slane %v1562, 1
      %v1892 = vrot.slane %v1564, 1
      %v1893 = vsel %vm1830, %v1891, %v1892
      %v1894 = vrot.slane %v1567, 1
      %v1895 = vsel %vm1830, %v1892, %v1894
      %v1896 = vrot.slane %v1571, 1
      %v1897 = vrot.slane %v1573, 1
      %v1898 = vsel %vm1830, %v1896, %v1897
      %v1899 = vrot.slane %v1576, 1
      %v1900 = vsel %vm1830, %v1897, %v1899
      %v1901 = vrot.slane %v1580, 1
      %v1902 = vrot.slane %v1582, 1
      %v1903 = vsel %vm1830, %v1901, %v1902
      %v1904 = vrot.slane %v1585, 1
      %v1905 = vsel %vm1830, %v1902, %v1904
      %v1906 = vrot.slane %v1589, 1
      %v1907 = vrot.slane %v1591, 1
      %v1908 = vsel %vm1830, %v1906, %v1907
      %v1909 = vrot.slane %v1594, 1
      %v1910 = vsel %vm1830, %v1907, %v1909
      %v1943 = vadd.f32 %v1317, %v1833
      %v1944 = vadd.f32 %v1319, %v1835
      %v1945 = vadd.f32 %v1325, %v1838
      %v1946 = vadd.f32 %v1327, %v1840
      %v1947 = vadd.f32 %v1333, %v1843
      %v1948 = vadd.f32 %v1335, %v1845
      %v1949 = vadd.f32 %v1341, %v1848
      %v1950 = vadd.f32 %v1343, %v1850
      %v1951 = vadd.f32 %v1349, %v1853
      %v1952 = vadd.f32 %v1351, %v1855
      %v1953 = vadd.f32 %v1357, %v1858
      %v1954 = vadd.f32 %v1359, %v1860
      %v1955 = vadd.f32 %v1365, %v1863
      %v1956 = vadd.f32 %v1367, %v1865
      %v1957 = vadd.f32 %v1373, %v1868
      %v1958 = vadd.f32 %v1375, %v1870
      %v1959 = vadd.f32 %v1381, %v1873
      %v1960 = vadd.f32 %v1383, %v1875
      %v1961 = vadd.f32 %v1389, %v1878
      %v1962 = vadd.f32 %v1391, %v1880
      %v1963 = vadd.f32 %v1397, %v1883
      %v1964 = vadd.f32 %v1399, %v1885
      %v1965 = vadd.f32 %v1405, %v1888
      %v1966 = vadd.f32 %v1407, %v1890
      %v1967 = vadd.f32 %v1413, %v1893
      %v1968 = vadd.f32 %v1415, %v1895
      %v1969 = vadd.f32 %v1421, %v1898
      %v1970 = vadd.f32 %v1423, %v1900
      %v1971 = vadd.f32 %v1429, %v1903
      %v1972 = vadd.f32 %v1431, %v1905
      %v1973 = vadd.f32 %v1437, %v1908
      %v1974 = vadd.f32 %v1439, %v1910
      %vm2023 = vcmask 1045504
      %v2024 = vrot.slane %v1607, 2
      %v2025 = vrot.slane %v1609, 2
      %v2026 = vsel %vm2023, %v2024, %v2025
      %v2027 = vrot.slane %v1612, 2
      %v2028 = vsel %vm2023, %v2025, %v2027
      %v2029 = vrot.slane %v1616, 2
      %v2030 = vrot.slane %v1618, 2
      %v2031 = vsel %vm2023, %v2029, %v2030
      %v2032 = vrot.slane %v1621, 2
      %v2033 = vsel %vm2023, %v2030, %v2032
      %v2034 = vrot.slane %v1625, 2
      %v2035 = vrot.slane %v1627, 2
      %v2036 = vsel %vm2023, %v2034, %v2035
      %v2037 = vrot.slane %v1630, 2
      %v2038 = vsel %vm2023, %v2035, %v2037
      %v2039 = vrot.slane %v1634, 2
      %v2040 = vrot.slane %v1636, 2
      %v2041 = vsel %vm2023, %v2039, %v2040
      %v2042 = vrot.slane %v1639, 2
      %v2043 = vsel %vm2023, %v2040, %v2042
      %v2044 = vrot.slane %v1643, 2
      %v2045 = vrot.slane %v1645, 2
      %v2046 = vsel %vm2023, %v2044, %v2045
      %v2047 = vrot.slane %v1648, 2
      %v2048 = vsel %vm2023, %v2045, %v2047
      %v2049 = vrot.slane %v1652, 2
      %v2050 = vrot.slane %v1654, 2
      %v2051 = vsel %vm2023, %v2049, %v2050
      %v2052 = vrot.slane %v1657, 2
      %v2053 = vsel %vm2023, %v2050, %v2052
      %v2054 = vrot.slane %v1661, 2
      %v2055 = vrot.slane %v1663, 2
      %v2056 = vsel %vm2023, %v2054, %v2055
      %v2057 = vrot.slane %v1666, 2
      %v2058 = vsel %vm2023, %v2055, %v2057
      %v2059 = vrot.slane %v1670, 2
      %v2060 = vrot.slane %v1672, 2
      %v2061 = vsel %vm2023, %v2059, %v2060
      %v2062 = vrot.slane %v1675, 2
      %v2063 = vsel %vm2023, %v2060, %v2062
      %v2064 = vrot.slane %v1679, 2
      %v2065 = vrot.slane %v1681, 2
      %v2066 = vsel %vm2023, %v2064, %v2065
      %v2067 = vrot.slane %v1684, 2
      %v2068 = vsel %vm2023, %v2065, %v2067
      %v2069 = vrot.slane %v1688, 2
      %v2070 = vrot.slane %v1690, 2
      %v2071 = vsel %vm2023, %v2069, %v2070
      %v2072 = vrot.slane %v1693, 2
      %v2073 = vsel %vm2023, %v2070, %v2072
      %v2074 = vrot.slane %v1697, 2
      %v2075 = vrot.slane %v1699, 2
      %v2076 = vsel %vm2023, %v2074, %v2075
      %v2077 = vrot.slane %v1702, 2
      %v2078 = vsel %vm2023, %v2075, %v2077
      %v2079 = vrot.slane %v1706, 2
      %v2080 = vrot.slane %v1708, 2
      %v2081 = vsel %vm2023, %v2079, %v2080
      %v2082 = vrot.slane %v1711, 2
      %v2083 = vsel %vm2023, %v2080, %v2082
      %v2084 = vrot.slane %v1715, 2
      %v2085 = vrot.slane %v1717, 2
      %v2086 = vsel %vm2023, %v2084, %v2085
      %v2087 = vrot.slane %v1720, 2
      %v2088 = vsel %vm2023, %v2085, %v2087
      %v2089 = vrot.slane %v1724, 2
      %v2090 = vrot.slane %v1726, 2
      %v2091 = vsel %vm2023, %v2089, %v2090
      %v2092 = vrot.slane %v1729, 2
      %v2093 = vsel %vm2023, %v2090, %v2092
      %v2094 = vrot.slane %v1733, 2
      %v2095 = vrot.slane %v1735, 2
      %v2096 = vsel %vm2023, %v2094, %v2095
      %v2097 = vrot.slane %v1738, 2
      %v2098 = vsel %vm2023, %v2095, %v2097
      %v2099 = vrot.slane %v1742, 2
      %v2100 = vrot.slane %v1744, 2
      %v2101 = vsel %vm2023, %v2099, %v2100
      %v2102 = vrot.slane %v1747, 2
      %v2103 = vsel %vm2023, %v2100, %v2102
      %v2136 = vadd.f32 %v1943, %v2026
      %v2137 = vadd.f32 %v1944, %v2028
      %v2138 = vadd.f32 %v1945, %v2031
      %v2139 = vadd.f32 %v1946, %v2033
      %v2140 = vadd.f32 %v1947, %v2036
      %v2141 = vadd.f32 %v1948, %v2038
      %v2142 = vadd.f32 %v1949, %v2041
      %v2143 = vadd.f32 %v1950, %v2043
      %v2144 = vadd.f32 %v1951, %v2046
      %v2145 = vadd.f32 %v1952, %v2048
      %v2146 = vadd.f32 %v1953, %v2051
      %v2147 = vadd.f32 %v1954, %v2053
      %v2148 = vadd.f32 %v1955, %v2056
      %v2149 = vadd.f32 %v1956, %v2058
      %v2150 = vadd.f32 %v1957, %v2061
      %v2151 = vadd.f32 %v1958, %v2063
      %v2152 = vadd.f32 %v1959, %v2066
      %v2153 = vadd.f32 %v1960, %v2068
      %v2154 = vadd.f32 %v1961, %v2071
      %v2155 = vadd.f32 %v1962, %v2073
      %v2156 = vadd.f32 %v1963, %v2076
      %v2157 = vadd.f32 %v1964, %v2078
      %v2158 = vadd.f32 %v1965, %v2081
      %v2159 = vadd.f32 %v1966, %v2083
      %v2160 = vadd.f32 %v1967, %v2086
      %v2161 = vadd.f32 %v1968, %v2088
      %v2162 = vadd.f32 %v1969, %v2091
      %v2163 = vadd.f32 %v1970, %v2093
      %v2164 = vadd.f32 %v1971, %v2096
      %v2165 = vadd.f32 %v1972, %v2098
      %v2166 = vadd.f32 %v1973, %v2101
      %v2167 = vadd.f32 %v1974, %v2103
      %v2168 = vadd.f32 %v1750, %v2136
      %v2169 = vadd.f32 %v1751, %v2137
      %v2170 = vadd.f32 %v1752, %v2138
      %v2171 = vadd.f32 %v1753, %v2139
      %v2172 = vadd.f32 %v1754, %v2140
      %v2173 = vadd.f32 %v1755, %v2141
      %v2174 = vadd.f32 %v1756, %v2142
      %v2175 = vadd.f32 %v1757, %v2143
      %v2176 = vadd.f32 %v1758, %v2144
      %v2177 = vadd.f32 %v1759, %v2145
      %v2178 = vadd.f32 %v1760, %v2146
      %v2179 = vadd.f32 %v1761, %v2147
      %v2180 = vadd.f32 %v1762, %v2148
      %v2181 = vadd.f32 %v1763, %v2149
      %v2182 = vadd.f32 %v1764, %v2150
      %v2183 = vadd.f32 %v1765, %v2151
      %v2184 = vadd.f32 %v1766, %v2152
      %v2185 = vadd.f32 %v1767, %v2153
      %v2186 = vadd.f32 %v1768, %v2154
      %v2187 = vadd.f32 %v1769, %v2155
      %v2188 = vadd.f32 %v1770, %v2156
      %v2189 = vadd.f32 %v1771, %v2157
      %v2190 = vadd.f32 %v1772, %v2158
      %v2191 = vadd.f32 %v1773, %v2159
      %v2192 = vadd.f32 %v1774, %v2160
      %v2193 = vadd.f32 %v1775, %v2161
      %v2194 = vadd.f32 %v1776, %v2162
      %v2195 = vadd.f32 %v1777, %v2163
      %v2196 = vadd.f32 %v1778, %v2164
      %v2197 = vadd.f32 %v1779, %v2165
      %v2198 = vadd.f32 %v1780, %v2166
      %v2199 = vadd.f32 %v1781, %v2167
      %2200 = vst [vmem:[#allocation4] sm:$0xff] %v2168
      %2201 = vst [vmem:[#allocation4 + $0x8] sm:$0xff] %v2169
      %2202 = vst [vmem:[#allocation4 + $0x10] sm:$0xff] %v2170
      %2203 = vst [vmem:[#allocation4 + $0x18] sm:$0xff] %v2171
      %2204 = vst [vmem:[#allocation4 + $0x20] sm:$0xff] %v2172
      %2205 = vst [vmem:[#allocation4 + $0x28] sm:$0xff] %v2173
      %2206 = vst [vmem:[#allocation4 + $0x30] sm:$0xff] %v2174
      %2207 = vst [vmem:[#allocation4 + $0x38] sm:$0xff] %v2175
      %2208 = vst [vmem:[#allocation4 + $0x40] sm:$0xff] %v2176
      %2209 = vst [vmem:[#allocation4 + $0x48] sm:$0xff] %v2177
      %2210 = vst [vmem:[#allocation4 + $0x50] sm:$0xff] %v2178
      %2211 = vst [vmem:[#allocation4 + $0x58] sm:$0xff] %v2179
      %2212 = vst [vmem:[#allocation4 + $0x60] sm:$0xff] %v2180
      %2213 = vst [vmem:[#allocation4 + $0x68] sm:$0xff] %v2181
      %2214 = vst [vmem:[#allocation4 + $0x70] sm:$0xff] %v2182
      %2215 = vst [vmem:[#allocation4 + $0x78] sm:$0xff] %v2183
      %2216 = vst [vmem:[#allocation4 + $0x80] sm:$0xff] %v2184
      %2217 = vst [vmem:[#allocation4 + $0x88] sm:$0xff] %v2185
      %2218 = vst [vmem:[#allocation4 + $0x90] sm:$0xff] %v2186
      %2219 = vst [vmem:[#allocation4 + $0x98] sm:$0xff] %v2187
      %2220 = vst [vmem:[#allocation4 + $0xa0] sm:$0xff] %v2188
      %2221 = vst [vmem:[#allocation4 + $0xa8] sm:$0xff] %v2189
      %2222 = vst [vmem:[#allocation4 + $0xb0] sm:$0xff] %v2190
      %2223 = vst [vmem:[#allocation4 + $0xb8] sm:$0xff] %v2191
      %2224 = vst [vmem:[#allocation4 + $0xc0] sm:$0xff] %v2192
      %2225 = vst [vmem:[#allocation4 + $0xc8] sm:$0xff] %v2193
      %2226 = vst [vmem:[#allocation4 + $0xd0] sm:$0xff] %v2194
      %2227 = vst [vmem:[#allocation4 + $0xd8] sm:$0xff] %v2195
      %2228 = vst [vmem:[#allocation4 + $0xe0] sm:$0xff] %v2196
      %2229 = vst [vmem:[#allocation4 + $0xe8] sm:$0xff] %v2197
      %2230 = vst [vmem:[#allocation4 + $0xf0] sm:$0xff] %v2198
      %2231 = vst [vmem:[#allocation4 + $0xf8] sm:$0xff] %v2199
      %v2232 = vld [vmem:[%s321] sm:$0xf]
      %v2233 = vld [vmem:[%s321 + $0x4] sm:$0xf]
      %v2234 = vld [vmem:[%s321 + $0x8] sm:$0xf]
      %v2235 = vld [vmem:[%s321 + $0xc] sm:$0xf]
      %v2236 = vld [vmem:[%s321 + $0x10] sm:$0xf]
      %v2237 = vld [vmem:[%s321 + $0x14] sm:$0xf]
      %v2238 = vld [vmem:[%s321 + $0x18] sm:$0xf]
      %v2239 = vld [vmem:[%s321 + $0x1c] sm:$0xf]
      %v2240 = vld [vmem:[%s321 + $0x20] sm:$0xf]
      %v2241 = vld [vmem:[%s321 + $0x24] sm:$0xf]
      %v2242 = vld [vmem:[%s321 + $0x28] sm:$0xf]
      %v2243 = vld [vmem:[%s321 + $0x2c] sm:$0xf]
      %v2244 = vld [vmem:[%s321 + $0x30] sm:$0xf]
      %v2245 = vld [vmem:[%s321 + $0x34] sm:$0xf]
      %v2246 = vld [vmem:[%s321 + $0x38] sm:$0xf]
      %v2247 = vld [vmem:[%s321 + $0x3c] sm:$0xf]
      %v2248 = vld [vmem:[%s321 + $0x40] sm:$0xf]
      %v2249 = vld [vmem:[%s321 + $0x44] sm:$0xf]
      %v2250 = vld [vmem:[%s321 + $0x48] sm:$0xf]
      %v2251 = vld [vmem:[%s321 + $0x4c] sm:$0xf]
      %v2252 = vld [vmem:[%s321 + $0x50] sm:$0xf]
      %v2253 = vld [vmem:[%s321 + $0x54] sm:$0xf]
      %v2254 = vld [vmem:[%s321 + $0x58] sm:$0xf]
      %v2255 = vld [vmem:[%s321 + $0x5c] sm:$0xf]
      %v2256 = vld [vmem:[%s321 + $0x60] sm:$0xf]
      %v2257 = vld [vmem:[%s321 + $0x64] sm:$0xf]
      %v2258 = vld [vmem:[%s321 + $0x68] sm:$0xf]
      %v2259 = vld [vmem:[%s321 + $0x6c] sm:$0xf]
      %v2260 = vld [vmem:[%s321 + $0x70] sm:$0xf]
      %v2261 = vld [vmem:[%s321 + $0x74] sm:$0xf]
      %v2262 = vld [vmem:[%s321 + $0x78] sm:$0xf]
      %v2263 = vld [vmem:[%s321 + $0x7c] sm:$0xf]
      %v2264 = vld [vmem:[%s321 + $0x80] sm:$0xf]
      %v2265 = vld [vmem:[%s321 + $0x84] sm:$0xf]
      %v2266 = vld [vmem:[%s321 + $0x88] sm:$0xf]
      %v2267 = vld [vmem:[%s321 + $0x8c] sm:$0xf]
      %v2268 = vld [vmem:[%s321 + $0x90] sm:$0xf]
      %v2269 = vld [vmem:[%s321 + $0x94] sm:$0xf]
      %v2270 = vld [vmem:[%s321 + $0x98] sm:$0xf]
      %v2271 = vld [vmem:[%s321 + $0x9c] sm:$0xf]
      %v2272 = vld [vmem:[%s321 + $0xa0] sm:$0xf]
      %v2273 = vld [vmem:[%s321 + $0xa4] sm:$0xf]
      %v2274 = vld [vmem:[%s321 + $0xa8] sm:$0xf]
      %v2275 = vld [vmem:[%s321 + $0xac] sm:$0xf]
      %v2276 = vld [vmem:[%s321 + $0xb0] sm:$0xf]
      %v2277 = vld [vmem:[%s321 + $0xb4] sm:$0xf]
      %v2278 = vld [vmem:[%s321 + $0xb8] sm:$0xf]
      %v2279 = vld [vmem:[%s321 + $0xbc] sm:$0xf]
      %v2280 = vld [vmem:[%s321 + $0xc0] sm:$0xf]
      %v2281 = vld [vmem:[%s321 + $0xc4] sm:$0xf]
      %v2282 = vld [vmem:[%s321 + $0xc8] sm:$0xf]
      %v2283 = vld [vmem:[%s321 + $0xcc] sm:$0xf]
      %v2284 = vld [vmem:[%s321 + $0xd0] sm:$0xf]
      %v2285 = vld [vmem:[%s321 + $0xd4] sm:$0xf]
      %v2286 = vld [vmem:[%s321 + $0xd8] sm:$0xf]
      %v2287 = vld [vmem:[%s321 + $0xdc] sm:$0xf]
      %v2288 = vld [vmem:[%s321 + $0xe0] sm:$0xf]
      %v2289 = vld [vmem:[%s321 + $0xe4] sm:$0xf]
      %v2290 = vld [vmem:[%s321 + $0xe8] sm:$0xf]
      %v2291 = vld [vmem:[%s321 + $0xec] sm:$0xf]
      %v2292 = vld [vmem:[%s321 + $0xf0] sm:$0xf]
      %v2293 = vld [vmem:[%s321 + $0xf4] sm:$0xf]
      %v2294 = vld [vmem:[%s321 + $0xf8] sm:$0xf]
      %v2295 = vld [vmem:[%s321 + $0xfc] sm:$0xf]
      %s2296 = scalar_lea.vmem %s1, 192
      %v2297 = vld [vmem:[%s2296] sm:$0xff]
      %v2298 = vld [vmem:[%s2296 + $0x8] sm:$0xf]
      %v2299 = vld [vmem:[%s2296 + $0xc] sm:$0xff]
      %v2300 = vld [vmem:[%s2296 + $0x14] sm:$0xf]
      %v2301 = vld [vmem:[%s2296 + $0x18] sm:$0xff]
      %v2302 = vld [vmem:[%s2296 + $0x20] sm:$0xf]
      %v2303 = vld [vmem:[%s2296 + $0x24] sm:$0xff]
      %v2304 = vld [vmem:[%s2296 + $0x2c] sm:$0xf]
      %v2305 = vld [vmem:[%s2296 + $0x30] sm:$0xff]
      %v2306 = vld [vmem:[%s2296 + $0x38] sm:$0xf]
      %v2307 = vld [vmem:[%s2296 + $0x3c] sm:$0xff]
      %v2308 = vld [vmem:[%s2296 + $0x44] sm:$0xf]
      %v2309 = vld [vmem:[%s2296 + $0x48] sm:$0xff]
      %v2310 = vld [vmem:[%s2296 + $0x50] sm:$0xf]
      %v2311 = vld [vmem:[%s2296 + $0x54] sm:$0xff]
      %v2312 = vld [vmem:[%s2296 + $0x5c] sm:$0xf]
      %v2313 = vld [vmem:[%s2296 + $0x60] sm:$0xff]
      %v2314 = vld [vmem:[%s2296 + $0x68] sm:$0xf]
      %v2315 = vld [vmem:[%s2296 + $0x6c] sm:$0xff]
      %v2316 = vld [vmem:[%s2296 + $0x74] sm:$0xf]
      %v2317 = vld [vmem:[%s2296 + $0x78] sm:$0xff]
      %v2318 = vld [vmem:[%s2296 + $0x80] sm:$0xf]
      %v2319 = vld [vmem:[%s2296 + $0x84] sm:$0xff]
      %v2320 = vld [vmem:[%s2296 + $0x8c] sm:$0xf]
      %v2321 = vld [vmem:[%s2296 + $0x90] sm:$0xff]
      %v2322 = vld [vmem:[%s2296 + $0x98] sm:$0xf]
      %v2323 = vld [vmem:[%s2296 + $0x9c] sm:$0xff]
      %v2324 = vld [vmem:[%s2296 + $0xa4] sm:$0xf]
      %v2325 = vld [vmem:[%s2296 + $0xa8] sm:$0xff]
      %v2326 = vld [vmem:[%s2296 + $0xb0] sm:$0xf]
      %v2327 = vld [vmem:[%s2296 + $0xb4] sm:$0xff]
      %v2328 = vld [vmem:[%s2296 + $0xbc] sm:$0xf]
      %v2393 = vunpack.c.l.b16 %v2232
      %v2394 = vunpack.c.l.b16 %v2233
      %v2395 = vunpack.c.l.b16 %v2234
      %v2396 = vunpack.c.l.b16 %v2235
      %v2397 = vunpack.c.l.b16 %v2236
      %v2398 = vunpack.c.l.b16 %v2237
      %v2399 = vunpack.c.l.b16 %v2238
      %v2400 = vunpack.c.l.b16 %v2239
      %v2401 = vunpack.c.l.b16 %v2240
      %v2402 = vunpack.c.l.b16 %v2241
      %v2403 = vunpack.c.l.b16 %v2242
      %v2404 = vunpack.c.l.b16 %v2243
      %v2405 = vunpack.c.l.b16 %v2244
      %v2406 = vunpack.c.l.b16 %v2245
      %v2407 = vunpack.c.l.b16 %v2246
      %v2408 = vunpack.c.l.b16 %v2247
      %v2409 = vunpack.c.l.b16 %v2248
      %v2410 = vunpack.c.l.b16 %v2249
      %v2411 = vunpack.c.l.b16 %v2250
      %v2412 = vunpack.c.l.b16 %v2251
      %v2413 = vunpack.c.l.b16 %v2252
      %v2414 = vunpack.c.l.b16 %v2253
      %v2415 = vunpack.c.l.b16 %v2254
      %v2416 = vunpack.c.l.b16 %v2255
      %v2417 = vunpack.c.l.b16 %v2256
      %v2418 = vunpack.c.l.b16 %v2257
      %v2419 = vunpack.c.l.b16 %v2258
      %v2420 = vunpack.c.l.b16 %v2259
      %v2421 = vunpack.c.l.b16 %v2260
      %v2422 = vunpack.c.l.b16 %v2261
      %v2423 = vunpack.c.l.b16 %v2262
      %v2424 = vunpack.c.l.b16 %v2263
      %v2425 = vunpack.c.l.b16 %v2264
      %v2426 = vunpack.c.l.b16 %v2265
      %v2427 = vunpack.c.l.b16 %v2266
      %v2428 = vunpack.c.l.b16 %v2267
      %v2429 = vunpack.c.l.b16 %v2268
      %v2430 = vunpack.c.l.b16 %v2269
      %v2431 = vunpack.c.l.b16 %v2270
      %v2432 = vunpack.c.l.b16 %v2271
      %v2433 = vunpack.c.l.b16 %v2272
      %v2434 = vunpack.c.l.b16 %v2273
      %v2435 = vunpack.c.l.b16 %v2274
      %v2436 = vunpack.c.l.b16 %v2275
      %v2437 = vunpack.c.l.b16 %v2276
      %v2438 = vunpack.c.l.b16 %v2277
      %v2439 = vunpack.c.l.b16 %v2278
      %v2440 = vunpack.c.l.b16 %v2279
      %v2441 = vunpack.c.l.b16 %v2280
      %v2442 = vunpack.c.l.b16 %v2281
      %v2443 = vunpack.c.l.b16 %v2282
      %v2444 = vunpack.c.l.b16 %v2283
      %v2445 = vunpack.c.l.b16 %v2284
      %v2446 = vunpack.c.l.b16 %v2285
      %v2447 = vunpack.c.l.b16 %v2286
      %v2448 = vunpack.c.l.b16 %v2287
      %v2449 = vunpack.c.l.b16 %v2288
      %v2450 = vunpack.c.l.b16 %v2289
      %v2451 = vunpack.c.l.b16 %v2290
      %v2452 = vunpack.c.l.b16 %v2291
      %v2453 = vunpack.c.l.b16 %v2292
      %v2454 = vunpack.c.l.b16 %v2293
      %v2455 = vunpack.c.l.b16 %v2294
      %v2456 = vunpack.c.l.b16 %v2295
      %v2457 = vpack.c.b16 %v2394, %v2393
      %v2458 = vpack.c.b16 %v2396, %v2395
      %v2459 = vpack.c.b16 %v2398, %v2397
      %v2460 = vpack.c.b16 %v2400, %v2399
      %v2461 = vpack.c.b16 %v2402, %v2401
      %v2462 = vpack.c.b16 %v2404, %v2403
      %v2463 = vpack.c.b16 %v2406, %v2405
      %v2464 = vpack.c.b16 %v2408, %v2407
      %v2465 = vpack.c.b16 %v2410, %v2409
      %v2466 = vpack.c.b16 %v2412, %v2411
      %v2467 = vpack.c.b16 %v2414, %v2413
      %v2468 = vpack.c.b16 %v2416, %v2415
      %v2469 = vpack.c.b16 %v2418, %v2417
      %v2470 = vpack.c.b16 %v2420, %v2419
      %v2471 = vpack.c.b16 %v2422, %v2421
      %v2472 = vpack.c.b16 %v2424, %v2423
      %v2473 = vpack.c.b16 %v2426, %v2425
      %v2474 = vpack.c.b16 %v2428, %v2427
      %v2475 = vpack.c.b16 %v2430, %v2429
      %v2476 = vpack.c.b16 %v2432, %v2431
      %v2477 = vpack.c.b16 %v2434, %v2433
      %v2478 = vpack.c.b16 %v2436, %v2435
      %v2479 = vpack.c.b16 %v2438, %v2437
      %v2480 = vpack.c.b16 %v2440, %v2439
      %v2481 = vpack.c.b16 %v2442, %v2441
      %v2482 = vpack.c.b16 %v2444, %v2443
      %v2483 = vpack.c.b16 %v2446, %v2445
      %v2484 = vpack.c.b16 %v2448, %v2447
      %v2485 = vpack.c.b16 %v2450, %v2449
      %v2486 = vpack.c.b16 %v2452, %v2451
      %v2487 = vpack.c.b16 %v2454, %v2453
      %v2488 = vpack.c.b16 %v2456, %v2455
      %v2553 = vunpack.c.l.b16 %v2297
      %v2554 = vunpack.c.h.b16 %v2297
      %v2555 = vunpack.c.l.b16 %v2298
      %v2556 = vunpack.c.l.b16 %v2299
      %v2557 = vunpack.c.h.b16 %v2299
      %v2558 = vunpack.c.l.b16 %v2300
      %v2559 = vunpack.c.l.b16 %v2301
      %v2560 = vunpack.c.h.b16 %v2301
      %v2561 = vunpack.c.l.b16 %v2302
      %v2562 = vunpack.c.l.b16 %v2303
      %v2563 = vunpack.c.h.b16 %v2303
      %v2564 = vunpack.c.l.b16 %v2304
      %v2565 = vunpack.c.l.b16 %v2305
      %v2566 = vunpack.c.h.b16 %v2305
      %v2567 = vunpack.c.l.b16 %v2306
      %v2568 = vunpack.c.l.b16 %v2307
      %v2569 = vunpack.c.h.b16 %v2307
      %v2570 = vunpack.c.l.b16 %v2308
      %v2571 = vunpack.c.l.b16 %v2309
      %v2572 = vunpack.c.h.b16 %v2309
      %v2573 = vunpack.c.l.b16 %v2310
      %v2574 = vunpack.c.l.b16 %v2311
      %v2575 = vunpack.c.h.b16 %v2311
      %v2576 = vunpack.c.l.b16 %v2312
      %v2577 = vunpack.c.l.b16 %v2313
      %v2578 = vunpack.c.h.b16 %v2313
      %v2579 = vunpack.c.l.b16 %v2314
      %v2580 = vunpack.c.l.b16 %v2315
      %v2581 = vunpack.c.h.b16 %v2315
      %v2582 = vunpack.c.l.b16 %v2316
      %v2583 = vunpack.c.l.b16 %v2317
      %v2584 = vunpack.c.h.b16 %v2317
      %v2585 = vunpack.c.l.b16 %v2318
      %v2586 = vunpack.c.l.b16 %v2319
      %v2587 = vunpack.c.h.b16 %v2319
      %v2588 = vunpack.c.l.b16 %v2320
      %v2589 = vunpack.c.l.b16 %v2321
      %v2590 = vunpack.c.h.b16 %v2321
      %v2591 = vunpack.c.l.b16 %v2322
      %v2592 = vunpack.c.l.b16 %v2323
      %v2593 = vunpack.c.h.b16 %v2323
      %v2594 = vunpack.c.l.b16 %v2324
      %v2595 = vunpack.c.l.b16 %v2325
      %v2596 = vunpack.c.h.b16 %v2325
      %v2597 = vunpack.c.l.b16 %v2326
      %v2598 = vunpack.c.l.b16 %v2327
      %v2599 = vunpack.c.h.b16 %v2327
      %v2600 = vunpack.c.l.b16 %v2328
      %v2601 = vpack.c.b16 %v2556, %v2553
      %v2602 = vpack.c.b16 %v2557, %v2554
      %v2603 = vpack.c.b16 %v2558, %v2555
      %v2604 = vpack.c.b16 %v2562, %v2559
      %v2605 = vpack.c.b16 %v2563, %v2560
      %v2606 = vpack.c.b16 %v2564, %v2561
      %v2607 = vpack.c.b16 %v2568, %v2565
      %v2608 = vpack.c.b16 %v2569, %v2566
      %v2609 = vpack.c.b16 %v2570, %v2567
      %v2610 = vpack.c.b16 %v2574, %v2571
      %v2611 = vpack.c.b16 %v2575, %v2572
      %v2612 = vpack.c.b16 %v2576, %v2573
      %v2613 = vpack.c.b16 %v2580, %v2577
      %v2614 = vpack.c.b16 %v2581, %v2578
      %v2615 = vpack.c.b16 %v2582, %v2579
      %v2616 = vpack.c.b16 %v2586, %v2583
      %v2617 = vpack.c.b16 %v2587, %v2584
      %v2618 = vpack.c.b16 %v2588, %v2585
      %v2619 = vpack.c.b16 %v2592, %v2589
      %v2620 = vpack.c.b16 %v2593, %v2590
      %v2621 = vpack.c.b16 %v2594, %v2591
      %v2622 = vpack.c.b16 %v2598, %v2595
      %v2623 = vpack.c.b16 %v2599, %v2596
      %v2624 = vpack.c.b16 %v2600, %v2597
      %2649 = vmatpush.bf16.msra.mxu0 %v2622
      %2650 = vmatpush.bf16.msra.mxu0 %v2619
      %2651 = vmatpush.bf16.msra.mxu0 %v2616
      %2652 = vmatpush.bf16.msra.mxu0 %v2613
      %2653 = vmatpush.bf16.msra.mxu0 %v2610
      %2654 = vmatpush.bf16.msra.mxu0 %v2607
      %2655 = vmatpush.bf16.msra.mxu0 %v2604
      %2656 = vmatpush.bf16.msra.mxu0 %v2601
      %2657 = vmatmul.bf16.gmra.mxu0 %v2457
      %v2658 = vpop.f32.mrf.mxu0
      %v2659 = vadd.f32 0.0, %v2658
      %v2660 = vpop.f32.mrf.mxu0
      %v2661 = vadd.f32 0.0, %v2660
      %2662 = vmatmul.bf16.gmra.mxu0 %v2458
      %v2663 = vpop.f32.mrf.mxu0
      %v2664 = vpop.f32.mrf.mxu0
      %2665 = vmatmul.bf16.gmra.mxu0 %v2459
      %v2666 = vpop.f32.mrf.mxu0
      %v2667 = vadd.f32 0.0, %v2666
      %v2668 = vpop.f32.mrf.mxu0
      %v2669 = vadd.f32 0.0, %v2668
      %2670 = vmatmul.bf16.gmra.mxu0 %v2460
      %v2671 = vpop.f32.mrf.mxu0
      %v2672 = vpop.f32.mrf.mxu0
      %2673 = vmatmul.bf16.gmra.mxu0 %v2461
      %v2674 = vpop.f32.mrf.mxu0
      %v2675 = vadd.f32 0.0, %v2674
      %v2676 = vpop.f32.mrf.mxu0
      %v2677 = vadd.f32 0.0, %v2676
      %2678 = vmatmul.bf16.gmra.mxu0 %v2462
      %v2679 = vpop.f32.mrf.mxu0
      %v2680 = vpop.f32.mrf.mxu0
      %2681 = vmatmul.bf16.gmra.mxu0 %v2463
      %v2682 = vpop.f32.mrf.mxu0
      %v2683 = vadd.f32 0.0, %v2682
      %v2684 = vpop.f32.mrf.mxu0
      %v2685 = vadd.f32 0.0, %v2684
      %2686 = vmatmul.bf16.gmra.mxu0 %v2464
      %v2687 = vpop.f32.mrf.mxu0
      %v2688 = vpop.f32.mrf.mxu0
      %2689 = vmatmul.bf16.gmra.mxu0 %v2465
      %v2690 = vpop.f32.mrf.mxu0
      %v2691 = vadd.f32 0.0, %v2690
      %v2692 = vpop.f32.mrf.mxu0
      %v2693 = vadd.f32 0.0, %v2692
      %2694 = vmatmul.bf16.gmra.mxu0 %v2466
      %v2695 = vpop.f32.mrf.mxu0
      %v2696 = vpop.f32.mrf.mxu0
      %2697 = vmatmul.bf16.gmra.mxu0 %v2467
      %v2698 = vpop.f32.mrf.mxu0
      %v2699 = vadd.f32 0.0, %v2698
      %v2700 = vpop.f32.mrf.mxu0
      %v2701 = vadd.f32 0.0, %v2700
      %2702 = vmatmul.bf16.gmra.mxu0 %v2468
      %v2703 = vpop.f32.mrf.mxu0
      %v2704 = vpop.f32.mrf.mxu0
      %2705 = vmatmul.bf16.gmra.mxu0 %v2469
      %v2706 = vpop.f32.mrf.mxu0
      %v2707 = vadd.f32 0.0, %v2706
      %v2708 = vpop.f32.mrf.mxu0
      %v2709 = vadd.f32 0.0, %v2708
      %2710 = vmatmul.bf16.gmra.mxu0 %v2470
      %v2711 = vpop.f32.mrf.mxu0
      %v2712 = vpop.f32.mrf.mxu0
      %2713 = vmatmul.bf16.gmra.mxu0 %v2471
      %v2714 = vpop.f32.mrf.mxu0
      %v2715 = vadd.f32 0.0, %v2714
      %v2716 = vpop.f32.mrf.mxu0
      %v2717 = vadd.f32 0.0, %v2716
      %2718 = vmatmul.bf16.gmra.mxu0 %v2472
      %v2719 = vpop.f32.mrf.mxu0
      %v2720 = vpop.f32.mrf.mxu0
      %2721 = vmatmul.bf16.gmra.mxu0 %v2473
      %v2722 = vpop.f32.mrf.mxu0
      %v2723 = vadd.f32 0.0, %v2722
      %v2724 = vpop.f32.mrf.mxu0
      %v2725 = vadd.f32 0.0, %v2724
      %2726 = vmatmul.bf16.gmra.mxu0 %v2474
      %v2727 = vpop.f32.mrf.mxu0
      %v2728 = vpop.f32.mrf.mxu0
      %2729 = vmatmul.bf16.gmra.mxu0 %v2475
      %v2730 = vpop.f32.mrf.mxu0
      %v2731 = vadd.f32 0.0, %v2730
      %v2732 = vpop.f32.mrf.mxu0
      %v2733 = vadd.f32 0.0, %v2732
      %2734 = vmatmul.bf16.gmra.mxu0 %v2476
      %v2735 = vpop.f32.mrf.mxu0
      %v2736 = vpop.f32.mrf.mxu0
      %2737 = vmatmul.bf16.gmra.mxu0 %v2477
      %v2738 = vpop.f32.mrf.mxu0
      %v2739 = vadd.f32 0.0, %v2738
      %v2740 = vpop.f32.mrf.mxu0
      %v2741 = vadd.f32 0.0, %v2740
      %2742 = vmatmul.bf16.gmra.mxu0 %v2478
      %v2743 = vpop.f32.mrf.mxu0
      %v2744 = vpop.f32.mrf.mxu0
      %2745 = vmatmul.bf16.gmra.mxu0 %v2479
      %v2746 = vpop.f32.mrf.mxu0
      %v2747 = vadd.f32 0.0, %v2746
      %v2748 = vpop.f32.mrf.mxu0
      %v2749 = vadd.f32 0.0, %v2748
      %2750 = vmatmul.bf16.gmra.mxu0 %v2480
      %v2751 = vpop.f32.mrf.mxu0
      %v2752 = vpop.f32.mrf.mxu0
      %2753 = vmatmul.bf16.gmra.mxu0 %v2481
      %v2754 = vpop.f32.mrf.mxu0
      %v2755 = vadd.f32 0.0, %v2754
      %v2756 = vpop.f32.mrf.mxu0
      %v2757 = vadd.f32 0.0, %v2756
      %2758 = vmatmul.bf16.gmra.mxu0 %v2482
      %v2759 = vpop.f32.mrf.mxu0
      %v2760 = vpop.f32.mrf.mxu0
      %2761 = vmatmul.bf16.gmra.mxu0 %v2483
      %v2762 = vpop.f32.mrf.mxu0
      %v2763 = vadd.f32 0.0, %v2762
      %v2764 = vpop.f32.mrf.mxu0
      %v2765 = vadd.f32 0.0, %v2764
      %2766 = vmatmul.bf16.gmra.mxu0 %v2484
      %v2767 = vpop.f32.mrf.mxu0
      %v2768 = vpop.f32.mrf.mxu0
      %2769 = vmatmul.bf16.gmra.mxu0 %v2485
      %v2770 = vpop.f32.mrf.mxu0
      %v2771 = vadd.f32 0.0, %v2770
      %v2772 = vpop.f32.mrf.mxu0
      %v2773 = vadd.f32 0.0, %v2772
      %2774 = vmatmul.bf16.gmra.mxu0 %v2486
      %v2775 = vpop.f32.mrf.mxu0
      %v2776 = vpop.f32.mrf.mxu0
      %2777 = vmatmul.bf16.gmra.mxu0 %v2487
      %v2778 = vpop.f32.mrf.mxu0
      %v2779 = vadd.f32 0.0, %v2778
      %v2780 = vpop.f32.mrf.mxu0
      %v2781 = vadd.f32 0.0, %v2780
      %2782 = vmatmul.bf16.gmra.mxu0 %v2488
      %v2783 = vpop.f32.mrf.mxu0
      %v2784 = vpop.f32.mrf.mxu0
      %2785 = vdwg.mxu0
      %2786 = vmatpush.bf16.msra.mxu0 %v2623
      %2787 = vmatpush.bf16.msra.mxu0 %v2620
      %2788 = vmatpush.bf16.msra.mxu0 %v2617
      %2789 = vmatpush.bf16.msra.mxu0 %v2614
      %2790 = vmatpush.bf16.msra.mxu0 %v2611
      %2791 = vmatpush.bf16.msra.mxu0 %v2608
      %2792 = vmatpush.bf16.msra.mxu0 %v2605
      %2793 = vmatpush.bf16.msra.mxu0 %v2602
      %2794 = vmatmul.bf16.gmra.mxu0 %v2457
      %v2795 = vpop.f32.mrf.mxu0
      %v2796 = vadd.f32 0.0, %v2795
      %v2797 = vpop.f32.mrf.mxu0
      %v2798 = vadd.f32 0.0, %v2797
      %2799 = vmatmul.bf16.gmra.mxu0 %v2458
      %v2800 = vpop.f32.mrf.mxu0
      %v2801 = vadd.f32 0.0, %v2800
      %v2802 = vpop.f32.mrf.mxu0
      %2803 = vmatmul.bf16.gmra.mxu0 %v2459
      %v2804 = vpop.f32.mrf.mxu0
      %v2805 = vadd.f32 0.0, %v2804
      %v2806 = vpop.f32.mrf.mxu0
      %v2807 = vadd.f32 0.0, %v2806
      %2808 = vmatmul.bf16.gmra.mxu0 %v2460
      %v2809 = vpop.f32.mrf.mxu0
      %v2810 = vadd.f32 0.0, %v2809
      %v2811 = vpop.f32.mrf.mxu0
      %2812 = vmatmul.bf16.gmra.mxu0 %v2461
      %v2813 = vpop.f32.mrf.mxu0
      %v2814 = vadd.f32 0.0, %v2813
      %v2815 = vpop.f32.mrf.mxu0
      %v2816 = vadd.f32 0.0, %v2815
      %2817 = vmatmul.bf16.gmra.mxu0 %v2462
      %v2818 = vpop.f32.mrf.mxu0
      %v2819 = vadd.f32 0.0, %v2818
      %v2820 = vpop.f32.mrf.mxu0
      %2821 = vmatmul.bf16.gmra.mxu0 %v2463
      %v2822 = vpop.f32.mrf.mxu0
      %v2823 = vadd.f32 0.0, %v2822
      %v2824 = vpop.f32.mrf.mxu0
      %v2825 = vadd.f32 0.0, %v2824
      %2826 = vmatmul.bf16.gmra.mxu0 %v2464
      %v2827 = vpop.f32.mrf.mxu0
      %v2828 = vadd.f32 0.0, %v2827
      %v2829 = vpop.f32.mrf.mxu0
      %2830 = vmatmul.bf16.gmra.mxu0 %v2465
      %v2831 = vpop.f32.mrf.mxu0
      %v2832 = vadd.f32 0.0, %v2831
      %v2833 = vpop.f32.mrf.mxu0
      %v2834 = vadd.f32 0.0, %v2833
      %2835 = vmatmul.bf16.gmra.mxu0 %v2466
      %v2836 = vpop.f32.mrf.mxu0
      %v2837 = vadd.f32 0.0, %v2836
      %v2838 = vpop.f32.mrf.mxu0
      %2839 = vmatmul.bf16.gmra.mxu0 %v2467
      %v2840 = vpop.f32.mrf.mxu0
      %v2841 = vadd.f32 0.0, %v2840
      %v2842 = vpop.f32.mrf.mxu0
      %v2843 = vadd.f32 0.0, %v2842
      %2844 = vmatmul.bf16.gmra.mxu0 %v2468
      %v2845 = vpop.f32.mrf.mxu0
      %v2846 = vadd.f32 0.0, %v2845
      %v2847 = vpop.f32.mrf.mxu0
      %2848 = vmatmul.bf16.gmra.mxu0 %v2469
      %v2849 = vpop.f32.mrf.mxu0
      %v2850 = vadd.f32 0.0, %v2849
      %v2851 = vpop.f32.mrf.mxu0
      %v2852 = vadd.f32 0.0, %v2851
      %2853 = vmatmul.bf16.gmra.mxu0 %v2470
      %v2854 = vpop.f32.mrf.mxu0
      %v2855 = vadd.f32 0.0, %v2854
      %v2856 = vpop.f32.mrf.mxu0
      %2857 = vmatmul.bf16.gmra.mxu0 %v2471
      %v2858 = vpop.f32.mrf.mxu0
      %v2859 = vadd.f32 0.0, %v2858
      %v2860 = vpop.f32.mrf.mxu0
      %v2861 = vadd.f32 0.0, %v2860
      %2862 = vmatmul.bf16.gmra.mxu0 %v2472
      %v2863 = vpop.f32.mrf.mxu0
      %v2864 = vadd.f32 0.0, %v2863
      %v2865 = vpop.f32.mrf.mxu0
      %2866 = vmatmul.bf16.gmra.mxu0 %v2473
      %v2867 = vpop.f32.mrf.mxu0
      %v2868 = vadd.f32 0.0, %v2867
      %v2869 = vpop.f32.mrf.mxu0
      %v2870 = vadd.f32 0.0, %v2869
      %2871 = vmatmul.bf16.gmra.mxu0 %v2474
      %v2872 = vpop.f32.mrf.mxu0
      %v2873 = vadd.f32 0.0, %v2872
      %v2874 = vpop.f32.mrf.mxu0
      %2875 = vmatmul.bf16.gmra.mxu0 %v2475
      %v2876 = vpop.f32.mrf.mxu0
      %v2877 = vadd.f32 0.0, %v2876
      %v2878 = vpop.f32.mrf.mxu0
      %v2879 = vadd.f32 0.0, %v2878
      %2880 = vmatmul.bf16.gmra.mxu0 %v2476
      %v2881 = vpop.f32.mrf.mxu0
      %v2882 = vadd.f32 0.0, %v2881
      %v2883 = vpop.f32.mrf.mxu0
      %2884 = vmatmul.bf16.gmra.mxu0 %v2477
      %v2885 = vpop.f32.mrf.mxu0
      %v2886 = vadd.f32 0.0, %v2885
      %v2887 = vpop.f32.mrf.mxu0
      %v2888 = vadd.f32 0.0, %v2887
      %2889 = vmatmul.bf16.gmra.mxu0 %v2478
      %v2890 = vpop.f32.mrf.mxu0
      %v2891 = vadd.f32 0.0, %v2890
      %v2892 = vpop.f32.mrf.mxu0
      %2893 = vmatmul.bf16.gmra.mxu0 %v2479
      %v2894 = vpop.f32.mrf.mxu0
      %v2895 = vadd.f32 0.0, %v2894
      %v2896 = vpop.f32.mrf.mxu0
      %v2897 = vadd.f32 0.0, %v2896
      %2898 = vmatmul.bf16.gmra.mxu0 %v2480
      %v2899 = vpop.f32.mrf.mxu0
      %v2900 = vadd.f32 0.0, %v2899
      %v2901 = vpop.f32.mrf.mxu0
      %2902 = vmatmul.bf16.gmra.mxu0 %v2481
      %v2903 = vpop.f32.mrf.mxu0
      %v2904 = vadd.f32 0.0, %v2903
      %v2905 = vpop.f32.mrf.mxu0
      %v2906 = vadd.f32 0.0, %v2905
      %2907 = vmatmul.bf16.gmra.mxu0 %v2482
      %v2908 = vpop.f32.mrf.mxu0
      %v2909 = vadd.f32 0.0, %v2908
      %v2910 = vpop.f32.mrf.mxu0
      %2911 = vmatmul.bf16.gmra.mxu0 %v2483
      %v2912 = vpop.f32.mrf.mxu0
      %v2913 = vadd.f32 0.0, %v2912
      %v2914 = vpop.f32.mrf.mxu0
      %v2915 = vadd.f32 0.0, %v2914
      %2916 = vmatmul.bf16.gmra.mxu0 %v2484
      %v2917 = vpop.f32.mrf.mxu0
      %v2918 = vadd.f32 0.0, %v2917
      %v2919 = vpop.f32.mrf.mxu0
      %2920 = vmatmul.bf16.gmra.mxu0 %v2485
      %v2921 = vpop.f32.mrf.mxu0
      %v2922 = vadd.f32 0.0, %v2921
      %v2923 = vpop.f32.mrf.mxu0
      %v2924 = vadd.f32 0.0, %v2923
      %2925 = vmatmul.bf16.gmra.mxu0 %v2486
      %v2926 = vpop.f32.mrf.mxu0
      %v2927 = vadd.f32 0.0, %v2926
      %v2928 = vpop.f32.mrf.mxu0
      %2929 = vmatmul.bf16.gmra.mxu0 %v2487
      %v2930 = vpop.f32.mrf.mxu0
      %v2931 = vadd.f32 0.0, %v2930
      %v2932 = vpop.f32.mrf.mxu0
      %v2933 = vadd.f32 0.0, %v2932
      %2934 = vmatmul.bf16.gmra.mxu0 %v2488
      %v2935 = vpop.f32.mrf.mxu0
      %v2936 = vadd.f32 0.0, %v2935
      %v2937 = vpop.f32.mrf.mxu0
      %2938 = vdwg.mxu0
      %2939 = vmatpush.bf16.msra.mxu0 %v2624
      %2940 = vmatpush.bf16.msra.mxu0 %v2621
      %2941 = vmatpush.bf16.msra.mxu0 %v2618
      %2942 = vmatpush.bf16.msra.mxu0 %v2615
      %2943 = vmatpush.bf16.msra.mxu0 %v2612
      %2944 = vmatpush.bf16.msra.mxu0 %v2609
      %2945 = vmatpush.bf16.msra.mxu0 %v2606
      %2946 = vmatpush.bf16.msra.mxu0 %v2603
      %2947 = vmatmul.bf16.gmra.mxu0 %v2457
      %v2948 = vpop.f32.mrf.mxu0
      %v2949 = vadd.f32 0.0, %v2948
      %v2950 = vpop.f32.mrf.mxu0
      %v2951 = vadd.f32 0.0, %v2950
      %2952 = vmatmul.bf16.gmra.mxu0 %v2458
      %v2953 = vpop.f32.mrf.mxu0
      %v2954 = vadd.f32 0.0, %v2953
      %v2955 = vpop.f32.mrf.mxu0
      %2956 = vmatmul.bf16.gmra.mxu0 %v2459
      %v2957 = vpop.f32.mrf.mxu0
      %v2958 = vadd.f32 0.0, %v2957
      %v2959 = vpop.f32.mrf.mxu0
      %v2960 = vadd.f32 0.0, %v2959
      %2961 = vmatmul.bf16.gmra.mxu0 %v2460
      %v2962 = vpop.f32.mrf.mxu0
      %v2963 = vadd.f32 0.0, %v2962
      %v2964 = vpop.f32.mrf.mxu0
      %2965 = vmatmul.bf16.gmra.mxu0 %v2461
      %v2966 = vpop.f32.mrf.mxu0
      %v2967 = vadd.f32 0.0, %v2966
      %v2968 = vpop.f32.mrf.mxu0
      %v2969 = vadd.f32 0.0, %v2968
      %2970 = vmatmul.bf16.gmra.mxu0 %v2462
      %v2971 = vpop.f32.mrf.mxu0
      %v2972 = vadd.f32 0.0, %v2971
      %v2973 = vpop.f32.mrf.mxu0
      %2974 = vmatmul.bf16.gmra.mxu0 %v2463
      %v2975 = vpop.f32.mrf.mxu0
      %v2976 = vadd.f32 0.0, %v2975
      %v2977 = vpop.f32.mrf.mxu0
      %v2978 = vadd.f32 0.0, %v2977
      %2979 = vmatmul.bf16.gmra.mxu0 %v2464
      %v2980 = vpop.f32.mrf.mxu0
      %v2981 = vadd.f32 0.0, %v2980
      %v2982 = vpop.f32.mrf.mxu0
      %2983 = vmatmul.bf16.gmra.mxu0 %v2465
      %v2984 = vpop.f32.mrf.mxu0
      %v2985 = vadd.f32 0.0, %v2984
      %v2986 = vpop.f32.mrf.mxu0
      %v2987 = vadd.f32 0.0, %v2986
      %2988 = vmatmul.bf16.gmra.mxu0 %v2466
      %v2989 = vpop.f32.mrf.mxu0
      %v2990 = vadd.f32 0.0, %v2989
      %v2991 = vpop.f32.mrf.mxu0
      %2992 = vmatmul.bf16.gmra.mxu0 %v2467
      %v2993 = vpop.f32.mrf.mxu0
      %v2994 = vadd.f32 0.0, %v2993
      %v2995 = vpop.f32.mrf.mxu0
      %v2996 = vadd.f32 0.0, %v2995
      %2997 = vmatmul.bf16.gmra.mxu0 %v2468
      %v2998 = vpop.f32.mrf.mxu0
      %v2999 = vadd.f32 0.0, %v2998
      %v3000 = vpop.f32.mrf.mxu0
      %3001 = vmatmul.bf16.gmra.mxu0 %v2469
      %v3002 = vpop.f32.mrf.mxu0
      %v3003 = vadd.f32 0.0, %v3002
      %v3004 = vpop.f32.mrf.mxu0
      %v3005 = vadd.f32 0.0, %v3004
      %3006 = vmatmul.bf16.gmra.mxu0 %v2470
      %v3007 = vpop.f32.mrf.mxu0
      %v3008 = vadd.f32 0.0, %v3007
      %v3009 = vpop.f32.mrf.mxu0
      %3010 = vmatmul.bf16.gmra.mxu0 %v2471
      %v3011 = vpop.f32.mrf.mxu0
      %v3012 = vadd.f32 0.0, %v3011
      %v3013 = vpop.f32.mrf.mxu0
      %v3014 = vadd.f32 0.0, %v3013
      %3015 = vmatmul.bf16.gmra.mxu0 %v2472
      %v3016 = vpop.f32.mrf.mxu0
      %v3017 = vadd.f32 0.0, %v3016
      %v3018 = vpop.f32.mrf.mxu0
      %3019 = vmatmul.bf16.gmra.mxu0 %v2473
      %v3020 = vpop.f32.mrf.mxu0
      %v3021 = vadd.f32 0.0, %v3020
      %v3022 = vpop.f32.mrf.mxu0
      %v3023 = vadd.f32 0.0, %v3022
      %3024 = vmatmul.bf16.gmra.mxu0 %v2474
      %v3025 = vpop.f32.mrf.mxu0
      %v3026 = vadd.f32 0.0, %v3025
      %v3027 = vpop.f32.mrf.mxu0
      %3028 = vmatmul.bf16.gmra.mxu0 %v2475
      %v3029 = vpop.f32.mrf.mxu0
      %v3030 = vadd.f32 0.0, %v3029
      %v3031 = vpop.f32.mrf.mxu0
      %v3032 = vadd.f32 0.0, %v3031
      %3033 = vmatmul.bf16.gmra.mxu0 %v2476
      %v3034 = vpop.f32.mrf.mxu0
      %v3035 = vadd.f32 0.0, %v3034
      %v3036 = vpop.f32.mrf.mxu0
      %3037 = vmatmul.bf16.gmra.mxu0 %v2477
      %v3038 = vpop.f32.mrf.mxu0
      %v3039 = vadd.f32 0.0, %v3038
      %v3040 = vpop.f32.mrf.mxu0
      %v3041 = vadd.f32 0.0, %v3040
      %3042 = vmatmul.bf16.gmra.mxu0 %v2478
      %v3043 = vpop.f32.mrf.mxu0
      %v3044 = vadd.f32 0.0, %v3043
      %v3045 = vpop.f32.mrf.mxu0
      %3046 = vmatmul.bf16.gmra.mxu0 %v2479
      %v3047 = vpop.f32.mrf.mxu0
      %v3048 = vadd.f32 0.0, %v3047
      %v3049 = vpop.f32.mrf.mxu0
      %v3050 = vadd.f32 0.0, %v3049
      %3051 = vmatmul.bf16.gmra.mxu0 %v2480
      %v3052 = vpop.f32.mrf.mxu0
      %v3053 = vadd.f32 0.0, %v3052
      %v3054 = vpop.f32.mrf.mxu0
      %3055 = vmatmul.bf16.gmra.mxu0 %v2481
      %v3056 = vpop.f32.mrf.mxu0
      %v3057 = vadd.f32 0.0, %v3056
      %v3058 = vpop.f32.mrf.mxu0
      %v3059 = vadd.f32 0.0, %v3058
      %3060 = vmatmul.bf16.gmra.mxu0 %v2482
      %v3061 = vpop.f32.mrf.mxu0
      %v3062 = vadd.f32 0.0, %v3061
      %v3063 = vpop.f32.mrf.mxu0
      %3064 = vmatmul.bf16.gmra.mxu0 %v2483
      %v3065 = vpop.f32.mrf.mxu0
      %v3066 = vadd.f32 0.0, %v3065
      %v3067 = vpop.f32.mrf.mxu0
      %v3068 = vadd.f32 0.0, %v3067
      %3069 = vmatmul.bf16.gmra.mxu0 %v2484
      %v3070 = vpop.f32.mrf.mxu0
      %v3071 = vadd.f32 0.0, %v3070
      %v3072 = vpop.f32.mrf.mxu0
      %3073 = vmatmul.bf16.gmra.mxu0 %v2485
      %v3074 = vpop.f32.mrf.mxu0
      %v3075 = vadd.f32 0.0, %v3074
      %v3076 = vpop.f32.mrf.mxu0
      %v3077 = vadd.f32 0.0, %v3076
      %3078 = vmatmul.bf16.gmra.mxu0 %v2486
      %v3079 = vpop.f32.mrf.mxu0
      %v3080 = vadd.f32 0.0, %v3079
      %v3081 = vpop.f32.mrf.mxu0
      %3082 = vmatmul.bf16.gmra.mxu0 %v2487
      %v3083 = vpop.f32.mrf.mxu0
      %v3084 = vadd.f32 0.0, %v3083
      %v3085 = vpop.f32.mrf.mxu0
      %v3086 = vadd.f32 0.0, %v3085
      %3087 = vmatmul.bf16.gmra.mxu0 %v2488
      %v3088 = vpop.f32.mrf.mxu0
      %v3089 = vadd.f32 0.0, %v3088
      %v3090 = vpop.f32.mrf.mxu0
      %3091 = vdwg.mxu0
      %v3092 = vld [vmem:[#allocation4] sm:$0xff]
      %v3093 = vld [vmem:[#allocation4 + $0x8] sm:$0xff]
      %v3094 = vld [vmem:[#allocation4 + $0x10] sm:$0xff]
      %v3095 = vld [vmem:[#allocation4 + $0x18] sm:$0xff]
      %v3096 = vld [vmem:[#allocation4 + $0x20] sm:$0xff]
      %v3097 = vld [vmem:[#allocation4 + $0x28] sm:$0xff]
      %v3098 = vld [vmem:[#allocation4 + $0x30] sm:$0xff]
      %v3099 = vld [vmem:[#allocation4 + $0x38] sm:$0xff]
      %v3100 = vld [vmem:[#allocation4 + $0x40] sm:$0xff]
      %v3101 = vld [vmem:[#allocation4 + $0x48] sm:$0xff]
      %v3102 = vld [vmem:[#allocation4 + $0x50] sm:$0xff]
      %v3103 = vld [vmem:[#allocation4 + $0x58] sm:$0xff]
      %v3104 = vld [vmem:[#allocation4 + $0x60] sm:$0xff]
      %v3105 = vld [vmem:[#allocation4 + $0x68] sm:$0xff]
      %v3106 = vld [vmem:[#allocation4 + $0x70] sm:$0xff]
      %v3107 = vld [vmem:[#allocation4 + $0x78] sm:$0xff]
      %v3108 = vld [vmem:[#allocation4 + $0x80] sm:$0xff]
      %v3109 = vld [vmem:[#allocation4 + $0x88] sm:$0xff]
      %v3110 = vld [vmem:[#allocation4 + $0x90] sm:$0xff]
      %v3111 = vld [vmem:[#allocation4 + $0x98] sm:$0xff]
      %v3112 = vld [vmem:[#allocation4 + $0xa0] sm:$0xff]
      %v3113 = vld [vmem:[#allocation4 + $0xa8] sm:$0xff]
      %v3114 = vld [vmem:[#allocation4 + $0xb0] sm:$0xff]
      %v3115 = vld [vmem:[#allocation4 + $0xb8] sm:$0xff]
      %v3116 = vld [vmem:[#allocation4 + $0xc0] sm:$0xff]
      %v3117 = vld [vmem:[#allocation4 + $0xc8] sm:$0xff]
      %v3118 = vld [vmem:[#allocation4 + $0xd0] sm:$0xff]
      %v3119 = vld [vmem:[#allocation4 + $0xd8] sm:$0xff]
      %v3120 = vld [vmem:[#allocation4 + $0xe0] sm:$0xff]
      %v3121 = vld [vmem:[#allocation4 + $0xe8] sm:$0xff]
      %v3122 = vld [vmem:[#allocation4 + $0xf0] sm:$0xff]
      %v3123 = vld [vmem:[#allocation4 + $0xf8] sm:$0xff]
      %v3172 = vrot.slane %v2796, 1
      %v3173 = vrot.slane %v2798, 1
      %v3174 = vsel %vm1830, %v3172, %v3173
      %v3175 = vrot.slane %v2801, 1
      %v3176 = vsel %vm1830, %v3173, %v3175
      %v3177 = vrot.slane %v2805, 1
      %v3178 = vrot.slane %v2807, 1
      %v3179 = vsel %vm1830, %v3177, %v3178
      %v3180 = vrot.slane %v2810, 1
      %v3181 = vsel %vm1830, %v3178, %v3180
      %v3182 = vrot.slane %v2814, 1
      %v3183 = vrot.slane %v2816, 1
      %v3184 = vsel %vm1830, %v3182, %v3183
      %v3185 = vrot.slane %v2819, 1
      %v3186 = vsel %vm1830, %v3183, %v3185
      %v3187 = vrot.slane %v2823, 1
      %v3188 = vrot.slane %v2825, 1
      %v3189 = vsel %vm1830, %v3187, %v3188
      %v3190 = vrot.slane %v2828, 1
      %v3191 = vsel %vm1830, %v3188, %v3190
      %v3192 = vrot.slane %v2832, 1
      %v3193 = vrot.slane %v2834, 1
      %v3194 = vsel %vm1830, %v3192, %v3193
      %v3195 = vrot.slane %v2837, 1
      %v3196 = vsel %vm1830, %v3193, %v3195
      %v3197 = vrot.slane %v2841, 1
      %v3198 = vrot.slane %v2843, 1
      %v3199 = vsel %vm1830, %v3197, %v3198
      %v3200 = vrot.slane %v2846, 1
      %v3201 = vsel %vm1830, %v3198, %v3200
      %v3202 = vrot.slane %v2850, 1
      %v3203 = vrot.slane %v2852, 1
      %v3204 = vsel %vm1830, %v3202, %v3203
      %v3205 = vrot.slane %v2855, 1
      %v3206 = vsel %vm1830, %v3203, %v3205
      %v3207 = vrot.slane %v2859, 1
      %v3208 = vrot.slane %v2861, 1
      %v3209 = vsel %vm1830, %v3207, %v3208
      %v3210 = vrot.slane %v2864, 1
      %v3211 = vsel %vm1830, %v3208, %v3210
      %v3212 = vrot.slane %v2868, 1
      %v3213 = vrot.slane %v2870, 1
      %v3214 = vsel %vm1830, %v3212, %v3213
      %v3215 = vrot.slane %v2873, 1
      %v3216 = vsel %vm1830, %v3213, %v3215
      %v3217 = vrot.slane %v2877, 1
      %v3218 = vrot.slane %v2879, 1
      %v3219 = vsel %vm1830, %v3217, %v3218
      %v3220 = vrot.slane %v2882, 1
      %v3221 = vsel %vm1830, %v3218, %v3220
      %v3222 = vrot.slane %v2886, 1
      %v3223 = vrot.slane %v2888, 1
      %v3224 = vsel %vm1830, %v3222, %v3223
      %v3225 = vrot.slane %v2891, 1
      %v3226 = vsel %vm1830, %v3223, %v3225
      %v3227 = vrot.slane %v2895, 1
      %v3228 = vrot.slane %v2897, 1
      %v3229 = vsel %vm1830, %v3227, %v3228
      %v3230 = vrot.slane %v2900, 1
      %v3231 = vsel %vm1830, %v3228, %v3230
      %v3232 = vrot.slane %v2904, 1
      %v3233 = vrot.slane %v2906, 1
      %v3234 = vsel %vm1830, %v3232, %v3233
      %v3235 = vrot.slane %v2909, 1
      %v3236 = vsel %vm1830, %v3233, %v3235
      %v3237 = vrot.slane %v2913, 1
      %v3238 = vrot.slane %v2915, 1
      %v3239 = vsel %vm1830, %v3237, %v3238
      %v3240 = vrot.slane %v2918, 1
      %v3241 = vsel %vm1830, %v3238, %v3240
      %v3242 = vrot.slane %v2922, 1
      %v3243 = vrot.slane %v2924, 1
      %v3244 = vsel %vm1830, %v3242, %v3243
      %v3245 = vrot.slane %v2927, 1
      %v3246 = vsel %vm1830, %v3243, %v3245
      %v3247 = vrot.slane %v2931, 1
      %v3248 = vrot.slane %v2933, 1
      %v3249 = vsel %vm1830, %v3247, %v3248
      %v3250 = vrot.slane %v2936, 1
      %v3251 = vsel %vm1830, %v3248, %v3250
      %v3284 = vadd.f32 %v2659, %v3174
      %v3285 = vadd.f32 %v2661, %v3176
      %v3286 = vadd.f32 %v2667, %v3179
      %v3287 = vadd.f32 %v2669, %v3181
      %v3288 = vadd.f32 %v2675, %v3184
      %v3289 = vadd.f32 %v2677, %v3186
      %v3290 = vadd.f32 %v2683, %v3189
      %v3291 = vadd.f32 %v2685, %v3191
      %v3292 = vadd.f32 %v2691, %v3194
      %v3293 = vadd.f32 %v2693, %v3196
      %v3294 = vadd.f32 %v2699, %v3199
      %v3295 = vadd.f32 %v2701, %v3201
      %v3296 = vadd.f32 %v2707, %v3204
      %v3297 = vadd.f32 %v2709, %v3206
      %v3298 = vadd.f32 %v2715, %v3209
      %v3299 = vadd.f32 %v2717, %v3211
      %v3300 = vadd.f32 %v2723, %v3214
      %v3301 = vadd.f32 %v2725, %v3216
      %v3302 = vadd.f32 %v2731, %v3219
      %v3303 = vadd.f32 %v2733, %v3221
      %v3304 = vadd.f32 %v2739, %v3224
      %v3305 = vadd.f32 %v2741, %v3226
      %v3306 = vadd.f32 %v2747, %v3229
      %v3307 = vadd.f32 %v2749, %v3231
      %v3308 = vadd.f32 %v2755, %v3234
      %v3309 = vadd.f32 %v2757, %v3236
      %v3310 = vadd.f32 %v2763, %v3239
      %v3311 = vadd.f32 %v2765, %v3241
      %v3312 = vadd.f32 %v2771, %v3244
      %v3313 = vadd.f32 %v2773, %v3246
      %v3314 = vadd.f32 %v2779, %v3249
      %v3315 = vadd.f32 %v2781, %v3251
      %v3364 = vrot.slane %v2949, 2
      %v3365 = vrot.slane %v2951, 2
      %v3366 = vsel %vm2023, %v3364, %v3365
      %v3367 = vrot.slane %v2954, 2
      %v3368 = vsel %vm2023, %v3365, %v3367
      %v3369 = vrot.slane %v2958, 2
      %v3370 = vrot.slane %v2960, 2
      %v3371 = vsel %vm2023, %v3369, %v3370
      %v3372 = vrot.slane %v2963, 2
      %v3373 = vsel %vm2023, %v3370, %v3372
      %v3374 = vrot.slane %v2967, 2
      %v3375 = vrot.slane %v2969, 2
      %v3376 = vsel %vm2023, %v3374, %v3375
      %v3377 = vrot.slane %v2972, 2
      %v3378 = vsel %vm2023, %v3375, %v3377
      %v3379 = vrot.slane %v2976, 2
      %v3380 = vrot.slane %v2978, 2
      %v3381 = vsel %vm2023, %v3379, %v3380
      %v3382 = vrot.slane %v2981, 2
      %v3383 = vsel %vm2023, %v3380, %v3382
      %v3384 = vrot.slane %v2985, 2
      %v3385 = vrot.slane %v2987, 2
      %v3386 = vsel %vm2023, %v3384, %v3385
      %v3387 = vrot.slane %v2990, 2
      %v3388 = vsel %vm2023, %v3385, %v3387
      %v3389 = vrot.slane %v2994, 2
      %v3390 = vrot.slane %v2996, 2
      %v3391 = vsel %vm2023, %v3389, %v3390
      %v3392 = vrot.slane %v2999, 2
      %v3393 = vsel %vm2023, %v3390, %v3392
      %v3394 = vrot.slane %v3003, 2
      %v3395 = vrot.slane %v3005, 2
      %v3396 = vsel %vm2023, %v3394, %v3395
      %v3397 = vrot.slane %v3008, 2
      %v3398 = vsel %vm2023, %v3395, %v3397
      %v3399 = vrot.slane %v3012, 2
      %v3400 = vrot.slane %v3014, 2
      %v3401 = vsel %vm2023, %v3399, %v3400
      %v3402 = vrot.slane %v3017, 2
      %v3403 = vsel %vm2023, %v3400, %v3402
      %v3404 = vrot.slane %v3021, 2
      %v3405 = vrot.slane %v3023, 2
      %v3406 = vsel %vm2023, %v3404, %v3405
      %v3407 = vrot.slane %v3026, 2
      %v3408 = vsel %vm2023, %v3405, %v3407
      %v3409 = vrot.slane %v3030, 2
      %v3410 = vrot.slane %v3032, 2
      %v3411 = vsel %vm2023, %v3409, %v3410
      %v3412 = vrot.slane %v3035, 2
      %v3413 = vsel %vm2023, %v3410, %v3412
      %v3414 = vrot.slane %v3039, 2
      %v3415 = vrot.slane %v3041, 2
      %v3416 = vsel %vm2023, %v3414, %v3415
      %v3417 = vrot.slane %v3044, 2
      %v3418 = vsel %vm2023, %v3415, %v3417
      %v3419 = vrot.slane %v3048, 2
      %v3420 = vrot.slane %v3050, 2
      %v3421 = vsel %vm2023, %v3419, %v3420
      %v3422 = vrot.slane %v3053, 2
      %v3423 = vsel %vm2023, %v3420, %v3422
      %v3424 = vrot.slane %v3057, 2
      %v3425 = vrot.slane %v3059, 2
      %v3426 = vsel %vm2023, %v3424, %v3425
      %v3427 = vrot.slane %v3062, 2
      %v3428 = vsel %vm2023, %v3425, %v3427
      %v3429 = vrot.slane %v3066, 2
      %v3430 = vrot.slane %v3068, 2
      %v3431 = vsel %vm2023, %v3429, %v3430
      %v3432 = vrot.slane %v3071, 2
      %v3433 = vsel %vm2023, %v3430, %v3432
      %v3434 = vrot.slane %v3075, 2
      %v3435 = vrot.slane %v3077, 2
      %v3436 = vsel %vm2023, %v3434, %v3435
      %v3437 = vrot.slane %v3080, 2
      %v3438 = vsel %vm2023, %v3435, %v3437
      %v3439 = vrot.slane %v3084, 2
      %v3440 = vrot.slane %v3086, 2
      %v3441 = vsel %vm2023, %v3439, %v3440
      %v3442 = vrot.slane %v3089, 2
      %v3443 = vsel %vm2023, %v3440, %v3442
      %v3476 = vadd.f32 %v3284, %v3366
      %v3477 = vadd.f32 %v3285, %v3368
      %v3478 = vadd.f32 %v3286, %v3371
      %v3479 = vadd.f32 %v3287, %v3373
      %v3480 = vadd.f32 %v3288, %v3376
      %v3481 = vadd.f32 %v3289, %v3378
      %v3482 = vadd.f32 %v3290, %v3381
      %v3483 = vadd.f32 %v3291, %v3383
      %v3484 = vadd.f32 %v3292, %v3386
      %v3485 = vadd.f32 %v3293, %v3388
      %v3486 = vadd.f32 %v3294, %v3391
      %v3487 = vadd.f32 %v3295, %v3393
      %v3488 = vadd.f32 %v3296, %v3396
      %v3489 = vadd.f32 %v3297, %v3398
      %v3490 = vadd.f32 %v3298, %v3401
      %v3491 = vadd.f32 %v3299, %v3403
      %v3492 = vadd.f32 %v3300, %v3406
      %v3493 = vadd.f32 %v3301, %v3408
      %v3494 = vadd.f32 %v3302, %v3411
      %v3495 = vadd.f32 %v3303, %v3413
      %v3496 = vadd.f32 %v3304, %v3416
      %v3497 = vadd.f32 %v3305, %v3418
      %v3498 = vadd.f32 %v3306, %v3421
      %v3499 = vadd.f32 %v3307, %v3423
      %v3500 = vadd.f32 %v3308, %v3426
      %v3501 = vadd.f32 %v3309, %v3428
      %v3502 = vadd.f32 %v3310, %v3431
      %v3503 = vadd.f32 %v3311, %v3433
      %v3504 = vadd.f32 %v3312, %v3436
      %v3505 = vadd.f32 %v3313, %v3438
      %v3506 = vadd.f32 %v3314, %v3441
      %v3507 = vadd.f32 %v3315, %v3443
      %v3508 = vadd.f32 %v3092, %v3476
      %v3509 = vadd.f32 %v3093, %v3477
      %v3510 = vadd.f32 %v3094, %v3478
      %v3511 = vadd.f32 %v3095, %v3479
      %v3512 = vadd.f32 %v3096, %v3480
      %v3513 = vadd.f32 %v3097, %v3481
      %v3514 = vadd.f32 %v3098, %v3482
      %v3515 = vadd.f32 %v3099, %v3483
      %v3516 = vadd.f32 %v3100, %v3484
      %v3517 = vadd.f32 %v3101, %v3485
      %v3518 = vadd.f32 %v3102, %v3486
      %v3519 = vadd.f32 %v3103, %v3487
      %v3520 = vadd.f32 %v3104, %v3488
      %v3521 = vadd.f32 %v3105, %v3489
      %v3522 = vadd.f32 %v3106, %v3490
      %v3523 = vadd.f32 %v3107, %v3491
      %v3524 = vadd.f32 %v3108, %v3492
      %v3525 = vadd.f32 %v3109, %v3493
      %v3526 = vadd.f32 %v3110, %v3494
      %v3527 = vadd.f32 %v3111, %v3495
      %v3528 = vadd.f32 %v3112, %v3496
      %v3529 = vadd.f32 %v3113, %v3497
      %v3530 = vadd.f32 %v3114, %v3498
      %v3531 = vadd.f32 %v3115, %v3499
      %v3532 = vadd.f32 %v3116, %v3500
      %v3533 = vadd.f32 %v3117, %v3501
      %v3534 = vadd.f32 %v3118, %v3502
      %v3535 = vadd.f32 %v3119, %v3503
      %v3536 = vadd.f32 %v3120, %v3504
      %v3537 = vadd.f32 %v3121, %v3505
      %v3538 = vadd.f32 %v3122, %v3506
      %v3539 = vadd.f32 %v3123, %v3507
      %3540 = vst [vmem:[#allocation4] sm:$0xff] %v3508
      %3541 = vst [vmem:[#allocation4 + $0x8] sm:$0xff] %v3509
      %3542 = vst [vmem:[#allocation4 + $0x10] sm:$0xff] %v3510
      %3543 = vst [vmem:[#allocation4 + $0x18] sm:$0xff] %v3511
      %3544 = vst [vmem:[#allocation4 + $0x20] sm:$0xff] %v3512
      %3545 = vst [vmem:[#allocation4 + $0x28] sm:$0xff] %v3513
      %3546 = vst [vmem:[#allocation4 + $0x30] sm:$0xff] %v3514
      %3547 = vst [vmem:[#allocation4 + $0x38] sm:$0xff] %v3515
      %3548 = vst [vmem:[#allocation4 + $0x40] sm:$0xff] %v3516
      %3549 = vst [vmem:[#allocation4 + $0x48] sm:$0xff] %v3517
      %3550 = vst [vmem:[#allocation4 + $0x50] sm:$0xff] %v3518
      %3551 = vst [vmem:[#allocation4 + $0x58] sm:$0xff] %v3519
      %3552 = vst [vmem:[#allocation4 + $0x60] sm:$0xff] %v3520
      %3553 = vst [vmem:[#allocation4 + $0x68] sm:$0xff] %v3521
      %3554 = vst [vmem:[#allocation4 + $0x70] sm:$0xff] %v3522
      %3555 = vst [vmem:[#allocation4 + $0x78] sm:$0xff] %v3523
      %3556 = vst [vmem:[#allocation4 + $0x80] sm:$0xff] %v3524
      %3557 = vst [vmem:[#allocation4 + $0x88] sm:$0xff] %v3525
      %3558 = vst [vmem:[#allocation4 + $0x90] sm:$0xff] %v3526
      %3559 = vst [vmem:[#allocation4 + $0x98] sm:$0xff] %v3527
      %3560 = vst [vmem:[#allocation4 + $0xa0] sm:$0xff] %v3528
      %3561 = vst [vmem:[#allocation4 + $0xa8] sm:$0xff] %v3529
      %3562 = vst [vmem:[#allocation4 + $0xb0] sm:$0xff] %v3530
      %3563 = vst [vmem:[#allocation4 + $0xb8] sm:$0xff] %v3531
      %3564 = vst [vmem:[#allocation4 + $0xc0] sm:$0xff] %v3532
      %3565 = vst [vmem:[#allocation4 + $0xc8] sm:$0xff] %v3533
      %3566 = vst [vmem:[#allocation4 + $0xd0] sm:$0xff] %v3534
      %3567 = vst [vmem:[#allocation4 + $0xd8] sm:$0xff] %v3535
      %3568 = vst [vmem:[#allocation4 + $0xe0] sm:$0xff] %v3536
      %3569 = vst [vmem:[#allocation4 + $0xe8] sm:$0xff] %v3537
      %3570 = vst [vmem:[#allocation4 + $0xf0] sm:$0xff] %v3538
      %3571 = vst [vmem:[#allocation4 + $0xf8] sm:$0xff] %v3539
      %s3572 = scalar_lea.vmem [#allocation2], 32
      %v3573 = vld [vmem:[%s3572] sm:$0xf]
      %v3574 = vld [vmem:[%s3572 + $0x4] sm:$0xf]
      %v3575 = vld [vmem:[%s3572 + $0x8] sm:$0xf]
      %v3576 = vld [vmem:[%s3572 + $0xc] sm:$0xf]
      %v3577 = vld [vmem:[%s3572 + $0x10] sm:$0xf]
      %v3578 = vld [vmem:[%s3572 + $0x14] sm:$0xf]
      %v3579 = vld [vmem:[%s3572 + $0x18] sm:$0xf]
      %v3580 = vld [vmem:[%s3572 + $0x1c] sm:$0xf]
      %v3581 = vld [vmem:[%s3572 + $0x20] sm:$0xf]
      %v3582 = vld [vmem:[%s3572 + $0x24] sm:$0xf]
      %v3583 = vld [vmem:[%s3572 + $0x28] sm:$0xf]
      %v3584 = vld [vmem:[%s3572 + $0x2c] sm:$0xf]
      %v3585 = vld [vmem:[%s3572 + $0x30] sm:$0xf]
      %v3586 = vld [vmem:[%s3572 + $0x34] sm:$0xf]
      %v3587 = vld [vmem:[%s3572 + $0x38] sm:$0xf]
      %v3588 = vld [vmem:[%s3572 + $0x3c] sm:$0xf]
      %v3589 = vld [vmem:[%s3572 + $0x40] sm:$0xf]
      %v3590 = vld [vmem:[%s3572 + $0x44] sm:$0xf]
      %v3591 = vld [vmem:[%s3572 + $0x48] sm:$0xf]
      %v3592 = vld [vmem:[%s3572 + $0x4c] sm:$0xf]
      %v3593 = vld [vmem:[%s3572 + $0x50] sm:$0xf]
      %v3594 = vld [vmem:[%s3572 + $0x54] sm:$0xf]
      %v3595 = vld [vmem:[%s3572 + $0x58] sm:$0xf]
      %v3596 = vld [vmem:[%s3572 + $0x5c] sm:$0xf]
      %v3597 = vld [vmem:[%s3572 + $0x60] sm:$0xf]
      %v3598 = vld [vmem:[%s3572 + $0x64] sm:$0xf]
      %v3599 = vld [vmem:[%s3572 + $0x68] sm:$0xf]
      %v3600 = vld [vmem:[%s3572 + $0x6c] sm:$0xf]
      %v3601 = vld [vmem:[%s3572 + $0x70] sm:$0xf]
      %v3602 = vld [vmem:[%s3572 + $0x74] sm:$0xf]
      %v3603 = vld [vmem:[%s3572 + $0x78] sm:$0xf]
      %v3604 = vld [vmem:[%s3572 + $0x7c] sm:$0xf]
      %v3605 = vld [vmem:[%s3572 + $0x80] sm:$0xf]
      %v3606 = vld [vmem:[%s3572 + $0x84] sm:$0xf]
      %v3607 = vld [vmem:[%s3572 + $0x88] sm:$0xf]
      %v3608 = vld [vmem:[%s3572 + $0x8c] sm:$0xf]
      %v3609 = vld [vmem:[%s3572 + $0x90] sm:$0xf]
      %v3610 = vld [vmem:[%s3572 + $0x94] sm:$0xf]
      %v3611 = vld [vmem:[%s3572 + $0x98] sm:$0xf]
      %v3612 = vld [vmem:[%s3572 + $0x9c] sm:$0xf]
      %v3613 = vld [vmem:[%s3572 + $0xa0] sm:$0xf]
      %v3614 = vld [vmem:[%s3572 + $0xa4] sm:$0xf]
      %v3615 = vld [vmem:[%s3572 + $0xa8] sm:$0xf]
      %v3616 = vld [vmem:[%s3572 + $0xac] sm:$0xf]
      %v3617 = vld [vmem:[%s3572 + $0xb0] sm:$0xf]
      %v3618 = vld [vmem:[%s3572 + $0xb4] sm:$0xf]
      %v3619 = vld [vmem:[%s3572 + $0xb8] sm:$0xf]
      %v3620 = vld [vmem:[%s3572 + $0xbc] sm:$0xf]
      %v3621 = vld [vmem:[%s3572 + $0xc0] sm:$0xf]
      %v3622 = vld [vmem:[%s3572 + $0xc4] sm:$0xf]
      %v3623 = vld [vmem:[%s3572 + $0xc8] sm:$0xf]
      %v3624 = vld [vmem:[%s3572 + $0xcc] sm:$0xf]
      %v3625 = vld [vmem:[%s3572 + $0xd0] sm:$0xf]
      %v3626 = vld [vmem:[%s3572 + $0xd4] sm:$0xf]
      %v3627 = vld [vmem:[%s3572 + $0xd8] sm:$0xf]
      %v3628 = vld [vmem:[%s3572 + $0xdc] sm:$0xf]
      %v3629 = vld [vmem:[%s3572 + $0xe0] sm:$0xf]
      %v3630 = vld [vmem:[%s3572 + $0xe4] sm:$0xf]
      %v3631 = vld [vmem:[%s3572 + $0xe8] sm:$0xf]
      %v3632 = vld [vmem:[%s3572 + $0xec] sm:$0xf]
      %v3633 = vld [vmem:[%s3572 + $0xf0] sm:$0xf]
      %v3634 = vld [vmem:[%s3572 + $0xf4] sm:$0xf]
      %v3635 = vld [vmem:[%s3572 + $0xf8] sm:$0xf]
      %v3636 = vld [vmem:[%s3572 + $0xfc] sm:$0xf]
      %s3637 = scalar_lea.vmem %s1, 384
      %v3638 = vld [vmem:[%s3637] sm:$0xff]
      %v3639 = vld [vmem:[%s3637 + $0x8] sm:$0xf]
      %v3640 = vld [vmem:[%s3637 + $0xc] sm:$0xff]
      %v3641 = vld [vmem:[%s3637 + $0x14] sm:$0xf]
      %v3642 = vld [vmem:[%s3637 + $0x18] sm:$0xff]
      %v3643 = vld [vmem:[%s3637 + $0x20] sm:$0xf]
      %v3644 = vld [vmem:[%s3637 + $0x24] sm:$0xff]
      %v3645 = vld [vmem:[%s3637 + $0x2c] sm:$0xf]
      %v3646 = vld [vmem:[%s3637 + $0x30] sm:$0xff]
      %v3647 = vld [vmem:[%s3637 + $0x38] sm:$0xf]
      %v3648 = vld [vmem:[%s3637 + $0x3c] sm:$0xff]
      %v3649 = vld [vmem:[%s3637 + $0x44] sm:$0xf]
      %v3650 = vld [vmem:[%s3637 + $0x48] sm:$0xff]
      %v3651 = vld [vmem:[%s3637 + $0x50] sm:$0xf]
      %v3652 = vld [vmem:[%s3637 + $0x54] sm:$0xff]
      %v3653 = vld [vmem:[%s3637 + $0x5c] sm:$0xf]
      %v3654 = vld [vmem:[%s3637 + $0x60] sm:$0xff]
      %v3655 = vld [vmem:[%s3637 + $0x68] sm:$0xf]
      %v3656 = vld [vmem:[%s3637 + $0x6c] sm:$0xff]
      %v3657 = vld [vmem:[%s3637 + $0x74] sm:$0xf]
      %v3658 = vld [vmem:[%s3637 + $0x78] sm:$0xff]
      %v3659 = vld [vmem:[%s3637 + $0x80] sm:$0xf]
      %v3660 = vld [vmem:[%s3637 + $0x84] sm:$0xff]
      %v3661 = vld [vmem:[%s3637 + $0x8c] sm:$0xf]
      %v3662 = vld [vmem:[%s3637 + $0x90] sm:$0xff]
      %v3663 = vld [vmem:[%s3637 + $0x98] sm:$0xf]
      %v3664 = vld [vmem:[%s3637 + $0x9c] sm:$0xff]
      %v3665 = vld [vmem:[%s3637 + $0xa4] sm:$0xf]
      %v3666 = vld [vmem:[%s3637 + $0xa8] sm:$0xff]
      %v3667 = vld [vmem:[%s3637 + $0xb0] sm:$0xf]
      %v3668 = vld [vmem:[%s3637 + $0xb4] sm:$0xff]
      %v3669 = vld [vmem:[%s3637 + $0xbc] sm:$0xf]
      %v3734 = vunpack.c.l.b16 %v3573
      %v3735 = vunpack.c.l.b16 %v3574
      %v3736 = vunpack.c.l.b16 %v3575
      %v3737 = vunpack.c.l.b16 %v3576
      %v3738 = vunpack.c.l.b16 %v3577
      %v3739 = vunpack.c.l.b16 %v3578
      %v3740 = vunpack.c.l.b16 %v3579
      %v3741 = vunpack.c.l.b16 %v3580
      %v3742 = vunpack.c.l.b16 %v3581
      %v3743 = vunpack.c.l.b16 %v3582
      %v3744 = vunpack.c.l.b16 %v3583
      %v3745 = vunpack.c.l.b16 %v3584
      %v3746 = vunpack.c.l.b16 %v3585
      %v3747 = vunpack.c.l.b16 %v3586
      %v3748 = vunpack.c.l.b16 %v3587
      %v3749 = vunpack.c.l.b16 %v3588
      %v3750 = vunpack.c.l.b16 %v3589
      %v3751 = vunpack.c.l.b16 %v3590
      %v3752 = vunpack.c.l.b16 %v3591
      %v3753 = vunpack.c.l.b16 %v3592
      %v3754 = vunpack.c.l.b16 %v3593
      %v3755 = vunpack.c.l.b16 %v3594
      %v3756 = vunpack.c.l.b16 %v3595
      %v3757 = vunpack.c.l.b16 %v3596
      %v3758 = vunpack.c.l.b16 %v3597
      %v3759 = vunpack.c.l.b16 %v3598
      %v3760 = vunpack.c.l.b16 %v3599
      %v3761 = vunpack.c.l.b16 %v3600
      %v3762 = vunpack.c.l.b16 %v3601
      %v3763 = vunpack.c.l.b16 %v3602
      %v3764 = vunpack.c.l.b16 %v3603
      %v3765 = vunpack.c.l.b16 %v3604
      %v3766 = vunpack.c.l.b16 %v3605
      %v3767 = vunpack.c.l.b16 %v3606
      %v3768 = vunpack.c.l.b16 %v3607
      %v3769 = vunpack.c.l.b16 %v3608
      %v3770 = vunpack.c.l.b16 %v3609
      %v3771 = vunpack.c.l.b16 %v3610
      %v3772 = vunpack.c.l.b16 %v3611
      %v3773 = vunpack.c.l.b16 %v3612
      %v3774 = vunpack.c.l.b16 %v3613
      %v3775 = vunpack.c.l.b16 %v3614
      %v3776 = vunpack.c.l.b16 %v3615
      %v3777 = vunpack.c.l.b16 %v3616
      %v3778 = vunpack.c.l.b16 %v3617
      %v3779 = vunpack.c.l.b16 %v3618
      %v3780 = vunpack.c.l.b16 %v3619
      %v3781 = vunpack.c.l.b16 %v3620
      %v3782 = vunpack.c.l.b16 %v3621
      %v3783 = vunpack.c.l.b16 %v3622
      %v3784 = vunpack.c.l.b16 %v3623
      %v3785 = vunpack.c.l.b16 %v3624
      %v3786 = vunpack.c.l.b16 %v3625
      %v3787 = vunpack.c.l.b16 %v3626
      %v3788 = vunpack.c.l.b16 %v3627
      %v3789 = vunpack.c.l.b16 %v3628
      %v3790 = vunpack.c.l.b16 %v3629
      %v3791 = vunpack.c.l.b16 %v3630
      %v3792 = vunpack.c.l.b16 %v3631
      %v3793 = vunpack.c.l.b16 %v3632
      %v3794 = vunpack.c.l.b16 %v3633
      %v3795 = vunpack.c.l.b16 %v3634
      %v3796 = vunpack.c.l.b16 %v3635
      %v3797 = vunpack.c.l.b16 %v3636
      %v3798 = vpack.c.b16 %v3735, %v3734
      %v3799 = vpack.c.b16 %v3737, %v3736
      %v3800 = vpack.c.b16 %v3739, %v3738
      %v3801 = vpack.c.b16 %v3741, %v3740
      %v3802 = vpack.c.b16 %v3743, %v3742
      %v3803 = vpack.c.b16 %v3745, %v3744
      %v3804 = vpack.c.b16 %v3747, %v3746
      %v3805 = vpack.c.b16 %v3749, %v3748
      %v3806 = vpack.c.b16 %v3751, %v3750
      %v3807 = vpack.c.b16 %v3753, %v3752
      %v3808 = vpack.c.b16 %v3755, %v3754
      %v3809 = vpack.c.b16 %v3757, %v3756
      %v3810 = vpack.c.b16 %v3759, %v3758
      %v3811 = vpack.c.b16 %v3761, %v3760
      %v3812 = vpack.c.b16 %v3763, %v3762
      %v3813 = vpack.c.b16 %v3765, %v3764
      %v3814 = vpack.c.b16 %v3767, %v3766
      %v3815 = vpack.c.b16 %v3769, %v3768
      %v3816 = vpack.c.b16 %v3771, %v3770
      %v3817 = vpack.c.b16 %v3773, %v3772
      %v3818 = vpack.c.b16 %v3775, %v3774
      %v3819 = vpack.c.b16 %v3777, %v3776
      %v3820 = vpack.c.b16 %v3779, %v3778
      %v3821 = vpack.c.b16 %v3781, %v3780
      %v3822 = vpack.c.b16 %v3783, %v3782
      %v3823 = vpack.c.b16 %v3785, %v3784
      %v3824 = vpack.c.b16 %v3787, %v3786
      %v3825 = vpack.c.b16 %v3789, %v3788
      %v3826 = vpack.c.b16 %v3791, %v3790
      %v3827 = vpack.c.b16 %v3793, %v3792
      %v3828 = vpack.c.b16 %v3795, %v3794
      %v3829 = vpack.c.b16 %v3797, %v3796
      %v3894 = vunpack.c.l.b16 %v3638
      %v3895 = vunpack.c.h.b16 %v3638
      %v3896 = vunpack.c.l.b16 %v3639
      %v3897 = vunpack.c.l.b16 %v3640
      %v3898 = vunpack.c.h.b16 %v3640
      %v3899 = vunpack.c.l.b16 %v3641
      %v3900 = vunpack.c.l.b16 %v3642
      %v3901 = vunpack.c.h.b16 %v3642
      %v3902 = vunpack.c.l.b16 %v3643
      %v3903 = vunpack.c.l.b16 %v3644
      %v3904 = vunpack.c.h.b16 %v3644
      %v3905 = vunpack.c.l.b16 %v3645
      %v3906 = vunpack.c.l.b16 %v3646
      %v3907 = vunpack.c.h.b16 %v3646
      %v3908 = vunpack.c.l.b16 %v3647
      %v3909 = vunpack.c.l.b16 %v3648
      %v3910 = vunpack.c.h.b16 %v3648
      %v3911 = vunpack.c.l.b16 %v3649
      %v3912 = vunpack.c.l.b16 %v3650
      %v3913 = vunpack.c.h.b16 %v3650
      %v3914 = vunpack.c.l.b16 %v3651
      %v3915 = vunpack.c.l.b16 %v3652
      %v3916 = vunpack.c.h.b16 %v3652
      %v3917 = vunpack.c.l.b16 %v3653
      %v3918 = vunpack.c.l.b16 %v3654
      %v3919 = vunpack.c.h.b16 %v3654
      %v3920 = vunpack.c.l.b16 %v3655
      %v3921 = vunpack.c.l.b16 %v3656
      %v3922 = vunpack.c.h.b16 %v3656
      %v3923 = vunpack.c.l.b16 %v3657
      %v3924 = vunpack.c.l.b16 %v3658
      %v3925 = vunpack.c.h.b16 %v3658
      %v3926 = vunpack.c.l.b16 %v3659
      %v3927 = vunpack.c.l.b16 %v3660
      %v3928 = vunpack.c.h.b16 %v3660
      %v3929 = vunpack.c.l.b16 %v3661
      %v3930 = vunpack.c.l.b16 %v3662
      %v3931 = vunpack.c.h.b16 %v3662
      %v3932 = vunpack.c.l.b16 %v3663
      %v3933 = vunpack.c.l.b16 %v3664
      %v3934 = vunpack.c.h.b16 %v3664
      %v3935 = vunpack.c.l.b16 %v3665
      %v3936 = vunpack.c.l.b16 %v3666
      %v3937 = vunpack.c.h.b16 %v3666
      %v3938 = vunpack.c.l.b16 %v3667
      %v3939 = vunpack.c.l.b16 %v3668
      %v3940 = vunpack.c.h.b16 %v3668
      %v3941 = vunpack.c.l.b16 %v3669
      %v3942 = vpack.c.b16 %v3897, %v3894
      %v3943 = vpack.c.b16 %v3898, %v3895
      %v3944 = vpack.c.b16 %v3899, %v3896
      %v3945 = vpack.c.b16 %v3903, %v3900
      %v3946 = vpack.c.b16 %v3904, %v3901
      %v3947 = vpack.c.b16 %v3905, %v3902
      %v3948 = vpack.c.b16 %v3909, %v3906
      %v3949 = vpack.c.b16 %v3910, %v3907
      %v3950 = vpack.c.b16 %v3911, %v3908
      %v3951 = vpack.c.b16 %v3915, %v3912
      %v3952 = vpack.c.b16 %v3916, %v3913
      %v3953 = vpack.c.b16 %v3917, %v3914
      %v3954 = vpack.c.b16 %v3921, %v3918
      %v3955 = vpack.c.b16 %v3922, %v3919
      %v3956 = vpack.c.b16 %v3923, %v3920
      %v3957 = vpack.c.b16 %v3927, %v3924
      %v3958 = vpack.c.b16 %v3928, %v3925
      %v3959 = vpack.c.b16 %v3929, %v3926
      %v3960 = vpack.c.b16 %v3933, %v3930
      %v3961 = vpack.c.b16 %v3934, %v3931
      %v3962 = vpack.c.b16 %v3935, %v3932
      %v3963 = vpack.c.b16 %v3939, %v3936
      %v3964 = vpack.c.b16 %v3940, %v3937
      %v3965 = vpack.c.b16 %v3941, %v3938
      %3990 = vmatpush.bf16.msra.mxu0 %v3963
      %3991 = vmatpush.bf16.msra.mxu0 %v3960
      %3992 = vmatpush.bf16.msra.mxu0 %v3957
      %3993 = vmatpush.bf16.msra.mxu0 %v3954
      %3994 = vmatpush.bf16.msra.mxu0 %v3951
      %3995 = vmatpush.bf16.msra.mxu0 %v3948
      %3996 = vmatpush.bf16.msra.mxu0 %v3945
      %3997 = vmatpush.bf16.msra.mxu0 %v3942
      %3998 = vmatmul.bf16.gmra.mxu0 %v3798
      %v3999 = vpop.f32.mrf.mxu0
      %v4000 = vadd.f32 0.0, %v3999
      %v4001 = vpop.f32.mrf.mxu0
      %v4002 = vadd.f32 0.0, %v4001
      %4003 = vmatmul.bf16.gmra.mxu0 %v3799
      %v4004 = vpop.f32.mrf.mxu0
      %v4005 = vpop.f32.mrf.mxu0
      %4006 = vmatmul.bf16.gmra.mxu0 %v3800
      %v4007 = vpop.f32.mrf.mxu0
      %v4008 = vadd.f32 0.0, %v4007
      %v4009 = vpop.f32.mrf.mxu0
      %v4010 = vadd.f32 0.0, %v4009
      %4011 = vmatmul.bf16.gmra.mxu0 %v3801
      %v4012 = vpop.f32.mrf.mxu0
      %v4013 = vpop.f32.mrf.mxu0
      %4014 = vmatmul.bf16.gmra.mxu0 %v3802
      %v4015 = vpop.f32.mrf.mxu0
      %v4016 = vadd.f32 0.0, %v4015
      %v4017 = vpop.f32.mrf.mxu0
      %v4018 = vadd.f32 0.0, %v4017
      %4019 = vmatmul.bf16.gmra.mxu0 %v3803
      %v4020 = vpop.f32.mrf.mxu0
      %v4021 = vpop.f32.mrf.mxu0
      %4022 = vmatmul.bf16.gmra.mxu0 %v3804
      %v4023 = vpop.f32.mrf.mxu0
      %v4024 = vadd.f32 0.0, %v4023
      %v4025 = vpop.f32.mrf.mxu0
      %v4026 = vadd.f32 0.0, %v4025
      %4027 = vmatmul.bf16.gmra.mxu0 %v3805
      %v4028 = vpop.f32.mrf.mxu0
      %v4029 = vpop.f32.mrf.mxu0
      %4030 = vmatmul.bf16.gmra.mxu0 %v3806
      %v4031 = vpop.f32.mrf.mxu0
      %v4032 = vadd.f32 0.0, %v4031
      %v4033 = vpop.f32.mrf.mxu0
      %v4034 = vadd.f32 0.0, %v4033
      %4035 = vmatmul.bf16.gmra.mxu0 %v3807
      %v4036 = vpop.f32.mrf.mxu0
      %v4037 = vpop.f32.mrf.mxu0
      %4038 = vmatmul.bf16.gmra.mxu0 %v3808
      %v4039 = vpop.f32.mrf.mxu0
      %v4040 = vadd.f32 0.0, %v4039
      %v4041 = vpop.f32.mrf.mxu0
      %v4042 = vadd.f32 0.0, %v4041
      %4043 = vmatmul.bf16.gmra.mxu0 %v3809
      %v4044 = vpop.f32.mrf.mxu0
      %v4045 = vpop.f32.mrf.mxu0
      %4046 = vmatmul.bf16.gmra.mxu0 %v3810
      %v4047 = vpop.f32.mrf.mxu0
      %v4048 = vadd.f32 0.0, %v4047
      %v4049 = vpop.f32.mrf.mxu0
      %v4050 = vadd.f32 0.0, %v4049
      %4051 = vmatmul.bf16.gmra.mxu0 %v3811
      %v4052 = vpop.f32.mrf.mxu0
      %v4053 = vpop.f32.mrf.mxu0
      %4054 = vmatmul.bf16.gmra.mxu0 %v3812
      %v4055 = vpop.f32.mrf.mxu0
      %v4056 = vadd.f32 0.0, %v4055
      %v4057 = vpop.f32.mrf.mxu0
      %v4058 = vadd.f32 0.0, %v4057
      %4059 = vmatmul.bf16.gmra.mxu0 %v3813
      %v4060 = vpop.f32.mrf.mxu0
      %v4061 = vpop.f32.mrf.mxu0
      %4062 = vmatmul.bf16.gmra.mxu0 %v3814
      %v4063 = vpop.f32.mrf.mxu0
      %v4064 = vadd.f32 0.0, %v4063
      %v4065 = vpop.f32.mrf.mxu0
      %v4066 = vadd.f32 0.0, %v4065
      %4067 = vmatmul.bf16.gmra.mxu0 %v3815
      %v4068 = vpop.f32.mrf.mxu0
      %v4069 = vpop.f32.mrf.mxu0
      %4070 = vmatmul.bf16.gmra.mxu0 %v3816
      %v4071 = vpop.f32.mrf.mxu0
      %v4072 = vadd.f32 0.0, %v4071
      %v4073 = vpop.f32.mrf.mxu0
      %v4074 = vadd.f32 0.0, %v4073
      %4075 = vmatmul.bf16.gmra.mxu0 %v3817
      %v4076 = vpop.f32.mrf.mxu0
      %v4077 = vpop.f32.mrf.mxu0
      %4078 = vmatmul.bf16.gmra.mxu0 %v3818
      %v4079 = vpop.f32.mrf.mxu0
      %v4080 = vadd.f32 0.0, %v4079
      %v4081 = vpop.f32.mrf.mxu0
      %v4082 = vadd.f32 0.0, %v4081
      %4083 = vmatmul.bf16.gmra.mxu0 %v3819
      %v4084 = vpop.f32.mrf.mxu0
      %v4085 = vpop.f32.mrf.mxu0
      %4086 = vmatmul.bf16.gmra.mxu0 %v3820
      %v4087 = vpop.f32.mrf.mxu0
      %v4088 = vadd.f32 0.0, %v4087
      %v4089 = vpop.f32.mrf.mxu0
      %v4090 = vadd.f32 0.0, %v4089
      %4091 = vmatmul.bf16.gmra.mxu0 %v3821
      %v4092 = vpop.f32.mrf.mxu0
      %v4093 = vpop.f32.mrf.mxu0
      %4094 = vmatmul.bf16.gmra.mxu0 %v3822
      %v4095 = vpop.f32.mrf.mxu0
      %v4096 = vadd.f32 0.0, %v4095
      %v4097 = vpop.f32.mrf.mxu0
      %v4098 = vadd.f32 0.0, %v4097
      %4099 = vmatmul.bf16.gmra.mxu0 %v3823
      %v4100 = vpop.f32.mrf.mxu0
      %v4101 = vpop.f32.mrf.mxu0
      %4102 = vmatmul.bf16.gmra.mxu0 %v3824
      %v4103 = vpop.f32.mrf.mxu0
      %v4104 = vadd.f32 0.0, %v4103
      %v4105 = vpop.f32.mrf.mxu0
      %v4106 = vadd.f32 0.0, %v4105
      %4107 = vmatmul.bf16.gmra.mxu0 %v3825
      %v4108 = vpop.f32.mrf.mxu0
      %v4109 = vpop.f32.mrf.mxu0
      %4110 = vmatmul.bf16.gmra.mxu0 %v3826
      %v4111 = vpop.f32.mrf.mxu0
      %v4112 = vadd.f32 0.0, %v4111
      %v4113 = vpop.f32.mrf.mxu0
      %v4114 = vadd.f32 0.0, %v4113
      %4115 = vmatmul.bf16.gmra.mxu0 %v3827
      %v4116 = vpop.f32.mrf.mxu0
      %v4117 = vpop.f32.mrf.mxu0
      %4118 = vmatmul.bf16.gmra.mxu0 %v3828
      %v4119 = vpop.f32.mrf.mxu0
      %v4120 = vadd.f32 0.0, %v4119
      %v4121 = vpop.f32.mrf.mxu0
      %v4122 = vadd.f32 0.0, %v4121
      %4123 = vmatmul.bf16.gmra.mxu0 %v3829
      %v4124 = vpop.f32.mrf.mxu0
      %v4125 = vpop.f32.mrf.mxu0
      %4126 = vdwg.mxu0
      %4127 = vmatpush.bf16.msra.mxu0 %v3964
      %4128 = vmatpush.bf16.msra.mxu0 %v3961
      %4129 = vmatpush.bf16.msra.mxu0 %v3958
      %4130 = vmatpush.bf16.msra.mxu0 %v3955
      %4131 = vmatpush.bf16.msra.mxu0 %v3952
      %4132 = vmatpush.bf16.msra.mxu0 %v3949
      %4133 = vmatpush.bf16.msra.mxu0 %v3946
      %4134 = vmatpush.bf16.msra.mxu0 %v3943
      %4135 = vmatmul.bf16.gmra.mxu0 %v3798
      %v4136 = vpop.f32.mrf.mxu0
      %v4137 = vadd.f32 0.0, %v4136
      %v4138 = vpop.f32.mrf.mxu0
      %v4139 = vadd.f32 0.0, %v4138
      %4140 = vmatmul.bf16.gmra.mxu0 %v3799
      %v4141 = vpop.f32.mrf.mxu0
      %v4142 = vadd.f32 0.0, %v4141
      %v4143 = vpop.f32.mrf.mxu0
      %4144 = vmatmul.bf16.gmra.mxu0 %v3800
      %v4145 = vpop.f32.mrf.mxu0
      %v4146 = vadd.f32 0.0, %v4145
      %v4147 = vpop.f32.mrf.mxu0
      %v4148 = vadd.f32 0.0, %v4147
      %4149 = vmatmul.bf16.gmra.mxu0 %v3801
      %v4150 = vpop.f32.mrf.mxu0
      %v4151 = vadd.f32 0.0, %v4150
      %v4152 = vpop.f32.mrf.mxu0
      %4153 = vmatmul.bf16.gmra.mxu0 %v3802
      %v4154 = vpop.f32.mrf.mxu0
      %v4155 = vadd.f32 0.0, %v4154
      %v4156 = vpop.f32.mrf.mxu0
      %v4157 = vadd.f32 0.0, %v4156
      %4158 = vmatmul.bf16.gmra.mxu0 %v3803
      %v4159 = vpop.f32.mrf.mxu0
      %v4160 = vadd.f32 0.0, %v4159
      %v4161 = vpop.f32.mrf.mxu0
      %4162 = vmatmul.bf16.gmra.mxu0 %v3804
      %v4163 = vpop.f32.mrf.mxu0
      %v4164 = vadd.f32 0.0, %v4163
      %v4165 = vpop.f32.mrf.mxu0
      %v4166 = vadd.f32 0.0, %v4165
      %4167 = vmatmul.bf16.gmra.mxu0 %v3805
      %v4168 = vpop.f32.mrf.mxu0
      %v4169 = vadd.f32 0.0, %v4168
      %v4170 = vpop.f32.mrf.mxu0
      %4171 = vmatmul.bf16.gmra.mxu0 %v3806
      %v4172 = vpop.f32.mrf.mxu0
      %v4173 = vadd.f32 0.0, %v4172
      %v4174 = vpop.f32.mrf.mxu0
      %v4175 = vadd.f32 0.0, %v4174
      %4176 = vmatmul.bf16.gmra.mxu0 %v3807
      %v4177 = vpop.f32.mrf.mxu0
      %v4178 = vadd.f32 0.0, %v4177
      %v4179 = vpop.f32.mrf.mxu0
      %4180 = vmatmul.bf16.gmra.mxu0 %v3808
      %v4181 = vpop.f32.mrf.mxu0
      %v4182 = vadd.f32 0.0, %v4181
      %v4183 = vpop.f32.mrf.mxu0
      %v4184 = vadd.f32 0.0, %v4183
      %4185 = vmatmul.bf16.gmra.mxu0 %v3809
      %v4186 = vpop.f32.mrf.mxu0
      %v4187 = vadd.f32 0.0, %v4186
      %v4188 = vpop.f32.mrf.mxu0
      %4189 = vmatmul.bf16.gmra.mxu0 %v3810
      %v4190 = vpop.f32.mrf.mxu0
      %v4191 = vadd.f32 0.0, %v4190
      %v4192 = vpop.f32.mrf.mxu0
      %v4193 = vadd.f32 0.0, %v4192
      %4194 = vmatmul.bf16.gmra.mxu0 %v3811
      %v4195 = vpop.f32.mrf.mxu0
      %v4196 = vadd.f32 0.0, %v4195
      %v4197 = vpop.f32.mrf.mxu0
      %4198 = vmatmul.bf16.gmra.mxu0 %v3812
      %v4199 = vpop.f32.mrf.mxu0
      %v4200 = vadd.f32 0.0, %v4199
      %v4201 = vpop.f32.mrf.mxu0
      %v4202 = vadd.f32 0.0, %v4201
      %4203 = vmatmul.bf16.gmra.mxu0 %v3813
      %v4204 = vpop.f32.mrf.mxu0
      %v4205 = vadd.f32 0.0, %v4204
      %v4206 = vpop.f32.mrf.mxu0
      %4207 = vmatmul.bf16.gmra.mxu0 %v3814
      %v4208 = vpop.f32.mrf.mxu0
      %v4209 = vadd.f32 0.0, %v4208
      %v4210 = vpop.f32.mrf.mxu0
      %v4211 = vadd.f32 0.0, %v4210
      %4212 = vmatmul.bf16.gmra.mxu0 %v3815
      %v4213 = vpop.f32.mrf.mxu0
      %v4214 = vadd.f32 0.0, %v4213
      %v4215 = vpop.f32.mrf.mxu0
      %4216 = vmatmul.bf16.gmra.mxu0 %v3816
      %v4217 = vpop.f32.mrf.mxu0
      %v4218 = vadd.f32 0.0, %v4217
      %v4219 = vpop.f32.mrf.mxu0
      %v4220 = vadd.f32 0.0, %v4219
      %4221 = vmatmul.bf16.gmra.mxu0 %v3817
      %v4222 = vpop.f32.mrf.mxu0
      %v4223 = vadd.f32 0.0, %v4222
      %v4224 = vpop.f32.mrf.mxu0
      %4225 = vmatmul.bf16.gmra.mxu0 %v3818
      %v4226 = vpop.f32.mrf.mxu0
      %v4227 = vadd.f32 0.0, %v4226
      %v4228 = vpop.f32.mrf.mxu0
      %v4229 = vadd.f32 0.0, %v4228
      %4230 = vmatmul.bf16.gmra.mxu0 %v3819
      %v4231 = vpop.f32.mrf.mxu0
      %v4232 = vadd.f32 0.0, %v4231
      %v4233 = vpop.f32.mrf.mxu0
      %4234 = vmatmul.bf16.gmra.mxu0 %v3820
      %v4235 = vpop.f32.mrf.mxu0
      %v4236 = vadd.f32 0.0, %v4235
      %v4237 = vpop.f32.mrf.mxu0
      %v4238 = vadd.f32 0.0, %v4237
      %4239 = vmatmul.bf16.gmra.mxu0 %v3821
      %v4240 = vpop.f32.mrf.mxu0
      %v4241 = vadd.f32 0.0, %v4240
      %v4242 = vpop.f32.mrf.mxu0
      %4243 = vmatmul.bf16.gmra.mxu0 %v3822
      %v4244 = vpop.f32.mrf.mxu0
      %v4245 = vadd.f32 0.0, %v4244
      %v4246 = vpop.f32.mrf.mxu0
      %v4247 = vadd.f32 0.0, %v4246
      %4248 = vmatmul.bf16.gmra.mxu0 %v3823
      %v4249 = vpop.f32.mrf.mxu0
      %v4250 = vadd.f32 0.0, %v4249
      %v4251 = vpop.f32.mrf.mxu0
      %4252 = vmatmul.bf16.gmra.mxu0 %v3824
      %v4253 = vpop.f32.mrf.mxu0
      %v4254 = vadd.f32 0.0, %v4253
      %v4255 = vpop.f32.mrf.mxu0
      %v4256 = vadd.f32 0.0, %v4255
      %4257 = vmatmul.bf16.gmra.mxu0 %v3825
      %v4258 = vpop.f32.mrf.mxu0
      %v4259 = vadd.f32 0.0, %v4258
      %v4260 = vpop.f32.mrf.mxu0
      %4261 = vmatmul.bf16.gmra.mxu0 %v3826
      %v4262 = vpop.f32.mrf.mxu0
      %v4263 = vadd.f32 0.0, %v4262
      %v4264 = vpop.f32.mrf.mxu0
      %v4265 = vadd.f32 0.0, %v4264
      %4266 = vmatmul.bf16.gmra.mxu0 %v3827
      %v4267 = vpop.f32.mrf.mxu0
      %v4268 = vadd.f32 0.0, %v4267
      %v4269 = vpop.f32.mrf.mxu0
      %4270 = vmatmul.bf16.gmra.mxu0 %v3828
      %v4271 = vpop.f32.mrf.mxu0
      %v4272 = vadd.f32 0.0, %v4271
      %v4273 = vpop.f32.mrf.mxu0
      %v4274 = vadd.f32 0.0, %v4273
      %4275 = vmatmul.bf16.gmra.mxu0 %v3829
      %v4276 = vpop.f32.mrf.mxu0
      %v4277 = vadd.f32 0.0, %v4276
      %v4278 = vpop.f32.mrf.mxu0
      %4279 = vdwg.mxu0
      %4280 = vmatpush.bf16.msra.mxu0 %v3965
      %4281 = vmatpush.bf16.msra.mxu0 %v3962
      %4282 = vmatpush.bf16.msra.mxu0 %v3959
      %4283 = vmatpush.bf16.msra.mxu0 %v3956
      %4284 = vmatpush.bf16.msra.mxu0 %v3953
      %4285 = vmatpush.bf16.msra.mxu0 %v3950
      %4286 = vmatpush.bf16.msra.mxu0 %v3947
      %4287 = vmatpush.bf16.msra.mxu0 %v3944
      %4288 = vmatmul.bf16.gmra.mxu0 %v3798
      %v4289 = vpop.f32.mrf.mxu0
      %v4290 = vadd.f32 0.0, %v4289
      %v4291 = vpop.f32.mrf.mxu0
      %v4292 = vadd.f32 0.0, %v4291
      %4293 = vmatmul.bf16.gmra.mxu0 %v3799
      %v4294 = vpop.f32.mrf.mxu0
      %v4295 = vadd.f32 0.0, %v4294
      %v4296 = vpop.f32.mrf.mxu0
      %4297 = vmatmul.bf16.gmra.mxu0 %v3800
      %v4298 = vpop.f32.mrf.mxu0
      %v4299 = vadd.f32 0.0, %v4298
      %v4300 = vpop.f32.mrf.mxu0
      %v4301 = vadd.f32 0.0, %v4300
      %4302 = vmatmul.bf16.gmra.mxu0 %v3801
      %v4303 = vpop.f32.mrf.mxu0
      %v4304 = vadd.f32 0.0, %v4303
      %v4305 = vpop.f32.mrf.mxu0
      %4306 = vmatmul.bf16.gmra.mxu0 %v3802
      %v4307 = vpop.f32.mrf.mxu0
      %v4308 = vadd.f32 0.0, %v4307
      %v4309 = vpop.f32.mrf.mxu0
      %v4310 = vadd.f32 0.0, %v4309
      %4311 = vmatmul.bf16.gmra.mxu0 %v3803
      %v4312 = vpop.f32.mrf.mxu0
      %v4313 = vadd.f32 0.0, %v4312
      %v4314 = vpop.f32.mrf.mxu0
      %4315 = vmatmul.bf16.gmra.mxu0 %v3804
      %v4316 = vpop.f32.mrf.mxu0
      %v4317 = vadd.f32 0.0, %v4316
      %v4318 = vpop.f32.mrf.mxu0
      %v4319 = vadd.f32 0.0, %v4318
      %4320 = vmatmul.bf16.gmra.mxu0 %v3805
      %v4321 = vpop.f32.mrf.mxu0
      %v4322 = vadd.f32 0.0, %v4321
      %v4323 = vpop.f32.mrf.mxu0
      %4324 = vmatmul.bf16.gmra.mxu0 %v3806
      %v4325 = vpop.f32.mrf.mxu0
      %v4326 = vadd.f32 0.0, %v4325
      %v4327 = vpop.f32.mrf.mxu0
      %v4328 = vadd.f32 0.0, %v4327
      %4329 = vmatmul.bf16.gmra.mxu0 %v3807
      %v4330 = vpop.f32.mrf.mxu0
      %v4331 = vadd.f32 0.0, %v4330
      %v4332 = vpop.f32.mrf.mxu0
      %4333 = vmatmul.bf16.gmra.mxu0 %v3808
      %v4334 = vpop.f32.mrf.mxu0
      %v4335 = vadd.f32 0.0, %v4334
      %v4336 = vpop.f32.mrf.mxu0
      %v4337 = vadd.f32 0.0, %v4336
      %4338 = vmatmul.bf16.gmra.mxu0 %v3809
      %v4339 = vpop.f32.mrf.mxu0
      %v4340 = vadd.f32 0.0, %v4339
      %v4341 = vpop.f32.mrf.mxu0
      %4342 = vmatmul.bf16.gmra.mxu0 %v3810
      %v4343 = vpop.f32.mrf.mxu0
      %v4344 = vadd.f32 0.0, %v4343
      %v4345 = vpop.f32.mrf.mxu0
      %v4346 = vadd.f32 0.0, %v4345
      %4347 = vmatmul.bf16.gmra.mxu0 %v3811
      %v4348 = vpop.f32.mrf.mxu0
      %v4349 = vadd.f32 0.0, %v4348
      %v4350 = vpop.f32.mrf.mxu0
      %4351 = vmatmul.bf16.gmra.mxu0 %v3812
      %v4352 = vpop.f32.mrf.mxu0
      %v4353 = vadd.f32 0.0, %v4352
      %v4354 = vpop.f32.mrf.mxu0
      %v4355 = vadd.f32 0.0, %v4354
      %4356 = vmatmul.bf16.gmra.mxu0 %v3813
      %v4357 = vpop.f32.mrf.mxu0
      %v4358 = vadd.f32 0.0, %v4357
      %v4359 = vpop.f32.mrf.mxu0
      %4360 = vmatmul.bf16.gmra.mxu0 %v3814
      %v4361 = vpop.f32.mrf.mxu0
      %v4362 = vadd.f32 0.0, %v4361
      %v4363 = vpop.f32.mrf.mxu0
      %v4364 = vadd.f32 0.0, %v4363
      %4365 = vmatmul.bf16.gmra.mxu0 %v3815
      %v4366 = vpop.f32.mrf.mxu0
      %v4367 = vadd.f32 0.0, %v4366
      %v4368 = vpop.f32.mrf.mxu0
      %4369 = vmatmul.bf16.gmra.mxu0 %v3816
      %v4370 = vpop.f32.mrf.mxu0
      %v4371 = vadd.f32 0.0, %v4370
      %v4372 = vpop.f32.mrf.mxu0
      %v4373 = vadd.f32 0.0, %v4372
      %4374 = vmatmul.bf16.gmra.mxu0 %v3817
      %v4375 = vpop.f32.mrf.mxu0
      %v4376 = vadd.f32 0.0, %v4375
      %v4377 = vpop.f32.mrf.mxu0
      %4378 = vmatmul.bf16.gmra.mxu0 %v3818
      %v4379 = vpop.f32.mrf.mxu0
      %v4380 = vadd.f32 0.0, %v4379
      %v4381 = vpop.f32.mrf.mxu0
      %v4382 = vadd.f32 0.0, %v4381
      %4383 = vmatmul.bf16.gmra.mxu0 %v3819
      %v4384 = vpop.f32.mrf.mxu0
      %v4385 = vadd.f32 0.0, %v4384
      %v4386 = vpop.f32.mrf.mxu0
      %4387 = vmatmul.bf16.gmra.mxu0 %v3820
      %v4388 = vpop.f32.mrf.mxu0
      %v4389 = vadd.f32 0.0, %v4388
      %v4390 = vpop.f32.mrf.mxu0
      %v4391 = vadd.f32 0.0, %v4390
      %4392 = vmatmul.bf16.gmra.mxu0 %v3821
      %v4393 = vpop.f32.mrf.mxu0
      %v4394 = vadd.f32 0.0, %v4393
      %v4395 = vpop.f32.mrf.mxu0
      %4396 = vmatmul.bf16.gmra.mxu0 %v3822
      %v4397 = vpop.f32.mrf.mxu0
      %v4398 = vadd.f32 0.0, %v4397
      %v4399 = vpop.f32.mrf.mxu0
      %v4400 = vadd.f32 0.0, %v4399
      %4401 = vmatmul.bf16.gmra.mxu0 %v3823
      %v4402 = vpop.f32.mrf.mxu0
      %v4403 = vadd.f32 0.0, %v4402
      %v4404 = vpop.f32.mrf.mxu0
      %4405 = vmatmul.bf16.gmra.mxu0 %v3824
      %v4406 = vpop.f32.mrf.mxu0
      %v4407 = vadd.f32 0.0, %v4406
      %v4408 = vpop.f32.mrf.mxu0
      %v4409 = vadd.f32 0.0, %v4408
      %4410 = vmatmul.bf16.gmra.mxu0 %v3825
      %v4411 = vpop.f32.mrf.mxu0
      %v4412 = vadd.f32 0.0, %v4411
      %v4413 = vpop.f32.mrf.mxu0
      %4414 = vmatmul.bf16.gmra.mxu0 %v3826
      %v4415 = vpop.f32.mrf.mxu0
      %v4416 = vadd.f32 0.0, %v4415
      %v4417 = vpop.f32.mrf.mxu0
      %v4418 = vadd.f32 0.0, %v4417
      %4419 = vmatmul.bf16.gmra.mxu0 %v3827
      %v4420 = vpop.f32.mrf.mxu0
      %v4421 = vadd.f32 0.0, %v4420
      %v4422 = vpop.f32.mrf.mxu0
      %4423 = vmatmul.bf16.gmra.mxu0 %v3828
      %v4424 = vpop.f32.mrf.mxu0
      %v4425 = vadd.f32 0.0, %v4424
      %v4426 = vpop.f32.mrf.mxu0
      %v4427 = vadd.f32 0.0, %v4426
      %4428 = vmatmul.bf16.gmra.mxu0 %v3829
      %v4429 = vpop.f32.mrf.mxu0
      %v4430 = vadd.f32 0.0, %v4429
      %v4431 = vpop.f32.mrf.mxu0
      %4432 = vdwg.mxu0
      %v4433 = vld [vmem:[#allocation4] sm:$0xff]
      %v4434 = vld [vmem:[#allocation4 + $0x8] sm:$0xff]
      %v4435 = vld [vmem:[#allocation4 + $0x10] sm:$0xff]
      %v4436 = vld [vmem:[#allocation4 + $0x18] sm:$0xff]
      %v4437 = vld [vmem:[#allocation4 + $0x20] sm:$0xff]
      %v4438 = vld [vmem:[#allocation4 + $0x28] sm:$0xff]
      %v4439 = vld [vmem:[#allocation4 + $0x30] sm:$0xff]
      %v4440 = vld [vmem:[#allocation4 + $0x38] sm:$0xff]
      %v4441 = vld [vmem:[#allocation4 + $0x40] sm:$0xff]
      %v4442 = vld [vmem:[#allocation4 + $0x48] sm:$0xff]
      %v4443 = vld [vmem:[#allocation4 + $0x50] sm:$0xff]
      %v4444 = vld [vmem:[#allocation4 + $0x58] sm:$0xff]
      %v4445 = vld [vmem:[#allocation4 + $0x60] sm:$0xff]
      %v4446 = vld [vmem:[#allocation4 + $0x68] sm:$0xff]
      %v4447 = vld [vmem:[#allocation4 + $0x70] sm:$0xff]
      %v4448 = vld [vmem:[#allocation4 + $0x78] sm:$0xff]
      %v4449 = vld [vmem:[#allocation4 + $0x80] sm:$0xff]
      %v4450 = vld [vmem:[#allocation4 + $0x88] sm:$0xff]
      %v4451 = vld [vmem:[#allocation4 + $0x90] sm:$0xff]
      %v4452 = vld [vmem:[#allocation4 + $0x98] sm:$0xff]
      %v4453 = vld [vmem:[#allocation4 + $0xa0] sm:$0xff]
      %v4454 = vld [vmem:[#allocation4 + $0xa8] sm:$0xff]
      %v4455 = vld [vmem:[#allocation4 + $0xb0] sm:$0xff]
      %v4456 = vld [vmem:[#allocation4 + $0xb8] sm:$0xff]
      %v4457 = vld [vmem:[#allocation4 + $0xc0] sm:$0xff]
      %v4458 = vld [vmem:[#allocation4 + $0xc8] sm:$0xff]
      %v4459 = vld [vmem:[#allocation4 + $0xd0] sm:$0xff]
      %v4460 = vld [vmem:[#allocation4 + $0xd8] sm:$0xff]
      %v4461 = vld [vmem:[#allocation4 + $0xe0] sm:$0xff]
      %v4462 = vld [vmem:[#allocation4 + $0xe8] sm:$0xff]
      %v4463 = vld [vmem:[#allocation4 + $0xf0] sm:$0xff]
      %v4464 = vld [vmem:[#allocation4 + $0xf8] sm:$0xff]
      %v4513 = vrot.slane %v4137, 1
      %v4514 = vrot.slane %v4139, 1
      %v4515 = vsel %vm1830, %v4513, %v4514
      %v4516 = vrot.slane %v4142, 1
      %v4517 = vsel %vm1830, %v4514, %v4516
      %v4518 = vrot.slane %v4146, 1
      %v4519 = vrot.slane %v4148, 1
      %v4520 = vsel %vm1830, %v4518, %v4519
      %v4521 = vrot.slane %v4151, 1
      %v4522 = vsel %vm1830, %v4519, %v4521
      %v4523 = vrot.slane %v4155, 1
      %v4524 = vrot.slane %v4157, 1
      %v4525 = vsel %vm1830, %v4523, %v4524
      %v4526 = vrot.slane %v4160, 1
      %v4527 = vsel %vm1830, %v4524, %v4526
      %v4528 = vrot.slane %v4164, 1
      %v4529 = vrot.slane %v4166, 1
      %v4530 = vsel %vm1830, %v4528, %v4529
      %v4531 = vrot.slane %v4169, 1
      %v4532 = vsel %vm1830, %v4529, %v4531
      %v4533 = vrot.slane %v4173, 1
      %v4534 = vrot.slane %v4175, 1
      %v4535 = vsel %vm1830, %v4533, %v4534
      %v4536 = vrot.slane %v4178, 1
      %v4537 = vsel %vm1830, %v4534, %v4536
      %v4538 = vrot.slane %v4182, 1
      %v4539 = vrot.slane %v4184, 1
      %v4540 = vsel %vm1830, %v4538, %v4539
      %v4541 = vrot.slane %v4187, 1
      %v4542 = vsel %vm1830, %v4539, %v4541
      %v4543 = vrot.slane %v4191, 1
      %v4544 = vrot.slane %v4193, 1
      %v4545 = vsel %vm1830, %v4543, %v4544
      %v4546 = vrot.slane %v4196, 1
      %v4547 = vsel %vm1830, %v4544, %v4546
      %v4548 = vrot.slane %v4200, 1
      %v4549 = vrot.slane %v4202, 1
      %v4550 = vsel %vm1830, %v4548, %v4549
      %v4551 = vrot.slane %v4205, 1
      %v4552 = vsel %vm1830, %v4549, %v4551
      %v4553 = vrot.slane %v4209, 1
      %v4554 = vrot.slane %v4211, 1
      %v4555 = vsel %vm1830, %v4553, %v4554
      %v4556 = vrot.slane %v4214, 1
      %v4557 = vsel %vm1830, %v4554, %v4556
      %v4558 = vrot.slane %v4218, 1
      %v4559 = vrot.slane %v4220, 1
      %v4560 = vsel %vm1830, %v4558, %v4559
      %v4561 = vrot.slane %v4223, 1
      %v4562 = vsel %vm1830, %v4559, %v4561
      %v4563 = vrot.slane %v4227, 1
      %v4564 = vrot.slane %v4229, 1
      %v4565 = vsel %vm1830, %v4563, %v4564
      %v4566 = vrot.slane %v4232, 1
      %v4567 = vsel %vm1830, %v4564, %v4566
      %v4568 = vrot.slane %v4236, 1
      %v4569 = vrot.slane %v4238, 1
      %v4570 = vsel %vm1830, %v4568, %v4569
      %v4571 = vrot.slane %v4241, 1
      %v4572 = vsel %vm1830, %v4569, %v4571
      %v4573 = vrot.slane %v4245, 1
      %v4574 = vrot.slane %v4247, 1
      %v4575 = vsel %vm1830, %v4573, %v4574
      %v4576 = vrot.slane %v4250, 1
      %v4577 = vsel %vm1830, %v4574, %v4576
      %v4578 = vrot.slane %v4254, 1
      %v4579 = vrot.slane %v4256, 1
      %v4580 = vsel %vm1830, %v4578, %v4579
      %v4581 = vrot.slane %v4259, 1
      %v4582 = vsel %vm1830, %v4579, %v4581
      %v4583 = vrot.slane %v4263, 1
      %v4584 = vrot.slane %v4265, 1
      %v4585 = vsel %vm1830, %v4583, %v4584
      %v4586 = vrot.slane %v4268, 1
      %v4587 = vsel %vm1830, %v4584, %v4586
      %v4588 = vrot.slane %v4272, 1
      %v4589 = vrot.slane %v4274, 1
      %v4590 = vsel %vm1830, %v4588, %v4589
      %v4591 = vrot.slane %v4277, 1
      %v4592 = vsel %vm1830, %v4589, %v4591
      %v4625 = vadd.f32 %v4000, %v4515
      %v4626 = vadd.f32 %v4002, %v4517
      %v4627 = vadd.f32 %v4008, %v4520
      %v4628 = vadd.f32 %v4010, %v4522
      %v4629 = vadd.f32 %v4016, %v4525
      %v4630 = vadd.f32 %v4018, %v4527
      %v4631 = vadd.f32 %v4024, %v4530
      %v4632 = vadd.f32 %v4026, %v4532
      %v4633 = vadd.f32 %v4032, %v4535
      %v4634 = vadd.f32 %v4034, %v4537
      %v4635 = vadd.f32 %v4040, %v4540
      %v4636 = vadd.f32 %v4042, %v4542
      %v4637 = vadd.f32 %v4048, %v4545
      %v4638 = vadd.f32 %v4050, %v4547
      %v4639 = vadd.f32 %v4056, %v4550
      %v4640 = vadd.f32 %v4058, %v4552
      %v4641 = vadd.f32 %v4064, %v4555
      %v4642 = vadd.f32 %v4066, %v4557
      %v4643 = vadd.f32 %v4072, %v4560
      %v4644 = vadd.f32 %v4074, %v4562
      %v4645 = vadd.f32 %v4080, %v4565
      %v4646 = vadd.f32 %v4082, %v4567
      %v4647 = vadd.f32 %v4088, %v4570
      %v4648 = vadd.f32 %v4090, %v4572
      %v4649 = vadd.f32 %v4096, %v4575
      %v4650 = vadd.f32 %v4098, %v4577
      %v4651 = vadd.f32 %v4104, %v4580
      %v4652 = vadd.f32 %v4106, %v4582
      %v4653 = vadd.f32 %v4112, %v4585
      %v4654 = vadd.f32 %v4114, %v4587
      %v4655 = vadd.f32 %v4120, %v4590
      %v4656 = vadd.f32 %v4122, %v4592
      %v4705 = vrot.slane %v4290, 2
      %v4706 = vrot.slane %v4292, 2
      %v4707 = vsel %vm2023, %v4705, %v4706
      %v4708 = vrot.slane %v4295, 2
      %v4709 = vsel %vm2023, %v4706, %v4708
      %v4710 = vrot.slane %v4299, 2
      %v4711 = vrot.slane %v4301, 2
      %v4712 = vsel %vm2023, %v4710, %v4711
      %v4713 = vrot.slane %v4304, 2
      %v4714 = vsel %vm2023, %v4711, %v4713
      %v4715 = vrot.slane %v4308, 2
      %v4716 = vrot.slane %v4310, 2
      %v4717 = vsel %vm2023, %v4715, %v4716
      %v4718 = vrot.slane %v4313, 2
      %v4719 = vsel %vm2023, %v4716, %v4718
      %v4720 = vrot.slane %v4317, 2
      %v4721 = vrot.slane %v4319, 2
      %v4722 = vsel %vm2023, %v4720, %v4721
      %v4723 = vrot.slane %v4322, 2
      %v4724 = vsel %vm2023, %v4721, %v4723
      %v4725 = vrot.slane %v4326, 2
      %v4726 = vrot.slane %v4328, 2
      %v4727 = vsel %vm2023, %v4725, %v4726
      %v4728 = vrot.slane %v4331, 2
      %v4729 = vsel %vm2023, %v4726, %v4728
      %v4730 = vrot.slane %v4335, 2
      %v4731 = vrot.slane %v4337, 2
      %v4732 = vsel %vm2023, %v4730, %v4731
      %v4733 = vrot.slane %v4340, 2
      %v4734 = vsel %vm2023, %v4731, %v4733
      %v4735 = vrot.slane %v4344, 2
      %v4736 = vrot.slane %v4346, 2
      %v4737 = vsel %vm2023, %v4735, %v4736
      %v4738 = vrot.slane %v4349, 2
      %v4739 = vsel %vm2023, %v4736, %v4738
      %v4740 = vrot.slane %v4353, 2
      %v4741 = vrot.slane %v4355, 2
      %v4742 = vsel %vm2023, %v4740, %v4741
      %v4743 = vrot.slane %v4358, 2
      %v4744 = vsel %vm2023, %v4741, %v4743
      %v4745 = vrot.slane %v4362, 2
      %v4746 = vrot.slane %v4364, 2
      %v4747 = vsel %vm2023, %v4745, %v4746
      %v4748 = vrot.slane %v4367, 2
      %v4749 = vsel %vm2023, %v4746, %v4748
      %v4750 = vrot.slane %v4371, 2
      %v4751 = vrot.slane %v4373, 2
      %v4752 = vsel %vm2023, %v4750, %v4751
      %v4753 = vrot.slane %v4376, 2
      %v4754 = vsel %vm2023, %v4751, %v4753
      %v4755 = vrot.slane %v4380, 2
      %v4756 = vrot.slane %v4382, 2
      %v4757 = vsel %vm2023, %v4755, %v4756
      %v4758 = vrot.slane %v4385, 2
      %v4759 = vsel %vm2023, %v4756, %v4758
      %v4760 = vrot.slane %v4389, 2
      %v4761 = vrot.slane %v4391, 2
      %v4762 = vsel %vm2023, %v4760, %v4761
      %v4763 = vrot.slane %v4394, 2
      %v4764 = vsel %vm2023, %v4761, %v4763
      %v4765 = vrot.slane %v4398, 2
      %v4766 = vrot.slane %v4400, 2
      %v4767 = vsel %vm2023, %v4765, %v4766
      %v4768 = vrot.slane %v4403, 2
      %v4769 = vsel %vm2023, %v4766, %v4768
      %v4770 = vrot.slane %v4407, 2
      %v4771 = vrot.slane %v4409, 2
      %v4772 = vsel %vm2023, %v4770, %v4771
      %v4773 = vrot.slane %v4412, 2
      %v4774 = vsel %vm2023, %v4771, %v4773
      %v4775 = vrot.slane %v4416, 2
      %v4776 = vrot.slane %v4418, 2
      %v4777 = vsel %vm2023, %v4775, %v4776
      %v4778 = vrot.slane %v4421, 2
      %v4779 = vsel %vm2023, %v4776, %v4778
      %v4780 = vrot.slane %v4425, 2
      %v4781 = vrot.slane %v4427, 2
      %v4782 = vsel %vm2023, %v4780, %v4781
      %v4783 = vrot.slane %v4430, 2
      %v4784 = vsel %vm2023, %v4781, %v4783
      %v4817 = vadd.f32 %v4625, %v4707
      %v4818 = vadd.f32 %v4626, %v4709
      %v4819 = vadd.f32 %v4627, %v4712
      %v4820 = vadd.f32 %v4628, %v4714
      %v4821 = vadd.f32 %v4629, %v4717
      %v4822 = vadd.f32 %v4630, %v4719
      %v4823 = vadd.f32 %v4631, %v4722
      %v4824 = vadd.f32 %v4632, %v4724
      %v4825 = vadd.f32 %v4633, %v4727
      %v4826 = vadd.f32 %v4634, %v4729
      %v4827 = vadd.f32 %v4635, %v4732
      %v4828 = vadd.f32 %v4636, %v4734
      %v4829 = vadd.f32 %v4637, %v4737
      %v4830 = vadd.f32 %v4638, %v4739
      %v4831 = vadd.f32 %v4639, %v4742
      %v4832 = vadd.f32 %v4640, %v4744
      %v4833 = vadd.f32 %v4641, %v4747
      %v4834 = vadd.f32 %v4642, %v4749
      %v4835 = vadd.f32 %v4643, %v4752
      %v4836 = vadd.f32 %v4644, %v4754
      %v4837 = vadd.f32 %v4645, %v4757
      %v4838 = vadd.f32 %v4646, %v4759
      %v4839 = vadd.f32 %v4647, %v4762
      %v4840 = vadd.f32 %v4648, %v4764
      %v4841 = vadd.f32 %v4649, %v4767
      %v4842 = vadd.f32 %v4650, %v4769
      %v4843 = vadd.f32 %v4651, %v4772
      %v4844 = vadd.f32 %v4652, %v4774
      %v4845 = vadd.f32 %v4653, %v4777
      %v4846 = vadd.f32 %v4654, %v4779
      %v4847 = vadd.f32 %v4655, %v4782
      %v4848 = vadd.f32 %v4656, %v4784
      %v4849 = vadd.f32 %v4433, %v4817
      %v4850 = vadd.f32 %v4434, %v4818
      %v4851 = vadd.f32 %v4435, %v4819
      %v4852 = vadd.f32 %v4436, %v4820
      %v4853 = vadd.f32 %v4437, %v4821
      %v4854 = vadd.f32 %v4438, %v4822
      %v4855 = vadd.f32 %v4439, %v4823
      %v4856 = vadd.f32 %v4440, %v4824
      %v4857 = vadd.f32 %v4441, %v4825
      %v4858 = vadd.f32 %v4442, %v4826
      %v4859 = vadd.f32 %v4443, %v4827
      %v4860 = vadd.f32 %v4444, %v4828
      %v4861 = vadd.f32 %v4445, %v4829
      %v4862 = vadd.f32 %v4446, %v4830
      %v4863 = vadd.f32 %v4447, %v4831
      %v4864 = vadd.f32 %v4448, %v4832
      %v4865 = vadd.f32 %v4449, %v4833
      %v4866 = vadd.f32 %v4450, %v4834
      %v4867 = vadd.f32 %v4451, %v4835
      %v4868 = vadd.f32 %v4452, %v4836
      %v4869 = vadd.f32 %v4453, %v4837
      %v4870 = vadd.f32 %v4454, %v4838
      %v4871 = vadd.f32 %v4455, %v4839
      %v4872 = vadd.f32 %v4456, %v4840
      %v4873 = vadd.f32 %v4457, %v4841
      %v4874 = vadd.f32 %v4458, %v4842
      %v4875 = vadd.f32 %v4459, %v4843
      %v4876 = vadd.f32 %v4460, %v4844
      %v4877 = vadd.f32 %v4461, %v4845
      %v4878 = vadd.f32 %v4462, %v4846
      %v4879 = vadd.f32 %v4463, %v4847
      %v4880 = vadd.f32 %v4464, %v4848
      %4881 = vst [vmem:[#allocation4] sm:$0xff] %v4849
      %4882 = vst [vmem:[#allocation4 + $0x8] sm:$0xff] %v4850
      %4883 = vst [vmem:[#allocation4 + $0x10] sm:$0xff] %v4851
      %4884 = vst [vmem:[#allocation4 + $0x18] sm:$0xff] %v4852
      %4885 = vst [vmem:[#allocation4 + $0x20] sm:$0xff] %v4853
      %4886 = vst [vmem:[#allocation4 + $0x28] sm:$0xff] %v4854
      %4887 = vst [vmem:[#allocation4 + $0x30] sm:$0xff] %v4855
      %4888 = vst [vmem:[#allocation4 + $0x38] sm:$0xff] %v4856
      %4889 = vst [vmem:[#allocation4 + $0x40] sm:$0xff] %v4857
      %4890 = vst [vmem:[#allocation4 + $0x48] sm:$0xff] %v4858
      %4891 = vst [vmem:[#allocation4 + $0x50] sm:$0xff] %v4859
      %4892 = vst [vmem:[#allocation4 + $0x58] sm:$0xff] %v4860
      %4893 = vst [vmem:[#allocation4 + $0x60] sm:$0xff] %v4861
      %4894 = vst [vmem:[#allocation4 + $0x68] sm:$0xff] %v4862
      %4895 = vst [vmem:[#allocation4 + $0x70] sm:$0xff] %v4863
      %4896 = vst [vmem:[#allocation4 + $0x78] sm:$0xff] %v4864
      %4897 = vst [vmem:[#allocation4 + $0x80] sm:$0xff] %v4865
      %4898 = vst [vmem:[#allocation4 + $0x88] sm:$0xff] %v4866
      %4899 = vst [vmem:[#allocation4 + $0x90] sm:$0xff] %v4867
      %4900 = vst [vmem:[#allocation4 + $0x98] sm:$0xff] %v4868
      %4901 = vst [vmem:[#allocation4 + $0xa0] sm:$0xff] %v4869
      %4902 = vst [vmem:[#allocation4 + $0xa8] sm:$0xff] %v4870
      %4903 = vst [vmem:[#allocation4 + $0xb0] sm:$0xff] %v4871
      %4904 = vst [vmem:[#allocation4 + $0xb8] sm:$0xff] %v4872
      %4905 = vst [vmem:[#allocation4 + $0xc0] sm:$0xff] %v4873
      %4906 = vst [vmem:[#allocation4 + $0xc8] sm:$0xff] %v4874
      %4907 = vst [vmem:[#allocation4 + $0xd0] sm:$0xff] %v4875
      %4908 = vst [vmem:[#allocation4 + $0xd8] sm:$0xff] %v4876
      %4909 = vst [vmem:[#allocation4 + $0xe0] sm:$0xff] %v4877
      %4910 = vst [vmem:[#allocation4 + $0xe8] sm:$0xff] %v4878
      %4911 = vst [vmem:[#allocation4 + $0xf0] sm:$0xff] %v4879
      %4912 = vst [vmem:[#allocation4 + $0xf8] sm:$0xff] %v4880
      %v4913 = vld [vmem:[#allocation4] sm:$0xff]
      %v4914 = vld [vmem:[#allocation4 + $0x8] sm:$0xff]
      %v4915 = vld [vmem:[#allocation4 + $0x10] sm:$0xff]
      %v4916 = vld [vmem:[#allocation4 + $0x18] sm:$0xff]
      %v4917 = vld [vmem:[#allocation4 + $0x20] sm:$0xff]
      %v4918 = vld [vmem:[#allocation4 + $0x28] sm:$0xff]
      %v4919 = vld [vmem:[#allocation4 + $0x30] sm:$0xff]
      %v4920 = vld [vmem:[#allocation4 + $0x38] sm:$0xff]
      %v4921 = vld [vmem:[#allocation4 + $0x40] sm:$0xff]
      %v4922 = vld [vmem:[#allocation4 + $0x48] sm:$0xff]
      %v4923 = vld [vmem:[#allocation4 + $0x50] sm:$0xff]
      %v4924 = vld [vmem:[#allocation4 + $0x58] sm:$0xff]
      %v4925 = vld [vmem:[#allocation4 + $0x60] sm:$0xff]
      %v4926 = vld [vmem:[#allocation4 + $0x68] sm:$0xff]
      %v4927 = vld [vmem:[#allocation4 + $0x70] sm:$0xff]
      %v4928 = vld [vmem:[#allocation4 + $0x78] sm:$0xff]
      %v4929 = vld [vmem:[#allocation4 + $0x80] sm:$0xff]
      %v4930 = vld [vmem:[#allocation4 + $0x88] sm:$0xff]
      %v4931 = vld [vmem:[#allocation4 + $0x90] sm:$0xff]
      %v4932 = vld [vmem:[#allocation4 + $0x98] sm:$0xff]
      %v4933 = vld [vmem:[#allocation4 + $0xa0] sm:$0xff]
      %v4934 = vld [vmem:[#allocation4 + $0xa8] sm:$0xff]
      %v4935 = vld [vmem:[#allocation4 + $0xb0] sm:$0xff]
      %v4936 = vld [vmem:[#allocation4 + $0xb8] sm:$0xff]
      %v4937 = vld [vmem:[#allocation4 + $0xc0] sm:$0xff]
      %v4938 = vld [vmem:[#allocation4 + $0xc8] sm:$0xff]
      %v4939 = vld [vmem:[#allocation4 + $0xd0] sm:$0xff]
      %v4940 = vld [vmem:[#allocation4 + $0xd8] sm:$0xff]
      %v4941 = vld [vmem:[#allocation4 + $0xe0] sm:$0xff]
      %v4942 = vld [vmem:[#allocation4 + $0xe8] sm:$0xff]
      %v4943 = vld [vmem:[#allocation4 + $0xf0] sm:$0xff]
      %v4944 = vld [vmem:[#allocation4 + $0xf8] sm:$0xff]
      %v4945 = vld [vmem:[%s3] sm:$0x1]
      %v4946 = vld [vmem:[%s4] sm:$0x1]
      %v4948 = vperm.slane %v4945, 0
      %v4950 = vmul.f32 %v4913, %v4948
      %v4951 = vmul.f32 %v4914, %v4948
      %v4952 = vmul.f32 %v4915, %v4948
      %v4953 = vmul.f32 %v4916, %v4948
      %v4954 = vmul.f32 %v4917, %v4948
      %v4955 = vmul.f32 %v4918, %v4948
      %v4956 = vmul.f32 %v4919, %v4948
      %v4957 = vmul.f32 %v4920, %v4948
      %v4958 = vmul.f32 %v4921, %v4948
      %v4959 = vmul.f32 %v4922, %v4948
      %v4960 = vmul.f32 %v4923, %v4948
      %v4961 = vmul.f32 %v4924, %v4948
      %v4962 = vmul.f32 %v4925, %v4948
      %v4963 = vmul.f32 %v4926, %v4948
      %v4964 = vmul.f32 %v4927, %v4948
      %v4965 = vmul.f32 %v4928, %v4948
      %v4966 = vmul.f32 %v4929, %v4948
      %v4967 = vmul.f32 %v4930, %v4948
      %v4968 = vmul.f32 %v4931, %v4948
      %v4969 = vmul.f32 %v4932, %v4948
      %v4970 = vmul.f32 %v4933, %v4948
      %v4971 = vmul.f32 %v4934, %v4948
      %v4972 = vmul.f32 %v4935, %v4948
      %v4973 = vmul.f32 %v4936, %v4948
      %v4974 = vmul.f32 %v4937, %v4948
      %v4975 = vmul.f32 %v4938, %v4948
      %v4976 = vmul.f32 %v4939, %v4948
      %v4977 = vmul.f32 %v4940, %v4948
      %v4978 = vmul.f32 %v4941, %v4948
      %v4979 = vmul.f32 %v4942, %v4948
      %v4980 = vmul.f32 %v4943, %v4948
      %v4981 = vmul.f32 %v4944, %v4948
      %v4983 = vperm.slane %v4946, 0
      %v4985 = vadd.f32 %v4950, %v4983
      %v4986 = vadd.f32 %v4951, %v4983
      %v4987 = vadd.f32 %v4952, %v4983
      %v4988 = vadd.f32 %v4953, %v4983
      %v4989 = vadd.f32 %v4954, %v4983
      %v4990 = vadd.f32 %v4955, %v4983
      %v4991 = vadd.f32 %v4956, %v4983
      %v4992 = vadd.f32 %v4957, %v4983
      %v4993 = vadd.f32 %v4958, %v4983
      %v4994 = vadd.f32 %v4959, %v4983
      %v4995 = vadd.f32 %v4960, %v4983
      %v4996 = vadd.f32 %v4961, %v4983
      %v4997 = vadd.f32 %v4962, %v4983
      %v4998 = vadd.f32 %v4963, %v4983
      %v4999 = vadd.f32 %v4964, %v4983
      %v5000 = vadd.f32 %v4965, %v4983
      %v5001 = vadd.f32 %v4966, %v4983
      %v5002 = vadd.f32 %v4967, %v4983
      %v5003 = vadd.f32 %v4968, %v4983
      %v5004 = vadd.f32 %v4969, %v4983
      %v5005 = vadd.f32 %v4970, %v4983
      %v5006 = vadd.f32 %v4971, %v4983
      %v5007 = vadd.f32 %v4972, %v4983
      %v5008 = vadd.f32 %v4973, %v4983
      %v5009 = vadd.f32 %v4974, %v4983
      %v5010 = vadd.f32 %v4975, %v4983
      %v5011 = vadd.f32 %v4976, %v4983
      %v5012 = vadd.f32 %v4977, %v4983
      %v5013 = vadd.f32 %v4978, %v4983
      %v5014 = vadd.f32 %v4979, %v4983
      %v5015 = vadd.f32 %v4980, %v4983
      %v5016 = vadd.f32 %v4981, %v4983
      %v5017 = vmax.f32 %v4985, 0.0
      %v5018 = vmax.f32 %v4986, 0.0
      %v5019 = vmax.f32 %v4987, 0.0
      %v5020 = vmax.f32 %v4988, 0.0
      %v5021 = vmax.f32 %v4989, 0.0
      %v5022 = vmax.f32 %v4990, 0.0
      %v5023 = vmax.f32 %v4991, 0.0
      %v5024 = vmax.f32 %v4992, 0.0
      %v5025 = vmax.f32 %v4993, 0.0
      %v5026 = vmax.f32 %v4994, 0.0
      %v5027 = vmax.f32 %v4995, 0.0
      %v5028 = vmax.f32 %v4996, 0.0
      %v5029 = vmax.f32 %v4997, 0.0
      %v5030 = vmax.f32 %v4998, 0.0
      %v5031 = vmax.f32 %v4999, 0.0
      %v5032 = vmax.f32 %v5000, 0.0
      %v5033 = vmax.f32 %v5001, 0.0
      %v5034 = vmax.f32 %v5002, 0.0
      %v5035 = vmax.f32 %v5003, 0.0
      %v5036 = vmax.f32 %v5004, 0.0
      %v5037 = vmax.f32 %v5005, 0.0
      %v5038 = vmax.f32 %v5006, 0.0
      %v5039 = vmax.f32 %v5007, 0.0
      %v5040 = vmax.f32 %v5008, 0.0
      %v5041 = vmax.f32 %v5009, 0.0
      %v5042 = vmax.f32 %v5010, 0.0
      %v5043 = vmax.f32 %v5011, 0.0
      %v5044 = vmax.f32 %v5012, 0.0
      %v5045 = vmax.f32 %v5013, 0.0
      %v5046 = vmax.f32 %v5014, 0.0
      %v5047 = vmax.f32 %v5015, 0.0
      %v5048 = vmax.f32 %v5016, 0.0
      %v5049 = vpack.c.bf16 %v5017, %v5017
      %v5050 = vpack.c.bf16 %v5018, %v5018
      %v5051 = vpack.c.bf16 %v5019, %v5019
      %v5052 = vpack.c.bf16 %v5020, %v5020
      %v5053 = vpack.c.bf16 %v5021, %v5021
      %v5054 = vpack.c.bf16 %v5022, %v5022
      %v5055 = vpack.c.bf16 %v5023, %v5023
      %v5056 = vpack.c.bf16 %v5024, %v5024
      %v5057 = vpack.c.bf16 %v5025, %v5025
      %v5058 = vpack.c.bf16 %v5026, %v5026
      %v5059 = vpack.c.bf16 %v5027, %v5027
      %v5060 = vpack.c.bf16 %v5028, %v5028
      %v5061 = vpack.c.bf16 %v5029, %v5029
      %v5062 = vpack.c.bf16 %v5030, %v5030
      %v5063 = vpack.c.bf16 %v5031, %v5031
      %v5064 = vpack.c.bf16 %v5032, %v5032
      %v5065 = vpack.c.bf16 %v5033, %v5033
      %v5066 = vpack.c.bf16 %v5034, %v5034
      %v5067 = vpack.c.bf16 %v5035, %v5035
      %v5068 = vpack.c.bf16 %v5036, %v5036
      %v5069 = vpack.c.bf16 %v5037, %v5037
      %v5070 = vpack.c.bf16 %v5038, %v5038
      %v5071 = vpack.c.bf16 %v5039, %v5039
      %v5072 = vpack.c.bf16 %v5040, %v5040
      %v5073 = vpack.c.bf16 %v5041, %v5041
      %v5074 = vpack.c.bf16 %v5042, %v5042
      %v5075 = vpack.c.bf16 %v5043, %v5043
      %v5076 = vpack.c.bf16 %v5044, %v5044
      %v5077 = vpack.c.bf16 %v5045, %v5045
      %v5078 = vpack.c.bf16 %v5046, %v5046
      %v5079 = vpack.c.bf16 %v5047, %v5047
      %v5080 = vpack.c.bf16 %v5048, %v5048
      %5081 = vst [vmem:[#allocation3] sm:$0xf] 0
      %5082 = vst [vmem:[#allocation3 + $0x4] sm:$0xf] 0
      %5083 = vst [vmem:[#allocation3 + $0x8] sm:$0xf] 0
      %5084 = vst [vmem:[#allocation3 + $0xc] sm:$0xf] 0
      %s5085 = scalar_lea.vmem [#allocation3], 272
      %5086 = vst [vmem:[%s5085] sm:$0xf] 0
      %5087 = vst [vmem:[%s5085 + $0x4] sm:$0xf] 0
      %5088 = vst [vmem:[%s5085 + $0x8] sm:$0xf] 0
      %5089 = vst [vmem:[%s5085 + $0xc] sm:$0xf] 0
      %s5090 = scalar_lea.vmem [#allocation3], 16
      %v5091 = vld [vmem:[%s5090] sm:$0x1]
      %v5092 = vsel %vm324, 0, %v5091
      %5093 = vst [vmem:[%s5090] sm:$0x1] %v5092
      %v5094 = vld [vmem:[%s5090 + $0x10] sm:$0x1]
      %v5095 = vsel %vm324, 0, %v5094
      %5096 = vst [vmem:[%s5090 + $0x10] sm:$0x1] %v5095
      %v5097 = vld [vmem:[%s5090 + $0x20] sm:$0x1]
      %v5098 = vsel %vm324, 0, %v5097
      %5099 = vst [vmem:[%s5090 + $0x20] sm:$0x1] %v5098
      %v5100 = vld [vmem:[%s5090 + $0x30] sm:$0x1]
      %v5101 = vsel %vm324, 0, %v5100
      %5102 = vst [vmem:[%s5090 + $0x30] sm:$0x1] %v5101
      %v5103 = vld [vmem:[%s5090 + $0x40] sm:$0x1]
      %v5104 = vsel %vm324, 0, %v5103
      %5105 = vst [vmem:[%s5090 + $0x40] sm:$0x1] %v5104
      %v5106 = vld [vmem:[%s5090 + $0x50] sm:$0x1]
      %v5107 = vsel %vm324, 0, %v5106
      %5108 = vst [vmem:[%s5090 + $0x50] sm:$0x1] %v5107
      %v5109 = vld [vmem:[%s5090 + $0x60] sm:$0x1]
      %v5110 = vsel %vm324, 0, %v5109
      %5111 = vst [vmem:[%s5090 + $0x60] sm:$0x1] %v5110
      %v5112 = vld [vmem:[%s5090 + $0x70] sm:$0x1]
      %v5113 = vsel %vm324, 0, %v5112
      %5114 = vst [vmem:[%s5090 + $0x70] sm:$0x1] %v5113
      %v5115 = vld [vmem:[%s5090 + $0x80] sm:$0x1]
      %v5116 = vsel %vm324, 0, %v5115
      %5117 = vst [vmem:[%s5090 + $0x80] sm:$0x1] %v5116
      %v5118 = vld [vmem:[%s5090 + $0x90] sm:$0x1]
      %v5119 = vsel %vm324, 0, %v5118
      %5120 = vst [vmem:[%s5090 + $0x90] sm:$0x1] %v5119
      %v5121 = vld [vmem:[%s5090 + $0xa0] sm:$0x1]
      %v5122 = vsel %vm324, 0, %v5121
      %5123 = vst [vmem:[%s5090 + $0xa0] sm:$0x1] %v5122
      %v5124 = vld [vmem:[%s5090 + $0xb0] sm:$0x1]
      %v5125 = vsel %vm324, 0, %v5124
      %5126 = vst [vmem:[%s5090 + $0xb0] sm:$0x1] %v5125
      %v5127 = vld [vmem:[%s5090 + $0xc0] sm:$0x1]
      %v5128 = vsel %vm324, 0, %v5127
      %5129 = vst [vmem:[%s5090 + $0xc0] sm:$0x1] %v5128
      %v5130 = vld [vmem:[%s5090 + $0xd0] sm:$0x1]
      %v5131 = vsel %vm324, 0, %v5130
      %5132 = vst [vmem:[%s5090 + $0xd0] sm:$0x1] %v5131
      %v5133 = vld [vmem:[%s5090 + $0xe0] sm:$0x1]
      %v5134 = vsel %vm324, 0, %v5133
      %5135 = vst [vmem:[%s5090 + $0xe0] sm:$0x1] %v5134
      %v5136 = vld [vmem:[%s5090 + $0xf0] sm:$0x1]
      %v5137 = vsel %vm324, 0, %v5136
      %5138 = vst [vmem:[%s5090 + $0xf0] sm:$0x1] %v5137
      %v5139 = vld [vmem:[%s5090 + $0x8] sm:$0x1]
      %v5140 = vsel %vm374, 0, %v5139
      %5141 = vst [vmem:[%s5090 + $0x8] sm:$0x1] %v5140
      %v5142 = vld [vmem:[%s5090 + $0x18] sm:$0x1]
      %v5143 = vsel %vm374, 0, %v5142
      %5144 = vst [vmem:[%s5090 + $0x18] sm:$0x1] %v5143
      %v5145 = vld [vmem:[%s5090 + $0x28] sm:$0x1]
      %v5146 = vsel %vm374, 0, %v5145
      %5147 = vst [vmem:[%s5090 + $0x28] sm:$0x1] %v5146
      %v5148 = vld [vmem:[%s5090 + $0x38] sm:$0x1]
      %v5149 = vsel %vm374, 0, %v5148
      %5150 = vst [vmem:[%s5090 + $0x38] sm:$0x1] %v5149
      %v5151 = vld [vmem:[%s5090 + $0x48] sm:$0x1]
      %v5152 = vsel %vm374, 0, %v5151
      %5153 = vst [vmem:[%s5090 + $0x48] sm:$0x1] %v5152
      %v5154 = vld [vmem:[%s5090 + $0x58] sm:$0x1]
      %v5155 = vsel %vm374, 0, %v5154
      %5156 = vst [vmem:[%s5090 + $0x58] sm:$0x1] %v5155
      %v5157 = vld [vmem:[%s5090 + $0x68] sm:$0x1]
      %v5158 = vsel %vm374, 0, %v5157
      %5159 = vst [vmem:[%s5090 + $0x68] sm:$0x1] %v5158
      %v5160 = vld [vmem:[%s5090 + $0x78] sm:$0x1]
      %v5161 = vsel %vm374, 0, %v5160
      %5162 = vst [vmem:[%s5090 + $0x78] sm:$0x1] %v5161
      %v5163 = vld [vmem:[%s5090 + $0x88] sm:$0x1]
      %v5164 = vsel %vm374, 0, %v5163
      %5165 = vst [vmem:[%s5090 + $0x88] sm:$0x1] %v5164
      %v5166 = vld [vmem:[%s5090 + $0x98] sm:$0x1]
      %v5167 = vsel %vm374, 0, %v5166
      %5168 = vst [vmem:[%s5090 + $0x98] sm:$0x1] %v5167
      %v5169 = vld [vmem:[%s5090 + $0xa8] sm:$0x1]
      %v5170 = vsel %vm374, 0, %v5169
      %5171 = vst [vmem:[%s5090 + $0xa8] sm:$0x1] %v5170
      %v5172 = vld [vmem:[%s5090 + $0xb8] sm:$0x1]
      %v5173 = vsel %vm374, 0, %v5172
      %5174 = vst [vmem:[%s5090 + $0xb8] sm:$0x1] %v5173
      %v5175 = vld [vmem:[%s5090 + $0xc8] sm:$0x1]
      %v5176 = vsel %vm374, 0, %v5175
      %5177 = vst [vmem:[%s5090 + $0xc8] sm:$0x1] %v5176
      %v5178 = vld [vmem:[%s5090 + $0xd8] sm:$0x1]
      %v5179 = vsel %vm374, 0, %v5178
      %5180 = vst [vmem:[%s5090 + $0xd8] sm:$0x1] %v5179
      %v5181 = vld [vmem:[%s5090 + $0xe8] sm:$0x1]
      %v5182 = vsel %vm374, 0, %v5181
      %5183 = vst [vmem:[%s5090 + $0xe8] sm:$0x1] %v5182
      %v5184 = vld [vmem:[%s5090 + $0xf8] sm:$0x1]
      %v5185 = vsel %vm374, 0, %v5184
      %5186 = vst [vmem:[%s5090 + $0xf8] sm:$0x1] %v5185
      %v5188 = vshrl.u32 %v5049, 16
      %v5190 = vrot.slane %v5188, 7
      %v5191 = vshll.u32 %v5049, 16
      %v5193 = vor.u32 %v5190, %v5191
      %v5194 = vrot.slane %v5190, 4
      %v5196 = vshrl.u32 %v5050, 16
      %v5198 = vrot.slane %v5196, 7
      %v5199 = vshll.u32 %v5050, 16
      %v5201 = vor.u32 %v5198, %v5199
      %v5202 = vsel %vm424, %v5194, %v5201
      %v5203 = vrot.slane %v5198, 4
      %v5205 = vshrl.u32 %v5051, 16
      %v5207 = vrot.slane %v5205, 7
      %v5208 = vshll.u32 %v5051, 16
      %v5210 = vor.u32 %v5207, %v5208
      %v5211 = vrot.slane %v5207, 4
      %v5213 = vshrl.u32 %v5052, 16
      %v5215 = vrot.slane %v5213, 7
      %v5216 = vshll.u32 %v5052, 16
      %v5218 = vor.u32 %v5215, %v5216
      %v5219 = vsel %vm424, %v5211, %v5218
      %v5220 = vrot.slane %v5215, 4
      %v5222 = vshrl.u32 %v5053, 16
      %v5224 = vrot.slane %v5222, 7
      %v5225 = vshll.u32 %v5053, 16
      %v5227 = vor.u32 %v5224, %v5225
      %v5228 = vrot.slane %v5224, 4
      %v5230 = vshrl.u32 %v5054, 16
      %v5232 = vrot.slane %v5230, 7
      %v5233 = vshll.u32 %v5054, 16
      %v5235 = vor.u32 %v5232, %v5233
      %v5236 = vsel %vm424, %v5228, %v5235
      %v5237 = vrot.slane %v5232, 4
      %v5239 = vshrl.u32 %v5055, 16
      %v5241 = vrot.slane %v5239, 7
      %v5242 = vshll.u32 %v5055, 16
      %v5244 = vor.u32 %v5241, %v5242
      %v5245 = vrot.slane %v5241, 4
      %v5247 = vshrl.u32 %v5056, 16
      %v5249 = vrot.slane %v5247, 7
      %v5250 = vshll.u32 %v5056, 16
      %v5252 = vor.u32 %v5249, %v5250
      %v5253 = vsel %vm424, %v5245, %v5252
      %v5254 = vrot.slane %v5249, 4
      %v5256 = vshrl.u32 %v5057, 16
      %v5258 = vrot.slane %v5256, 7
      %v5259 = vshll.u32 %v5057, 16
      %v5261 = vor.u32 %v5258, %v5259
      %v5262 = vrot.slane %v5258, 4
      %v5264 = vshrl.u32 %v5058, 16
      %v5266 = vrot.slane %v5264, 7
      %v5267 = vshll.u32 %v5058, 16
      %v5269 = vor.u32 %v5266, %v5267
      %v5270 = vsel %vm424, %v5262, %v5269
      %v5271 = vrot.slane %v5266, 4
      %v5273 = vshrl.u32 %v5059, 16
      %v5275 = vrot.slane %v5273, 7
      %v5276 = vshll.u32 %v5059, 16
      %v5278 = vor.u32 %v5275, %v5276
      %v5279 = vrot.slane %v5275, 4
      %v5281 = vshrl.u32 %v5060, 16
      %v5283 = vrot.slane %v5281, 7
      %v5284 = vshll.u32 %v5060, 16
      %v5286 = vor.u32 %v5283, %v5284
      %v5287 = vsel %vm424, %v5279, %v5286
      %v5288 = vrot.slane %v5283, 4
      %v5290 = vshrl.u32 %v5061, 16
      %v5292 = vrot.slane %v5290, 7
      %v5293 = vshll.u32 %v5061, 16
      %v5295 = vor.u32 %v5292, %v5293
      %v5296 = vrot.slane %v5292, 4
      %v5298 = vshrl.u32 %v5062, 16
      %v5300 = vrot.slane %v5298, 7
      %v5301 = vshll.u32 %v5062, 16
      %v5303 = vor.u32 %v5300, %v5301
      %v5304 = vsel %vm424, %v5296, %v5303
      %v5305 = vrot.slane %v5300, 4
      %v5307 = vshrl.u32 %v5063, 16
      %v5309 = vrot.slane %v5307, 7
      %v5310 = vshll.u32 %v5063, 16
      %v5312 = vor.u32 %v5309, %v5310
      %v5313 = vrot.slane %v5309, 4
      %v5315 = vshrl.u32 %v5064, 16
      %v5317 = vrot.slane %v5315, 7
      %v5318 = vshll.u32 %v5064, 16
      %v5320 = vor.u32 %v5317, %v5318
      %v5321 = vsel %vm424, %v5313, %v5320
      %v5322 = vrot.slane %v5317, 4
      %v5324 = vshrl.u32 %v5065, 16
      %v5326 = vrot.slane %v5324, 7
      %v5327 = vshll.u32 %v5065, 16
      %v5329 = vor.u32 %v5326, %v5327
      %v5330 = vrot.slane %v5326, 4
      %v5332 = vshrl.u32 %v5066, 16
      %v5334 = vrot.slane %v5332, 7
      %v5335 = vshll.u32 %v5066, 16
      %v5337 = vor.u32 %v5334, %v5335
      %v5338 = vsel %vm424, %v5330, %v5337
      %v5339 = vrot.slane %v5334, 4
      %v5341 = vshrl.u32 %v5067, 16
      %v5343 = vrot.slane %v5341, 7
      %v5344 = vshll.u32 %v5067, 16
      %v5346 = vor.u32 %v5343, %v5344
      %v5347 = vrot.slane %v5343, 4
      %v5349 = vshrl.u32 %v5068, 16
      %v5351 = vrot.slane %v5349, 7
      %v5352 = vshll.u32 %v5068, 16
      %v5354 = vor.u32 %v5351, %v5352
      %v5355 = vsel %vm424, %v5347, %v5354
      %v5356 = vrot.slane %v5351, 4
      %v5358 = vshrl.u32 %v5069, 16
      %v5360 = vrot.slane %v5358, 7
      %v5361 = vshll.u32 %v5069, 16
      %v5363 = vor.u32 %v5360, %v5361
      %v5364 = vrot.slane %v5360, 4
      %v5366 = vshrl.u32 %v5070, 16
      %v5368 = vrot.slane %v5366, 7
      %v5369 = vshll.u32 %v5070, 16
      %v5371 = vor.u32 %v5368, %v5369
      %v5372 = vsel %vm424, %v5364, %v5371
      %v5373 = vrot.slane %v5368, 4
      %v5375 = vshrl.u32 %v5071, 16
      %v5377 = vrot.slane %v5375, 7
      %v5378 = vshll.u32 %v5071, 16
      %v5380 = vor.u32 %v5377, %v5378
      %v5381 = vrot.slane %v5377, 4
      %v5383 = vshrl.u32 %v5072, 16
      %v5385 = vrot.slane %v5383, 7
      %v5386 = vshll.u32 %v5072, 16
      %v5388 = vor.u32 %v5385, %v5386
      %v5389 = vsel %vm424, %v5381, %v5388
      %v5390 = vrot.slane %v5385, 4
      %v5392 = vshrl.u32 %v5073, 16
      %v5394 = vrot.slane %v5392, 7
      %v5395 = vshll.u32 %v5073, 16
      %v5397 = vor.u32 %v5394, %v5395
      %v5398 = vrot.slane %v5394, 4
      %v5400 = vshrl.u32 %v5074, 16
      %v5402 = vrot.slane %v5400, 7
      %v5403 = vshll.u32 %v5074, 16
      %v5405 = vor.u32 %v5402, %v5403
      %v5406 = vsel %vm424, %v5398, %v5405
      %v5407 = vrot.slane %v5402, 4
      %v5409 = vshrl.u32 %v5075, 16
      %v5411 = vrot.slane %v5409, 7
      %v5412 = vshll.u32 %v5075, 16
      %v5414 = vor.u32 %v5411, %v5412
      %v5415 = vrot.slane %v5411, 4
      %v5417 = vshrl.u32 %v5076, 16
      %v5419 = vrot.slane %v5417, 7
      %v5420 = vshll.u32 %v5076, 16
      %v5422 = vor.u32 %v5419, %v5420
      %v5423 = vsel %vm424, %v5415, %v5422
      %v5424 = vrot.slane %v5419, 4
      %v5426 = vshrl.u32 %v5077, 16
      %v5428 = vrot.slane %v5426, 7
      %v5429 = vshll.u32 %v5077, 16
      %v5431 = vor.u32 %v5428, %v5429
      %v5432 = vrot.slane %v5428, 4
      %v5434 = vshrl.u32 %v5078, 16
      %v5436 = vrot.slane %v5434, 7
      %v5437 = vshll.u32 %v5078, 16
      %v5439 = vor.u32 %v5436, %v5437
      %v5440 = vsel %vm424, %v5432, %v5439
      %v5441 = vrot.slane %v5436, 4
      %v5443 = vshrl.u32 %v5079, 16
      %v5445 = vrot.slane %v5443, 7
      %v5446 = vshll.u32 %v5079, 16
      %v5448 = vor.u32 %v5445, %v5446
      %v5449 = vrot.slane %v5445, 4
      %v5451 = vshrl.u32 %v5080, 16
      %v5453 = vrot.slane %v5451, 7
      %v5454 = vshll.u32 %v5080, 16
      %v5456 = vor.u32 %v5453, %v5454
      %v5457 = vsel %vm424, %v5449, %v5456
      %v5458 = vrot.slane %v5453, 4
      %v5507 = vld [vmem:[%s5090] sm:$0xf]
      %v5508 = vsel %vm746, %v5193, %v5507
      %5509 = vst [vmem:[%s5090] sm:$0xf] %v5508
      %5510 = vst [vmem:[%s5090 + $0x4] sm:$0xf] %v5202
      %v5511 = vld [vmem:[%s5090 + $0x8] sm:$0x1]
      %v5512 = vsel %vm324, %v5203, %v5511
      %5513 = vst [vmem:[%s5090 + $0x8] sm:$0x1] %v5512
      %v5514 = vld [vmem:[%s5090 + $0x10] sm:$0xf]
      %v5515 = vsel %vm746, %v5210, %v5514
      %5516 = vst [vmem:[%s5090 + $0x10] sm:$0xf] %v5515
      %5517 = vst [vmem:[%s5090 + $0x14] sm:$0xf] %v5219
      %v5518 = vld [vmem:[%s5090 + $0x18] sm:$0x1]
      %v5519 = vsel %vm324, %v5220, %v5518
      %5520 = vst [vmem:[%s5090 + $0x18] sm:$0x1] %v5519
      %v5521 = vld [vmem:[%s5090 + $0x20] sm:$0xf]
      %v5522 = vsel %vm746, %v5227, %v5521
      %5523 = vst [vmem:[%s5090 + $0x20] sm:$0xf] %v5522
      %5524 = vst [vmem:[%s5090 + $0x24] sm:$0xf] %v5236
      %v5525 = vld [vmem:[%s5090 + $0x28] sm:$0x1]
      %v5526 = vsel %vm324, %v5237, %v5525
      %5527 = vst [vmem:[%s5090 + $0x28] sm:$0x1] %v5526
      %v5528 = vld [vmem:[%s5090 + $0x30] sm:$0xf]
      %v5529 = vsel %vm746, %v5244, %v5528
      %5530 = vst [vmem:[%s5090 + $0x30] sm:$0xf] %v5529
      %5531 = vst [vmem:[%s5090 + $0x34] sm:$0xf] %v5253
      %v5532 = vld [vmem:[%s5090 + $0x38] sm:$0x1]
      %v5533 = vsel %vm324, %v5254, %v5532
      %5534 = vst [vmem:[%s5090 + $0x38] sm:$0x1] %v5533
      %v5535 = vld [vmem:[%s5090 + $0x40] sm:$0xf]
      %v5536 = vsel %vm746, %v5261, %v5535
      %5537 = vst [vmem:[%s5090 + $0x40] sm:$0xf] %v5536
      %5538 = vst [vmem:[%s5090 + $0x44] sm:$0xf] %v5270
      %v5539 = vld [vmem:[%s5090 + $0x48] sm:$0x1]
      %v5540 = vsel %vm324, %v5271, %v5539
      %5541 = vst [vmem:[%s5090 + $0x48] sm:$0x1] %v5540
      %v5542 = vld [vmem:[%s5090 + $0x50] sm:$0xf]
      %v5543 = vsel %vm746, %v5278, %v5542
      %5544 = vst [vmem:[%s5090 + $0x50] sm:$0xf] %v5543
      %5545 = vst [vmem:[%s5090 + $0x54] sm:$0xf] %v5287
      %v5546 = vld [vmem:[%s5090 + $0x58] sm:$0x1]
      %v5547 = vsel %vm324, %v5288, %v5546
      %5548 = vst [vmem:[%s5090 + $0x58] sm:$0x1] %v5547
      %v5549 = vld [vmem:[%s5090 + $0x60] sm:$0xf]
      %v5550 = vsel %vm746, %v5295, %v5549
      %5551 = vst [vmem:[%s5090 + $0x60] sm:$0xf] %v5550
      %5552 = vst [vmem:[%s5090 + $0x64] sm:$0xf] %v5304
      %v5553 = vld [vmem:[%s5090 + $0x68] sm:$0x1]
      %v5554 = vsel %vm324, %v5305, %v5553
      %5555 = vst [vmem:[%s5090 + $0x68] sm:$0x1] %v5554
      %v5556 = vld [vmem:[%s5090 + $0x70] sm:$0xf]
      %v5557 = vsel %vm746, %v5312, %v5556
      %5558 = vst [vmem:[%s5090 + $0x70] sm:$0xf] %v5557
      %5559 = vst [vmem:[%s5090 + $0x74] sm:$0xf] %v5321
      %v5560 = vld [vmem:[%s5090 + $0x78] sm:$0x1]
      %v5561 = vsel %vm324, %v5322, %v5560
      %5562 = vst [vmem:[%s5090 + $0x78] sm:$0x1] %v5561
      %v5563 = vld [vmem:[%s5090 + $0x80] sm:$0xf]
      %v5564 = vsel %vm746, %v5329, %v5563
      %5565 = vst [vmem:[%s5090 + $0x80] sm:$0xf] %v5564
      %5566 = vst [vmem:[%s5090 + $0x84] sm:$0xf] %v5338
      %v5567 = vld [vmem:[%s5090 + $0x88] sm:$0x1]
      %v5568 = vsel %vm324, %v5339, %v5567
      %5569 = vst [vmem:[%s5090 + $0x88] sm:$0x1] %v5568
      %v5570 = vld [vmem:[%s5090 + $0x90] sm:$0xf]
      %v5571 = vsel %vm746, %v5346, %v5570
      %5572 = vst [vmem:[%s5090 + $0x90] sm:$0xf] %v5571
      %5573 = vst [vmem:[%s5090 + $0x94] sm:$0xf] %v5355
      %v5574 = vld [vmem:[%s5090 + $0x98] sm:$0x1]
      %v5575 = vsel %vm324, %v5356, %v5574
      %5576 = vst [vmem:[%s5090 + $0x98] sm:$0x1] %v5575
      %v5577 = vld [vmem:[%s5090 + $0xa0] sm:$0xf]
      %v5578 = vsel %vm746, %v5363, %v5577
      %5579 = vst [vmem:[%s5090 + $0xa0] sm:$0xf] %v5578
      %5580 = vst [vmem:[%s5090 + $0xa4] sm:$0xf] %v5372
      %v5581 = vld [vmem:[%s5090 + $0xa8] sm:$0x1]
      %v5582 = vsel %vm324, %v5373, %v5581
      %5583 = vst [vmem:[%s5090 + $0xa8] sm:$0x1] %v5582
      %v5584 = vld [vmem:[%s5090 + $0xb0] sm:$0xf]
      %v5585 = vsel %vm746, %v5380, %v5584
      %5586 = vst [vmem:[%s5090 + $0xb0] sm:$0xf] %v5585
      %5587 = vst [vmem:[%s5090 + $0xb4] sm:$0xf] %v5389
      %v5588 = vld [vmem:[%s5090 + $0xb8] sm:$0x1]
      %v5589 = vsel %vm324, %v5390, %v5588
      %5590 = vst [vmem:[%s5090 + $0xb8] sm:$0x1] %v5589
      %v5591 = vld [vmem:[%s5090 + $0xc0] sm:$0xf]
      %v5592 = vsel %vm746, %v5397, %v5591
      %5593 = vst [vmem:[%s5090 + $0xc0] sm:$0xf] %v5592
      %5594 = vst [vmem:[%s5090 + $0xc4] sm:$0xf] %v5406
      %v5595 = vld [vmem:[%s5090 + $0xc8] sm:$0x1]
      %v5596 = vsel %vm324, %v5407, %v5595
      %5597 = vst [vmem:[%s5090 + $0xc8] sm:$0x1] %v5596
      %v5598 = vld [vmem:[%s5090 + $0xd0] sm:$0xf]
      %v5599 = vsel %vm746, %v5414, %v5598
      %5600 = vst [vmem:[%s5090 + $0xd0] sm:$0xf] %v5599
      %5601 = vst [vmem:[%s5090 + $0xd4] sm:$0xf] %v5423
      %v5602 = vld [vmem:[%s5090 + $0xd8] sm:$0x1]
      %v5603 = vsel %vm324, %v5424, %v5602
      %5604 = vst [vmem:[%s5090 + $0xd8] sm:$0x1] %v5603
      %v5605 = vld [vmem:[%s5090 + $0xe0] sm:$0xf]
      %v5606 = vsel %vm746, %v5431, %v5605
      %5607 = vst [vmem:[%s5090 + $0xe0] sm:$0xf] %v5606
      %5608 = vst [vmem:[%s5090 + $0xe4] sm:$0xf] %v5440
      %v5609 = vld [vmem:[%s5090 + $0xe8] sm:$0x1]
      %v5610 = vsel %vm324, %v5441, %v5609
      %5611 = vst [vmem:[%s5090 + $0xe8] sm:$0x1] %v5610
      %v5612 = vld [vmem:[%s5090 + $0xf0] sm:$0xf]
      %v5613 = vsel %vm746, %v5448, %v5612
      %5614 = vst [vmem:[%s5090 + $0xf0] sm:$0xf] %v5613
      %5615 = vst [vmem:[%s5090 + $0xf4] sm:$0xf] %v5457
      %v5616 = vld [vmem:[%s5090 + $0xf8] sm:$0x1]
      %v5617 = vsel %vm324, %v5458, %v5616
      %5618 = vst [vmem:[%s5090 + $0xf8] sm:$0x1] %v5617
      %5619 = vst [vmem:[#allocation4] sm:$0xff] 0.0
      %5620 = vst [vmem:[#allocation4 + $0x8] sm:$0xff] 0.0
      %5621 = vst [vmem:[#allocation4 + $0x10] sm:$0xff] 0.0
      %5622 = vst [vmem:[#allocation4 + $0x18] sm:$0xff] 0.0
      %5623 = vst [vmem:[#allocation4 + $0x20] sm:$0xff] 0.0
      %5624 = vst [vmem:[#allocation4 + $0x28] sm:$0xff] 0.0
      %5625 = vst [vmem:[#allocation4 + $0x30] sm:$0xff] 0.0
      %5626 = vst [vmem:[#allocation4 + $0x38] sm:$0xff] 0.0
      %5627 = vst [vmem:[#allocation4 + $0x40] sm:$0xff] 0.0
      %5628 = vst [vmem:[#allocation4 + $0x48] sm:$0xff] 0.0
      %5629 = vst [vmem:[#allocation4 + $0x50] sm:$0xff] 0.0
      %5630 = vst [vmem:[#allocation4 + $0x58] sm:$0xff] 0.0
      %5631 = vst [vmem:[#allocation4 + $0x60] sm:$0xff] 0.0
      %5632 = vst [vmem:[#allocation4 + $0x68] sm:$0xff] 0.0
      %5633 = vst [vmem:[#allocation4 + $0x70] sm:$0xff] 0.0
      %5634 = vst [vmem:[#allocation4 + $0x78] sm:$0xff] 0.0
      %5635 = vst [vmem:[#allocation4 + $0x80] sm:$0xff] 0.0
      %5636 = vst [vmem:[#allocation4 + $0x88] sm:$0xff] 0.0
      %5637 = vst [vmem:[#allocation4 + $0x90] sm:$0xff] 0.0
      %5638 = vst [vmem:[#allocation4 + $0x98] sm:$0xff] 0.0
      %5639 = vst [vmem:[#allocation4 + $0xa0] sm:$0xff] 0.0
      %5640 = vst [vmem:[#allocation4 + $0xa8] sm:$0xff] 0.0
      %5641 = vst [vmem:[#allocation4 + $0xb0] sm:$0xff] 0.0
      %5642 = vst [vmem:[#allocation4 + $0xb8] sm:$0xff] 0.0
      %5643 = vst [vmem:[#allocation4 + $0xc0] sm:$0xff] 0.0
      %5644 = vst [vmem:[#allocation4 + $0xc8] sm:$0xff] 0.0
      %5645 = vst [vmem:[#allocation4 + $0xd0] sm:$0xff] 0.0
      %5646 = vst [vmem:[#allocation4 + $0xd8] sm:$0xff] 0.0
      %5647 = vst [vmem:[#allocation4 + $0xe0] sm:$0xff] 0.0
      %5648 = vst [vmem:[#allocation4 + $0xe8] sm:$0xff] 0.0
      %5649 = vst [vmem:[#allocation4 + $0xf0] sm:$0xff] 0.0
      %5650 = vst [vmem:[#allocation4 + $0xf8] sm:$0xff] 0.0
      %v5651 = vld [vmem:[#allocation3] sm:$0xf]
      %v5652 = vld [vmem:[#allocation3 + $0x4] sm:$0xf]
      %v5653 = vld [vmem:[#allocation3 + $0x8] sm:$0xf]
      %v5654 = vld [vmem:[#allocation3 + $0xc] sm:$0xf]
      %v5655 = vld [vmem:[#allocation3 + $0x10] sm:$0xf]
      %v5656 = vld [vmem:[#allocation3 + $0x14] sm:$0xf]
      %v5657 = vld [vmem:[#allocation3 + $0x18] sm:$0xf]
      %v5658 = vld [vmem:[#allocation3 + $0x1c] sm:$0xf]
      %v5659 = vld [vmem:[#allocation3 + $0x20] sm:$0xf]
      %v5660 = vld [vmem:[#allocation3 + $0x24] sm:$0xf]
      %v5661 = vld [vmem:[#allocation3 + $0x28] sm:$0xf]
      %v5662 = vld [vmem:[#allocation3 + $0x2c] sm:$0xf]
      %v5663 = vld [vmem:[#allocation3 + $0x30] sm:$0xf]
      %v5664 = vld [vmem:[#allocation3 + $0x34] sm:$0xf]
      %v5665 = vld [vmem:[#allocation3 + $0x38] sm:$0xf]
      %v5666 = vld [vmem:[#allocation3 + $0x3c] sm:$0xf]
      %v5667 = vld [vmem:[#allocation3 + $0x40] sm:$0xf]
      %v5668 = vld [vmem:[#allocation3 + $0x44] sm:$0xf]
      %v5669 = vld [vmem:[#allocation3 + $0x48] sm:$0xf]
      %v5670 = vld [vmem:[#allocation3 + $0x4c] sm:$0xf]
      %v5671 = vld [vmem:[#allocation3 + $0x50] sm:$0xf]
      %v5672 = vld [vmem:[#allocation3 + $0x54] sm:$0xf]
      %v5673 = vld [vmem:[#allocation3 + $0x58] sm:$0xf]
      %v5674 = vld [vmem:[#allocation3 + $0x5c] sm:$0xf]
      %v5675 = vld [vmem:[#allocation3 + $0x60] sm:$0xf]
      %v5676 = vld [vmem:[#allocation3 + $0x64] sm:$0xf]
      %v5677 = vld [vmem:[#allocation3 + $0x68] sm:$0xf]
      %v5678 = vld [vmem:[#allocation3 + $0x6c] sm:$0xf]
      %v5679 = vld [vmem:[#allocation3 + $0x70] sm:$0xf]
      %v5680 = vld [vmem:[#allocation3 + $0x74] sm:$0xf]
      %v5681 = vld [vmem:[#allocation3 + $0x78] sm:$0xf]
      %v5682 = vld [vmem:[#allocation3 + $0x7c] sm:$0xf]
      %v5683 = vld [vmem:[#allocation3 + $0x80] sm:$0xf]
      %v5684 = vld [vmem:[#allocation3 + $0x84] sm:$0xf]
      %v5685 = vld [vmem:[#allocation3 + $0x88] sm:$0xf]
      %v5686 = vld [vmem:[#allocation3 + $0x8c] sm:$0xf]
      %v5687 = vld [vmem:[#allocation3 + $0x90] sm:$0xf]
      %v5688 = vld [vmem:[#allocation3 + $0x94] sm:$0xf]
      %v5689 = vld [vmem:[#allocation3 + $0x98] sm:$0xf]
      %v5690 = vld [vmem:[#allocation3 + $0x9c] sm:$0xf]
      %v5691 = vld [vmem:[#allocation3 + $0xa0] sm:$0xf]
      %v5692 = vld [vmem:[#allocation3 + $0xa4] sm:$0xf]
      %v5693 = vld [vmem:[#allocation3 + $0xa8] sm:$0xf]
      %v5694 = vld [vmem:[#allocation3 + $0xac] sm:$0xf]
      %v5695 = vld [vmem:[#allocation3 + $0xb0] sm:$0xf]
      %v5696 = vld [vmem:[#allocation3 + $0xb4] sm:$0xf]
      %v5697 = vld [vmem:[#allocation3 + $0xb8] sm:$0xf]
      %v5698 = vld [vmem:[#allocation3 + $0xbc] sm:$0xf]
      %v5699 = vld [vmem:[#allocation3 + $0xc0] sm:$0xf]
      %v5700 = vld [vmem:[#allocation3 + $0xc4] sm:$0xf]
      %v5701 = vld [vmem:[#allocation3 + $0xc8] sm:$0xf]
      %v5702 = vld [vmem:[#allocation3 + $0xcc] sm:$0xf]
      %v5703 = vld [vmem:[#allocation3 + $0xd0] sm:$0xf]
      %v5704 = vld [vmem:[#allocation3 + $0xd4] sm:$0xf]
      %v5705 = vld [vmem:[#allocation3 + $0xd8] sm:$0xf]
      %v5706 = vld [vmem:[#allocation3 + $0xdc] sm:$0xf]
      %v5707 = vld [vmem:[#allocation3 + $0xe0] sm:$0xf]
      %v5708 = vld [vmem:[#allocation3 + $0xe4] sm:$0xf]
      %v5709 = vld [vmem:[#allocation3 + $0xe8] sm:$0xf]
      %v5710 = vld [vmem:[#allocation3 + $0xec] sm:$0xf]
      %v5711 = vld [vmem:[#allocation3 + $0xf0] sm:$0xf]
      %v5712 = vld [vmem:[#allocation3 + $0xf4] sm:$0xf]
      %v5713 = vld [vmem:[#allocation3 + $0xf8] sm:$0xf]
      %v5714 = vld [vmem:[#allocation3 + $0xfc] sm:$0xf]
      %v5715 = vld [vmem:[%s2] sm:$0xff]
      %v5716 = vld [vmem:[%s2 + $0x8] sm:$0xf]
      %v5717 = vld [vmem:[%s2 + $0xc] sm:$0xff]
      %v5718 = vld [vmem:[%s2 + $0x14] sm:$0xf]
      %v5719 = vld [vmem:[%s2 + $0x18] sm:$0xff]
      %v5720 = vld [vmem:[%s2 + $0x20] sm:$0xf]
      %v5721 = vld [vmem:[%s2 + $0x24] sm:$0xff]
      %v5722 = vld [vmem:[%s2 + $0x2c] sm:$0xf]
      %v5723 = vld [vmem:[%s2 + $0x30] sm:$0xff]
      %v5724 = vld [vmem:[%s2 + $0x38] sm:$0xf]
      %v5725 = vld [vmem:[%s2 + $0x3c] sm:$0xff]
      %v5726 = vld [vmem:[%s2 + $0x44] sm:$0xf]
      %v5727 = vld [vmem:[%s2 + $0x48] sm:$0xff]
      %v5728 = vld [vmem:[%s2 + $0x50] sm:$0xf]
      %v5729 = vld [vmem:[%s2 + $0x54] sm:$0xff]
      %v5730 = vld [vmem:[%s2 + $0x5c] sm:$0xf]
      %v5731 = vld [vmem:[%s2 + $0x60] sm:$0xff]
      %v5732 = vld [vmem:[%s2 + $0x68] sm:$0xf]
      %v5733 = vld [vmem:[%s2 + $0x6c] sm:$0xff]
      %v5734 = vld [vmem:[%s2 + $0x74] sm:$0xf]
      %v5735 = vld [vmem:[%s2 + $0x78] sm:$0xff]
      %v5736 = vld [vmem:[%s2 + $0x80] sm:$0xf]
      %v5737 = vld [vmem:[%s2 + $0x84] sm:$0xff]
      %v5738 = vld [vmem:[%s2 + $0x8c] sm:$0xf]
      %v5739 = vld [vmem:[%s2 + $0x90] sm:$0xff]
      %v5740 = vld [vmem:[%s2 + $0x98] sm:$0xf]
      %v5741 = vld [vmem:[%s2 + $0x9c] sm:$0xff]
      %v5742 = vld [vmem:[%s2 + $0xa4] sm:$0xf]
      %v5743 = vld [vmem:[%s2 + $0xa8] sm:$0xff]
      %v5744 = vld [vmem:[%s2 + $0xb0] sm:$0xf]
      %v5745 = vld [vmem:[%s2 + $0xb4] sm:$0xff]
      %v5746 = vld [vmem:[%s2 + $0xbc] sm:$0xf]
      %v5811 = vunpack.c.l.b16 %v5651
      %v5812 = vunpack.c.l.b16 %v5652
      %v5813 = vunpack.c.l.b16 %v5653
      %v5814 = vunpack.c.l.b16 %v5654
      %v5815 = vunpack.c.l.b16 %v5655
      %v5816 = vunpack.c.l.b16 %v5656
      %v5817 = vunpack.c.l.b16 %v5657
      %v5818 = vunpack.c.l.b16 %v5658
      %v5819 = vunpack.c.l.b16 %v5659
      %v5820 = vunpack.c.l.b16 %v5660
      %v5821 = vunpack.c.l.b16 %v5661
      %v5822 = vunpack.c.l.b16 %v5662
      %v5823 = vunpack.c.l.b16 %v5663
      %v5824 = vunpack.c.l.b16 %v5664
      %v5825 = vunpack.c.l.b16 %v5665
      %v5826 = vunpack.c.l.b16 %v5666
      %v5827 = vunpack.c.l.b16 %v5667
      %v5828 = vunpack.c.l.b16 %v5668
      %v5829 = vunpack.c.l.b16 %v5669
      %v5830 = vunpack.c.l.b16 %v5670
      %v5831 = vunpack.c.l.b16 %v5671
      %v5832 = vunpack.c.l.b16 %v5672
      %v5833 = vunpack.c.l.b16 %v5673
      %v5834 = vunpack.c.l.b16 %v5674
      %v5835 = vunpack.c.l.b16 %v5675
      %v5836 = vunpack.c.l.b16 %v5676
      %v5837 = vunpack.c.l.b16 %v5677
      %v5838 = vunpack.c.l.b16 %v5678
      %v5839 = vunpack.c.l.b16 %v5679
      %v5840 = vunpack.c.l.b16 %v5680
      %v5841 = vunpack.c.l.b16 %v5681
      %v5842 = vunpack.c.l.b16 %v5682
      %v5843 = vunpack.c.l.b16 %v5683
      %v5844 = vunpack.c.l.b16 %v5684
      %v5845 = vunpack.c.l.b16 %v5685
      %v5846 = vunpack.c.l.b16 %v5686
      %v5847 = vunpack.c.l.b16 %v5687
      %v5848 = vunpack.c.l.b16 %v5688
      %v5849 = vunpack.c.l.b16 %v5689
      %v5850 = vunpack.c.l.b16 %v5690
      %v5851 = vunpack.c.l.b16 %v5691
      %v5852 = vunpack.c.l.b16 %v5692
      %v5853 = vunpack.c.l.b16 %v5693
      %v5854 = vunpack.c.l.b16 %v5694
      %v5855 = vunpack.c.l.b16 %v5695
      %v5856 = vunpack.c.l.b16 %v5696
      %v5857 = vunpack.c.l.b16 %v5697
      %v5858 = vunpack.c.l.b16 %v5698
      %v5859 = vunpack.c.l.b16 %v5699
      %v5860 = vunpack.c.l.b16 %v5700
      %v5861 = vunpack.c.l.b16 %v5701
      %v5862 = vunpack.c.l.b16 %v5702
      %v5863 = vunpack.c.l.b16 %v5703
      %v5864 = vunpack.c.l.b16 %v5704
      %v5865 = vunpack.c.l.b16 %v5705
      %v5866 = vunpack.c.l.b16 %v5706
      %v5867 = vunpack.c.l.b16 %v5707
      %v5868 = vunpack.c.l.b16 %v5708
      %v5869 = vunpack.c.l.b16 %v5709
      %v5870 = vunpack.c.l.b16 %v5710
      %v5871 = vunpack.c.l.b16 %v5711
      %v5872 = vunpack.c.l.b16 %v5712
      %v5873 = vunpack.c.l.b16 %v5713
      %v5874 = vunpack.c.l.b16 %v5714
      %v5875 = vpack.c.b16 %v5812, %v5811
      %v5876 = vpack.c.b16 %v5814, %v5813
      %v5877 = vpack.c.b16 %v5816, %v5815
      %v5878 = vpack.c.b16 %v5818, %v5817
      %v5879 = vpack.c.b16 %v5820, %v5819
      %v5880 = vpack.c.b16 %v5822, %v5821
      %v5881 = vpack.c.b16 %v5824, %v5823
      %v5882 = vpack.c.b16 %v5826, %v5825
      %v5883 = vpack.c.b16 %v5828, %v5827
      %v5884 = vpack.c.b16 %v5830, %v5829
      %v5885 = vpack.c.b16 %v5832, %v5831
      %v5886 = vpack.c.b16 %v5834, %v5833
      %v5887 = vpack.c.b16 %v5836, %v5835
      %v5888 = vpack.c.b16 %v5838, %v5837
      %v5889 = vpack.c.b16 %v5840, %v5839
      %v5890 = vpack.c.b16 %v5842, %v5841
      %v5891 = vpack.c.b16 %v5844, %v5843
      %v5892 = vpack.c.b16 %v5846, %v5845
      %v5893 = vpack.c.b16 %v5848, %v5847
      %v5894 = vpack.c.b16 %v5850, %v5849
      %v5895 = vpack.c.b16 %v5852, %v5851
      %v5896 = vpack.c.b16 %v5854, %v5853
      %v5897 = vpack.c.b16 %v5856, %v5855
      %v5898 = vpack.c.b16 %v5858, %v5857
      %v5899 = vpack.c.b16 %v5860, %v5859
      %v5900 = vpack.c.b16 %v5862, %v5861
      %v5901 = vpack.c.b16 %v5864, %v5863
      %v5902 = vpack.c.b16 %v5866, %v5865
      %v5903 = vpack.c.b16 %v5868, %v5867
      %v5904 = vpack.c.b16 %v5870, %v5869
      %v5905 = vpack.c.b16 %v5872, %v5871
      %v5906 = vpack.c.b16 %v5874, %v5873
      %v5971 = vunpack.c.l.b16 %v5715
      %v5972 = vunpack.c.h.b16 %v5715
      %v5973 = vunpack.c.l.b16 %v5716
      %v5974 = vunpack.c.l.b16 %v5717
      %v5975 = vunpack.c.h.b16 %v5717
      %v5976 = vunpack.c.l.b16 %v5718
      %v5977 = vunpack.c.l.b16 %v5719
      %v5978 = vunpack.c.h.b16 %v5719
      %v5979 = vunpack.c.l.b16 %v5720
      %v5980 = vunpack.c.l.b16 %v5721
      %v5981 = vunpack.c.h.b16 %v5721
      %v5982 = vunpack.c.l.b16 %v5722
      %v5983 = vunpack.c.l.b16 %v5723
      %v5984 = vunpack.c.h.b16 %v5723
      %v5985 = vunpack.c.l.b16 %v5724
      %v5986 = vunpack.c.l.b16 %v5725
      %v5987 = vunpack.c.h.b16 %v5725
      %v5988 = vunpack.c.l.b16 %v5726
      %v5989 = vunpack.c.l.b16 %v5727
      %v5990 = vunpack.c.h.b16 %v5727
      %v5991 = vunpack.c.l.b16 %v5728
      %v5992 = vunpack.c.l.b16 %v5729
      %v5993 = vunpack.c.h.b16 %v5729
      %v5994 = vunpack.c.l.b16 %v5730
      %v5995 = vunpack.c.l.b16 %v5731
      %v5996 = vunpack.c.h.b16 %v5731
      %v5997 = vunpack.c.l.b16 %v5732
      %v5998 = vunpack.c.l.b16 %v5733
      %v5999 = vunpack.c.h.b16 %v5733
      %v6000 = vunpack.c.l.b16 %v5734
      %v6001 = vunpack.c.l.b16 %v5735
      %v6002 = vunpack.c.h.b16 %v5735
      %v6003 = vunpack.c.l.b16 %v5736
      %v6004 = vunpack.c.l.b16 %v5737
      %v6005 = vunpack.c.h.b16 %v5737
      %v6006 = vunpack.c.l.b16 %v5738
      %v6007 = vunpack.c.l.b16 %v5739
      %v6008 = vunpack.c.h.b16 %v5739
      %v6009 = vunpack.c.l.b16 %v5740
      %v6010 = vunpack.c.l.b16 %v5741
      %v6011 = vunpack.c.h.b16 %v5741
      %v6012 = vunpack.c.l.b16 %v5742
      %v6013 = vunpack.c.l.b16 %v5743
      %v6014 = vunpack.c.h.b16 %v5743
      %v6015 = vunpack.c.l.b16 %v5744
      %v6016 = vunpack.c.l.b16 %v5745
      %v6017 = vunpack.c.h.b16 %v5745
      %v6018 = vunpack.c.l.b16 %v5746
      %v6019 = vpack.c.b16 %v5974, %v5971
      %v6020 = vpack.c.b16 %v5975, %v5972
      %v6021 = vpack.c.b16 %v5976, %v5973
      %v6022 = vpack.c.b16 %v5980, %v5977
      %v6023 = vpack.c.b16 %v5981, %v5978
      %v6024 = vpack.c.b16 %v5982, %v5979
      %v6025 = vpack.c.b16 %v5986, %v5983
      %v6026 = vpack.c.b16 %v5987, %v5984
      %v6027 = vpack.c.b16 %v5988, %v5985
      %v6028 = vpack.c.b16 %v5992, %v5989
      %v6029 = vpack.c.b16 %v5993, %v5990
      %v6030 = vpack.c.b16 %v5994, %v5991
      %v6031 = vpack.c.b16 %v5998, %v5995
      %v6032 = vpack.c.b16 %v5999, %v5996
      %v6033 = vpack.c.b16 %v6000, %v5997
      %v6034 = vpack.c.b16 %v6004, %v6001
      %v6035 = vpack.c.b16 %v6005, %v6002
      %v6036 = vpack.c.b16 %v6006, %v6003
      %v6037 = vpack.c.b16 %v6010, %v6007
      %v6038 = vpack.c.b16 %v6011, %v6008
      %v6039 = vpack.c.b16 %v6012, %v6009
      %v6040 = vpack.c.b16 %v6016, %v6013
      %v6041 = vpack.c.b16 %v6017, %v6014
      %v6042 = vpack.c.b16 %v6018, %v6015
      %6067 = vmatpush.bf16.msra.mxu0 %v6040
      %6068 = vmatpush.bf16.msra.mxu0 %v6037
      %6069 = vmatpush.bf16.msra.mxu0 %v6034
      %6070 = vmatpush.bf16.msra.mxu0 %v6031
      %6071 = vmatpush.bf16.msra.mxu0 %v6028
      %6072 = vmatpush.bf16.msra.mxu0 %v6025
      %6073 = vmatpush.bf16.msra.mxu0 %v6022
      %6074 = vmatpush.bf16.msra.mxu0 %v6019
      %6075 = vmatmul.bf16.gmra.mxu0 %v5875
      %v6076 = vpop.f32.mrf.mxu0
      %v6077 = vadd.f32 0.0, %v6076
      %v6078 = vpop.f32.mrf.mxu0
      %v6079 = vadd.f32 0.0, %v6078
      %6080 = vmatmul.bf16.gmra.mxu0 %v5876
      %v6081 = vpop.f32.mrf.mxu0
      %v6082 = vpop.f32.mrf.mxu0
      %6083 = vmatmul.bf16.gmra.mxu0 %v5877
      %v6084 = vpop.f32.mrf.mxu0
      %v6085 = vadd.f32 0.0, %v6084
      %v6086 = vpop.f32.mrf.mxu0
      %v6087 = vadd.f32 0.0, %v6086
      %6088 = vmatmul.bf16.gmra.mxu0 %v5878
      %v6089 = vpop.f32.mrf.mxu0
      %v6090 = vpop.f32.mrf.mxu0
      %6091 = vmatmul.bf16.gmra.mxu0 %v5879
      %v6092 = vpop.f32.mrf.mxu0
      %v6093 = vadd.f32 0.0, %v6092
      %v6094 = vpop.f32.mrf.mxu0
      %v6095 = vadd.f32 0.0, %v6094
      %6096 = vmatmul.bf16.gmra.mxu0 %v5880
      %v6097 = vpop.f32.mrf.mxu0
      %v6098 = vpop.f32.mrf.mxu0
      %6099 = vmatmul.bf16.gmra.mxu0 %v5881
      %v6100 = vpop.f32.mrf.mxu0
      %v6101 = vadd.f32 0.0, %v6100
      %v6102 = vpop.f32.mrf.mxu0
      %v6103 = vadd.f32 0.0, %v6102
      %6104 = vmatmul.bf16.gmra.mxu0 %v5882
      %v6105 = vpop.f32.mrf.mxu0
      %v6106 = vpop.f32.mrf.mxu0
      %6107 = vmatmul.bf16.gmra.mxu0 %v5883
      %v6108 = vpop.f32.mrf.mxu0
      %v6109 = vadd.f32 0.0, %v6108
      %v6110 = vpop.f32.mrf.mxu0
      %v6111 = vadd.f32 0.0, %v6110
      %6112 = vmatmul.bf16.gmra.mxu0 %v5884
      %v6113 = vpop.f32.mrf.mxu0
      %v6114 = vpop.f32.mrf.mxu0
      %6115 = vmatmul.bf16.gmra.mxu0 %v5885
      %v6116 = vpop.f32.mrf.mxu0
      %v6117 = vadd.f32 0.0, %v6116
      %v6118 = vpop.f32.mrf.mxu0
      %v6119 = vadd.f32 0.0, %v6118
      %6120 = vmatmul.bf16.gmra.mxu0 %v5886
      %v6121 = vpop.f32.mrf.mxu0
      %v6122 = vpop.f32.mrf.mxu0
      %6123 = vmatmul.bf16.gmra.mxu0 %v5887
      %v6124 = vpop.f32.mrf.mxu0
      %v6125 = vadd.f32 0.0, %v6124
      %v6126 = vpop.f32.mrf.mxu0
      %v6127 = vadd.f32 0.0, %v6126
      %6128 = vmatmul.bf16.gmra.mxu0 %v5888
      %v6129 = vpop.f32.mrf.mxu0
      %v6130 = vpop.f32.mrf.mxu0
      %6131 = vmatmul.bf16.gmra.mxu0 %v5889
      %v6132 = vpop.f32.mrf.mxu0
      %v6133 = vadd.f32 0.0, %v6132
      %v6134 = vpop.f32.mrf.mxu0
      %v6135 = vadd.f32 0.0, %v6134
      %6136 = vmatmul.bf16.gmra.mxu0 %v5890
      %v6137 = vpop.f32.mrf.mxu0
      %v6138 = vpop.f32.mrf.mxu0
      %6139 = vmatmul.bf16.gmra.mxu0 %v5891
      %v6140 = vpop.f32.mrf.mxu0
      %v6141 = vadd.f32 0.0, %v6140
      %v6142 = vpop.f32.mrf.mxu0
      %v6143 = vadd.f32 0.0, %v6142
      %6144 = vmatmul.bf16.gmra.mxu0 %v5892
      %v6145 = vpop.f32.mrf.mxu0
      %v6146 = vpop.f32.mrf.mxu0
      %6147 = vmatmul.bf16.gmra.mxu0 %v5893
      %v6148 = vpop.f32.mrf.mxu0
      %v6149 = vadd.f32 0.0, %v6148
      %v6150 = vpop.f32.mrf.mxu0
      %v6151 = vadd.f32 0.0, %v6150
      %6152 = vmatmul.bf16.gmra.mxu0 %v5894
      %v6153 = vpop.f32.mrf.mxu0
      %v6154 = vpop.f32.mrf.mxu0
      %6155 = vmatmul.bf16.gmra.mxu0 %v5895
      %v6156 = vpop.f32.mrf.mxu0
      %v6157 = vadd.f32 0.0, %v6156
      %v6158 = vpop.f32.mrf.mxu0
      %v6159 = vadd.f32 0.0, %v6158
      %6160 = vmatmul.bf16.gmra.mxu0 %v5896
      %v6161 = vpop.f32.mrf.mxu0
      %v6162 = vpop.f32.mrf.mxu0
      %6163 = vmatmul.bf16.gmra.mxu0 %v5897
      %v6164 = vpop.f32.mrf.mxu0
      %v6165 = vadd.f32 0.0, %v6164
      %v6166 = vpop.f32.mrf.mxu0
      %v6167 = vadd.f32 0.0, %v6166
      %6168 = vmatmul.bf16.gmra.mxu0 %v5898
      %v6169 = vpop.f32.mrf.mxu0
      %v6170 = vpop.f32.mrf.mxu0
      %6171 = vmatmul.bf16.gmra.mxu0 %v5899
      %v6172 = vpop.f32.mrf.mxu0
      %v6173 = vadd.f32 0.0, %v6172
      %v6174 = vpop.f32.mrf.mxu0
      %v6175 = vadd.f32 0.0, %v6174
      %6176 = vmatmul.bf16.gmra.mxu0 %v5900
      %v6177 = vpop.f32.mrf.mxu0
      %v6178 = vpop.f32.mrf.mxu0
      %6179 = vmatmul.bf16.gmra.mxu0 %v5901
      %v6180 = vpop.f32.mrf.mxu0
      %v6181 = vadd.f32 0.0, %v6180
      %v6182 = vpop.f32.mrf.mxu0
      %v6183 = vadd.f32 0.0, %v6182
      %6184 = vmatmul.bf16.gmra.mxu0 %v5902
      %v6185 = vpop.f32.mrf.mxu0
      %v6186 = vpop.f32.mrf.mxu0
      %6187 = vmatmul.bf16.gmra.mxu0 %v5903
      %v6188 = vpop.f32.mrf.mxu0
      %v6189 = vadd.f32 0.0, %v6188
      %v6190 = vpop.f32.mrf.mxu0
      %v6191 = vadd.f32 0.0, %v6190
      %6192 = vmatmul.bf16.gmra.mxu0 %v5904
      %v6193 = vpop.f32.mrf.mxu0
      %v6194 = vpop.f32.mrf.mxu0
      %6195 = vmatmul.bf16.gmra.mxu0 %v5905
      %v6196 = vpop.f32.mrf.mxu0
      %v6197 = vadd.f32 0.0, %v6196
      %v6198 = vpop.f32.mrf.mxu0
      %v6199 = vadd.f32 0.0, %v6198
      %6200 = vmatmul.bf16.gmra.mxu0 %v5906
      %v6201 = vpop.f32.mrf.mxu0
      %v6202 = vpop.f32.mrf.mxu0
      %6203 = vdwg.mxu0
      %6204 = vmatpush.bf16.msra.mxu0 %v6041
      %6205 = vmatpush.bf16.msra.mxu0 %v6038
      %6206 = vmatpush.bf16.msra.mxu0 %v6035
      %6207 = vmatpush.bf16.msra.mxu0 %v6032
      %6208 = vmatpush.bf16.msra.mxu0 %v6029
      %6209 = vmatpush.bf16.msra.mxu0 %v6026
      %6210 = vmatpush.bf16.msra.mxu0 %v6023
      %6211 = vmatpush.bf16.msra.mxu0 %v6020
      %6212 = vmatmul.bf16.gmra.mxu0 %v5875
      %v6213 = vpop.f32.mrf.mxu0
      %v6214 = vadd.f32 0.0, %v6213
      %v6215 = vpop.f32.mrf.mxu0
      %v6216 = vadd.f32 0.0, %v6215
      %6217 = vmatmul.bf16.gmra.mxu0 %v5876
      %v6218 = vpop.f32.mrf.mxu0
      %v6219 = vadd.f32 0.0, %v6218
      %v6220 = vpop.f32.mrf.mxu0
      %6221 = vmatmul.bf16.gmra.mxu0 %v5877
      %v6222 = vpop.f32.mrf.mxu0
      %v6223 = vadd.f32 0.0, %v6222
      %v6224 = vpop.f32.mrf.mxu0
      %v6225 = vadd.f32 0.0, %v6224
      %6226 = vmatmul.bf16.gmra.mxu0 %v5878
      %v6227 = vpop.f32.mrf.mxu0
      %v6228 = vadd.f32 0.0, %v6227
      %v6229 = vpop.f32.mrf.mxu0
      %6230 = vmatmul.bf16.gmra.mxu0 %v5879
      %v6231 = vpop.f32.mrf.mxu0
      %v6232 = vadd.f32 0.0, %v6231
      %v6233 = vpop.f32.mrf.mxu0
      %v6234 = vadd.f32 0.0, %v6233
      %6235 = vmatmul.bf16.gmra.mxu0 %v5880
      %v6236 = vpop.f32.mrf.mxu0
      %v6237 = vadd.f32 0.0, %v6236
      %v6238 = vpop.f32.mrf.mxu0
      %6239 = vmatmul.bf16.gmra.mxu0 %v5881
      %v6240 = vpop.f32.mrf.mxu0
      %v6241 = vadd.f32 0.0, %v6240
      %v6242 = vpop.f32.mrf.mxu0
      %v6243 = vadd.f32 0.0, %v6242
      %6244 = vmatmul.bf16.gmra.mxu0 %v5882
      %v6245 = vpop.f32.mrf.mxu0
      %v6246 = vadd.f32 0.0, %v6245
      %v6247 = vpop.f32.mrf.mxu0
      %6248 = vmatmul.bf16.gmra.mxu0 %v5883
      %v6249 = vpop.f32.mrf.mxu0
      %v6250 = vadd.f32 0.0, %v6249
      %v6251 = vpop.f32.mrf.mxu0
      %v6252 = vadd.f32 0.0, %v6251
      %6253 = vmatmul.bf16.gmra.mxu0 %v5884
      %v6254 = vpop.f32.mrf.mxu0
      %v6255 = vadd.f32 0.0, %v6254
      %v6256 = vpop.f32.mrf.mxu0
      %6257 = vmatmul.bf16.gmra.mxu0 %v5885
      %v6258 = vpop.f32.mrf.mxu0
      %v6259 = vadd.f32 0.0, %v6258
      %v6260 = vpop.f32.mrf.mxu0
      %v6261 = vadd.f32 0.0, %v6260
      %6262 = vmatmul.bf16.gmra.mxu0 %v5886
      %v6263 = vpop.f32.mrf.mxu0
      %v6264 = vadd.f32 0.0, %v6263
      %v6265 = vpop.f32.mrf.mxu0
      %6266 = vmatmul.bf16.gmra.mxu0 %v5887
      %v6267 = vpop.f32.mrf.mxu0
      %v6268 = vadd.f32 0.0, %v6267
      %v6269 = vpop.f32.mrf.mxu0
      %v6270 = vadd.f32 0.0, %v6269
      %6271 = vmatmul.bf16.gmra.mxu0 %v5888
      %v6272 = vpop.f32.mrf.mxu0
      %v6273 = vadd.f32 0.0, %v6272
      %v6274 = vpop.f32.mrf.mxu0
      %6275 = vmatmul.bf16.gmra.mxu0 %v5889
      %v6276 = vpop.f32.mrf.mxu0
      %v6277 = vadd.f32 0.0, %v6276
      %v6278 = vpop.f32.mrf.mxu0
      %v6279 = vadd.f32 0.0, %v6278
      %6280 = vmatmul.bf16.gmra.mxu0 %v5890
      %v6281 = vpop.f32.mrf.mxu0
      %v6282 = vadd.f32 0.0, %v6281
      %v6283 = vpop.f32.mrf.mxu0
      %6284 = vmatmul.bf16.gmra.mxu0 %v5891
      %v6285 = vpop.f32.mrf.mxu0
      %v6286 = vadd.f32 0.0, %v6285
      %v6287 = vpop.f32.mrf.mxu0
      %v6288 = vadd.f32 0.0, %v6287
      %6289 = vmatmul.bf16.gmra.mxu0 %v5892
      %v6290 = vpop.f32.mrf.mxu0
      %v6291 = vadd.f32 0.0, %v6290
      %v6292 = vpop.f32.mrf.mxu0
      %6293 = vmatmul.bf16.gmra.mxu0 %v5893
      %v6294 = vpop.f32.mrf.mxu0
      %v6295 = vadd.f32 0.0, %v6294
      %v6296 = vpop.f32.mrf.mxu0
      %v6297 = vadd.f32 0.0, %v6296
      %6298 = vmatmul.bf16.gmra.mxu0 %v5894
      %v6299 = vpop.f32.mrf.mxu0
      %v6300 = vadd.f32 0.0, %v6299
      %v6301 = vpop.f32.mrf.mxu0
      %6302 = vmatmul.bf16.gmra.mxu0 %v5895
      %v6303 = vpop.f32.mrf.mxu0
      %v6304 = vadd.f32 0.0, %v6303
      %v6305 = vpop.f32.mrf.mxu0
      %v6306 = vadd.f32 0.0, %v6305
      %6307 = vmatmul.bf16.gmra.mxu0 %v5896
      %v6308 = vpop.f32.mrf.mxu0
      %v6309 = vadd.f32 0.0, %v6308
      %v6310 = vpop.f32.mrf.mxu0
      %6311 = vmatmul.bf16.gmra.mxu0 %v5897
      %v6312 = vpop.f32.mrf.mxu0
      %v6313 = vadd.f32 0.0, %v6312
      %v6314 = vpop.f32.mrf.mxu0
      %v6315 = vadd.f32 0.0, %v6314
      %6316 = vmatmul.bf16.gmra.mxu0 %v5898
      %v6317 = vpop.f32.mrf.mxu0
      %v6318 = vadd.f32 0.0, %v6317
      %v6319 = vpop.f32.mrf.mxu0
      %6320 = vmatmul.bf16.gmra.mxu0 %v5899
      %v6321 = vpop.f32.mrf.mxu0
      %v6322 = vadd.f32 0.0, %v6321
      %v6323 = vpop.f32.mrf.mxu0
      %v6324 = vadd.f32 0.0, %v6323
      %6325 = vmatmul.bf16.gmra.mxu0 %v5900
      %v6326 = vpop.f32.mrf.mxu0
      %v6327 = vadd.f32 0.0, %v6326
      %v6328 = vpop.f32.mrf.mxu0
      %6329 = vmatmul.bf16.gmra.mxu0 %v5901
      %v6330 = vpop.f32.mrf.mxu0
      %v6331 = vadd.f32 0.0, %v6330
      %v6332 = vpop.f32.mrf.mxu0
      %v6333 = vadd.f32 0.0, %v6332
      %6334 = vmatmul.bf16.gmra.mxu0 %v5902
      %v6335 = vpop.f32.mrf.mxu0
      %v6336 = vadd.f32 0.0, %v6335
      %v6337 = vpop.f32.mrf.mxu0
      %6338 = vmatmul.bf16.gmra.mxu0 %v5903
      %v6339 = vpop.f32.mrf.mxu0
      %v6340 = vadd.f32 0.0, %v6339
      %v6341 = vpop.f32.mrf.mxu0
      %v6342 = vadd.f32 0.0, %v6341
      %6343 = vmatmul.bf16.gmra.mxu0 %v5904
      %v6344 = vpop.f32.mrf.mxu0
      %v6345 = vadd.f32 0.0, %v6344
      %v6346 = vpop.f32.mrf.mxu0
      %6347 = vmatmul.bf16.gmra.mxu0 %v5905
      %v6348 = vpop.f32.mrf.mxu0
      %v6349 = vadd.f32 0.0, %v6348
      %v6350 = vpop.f32.mrf.mxu0
      %v6351 = vadd.f32 0.0, %v6350
      %6352 = vmatmul.bf16.gmra.mxu0 %v5906
      %v6353 = vpop.f32.mrf.mxu0
      %v6354 = vadd.f32 0.0, %v6353
      %v6355 = vpop.f32.mrf.mxu0
      %6356 = vdwg.mxu0
      %6357 = vmatpush.bf16.msra.mxu0 %v6042
      %6358 = vmatpush.bf16.msra.mxu0 %v6039
      %6359 = vmatpush.bf16.msra.mxu0 %v6036
      %6360 = vmatpush.bf16.msra.mxu0 %v6033
      %6361 = vmatpush.bf16.msra.mxu0 %v6030
      %6362 = vmatpush.bf16.msra.mxu0 %v6027
      %6363 = vmatpush.bf16.msra.mxu0 %v6024
      %6364 = vmatpush.bf16.msra.mxu0 %v6021
      %6365 = vmatmul.bf16.gmra.mxu0 %v5875
      %v6366 = vpop.f32.mrf.mxu0
      %v6367 = vadd.f32 0.0, %v6366
      %v6368 = vpop.f32.mrf.mxu0
      %v6369 = vadd.f32 0.0, %v6368
      %6370 = vmatmul.bf16.gmra.mxu0 %v5876
      %v6371 = vpop.f32.mrf.mxu0
      %v6372 = vadd.f32 0.0, %v6371
      %v6373 = vpop.f32.mrf.mxu0
      %6374 = vmatmul.bf16.gmra.mxu0 %v5877
      %v6375 = vpop.f32.mrf.mxu0
      %v6376 = vadd.f32 0.0, %v6375
      %v6377 = vpop.f32.mrf.mxu0
      %v6378 = vadd.f32 0.0, %v6377
      %6379 = vmatmul.bf16.gmra.mxu0 %v5878
      %v6380 = vpop.f32.mrf.mxu0
      %v6381 = vadd.f32 0.0, %v6380
      %v6382 = vpop.f32.mrf.mxu0
      %6383 = vmatmul.bf16.gmra.mxu0 %v5879
      %v6384 = vpop.f32.mrf.mxu0
      %v6385 = vadd.f32 0.0, %v6384
      %v6386 = vpop.f32.mrf.mxu0
      %v6387 = vadd.f32 0.0, %v6386
      %6388 = vmatmul.bf16.gmra.mxu0 %v5880
      %v6389 = vpop.f32.mrf.mxu0
      %v6390 = vadd.f32 0.0, %v6389
      %v6391 = vpop.f32.mrf.mxu0
      %6392 = vmatmul.bf16.gmra.mxu0 %v5881
      %v6393 = vpop.f32.mrf.mxu0
      %v6394 = vadd.f32 0.0, %v6393
      %v6395 = vpop.f32.mrf.mxu0
      %v6396 = vadd.f32 0.0, %v6395
      %6397 = vmatmul.bf16.gmra.mxu0 %v5882
      %v6398 = vpop.f32.mrf.mxu0
      %v6399 = vadd.f32 0.0, %v6398
      %v6400 = vpop.f32.mrf.mxu0
      %6401 = vmatmul.bf16.gmra.mxu0 %v5883
      %v6402 = vpop.f32.mrf.mxu0
      %v6403 = vadd.f32 0.0, %v6402
      %v6404 = vpop.f32.mrf.mxu0
      %v6405 = vadd.f32 0.0, %v6404
      %6406 = vmatmul.bf16.gmra.mxu0 %v5884
      %v6407 = vpop.f32.mrf.mxu0
      %v6408 = vadd.f32 0.0, %v6407
      %v6409 = vpop.f32.mrf.mxu0
      %6410 = vmatmul.bf16.gmra.mxu0 %v5885
      %v6411 = vpop.f32.mrf.mxu0
      %v6412 = vadd.f32 0.0, %v6411
      %v6413 = vpop.f32.mrf.mxu0
      %v6414 = vadd.f32 0.0, %v6413
      %6415 = vmatmul.bf16.gmra.mxu0 %v5886
      %v6416 = vpop.f32.mrf.mxu0
      %v6417 = vadd.f32 0.0, %v6416
      %v6418 = vpop.f32.mrf.mxu0
      %6419 = vmatmul.bf16.gmra.mxu0 %v5887
      %v6420 = vpop.f32.mrf.mxu0
      %v6421 = vadd.f32 0.0, %v6420
      %v6422 = vpop.f32.mrf.mxu0
      %v6423 = vadd.f32 0.0, %v6422
      %6424 = vmatmul.bf16.gmra.mxu0 %v5888
      %v6425 = vpop.f32.mrf.mxu0
      %v6426 = vadd.f32 0.0, %v6425
      %v6427 = vpop.f32.mrf.mxu0
      %6428 = vmatmul.bf16.gmra.mxu0 %v5889
      %v6429 = vpop.f32.mrf.mxu0
      %v6430 = vadd.f32 0.0, %v6429
      %v6431 = vpop.f32.mrf.mxu0
      %v6432 = vadd.f32 0.0, %v6431
      %6433 = vmatmul.bf16.gmra.mxu0 %v5890
      %v6434 = vpop.f32.mrf.mxu0
      %v6435 = vadd.f32 0.0, %v6434
      %v6436 = vpop.f32.mrf.mxu0
      %6437 = vmatmul.bf16.gmra.mxu0 %v5891
      %v6438 = vpop.f32.mrf.mxu0
      %v6439 = vadd.f32 0.0, %v6438
      %v6440 = vpop.f32.mrf.mxu0
      %v6441 = vadd.f32 0.0, %v6440
      %6442 = vmatmul.bf16.gmra.mxu0 %v5892
      %v6443 = vpop.f32.mrf.mxu0
      %v6444 = vadd.f32 0.0, %v6443
      %v6445 = vpop.f32.mrf.mxu0
      %6446 = vmatmul.bf16.gmra.mxu0 %v5893
      %v6447 = vpop.f32.mrf.mxu0
      %v6448 = vadd.f32 0.0, %v6447
      %v6449 = vpop.f32.mrf.mxu0
      %v6450 = vadd.f32 0.0, %v6449
      %6451 = vmatmul.bf16.gmra.mxu0 %v5894
      %v6452 = vpop.f32.mrf.mxu0
      %v6453 = vadd.f32 0.0, %v6452
      %v6454 = vpop.f32.mrf.mxu0
      %6455 = vmatmul.bf16.gmra.mxu0 %v5895
      %v6456 = vpop.f32.mrf.mxu0
      %v6457 = vadd.f32 0.0, %v6456
      %v6458 = vpop.f32.mrf.mxu0
      %v6459 = vadd.f32 0.0, %v6458
      %6460 = vmatmul.bf16.gmra.mxu0 %v5896
      %v6461 = vpop.f32.mrf.mxu0
      %v6462 = vadd.f32 0.0, %v6461
      %v6463 = vpop.f32.mrf.mxu0
      %6464 = vmatmul.bf16.gmra.mxu0 %v5897
      %v6465 = vpop.f32.mrf.mxu0
      %v6466 = vadd.f32 0.0, %v6465
      %v6467 = vpop.f32.mrf.mxu0
      %v6468 = vadd.f32 0.0, %v6467
      %6469 = vmatmul.bf16.gmra.mxu0 %v5898
      %v6470 = vpop.f32.mrf.mxu0
      %v6471 = vadd.f32 0.0, %v6470
      %v6472 = vpop.f32.mrf.mxu0
      %6473 = vmatmul.bf16.gmra.mxu0 %v5899
      %v6474 = vpop.f32.mrf.mxu0
      %v6475 = vadd.f32 0.0, %v6474
      %v6476 = vpop.f32.mrf.mxu0
      %v6477 = vadd.f32 0.0, %v6476
      %6478 = vmatmul.bf16.gmra.mxu0 %v5900
      %v6479 = vpop.f32.mrf.mxu0
      %v6480 = vadd.f32 0.0, %v6479
      %v6481 = vpop.f32.mrf.mxu0
      %6482 = vmatmul.bf16.gmra.mxu0 %v5901
      %v6483 = vpop.f32.mrf.mxu0
      %v6484 = vadd.f32 0.0, %v6483
      %v6485 = vpop.f32.mrf.mxu0
      %v6486 = vadd.f32 0.0, %v6485
      %6487 = vmatmul.bf16.gmra.mxu0 %v5902
      %v6488 = vpop.f32.mrf.mxu0
      %v6489 = vadd.f32 0.0, %v6488
      %v6490 = vpop.f32.mrf.mxu0
      %6491 = vmatmul.bf16.gmra.mxu0 %v5903
      %v6492 = vpop.f32.mrf.mxu0
      %v6493 = vadd.f32 0.0, %v6492
      %v6494 = vpop.f32.mrf.mxu0
      %v6495 = vadd.f32 0.0, %v6494
      %6496 = vmatmul.bf16.gmra.mxu0 %v5904
      %v6497 = vpop.f32.mrf.mxu0
      %v6498 = vadd.f32 0.0, %v6497
      %v6499 = vpop.f32.mrf.mxu0
      %6500 = vmatmul.bf16.gmra.mxu0 %v5905
      %v6501 = vpop.f32.mrf.mxu0
      %v6502 = vadd.f32 0.0, %v6501
      %v6503 = vpop.f32.mrf.mxu0
      %v6504 = vadd.f32 0.0, %v6503
      %6505 = vmatmul.bf16.gmra.mxu0 %v5906
      %v6506 = vpop.f32.mrf.mxu0
      %v6507 = vadd.f32 0.0, %v6506
      %v6508 = vpop.f32.mrf.mxu0
      %6509 = vdwg.mxu0
      %v6510 = vld [vmem:[#allocation4] sm:$0xff]
      %v6511 = vld [vmem:[#allocation4 + $0x8] sm:$0xff]
      %v6512 = vld [vmem:[#allocation4 + $0x10] sm:$0xff]
      %v6513 = vld [vmem:[#allocation4 + $0x18] sm:$0xff]
      %v6514 = vld [vmem:[#allocation4 + $0x20] sm:$0xff]
      %v6515 = vld [vmem:[#allocation4 + $0x28] sm:$0xff]
      %v6516 = vld [vmem:[#allocation4 + $0x30] sm:$0xff]
      %v6517 = vld [vmem:[#allocation4 + $0x38] sm:$0xff]
      %v6518 = vld [vmem:[#allocation4 + $0x40] sm:$0xff]
      %v6519 = vld [vmem:[#allocation4 + $0x48] sm:$0xff]
      %v6520 = vld [vmem:[#allocation4 + $0x50] sm:$0xff]
      %v6521 = vld [vmem:[#allocation4 + $0x58] sm:$0xff]
      %v6522 = vld [vmem:[#allocation4 + $0x60] sm:$0xff]
      %v6523 = vld [vmem:[#allocation4 + $0x68] sm:$0xff]
      %v6524 = vld [vmem:[#allocation4 + $0x70] sm:$0xff]
      %v6525 = vld [vmem:[#allocation4 + $0x78] sm:$0xff]
      %v6526 = vld [vmem:[#allocation4 + $0x80] sm:$0xff]
      %v6527 = vld [vmem:[#allocation4 + $0x88] sm:$0xff]
      %v6528 = vld [vmem:[#allocation4 + $0x90] sm:$0xff]
      %v6529 = vld [vmem:[#allocation4 + $0x98] sm:$0xff]
      %v6530 = vld [vmem:[#allocation4 + $0xa0] sm:$0xff]
      %v6531 = vld [vmem:[#allocation4 + $0xa8] sm:$0xff]
      %v6532 = vld [vmem:[#allocation4 + $0xb0] sm:$0xff]
      %v6533 = vld [vmem:[#allocation4 + $0xb8] sm:$0xff]
      %v6534 = vld [vmem:[#allocation4 + $0xc0] sm:$0xff]
      %v6535 = vld [vmem:[#allocation4 + $0xc8] sm:$0xff]
      %v6536 = vld [vmem:[#allocation4 + $0xd0] sm:$0xff]
      %v6537 = vld [vmem:[#allocation4 + $0xd8] sm:$0xff]
      %v6538 = vld [vmem:[#allocation4 + $0xe0] sm:$0xff]
      %v6539 = vld [vmem:[#allocation4 + $0xe8] sm:$0xff]
      %v6540 = vld [vmem:[#allocation4 + $0xf0] sm:$0xff]
      %v6541 = vld [vmem:[#allocation4 + $0xf8] sm:$0xff]
      %v6590 = vrot.slane %v6214, 1
      %v6591 = vrot.slane %v6216, 1
      %v6592 = vsel %vm1830, %v6590, %v6591
      %v6593 = vrot.slane %v6219, 1
      %v6594 = vsel %vm1830, %v6591, %v6593
      %v6595 = vrot.slane %v6223, 1
      %v6596 = vrot.slane %v6225, 1
      %v6597 = vsel %vm1830, %v6595, %v6596
      %v6598 = vrot.slane %v6228, 1
      %v6599 = vsel %vm1830, %v6596, %v6598
      %v6600 = vrot.slane %v6232, 1
      %v6601 = vrot.slane %v6234, 1
      %v6602 = vsel %vm1830, %v6600, %v6601
      %v6603 = vrot.slane %v6237, 1
      %v6604 = vsel %vm1830, %v6601, %v6603
      %v6605 = vrot.slane %v6241, 1
      %v6606 = vrot.slane %v6243, 1
      %v6607 = vsel %vm1830, %v6605, %v6606
      %v6608 = vrot.slane %v6246, 1
      %v6609 = vsel %vm1830, %v6606, %v6608
      %v6610 = vrot.slane %v6250, 1
      %v6611 = vrot.slane %v6252, 1
      %v6612 = vsel %vm1830, %v6610, %v6611
      %v6613 = vrot.slane %v6255, 1
      %v6614 = vsel %vm1830, %v6611, %v6613
      %v6615 = vrot.slane %v6259, 1
      %v6616 = vrot.slane %v6261, 1
      %v6617 = vsel %vm1830, %v6615, %v6616
      %v6618 = vrot.slane %v6264, 1
      %v6619 = vsel %vm1830, %v6616, %v6618
      %v6620 = vrot.slane %v6268, 1
      %v6621 = vrot.slane %v6270, 1
      %v6622 = vsel %vm1830, %v6620, %v6621
      %v6623 = vrot.slane %v6273, 1
      %v6624 = vsel %vm1830, %v6621, %v6623
      %v6625 = vrot.slane %v6277, 1
      %v6626 = vrot.slane %v6279, 1
      %v6627 = vsel %vm1830, %v6625, %v6626
      %v6628 = vrot.slane %v6282, 1
      %v6629 = vsel %vm1830, %v6626, %v6628
      %v6630 = vrot.slane %v6286, 1
      %v6631 = vrot.slane %v6288, 1
      %v6632 = vsel %vm1830, %v6630, %v6631
      %v6633 = vrot.slane %v6291, 1
      %v6634 = vsel %vm1830, %v6631, %v6633
      %v6635 = vrot.slane %v6295, 1
      %v6636 = vrot.slane %v6297, 1
      %v6637 = vsel %vm1830, %v6635, %v6636
      %v6638 = vrot.slane %v6300, 1
      %v6639 = vsel %vm1830, %v6636, %v6638
      %v6640 = vrot.slane %v6304, 1
      %v6641 = vrot.slane %v6306, 1
      %v6642 = vsel %vm1830, %v6640, %v6641
      %v6643 = vrot.slane %v6309, 1
      %v6644 = vsel %vm1830, %v6641, %v6643
      %v6645 = vrot.slane %v6313, 1
      %v6646 = vrot.slane %v6315, 1
      %v6647 = vsel %vm1830, %v6645, %v6646
      %v6648 = vrot.slane %v6318, 1
      %v6649 = vsel %vm1830, %v6646, %v6648
      %v6650 = vrot.slane %v6322, 1
      %v6651 = vrot.slane %v6324, 1
      %v6652 = vsel %vm1830, %v6650, %v6651
      %v6653 = vrot.slane %v6327, 1
      %v6654 = vsel %vm1830, %v6651, %v6653
      %v6655 = vrot.slane %v6331, 1
      %v6656 = vrot.slane %v6333, 1
      %v6657 = vsel %vm1830, %v6655, %v6656
      %v6658 = vrot.slane %v6336, 1
      %v6659 = vsel %vm1830, %v6656, %v6658
      %v6660 = vrot.slane %v6340, 1
      %v6661 = vrot.slane %v6342, 1
      %v6662 = vsel %vm1830, %v6660, %v6661
      %v6663 = vrot.slane %v6345, 1
      %v6664 = vsel %vm1830, %v6661, %v6663
      %v6665 = vrot.slane %v6349, 1
      %v6666 = vrot.slane %v6351, 1
      %v6667 = vsel %vm1830, %v6665, %v6666
      %v6668 = vrot.slane %v6354, 1
      %v6669 = vsel %vm1830, %v6666, %v6668
      %v6702 = vadd.f32 %v6077, %v6592
      %v6703 = vadd.f32 %v6079, %v6594
      %v6704 = vadd.f32 %v6085, %v6597
      %v6705 = vadd.f32 %v6087, %v6599
      %v6706 = vadd.f32 %v6093, %v6602
      %v6707 = vadd.f32 %v6095, %v6604
      %v6708 = vadd.f32 %v6101, %v6607
      %v6709 = vadd.f32 %v6103, %v6609
      %v6710 = vadd.f32 %v6109, %v6612
      %v6711 = vadd.f32 %v6111, %v6614
      %v6712 = vadd.f32 %v6117, %v6617
      %v6713 = vadd.f32 %v6119, %v6619
      %v6714 = vadd.f32 %v6125, %v6622
      %v6715 = vadd.f32 %v6127, %v6624
      %v6716 = vadd.f32 %v6133, %v6627
      %v6717 = vadd.f32 %v6135, %v6629
      %v6718 = vadd.f32 %v6141, %v6632
      %v6719 = vadd.f32 %v6143, %v6634
      %v6720 = vadd.f32 %v6149, %v6637
      %v6721 = vadd.f32 %v6151, %v6639
      %v6722 = vadd.f32 %v6157, %v6642
      %v6723 = vadd.f32 %v6159, %v6644
      %v6724 = vadd.f32 %v6165, %v6647
      %v6725 = vadd.f32 %v6167, %v6649
      %v6726 = vadd.f32 %v6173, %v6652
      %v6727 = vadd.f32 %v6175, %v6654
      %v6728 = vadd.f32 %v6181, %v6657
      %v6729 = vadd.f32 %v6183, %v6659
      %v6730 = vadd.f32 %v6189, %v6662
      %v6731 = vadd.f32 %v6191, %v6664
      %v6732 = vadd.f32 %v6197, %v6667
      %v6733 = vadd.f32 %v6199, %v6669
      %v6782 = vrot.slane %v6367, 2
      %v6783 = vrot.slane %v6369, 2
      %v6784 = vsel %vm2023, %v6782, %v6783
      %v6785 = vrot.slane %v6372, 2
      %v6786 = vsel %vm2023, %v6783, %v6785
      %v6787 = vrot.slane %v6376, 2
      %v6788 = vrot.slane %v6378, 2
      %v6789 = vsel %vm2023, %v6787, %v6788
      %v6790 = vrot.slane %v6381, 2
      %v6791 = vsel %vm2023, %v6788, %v6790
      %v6792 = vrot.slane %v6385, 2
      %v6793 = vrot.slane %v6387, 2
      %v6794 = vsel %vm2023, %v6792, %v6793
      %v6795 = vrot.slane %v6390, 2
      %v6796 = vsel %vm2023, %v6793, %v6795
      %v6797 = vrot.slane %v6394, 2
      %v6798 = vrot.slane %v6396, 2
      %v6799 = vsel %vm2023, %v6797, %v6798
      %v6800 = vrot.slane %v6399, 2
      %v6801 = vsel %vm2023, %v6798, %v6800
      %v6802 = vrot.slane %v6403, 2
      %v6803 = vrot.slane %v6405, 2
      %v6804 = vsel %vm2023, %v6802, %v6803
      %v6805 = vrot.slane %v6408, 2
      %v6806 = vsel %vm2023, %v6803, %v6805
      %v6807 = vrot.slane %v6412, 2
      %v6808 = vrot.slane %v6414, 2
      %v6809 = vsel %vm2023, %v6807, %v6808
      %v6810 = vrot.slane %v6417, 2
      %v6811 = vsel %vm2023, %v6808, %v6810
      %v6812 = vrot.slane %v6421, 2
      %v6813 = vrot.slane %v6423, 2
      %v6814 = vsel %vm2023, %v6812, %v6813
      %v6815 = vrot.slane %v6426, 2
      %v6816 = vsel %vm2023, %v6813, %v6815
      %v6817 = vrot.slane %v6430, 2
      %v6818 = vrot.slane %v6432, 2
      %v6819 = vsel %vm2023, %v6817, %v6818
      %v6820 = vrot.slane %v6435, 2
      %v6821 = vsel %vm2023, %v6818, %v6820
      %v6822 = vrot.slane %v6439, 2
      %v6823 = vrot.slane %v6441, 2
      %v6824 = vsel %vm2023, %v6822, %v6823
      %v6825 = vrot.slane %v6444, 2
      %v6826 = vsel %vm2023, %v6823, %v6825
      %v6827 = vrot.slane %v6448, 2
      %v6828 = vrot.slane %v6450, 2
      %v6829 = vsel %vm2023, %v6827, %v6828
      %v6830 = vrot.slane %v6453, 2
      %v6831 = vsel %vm2023, %v6828, %v6830
      %v6832 = vrot.slane %v6457, 2
      %v6833 = vrot.slane %v6459, 2
      %v6834 = vsel %vm2023, %v6832, %v6833
      %v6835 = vrot.slane %v6462, 2
      %v6836 = vsel %vm2023, %v6833, %v6835
      %v6837 = vrot.slane %v6466, 2
      %v6838 = vrot.slane %v6468, 2
      %v6839 = vsel %vm2023, %v6837, %v6838
      %v6840 = vrot.slane %v6471, 2
      %v6841 = vsel %vm2023, %v6838, %v6840
      %v6842 = vrot.slane %v6475, 2
      %v6843 = vrot.slane %v6477, 2
      %v6844 = vsel %vm2023, %v6842, %v6843
      %v6845 = vrot.slane %v6480, 2
      %v6846 = vsel %vm2023, %v6843, %v6845
      %v6847 = vrot.slane %v6484, 2
      %v6848 = vrot.slane %v6486, 2
      %v6849 = vsel %vm2023, %v6847, %v6848
      %v6850 = vrot.slane %v6489, 2
      %v6851 = vsel %vm2023, %v6848, %v6850
      %v6852 = vrot.slane %v6493, 2
      %v6853 = vrot.slane %v6495, 2
      %v6854 = vsel %vm2023, %v6852, %v6853
      %v6855 = vrot.slane %v6498, 2
      %v6856 = vsel %vm2023, %v6853, %v6855
      %v6857 = vrot.slane %v6502, 2
      %v6858 = vrot.slane %v6504, 2
      %v6859 = vsel %vm2023, %v6857, %v6858
      %v6860 = vrot.slane %v6507, 2
      %v6861 = vsel %vm2023, %v6858, %v6860
      %v6894 = vadd.f32 %v6702, %v6784
      %v6895 = vadd.f32 %v6703, %v6786
      %v6896 = vadd.f32 %v6704, %v6789
      %v6897 = vadd.f32 %v6705, %v6791
      %v6898 = vadd.f32 %v6706, %v6794
      %v6899 = vadd.f32 %v6707, %v6796
      %v6900 = vadd.f32 %v6708, %v6799
      %v6901 = vadd.f32 %v6709, %v6801
      %v6902 = vadd.f32 %v6710, %v6804
      %v6903 = vadd.f32 %v6711, %v6806
      %v6904 = vadd.f32 %v6712, %v6809
      %v6905 = vadd.f32 %v6713, %v6811
      %v6906 = vadd.f32 %v6714, %v6814
      %v6907 = vadd.f32 %v6715, %v6816
      %v6908 = vadd.f32 %v6716, %v6819
      %v6909 = vadd.f32 %v6717, %v6821
      %v6910 = vadd.f32 %v6718, %v6824
      %v6911 = vadd.f32 %v6719, %v6826
      %v6912 = vadd.f32 %v6720, %v6829
      %v6913 = vadd.f32 %v6721, %v6831
      %v6914 = vadd.f32 %v6722, %v6834
      %v6915 = vadd.f32 %v6723, %v6836
      %v6916 = vadd.f32 %v6724, %v6839
      %v6917 = vadd.f32 %v6725, %v6841
      %v6918 = vadd.f32 %v6726, %v6844
      %v6919 = vadd.f32 %v6727, %v6846
      %v6920 = vadd.f32 %v6728, %v6849
      %v6921 = vadd.f32 %v6729, %v6851
      %v6922 = vadd.f32 %v6730, %v6854
      %v6923 = vadd.f32 %v6731, %v6856
      %v6924 = vadd.f32 %v6732, %v6859
      %v6925 = vadd.f32 %v6733, %v6861
      %v6926 = vadd.f32 %v6510, %v6894
      %v6927 = vadd.f32 %v6511, %v6895
      %v6928 = vadd.f32 %v6512, %v6896
      %v6929 = vadd.f32 %v6513, %v6897
      %v6930 = vadd.f32 %v6514, %v6898
      %v6931 = vadd.f32 %v6515, %v6899
      %v6932 = vadd.f32 %v6516, %v6900
      %v6933 = vadd.f32 %v6517, %v6901
      %v6934 = vadd.f32 %v6518, %v6902
      %v6935 = vadd.f32 %v6519, %v6903
      %v6936 = vadd.f32 %v6520, %v6904
      %v6937 = vadd.f32 %v6521, %v6905
      %v6938 = vadd.f32 %v6522, %v6906
      %v6939 = vadd.f32 %v6523, %v6907
      %v6940 = vadd.f32 %v6524, %v6908
      %v6941 = vadd.f32 %v6525, %v6909
      %v6942 = vadd.f32 %v6526, %v6910
      %v6943 = vadd.f32 %v6527, %v6911
      %v6944 = vadd.f32 %v6528, %v6912
      %v6945 = vadd.f32 %v6529, %v6913
      %v6946 = vadd.f32 %v6530, %v6914
      %v6947 = vadd.f32 %v6531, %v6915
      %v6948 = vadd.f32 %v6532, %v6916
      %v6949 = vadd.f32 %v6533, %v6917
      %v6950 = vadd.f32 %v6534, %v6918
      %v6951 = vadd.f32 %v6535, %v6919
      %v6952 = vadd.f32 %v6536, %v6920
      %v6953 = vadd.f32 %v6537, %v6921
      %v6954 = vadd.f32 %v6538, %v6922
      %v6955 = vadd.f32 %v6539, %v6923
      %v6956 = vadd.f32 %v6540, %v6924
      %v6957 = vadd.f32 %v6541, %v6925
      %6958 = vst [vmem:[#allocation4] sm:$0xff] %v6926
      %6959 = vst [vmem:[#allocation4 + $0x8] sm:$0xff] %v6927
      %6960 = vst [vmem:[#allocation4 + $0x10] sm:$0xff] %v6928
      %6961 = vst [vmem:[#allocation4 + $0x18] sm:$0xff] %v6929
      %6962 = vst [vmem:[#allocation4 + $0x20] sm:$0xff] %v6930
      %6963 = vst [vmem:[#allocation4 + $0x28] sm:$0xff] %v6931
      %6964 = vst [vmem:[#allocation4 + $0x30] sm:$0xff] %v6932
      %6965 = vst [vmem:[#allocation4 + $0x38] sm:$0xff] %v6933
      %6966 = vst [vmem:[#allocation4 + $0x40] sm:$0xff] %v6934
      %6967 = vst [vmem:[#allocation4 + $0x48] sm:$0xff] %v6935
      %6968 = vst [vmem:[#allocation4 + $0x50] sm:$0xff] %v6936
      %6969 = vst [vmem:[#allocation4 + $0x58] sm:$0xff] %v6937
      %6970 = vst [vmem:[#allocation4 + $0x60] sm:$0xff] %v6938
      %6971 = vst [vmem:[#allocation4 + $0x68] sm:$0xff] %v6939
      %6972 = vst [vmem:[#allocation4 + $0x70] sm:$0xff] %v6940
      %6973 = vst [vmem:[#allocation4 + $0x78] sm:$0xff] %v6941
      %6974 = vst [vmem:[#allocation4 + $0x80] sm:$0xff] %v6942
      %6975 = vst [vmem:[#allocation4 + $0x88] sm:$0xff] %v6943
      %6976 = vst [vmem:[#allocation4 + $0x90] sm:$0xff] %v6944
      %6977 = vst [vmem:[#allocation4 + $0x98] sm:$0xff] %v6945
      %6978 = vst [vmem:[#allocation4 + $0xa0] sm:$0xff] %v6946
      %6979 = vst [vmem:[#allocation4 + $0xa8] sm:$0xff] %v6947
      %6980 = vst [vmem:[#allocation4 + $0xb0] sm:$0xff] %v6948
      %6981 = vst [vmem:[#allocation4 + $0xb8] sm:$0xff] %v6949
      %6982 = vst [vmem:[#allocation4 + $0xc0] sm:$0xff] %v6950
      %6983 = vst [vmem:[#allocation4 + $0xc8] sm:$0xff] %v6951
      %6984 = vst [vmem:[#allocation4 + $0xd0] sm:$0xff] %v6952
      %6985 = vst [vmem:[#allocation4 + $0xd8] sm:$0xff] %v6953
      %6986 = vst [vmem:[#allocation4 + $0xe0] sm:$0xff] %v6954
      %6987 = vst [vmem:[#allocation4 + $0xe8] sm:$0xff] %v6955
      %6988 = vst [vmem:[#allocation4 + $0xf0] sm:$0xff] %v6956
      %6989 = vst [vmem:[#allocation4 + $0xf8] sm:$0xff] %v6957
      %v6990 = vld [vmem:[%s5090] sm:$0xf]
      %v6991 = vld [vmem:[%s5090 + $0x4] sm:$0xf]
      %v6992 = vld [vmem:[%s5090 + $0x8] sm:$0xf]
      %v6993 = vld [vmem:[%s5090 + $0xc] sm:$0xf]
      %v6994 = vld [vmem:[%s5090 + $0x10] sm:$0xf]
      %v6995 = vld [vmem:[%s5090 + $0x14] sm:$0xf]
      %v6996 = vld [vmem:[%s5090 + $0x18] sm:$0xf]
      %v6997 = vld [vmem:[%s5090 + $0x1c] sm:$0xf]
      %v6998 = vld [vmem:[%s5090 + $0x20] sm:$0xf]
      %v6999 = vld [vmem:[%s5090 + $0x24] sm:$0xf]
      %v7000 = vld [vmem:[%s5090 + $0x28] sm:$0xf]
      %v7001 = vld [vmem:[%s5090 + $0x2c] sm:$0xf]
      %v7002 = vld [vmem:[%s5090 + $0x30] sm:$0xf]
      %v7003 = vld [vmem:[%s5090 + $0x34] sm:$0xf]
      %v7004 = vld [vmem:[%s5090 + $0x38] sm:$0xf]
      %v7005 = vld [vmem:[%s5090 + $0x3c] sm:$0xf]
      %v7006 = vld [vmem:[%s5090 + $0x40] sm:$0xf]
      %v7007 = vld [vmem:[%s5090 + $0x44] sm:$0xf]
      %v7008 = vld [vmem:[%s5090 + $0x48] sm:$0xf]
      %v7009 = vld [vmem:[%s5090 + $0x4c] sm:$0xf]
      %v7010 = vld [vmem:[%s5090 + $0x50] sm:$0xf]
      %v7011 = vld [vmem:[%s5090 + $0x54] sm:$0xf]
      %v7012 = vld [vmem:[%s5090 + $0x58] sm:$0xf]
      %v7013 = vld [vmem:[%s5090 + $0x5c] sm:$0xf]
      %v7014 = vld [vmem:[%s5090 + $0x60] sm:$0xf]
      %v7015 = vld [vmem:[%s5090 + $0x64] sm:$0xf]
      %v7016 = vld [vmem:[%s5090 + $0x68] sm:$0xf]
      %v7017 = vld [vmem:[%s5090 + $0x6c] sm:$0xf]
      %v7018 = vld [vmem:[%s5090 + $0x70] sm:$0xf]
      %v7019 = vld [vmem:[%s5090 + $0x74] sm:$0xf]
      %v7020 = vld [vmem:[%s5090 + $0x78] sm:$0xf]
      %v7021 = vld [vmem:[%s5090 + $0x7c] sm:$0xf]
      %v7022 = vld [vmem:[%s5090 + $0x80] sm:$0xf]
      %v7023 = vld [vmem:[%s5090 + $0x84] sm:$0xf]
      %v7024 = vld [vmem:[%s5090 + $0x88] sm:$0xf]
      %v7025 = vld [vmem:[%s5090 + $0x8c] sm:$0xf]
      %v7026 = vld [vmem:[%s5090 + $0x90] sm:$0xf]
      %v7027 = vld [vmem:[%s5090 + $0x94] sm:$0xf]
      %v7028 = vld [vmem:[%s5090 + $0x98] sm:$0xf]
      %v7029 = vld [vmem:[%s5090 + $0x9c] sm:$0xf]
      %v7030 = vld [vmem:[%s5090 + $0xa0] sm:$0xf]
      %v7031 = vld [vmem:[%s5090 + $0xa4] sm:$0xf]
      %v7032 = vld [vmem:[%s5090 + $0xa8] sm:$0xf]
      %v7033 = vld [vmem:[%s5090 + $0xac] sm:$0xf]
      %v7034 = vld [vmem:[%s5090 + $0xb0] sm:$0xf]
      %v7035 = vld [vmem:[%s5090 + $0xb4] sm:$0xf]
      %v7036 = vld [vmem:[%s5090 + $0xb8] sm:$0xf]
      %v7037 = vld [vmem:[%s5090 + $0xbc] sm:$0xf]
      %v7038 = vld [vmem:[%s5090 + $0xc0] sm:$0xf]
      %v7039 = vld [vmem:[%s5090 + $0xc4] sm:$0xf]
      %v7040 = vld [vmem:[%s5090 + $0xc8] sm:$0xf]
      %v7041 = vld [vmem:[%s5090 + $0xcc] sm:$0xf]
      %v7042 = vld [vmem:[%s5090 + $0xd0] sm:$0xf]
      %v7043 = vld [vmem:[%s5090 + $0xd4] sm:$0xf]
      %v7044 = vld [vmem:[%s5090 + $0xd8] sm:$0xf]
      %v7045 = vld [vmem:[%s5090 + $0xdc] sm:$0xf]
      %v7046 = vld [vmem:[%s5090 + $0xe0] sm:$0xf]
      %v7047 = vld [vmem:[%s5090 + $0xe4] sm:$0xf]
      %v7048 = vld [vmem:[%s5090 + $0xe8] sm:$0xf]
      %v7049 = vld [vmem:[%s5090 + $0xec] sm:$0xf]
      %v7050 = vld [vmem:[%s5090 + $0xf0] sm:$0xf]
      %v7051 = vld [vmem:[%s5090 + $0xf4] sm:$0xf]
      %v7052 = vld [vmem:[%s5090 + $0xf8] sm:$0xf]
      %v7053 = vld [vmem:[%s5090 + $0xfc] sm:$0xf]
      %s7054 = scalar_lea.vmem %s2, 192
      %v7055 = vld [vmem:[%s7054] sm:$0xff]
      %v7056 = vld [vmem:[%s7054 + $0x8] sm:$0xf]
      %v7057 = vld [vmem:[%s7054 + $0xc] sm:$0xff]
      %v7058 = vld [vmem:[%s7054 + $0x14] sm:$0xf]
      %v7059 = vld [vmem:[%s7054 + $0x18] sm:$0xff]
      %v7060 = vld [vmem:[%s7054 + $0x20] sm:$0xf]
      %v7061 = vld [vmem:[%s7054 + $0x24] sm:$0xff]
      %v7062 = vld [vmem:[%s7054 + $0x2c] sm:$0xf]
      %v7063 = vld [vmem:[%s7054 + $0x30] sm:$0xff]
      %v7064 = vld [vmem:[%s7054 + $0x38] sm:$0xf]
      %v7065 = vld [vmem:[%s7054 + $0x3c] sm:$0xff]
      %v7066 = vld [vmem:[%s7054 + $0x44] sm:$0xf]
      %v7067 = vld [vmem:[%s7054 + $0x48] sm:$0xff]
      %v7068 = vld [vmem:[%s7054 + $0x50] sm:$0xf]
      %v7069 = vld [vmem:[%s7054 + $0x54] sm:$0xff]
      %v7070 = vld [vmem:[%s7054 + $0x5c] sm:$0xf]
      %v7071 = vld [vmem:[%s7054 + $0x60] sm:$0xff]
      %v7072 = vld [vmem:[%s7054 + $0x68] sm:$0xf]
      %v7073 = vld [vmem:[%s7054 + $0x6c] sm:$0xff]
      %v7074 = vld [vmem:[%s7054 + $0x74] sm:$0xf]
      %v7075 = vld [vmem:[%s7054 + $0x78] sm:$0xff]
      %v7076 = vld [vmem:[%s7054 + $0x80] sm:$0xf]
      %v7077 = vld [vmem:[%s7054 + $0x84] sm:$0xff]
      %v7078 = vld [vmem:[%s7054 + $0x8c] sm:$0xf]
      %v7079 = vld [vmem:[%s7054 + $0x90] sm:$0xff]
      %v7080 = vld [vmem:[%s7054 + $0x98] sm:$0xf]
      %v7081 = vld [vmem:[%s7054 + $0x9c] sm:$0xff]
      %v7082 = vld [vmem:[%s7054 + $0xa4] sm:$0xf]
      %v7083 = vld [vmem:[%s7054 + $0xa8] sm:$0xff]
      %v7084 = vld [vmem:[%s7054 + $0xb0] sm:$0xf]
      %v7085 = vld [vmem:[%s7054 + $0xb4] sm:$0xff]
      %v7086 = vld [vmem:[%s7054 + $0xbc] sm:$0xf]
      %v7151 = vunpack.c.l.b16 %v6990
      %v7152 = vunpack.c.l.b16 %v6991
      %v7153 = vunpack.c.l.b16 %v6992
      %v7154 = vunpack.c.l.b16 %v6993
      %v7155 = vunpack.c.l.b16 %v6994
      %v7156 = vunpack.c.l.b16 %v6995
      %v7157 = vunpack.c.l.b16 %v6996
      %v7158 = vunpack.c.l.b16 %v6997
      %v7159 = vunpack.c.l.b16 %v6998
      %v7160 = vunpack.c.l.b16 %v6999
      %v7161 = vunpack.c.l.b16 %v7000
      %v7162 = vunpack.c.l.b16 %v7001
      %v7163 = vunpack.c.l.b16 %v7002
      %v7164 = vunpack.c.l.b16 %v7003
      %v7165 = vunpack.c.l.b16 %v7004
      %v7166 = vunpack.c.l.b16 %v7005
      %v7167 = vunpack.c.l.b16 %v7006
      %v7168 = vunpack.c.l.b16 %v7007
      %v7169 = vunpack.c.l.b16 %v7008
      %v7170 = vunpack.c.l.b16 %v7009
      %v7171 = vunpack.c.l.b16 %v7010
      %v7172 = vunpack.c.l.b16 %v7011
      %v7173 = vunpack.c.l.b16 %v7012
      %v7174 = vunpack.c.l.b16 %v7013
      %v7175 = vunpack.c.l.b16 %v7014
      %v7176 = vunpack.c.l.b16 %v7015
      %v7177 = vunpack.c.l.b16 %v7016
      %v7178 = vunpack.c.l.b16 %v7017
      %v7179 = vunpack.c.l.b16 %v7018
      %v7180 = vunpack.c.l.b16 %v7019
      %v7181 = vunpack.c.l.b16 %v7020
      %v7182 = vunpack.c.l.b16 %v7021
      %v7183 = vunpack.c.l.b16 %v7022
      %v7184 = vunpack.c.l.b16 %v7023
      %v7185 = vunpack.c.l.b16 %v7024
      %v7186 = vunpack.c.l.b16 %v7025
      %v7187 = vunpack.c.l.b16 %v7026
      %v7188 = vunpack.c.l.b16 %v7027
      %v7189 = vunpack.c.l.b16 %v7028
      %v7190 = vunpack.c.l.b16 %v7029
      %v7191 = vunpack.c.l.b16 %v7030
      %v7192 = vunpack.c.l.b16 %v7031
      %v7193 = vunpack.c.l.b16 %v7032
      %v7194 = vunpack.c.l.b16 %v7033
      %v7195 = vunpack.c.l.b16 %v7034
      %v7196 = vunpack.c.l.b16 %v7035
      %v7197 = vunpack.c.l.b16 %v7036
      %v7198 = vunpack.c.l.b16 %v7037
      %v7199 = vunpack.c.l.b16 %v7038
      %v7200 = vunpack.c.l.b16 %v7039
      %v7201 = vunpack.c.l.b16 %v7040
      %v7202 = vunpack.c.l.b16 %v7041
      %v7203 = vunpack.c.l.b16 %v7042
      %v7204 = vunpack.c.l.b16 %v7043
      %v7205 = vunpack.c.l.b16 %v7044
      %v7206 = vunpack.c.l.b16 %v7045
      %v7207 = vunpack.c.l.b16 %v7046
      %v7208 = vunpack.c.l.b16 %v7047
      %v7209 = vunpack.c.l.b16 %v7048
      %v7210 = vunpack.c.l.b16 %v7049
      %v7211 = vunpack.c.l.b16 %v7050
      %v7212 = vunpack.c.l.b16 %v7051
      %v7213 = vunpack.c.l.b16 %v7052
      %v7214 = vunpack.c.l.b16 %v7053
      %v7215 = vpack.c.b16 %v7152, %v7151
      %v7216 = vpack.c.b16 %v7154, %v7153
      %v7217 = vpack.c.b16 %v7156, %v7155
      %v7218 = vpack.c.b16 %v7158, %v7157
      %v7219 = vpack.c.b16 %v7160, %v7159
      %v7220 = vpack.c.b16 %v7162, %v7161
      %v7221 = vpack.c.b16 %v7164, %v7163
      %v7222 = vpack.c.b16 %v7166, %v7165
      %v7223 = vpack.c.b16 %v7168, %v7167
      %v7224 = vpack.c.b16 %v7170, %v7169
      %v7225 = vpack.c.b16 %v7172, %v7171
      %v7226 = vpack.c.b16 %v7174, %v7173
      %v7227 = vpack.c.b16 %v7176, %v7175
      %v7228 = vpack.c.b16 %v7178, %v7177
      %v7229 = vpack.c.b16 %v7180, %v7179
      %v7230 = vpack.c.b16 %v7182, %v7181
      %v7231 = vpack.c.b16 %v7184, %v7183
      %v7232 = vpack.c.b16 %v7186, %v7185
      %v7233 = vpack.c.b16 %v7188, %v7187
      %v7234 = vpack.c.b16 %v7190, %v7189
      %v7235 = vpack.c.b16 %v7192, %v7191
      %v7236 = vpack.c.b16 %v7194, %v7193
      %v7237 = vpack.c.b16 %v7196, %v7195
      %v7238 = vpack.c.b16 %v7198, %v7197
      %v7239 = vpack.c.b16 %v7200, %v7199
      %v7240 = vpack.c.b16 %v7202, %v7201
      %v7241 = vpack.c.b16 %v7204, %v7203
      %v7242 = vpack.c.b16 %v7206, %v7205
      %v7243 = vpack.c.b16 %v7208, %v7207
      %v7244 = vpack.c.b16 %v7210, %v7209
      %v7245 = vpack.c.b16 %v7212, %v7211
      %v7246 = vpack.c.b16 %v7214, %v7213
      %v7311 = vunpack.c.l.b16 %v7055
      %v7312 = vunpack.c.h.b16 %v7055
      %v7313 = vunpack.c.l.b16 %v7056
      %v7314 = vunpack.c.l.b16 %v7057
      %v7315 = vunpack.c.h.b16 %v7057
      %v7316 = vunpack.c.l.b16 %v7058
      %v7317 = vunpack.c.l.b16 %v7059
      %v7318 = vunpack.c.h.b16 %v7059
      %v7319 = vunpack.c.l.b16 %v7060
      %v7320 = vunpack.c.l.b16 %v7061
      %v7321 = vunpack.c.h.b16 %v7061
      %v7322 = vunpack.c.l.b16 %v7062
      %v7323 = vunpack.c.l.b16 %v7063
      %v7324 = vunpack.c.h.b16 %v7063
      %v7325 = vunpack.c.l.b16 %v7064
      %v7326 = vunpack.c.l.b16 %v7065
      %v7327 = vunpack.c.h.b16 %v7065
      %v7328 = vunpack.c.l.b16 %v7066
      %v7329 = vunpack.c.l.b16 %v7067
      %v7330 = vunpack.c.h.b16 %v7067
      %v7331 = vunpack.c.l.b16 %v7068
      %v7332 = vunpack.c.l.b16 %v7069
      %v7333 = vunpack.c.h.b16 %v7069
      %v7334 = vunpack.c.l.b16 %v7070
      %v7335 = vunpack.c.l.b16 %v7071
      %v7336 = vunpack.c.h.b16 %v7071
      %v7337 = vunpack.c.l.b16 %v7072
      %v7338 = vunpack.c.l.b16 %v7073
      %v7339 = vunpack.c.h.b16 %v7073
      %v7340 = vunpack.c.l.b16 %v7074
      %v7341 = vunpack.c.l.b16 %v7075
      %v7342 = vunpack.c.h.b16 %v7075
      %v7343 = vunpack.c.l.b16 %v7076
      %v7344 = vunpack.c.l.b16 %v7077
      %v7345 = vunpack.c.h.b16 %v7077
      %v7346 = vunpack.c.l.b16 %v7078
      %v7347 = vunpack.c.l.b16 %v7079
      %v7348 = vunpack.c.h.b16 %v7079
      %v7349 = vunpack.c.l.b16 %v7080
      %v7350 = vunpack.c.l.b16 %v7081
      %v7351 = vunpack.c.h.b16 %v7081
      %v7352 = vunpack.c.l.b16 %v7082
      %v7353 = vunpack.c.l.b16 %v7083
      %v7354 = vunpack.c.h.b16 %v7083
      %v7355 = vunpack.c.l.b16 %v7084
      %v7356 = vunpack.c.l.b16 %v7085
      %v7357 = vunpack.c.h.b16 %v7085
      %v7358 = vunpack.c.l.b16 %v7086
      %v7359 = vpack.c.b16 %v7314, %v7311
      %v7360 = vpack.c.b16 %v7315, %v7312
      %v7361 = vpack.c.b16 %v7316, %v7313
      %v7362 = vpack.c.b16 %v7320, %v7317
      %v7363 = vpack.c.b16 %v7321, %v7318
      %v7364 = vpack.c.b16 %v7322, %v7319
      %v7365 = vpack.c.b16 %v7326, %v7323
      %v7366 = vpack.c.b16 %v7327, %v7324
      %v7367 = vpack.c.b16 %v7328, %v7325
      %v7368 = vpack.c.b16 %v7332, %v7329
      %v7369 = vpack.c.b16 %v7333, %v7330
      %v7370 = vpack.c.b16 %v7334, %v7331
      %v7371 = vpack.c.b16 %v7338, %v7335
      %v7372 = vpack.c.b16 %v7339, %v7336
      %v7373 = vpack.c.b16 %v7340, %v7337
      %v7374 = vpack.c.b16 %v7344, %v7341
      %v7375 = vpack.c.b16 %v7345, %v7342
      %v7376 = vpack.c.b16 %v7346, %v7343
      %v7377 = vpack.c.b16 %v7350, %v7347
      %v7378 = vpack.c.b16 %v7351, %v7348
      %v7379 = vpack.c.b16 %v7352, %v7349
      %v7380 = vpack.c.b16 %v7356, %v7353
      %v7381 = vpack.c.b16 %v7357, %v7354
      %v7382 = vpack.c.b16 %v7358, %v7355
      %7407 = vmatpush.bf16.msra.mxu0 %v7380
      %7408 = vmatpush.bf16.msra.mxu0 %v7377
      %7409 = vmatpush.bf16.msra.mxu0 %v7374
      %7410 = vmatpush.bf16.msra.mxu0 %v7371
      %7411 = vmatpush.bf16.msra.mxu0 %v7368
      %7412 = vmatpush.bf16.msra.mxu0 %v7365
      %7413 = vmatpush.bf16.msra.mxu0 %v7362
      %7414 = vmatpush.bf16.msra.mxu0 %v7359
      %7415 = vmatmul.bf16.gmra.mxu0 %v7215
      %v7416 = vpop.f32.mrf.mxu0
      %v7417 = vadd.f32 0.0, %v7416
      %v7418 = vpop.f32.mrf.mxu0
      %v7419 = vadd.f32 0.0, %v7418
      %7420 = vmatmul.bf16.gmra.mxu0 %v7216
      %v7421 = vpop.f32.mrf.mxu0
      %v7422 = vpop.f32.mrf.mxu0
      %7423 = vmatmul.bf16.gmra.mxu0 %v7217
      %v7424 = vpop.f32.mrf.mxu0
      %v7425 = vadd.f32 0.0, %v7424
      %v7426 = vpop.f32.mrf.mxu0
      %v7427 = vadd.f32 0.0, %v7426
      %7428 = vmatmul.bf16.gmra.mxu0 %v7218
      %v7429 = vpop.f32.mrf.mxu0
      %v7430 = vpop.f32.mrf.mxu0
      %7431 = vmatmul.bf16.gmra.mxu0 %v7219
      %v7432 = vpop.f32.mrf.mxu0
      %v7433 = vadd.f32 0.0, %v7432
      %v7434 = vpop.f32.mrf.mxu0
      %v7435 = vadd.f32 0.0, %v7434
      %7436 = vmatmul.bf16.gmra.mxu0 %v7220
      %v7437 = vpop.f32.mrf.mxu0
      %v7438 = vpop.f32.mrf.mxu0
      %7439 = vmatmul.bf16.gmra.mxu0 %v7221
      %v7440 = vpop.f32.mrf.mxu0
      %v7441 = vadd.f32 0.0, %v7440
      %v7442 = vpop.f32.mrf.mxu0
      %v7443 = vadd.f32 0.0, %v7442
      %7444 = vmatmul.bf16.gmra.mxu0 %v7222
      %v7445 = vpop.f32.mrf.mxu0
      %v7446 = vpop.f32.mrf.mxu0
      %7447 = vmatmul.bf16.gmra.mxu0 %v7223
      %v7448 = vpop.f32.mrf.mxu0
      %v7449 = vadd.f32 0.0, %v7448
      %v7450 = vpop.f32.mrf.mxu0
      %v7451 = vadd.f32 0.0, %v7450
      %7452 = vmatmul.bf16.gmra.mxu0 %v7224
      %v7453 = vpop.f32.mrf.mxu0
      %v7454 = vpop.f32.mrf.mxu0
      %7455 = vmatmul.bf16.gmra.mxu0 %v7225
      %v7456 = vpop.f32.mrf.mxu0
      %v7457 = vadd.f32 0.0, %v7456
      %v7458 = vpop.f32.mrf.mxu0
      %v7459 = vadd.f32 0.0, %v7458
      %7460 = vmatmul.bf16.gmra.mxu0 %v7226
      %v7461 = vpop.f32.mrf.mxu0
      %v7462 = vpop.f32.mrf.mxu0
      %7463 = vmatmul.bf16.gmra.mxu0 %v7227
      %v7464 = vpop.f32.mrf.mxu0
      %v7465 = vadd.f32 0.0, %v7464
      %v7466 = vpop.f32.mrf.mxu0
      %v7467 = vadd.f32 0.0, %v7466
      %7468 = vmatmul.bf16.gmra.mxu0 %v7228
      %v7469 = vpop.f32.mrf.mxu0
      %v7470 = vpop.f32.mrf.mxu0
      %7471 = vmatmul.bf16.gmra.mxu0 %v7229
      %v7472 = vpop.f32.mrf.mxu0
      %v7473 = vadd.f32 0.0, %v7472
      %v7474 = vpop.f32.mrf.mxu0
      %v7475 = vadd.f32 0.0, %v7474
      %7476 = vmatmul.bf16.gmra.mxu0 %v7230
      %v7477 = vpop.f32.mrf.mxu0
      %v7478 = vpop.f32.mrf.mxu0
      %7479 = vmatmul.bf16.gmra.mxu0 %v7231
      %v7480 = vpop.f32.mrf.mxu0
      %v7481 = vadd.f32 0.0, %v7480
      %v7482 = vpop.f32.mrf.mxu0
      %v7483 = vadd.f32 0.0, %v7482
      %7484 = vmatmul.bf16.gmra.mxu0 %v7232
      %v7485 = vpop.f32.mrf.mxu0
      %v7486 = vpop.f32.mrf.mxu0
      %7487 = vmatmul.bf16.gmra.mxu0 %v7233
      %v7488 = vpop.f32.mrf.mxu0
      %v7489 = vadd.f32 0.0, %v7488
      %v7490 = vpop.f32.mrf.mxu0
      %v7491 = vadd.f32 0.0, %v7490
      %7492 = vmatmul.bf16.gmra.mxu0 %v7234
      %v7493 = vpop.f32.mrf.mxu0
      %v7494 = vpop.f32.mrf.mxu0
      %7495 = vmatmul.bf16.gmra.mxu0 %v7235
      %v7496 = vpop.f32.mrf.mxu0
      %v7497 = vadd.f32 0.0, %v7496
      %v7498 = vpop.f32.mrf.mxu0
      %v7499 = vadd.f32 0.0, %v7498
      %7500 = vmatmul.bf16.gmra.mxu0 %v7236
      %v7501 = vpop.f32.mrf.mxu0
      %v7502 = vpop.f32.mrf.mxu0
      %7503 = vmatmul.bf16.gmra.mxu0 %v7237
      %v7504 = vpop.f32.mrf.mxu0
      %v7505 = vadd.f32 0.0, %v7504
      %v7506 = vpop.f32.mrf.mxu0
      %v7507 = vadd.f32 0.0, %v7506
      %7508 = vmatmul.bf16.gmra.mxu0 %v7238
      %v7509 = vpop.f32.mrf.mxu0
      %v7510 = vpop.f32.mrf.mxu0
      %7511 = vmatmul.bf16.gmra.mxu0 %v7239
      %v7512 = vpop.f32.mrf.mxu0
      %v7513 = vadd.f32 0.0, %v7512
      %v7514 = vpop.f32.mrf.mxu0
      %v7515 = vadd.f32 0.0, %v7514
      %7516 = vmatmul.bf16.gmra.mxu0 %v7240
      %v7517 = vpop.f32.mrf.mxu0
      %v7518 = vpop.f32.mrf.mxu0
      %7519 = vmatmul.bf16.gmra.mxu0 %v7241
      %v7520 = vpop.f32.mrf.mxu0
      %v7521 = vadd.f32 0.0, %v7520
      %v7522 = vpop.f32.mrf.mxu0
      %v7523 = vadd.f32 0.0, %v7522
      %7524 = vmatmul.bf16.gmra.mxu0 %v7242
      %v7525 = vpop.f32.mrf.mxu0
      %v7526 = vpop.f32.mrf.mxu0
      %7527 = vmatmul.bf16.gmra.mxu0 %v7243
      %v7528 = vpop.f32.mrf.mxu0
      %v7529 = vadd.f32 0.0, %v7528
      %v7530 = vpop.f32.mrf.mxu0
      %v7531 = vadd.f32 0.0, %v7530
      %7532 = vmatmul.bf16.gmra.mxu0 %v7244
      %v7533 = vpop.f32.mrf.mxu0
      %v7534 = vpop.f32.mrf.mxu0
      %7535 = vmatmul.bf16.gmra.mxu0 %v7245
      %v7536 = vpop.f32.mrf.mxu0
      %v7537 = vadd.f32 0.0, %v7536
      %v7538 = vpop.f32.mrf.mxu0
      %v7539 = vadd.f32 0.0, %v7538
      %7540 = vmatmul.bf16.gmra.mxu0 %v7246
      %v7541 = vpop.f32.mrf.mxu0
      %v7542 = vpop.f32.mrf.mxu0
      %7543 = vdwg.mxu0
      %7544 = vmatpush.bf16.msra.mxu0 %v7381
      %7545 = vmatpush.bf16.msra.mxu0 %v7378
      %7546 = vmatpush.bf16.msra.mxu0 %v7375
      %7547 = vmatpush.bf16.msra.mxu0 %v7372
      %7548 = vmatpush.bf16.msra.mxu0 %v7369
      %7549 = vmatpush.bf16.msra.mxu0 %v7366
      %7550 = vmatpush.bf16.msra.mxu0 %v7363
      %7551 = vmatpush.bf16.msra.mxu0 %v7360
      %7552 = vmatmul.bf16.gmra.mxu0 %v7215
      %v7553 = vpop.f32.mrf.mxu0
      %v7554 = vadd.f32 0.0, %v7553
      %v7555 = vpop.f32.mrf.mxu0
      %v7556 = vadd.f32 0.0, %v7555
      %7557 = vmatmul.bf16.gmra.mxu0 %v7216
      %v7558 = vpop.f32.mrf.mxu0
      %v7559 = vadd.f32 0.0, %v7558
      %v7560 = vpop.f32.mrf.mxu0
      %7561 = vmatmul.bf16.gmra.mxu0 %v7217
      %v7562 = vpop.f32.mrf.mxu0
      %v7563 = vadd.f32 0.0, %v7562
      %v7564 = vpop.f32.mrf.mxu0
      %v7565 = vadd.f32 0.0, %v7564
      %7566 = vmatmul.bf16.gmra.mxu0 %v7218
      %v7567 = vpop.f32.mrf.mxu0
      %v7568 = vadd.f32 0.0, %v7567
      %v7569 = vpop.f32.mrf.mxu0
      %7570 = vmatmul.bf16.gmra.mxu0 %v7219
      %v7571 = vpop.f32.mrf.mxu0
      %v7572 = vadd.f32 0.0, %v7571
      %v7573 = vpop.f32.mrf.mxu0
      %v7574 = vadd.f32 0.0, %v7573
      %7575 = vmatmul.bf16.gmra.mxu0 %v7220
      %v7576 = vpop.f32.mrf.mxu0
      %v7577 = vadd.f32 0.0, %v7576
      %v7578 = vpop.f32.mrf.mxu0
      %7579 = vmatmul.bf16.gmra.mxu0 %v7221
      %v7580 = vpop.f32.mrf.mxu0
      %v7581 = vadd.f32 0.0, %v7580
      %v7582 = vpop.f32.mrf.mxu0
      %v7583 = vadd.f32 0.0, %v7582
      %7584 = vmatmul.bf16.gmra.mxu0 %v7222
      %v7585 = vpop.f32.mrf.mxu0
      %v7586 = vadd.f32 0.0, %v7585
      %v7587 = vpop.f32.mrf.mxu0
      %7588 = vmatmul.bf16.gmra.mxu0 %v7223
      %v7589 = vpop.f32.mrf.mxu0
      %v7590 = vadd.f32 0.0, %v7589
      %v7591 = vpop.f32.mrf.mxu0
      %v7592 = vadd.f32 0.0, %v7591
      %7593 = vmatmul.bf16.gmra.mxu0 %v7224
      %v7594 = vpop.f32.mrf.mxu0
      %v7595 = vadd.f32 0.0, %v7594
      %v7596 = vpop.f32.mrf.mxu0
      %7597 = vmatmul.bf16.gmra.mxu0 %v7225
      %v7598 = vpop.f32.mrf.mxu0
      %v7599 = vadd.f32 0.0, %v7598
      %v7600 = vpop.f32.mrf.mxu0
      %v7601 = vadd.f32 0.0, %v7600
      %7602 = vmatmul.bf16.gmra.mxu0 %v7226
      %v7603 = vpop.f32.mrf.mxu0
      %v7604 = vadd.f32 0.0, %v7603
      %v7605 = vpop.f32.mrf.mxu0
      %7606 = vmatmul.bf16.gmra.mxu0 %v7227
      %v7607 = vpop.f32.mrf.mxu0
      %v7608 = vadd.f32 0.0, %v7607
      %v7609 = vpop.f32.mrf.mxu0
      %v7610 = vadd.f32 0.0, %v7609
      %7611 = vmatmul.bf16.gmra.mxu0 %v7228
      %v7612 = vpop.f32.mrf.mxu0
      %v7613 = vadd.f32 0.0, %v7612
      %v7614 = vpop.f32.mrf.mxu0
      %7615 = vmatmul.bf16.gmra.mxu0 %v7229
      %v7616 = vpop.f32.mrf.mxu0
      %v7617 = vadd.f32 0.0, %v7616
      %v7618 = vpop.f32.mrf.mxu0
      %v7619 = vadd.f32 0.0, %v7618
      %7620 = vmatmul.bf16.gmra.mxu0 %v7230
      %v7621 = vpop.f32.mrf.mxu0
      %v7622 = vadd.f32 0.0, %v7621
      %v7623 = vpop.f32.mrf.mxu0
      %7624 = vmatmul.bf16.gmra.mxu0 %v7231
      %v7625 = vpop.f32.mrf.mxu0
      %v7626 = vadd.f32 0.0, %v7625
      %v7627 = vpop.f32.mrf.mxu0
      %v7628 = vadd.f32 0.0, %v7627
      %7629 = vmatmul.bf16.gmra.mxu0 %v7232
      %v7630 = vpop.f32.mrf.mxu0
      %v7631 = vadd.f32 0.0, %v7630
      %v7632 = vpop.f32.mrf.mxu0
      %7633 = vmatmul.bf16.gmra.mxu0 %v7233
      %v7634 = vpop.f32.mrf.mxu0
      %v7635 = vadd.f32 0.0, %v7634
      %v7636 = vpop.f32.mrf.mxu0
      %v7637 = vadd.f32 0.0, %v7636
      %7638 = vmatmul.bf16.gmra.mxu0 %v7234
      %v7639 = vpop.f32.mrf.mxu0
      %v7640 = vadd.f32 0.0, %v7639
      %v7641 = vpop.f32.mrf.mxu0
      %7642 = vmatmul.bf16.gmra.mxu0 %v7235
      %v7643 = vpop.f32.mrf.mxu0
      %v7644 = vadd.f32 0.0, %v7643
      %v7645 = vpop.f32.mrf.mxu0
      %v7646 = vadd.f32 0.0, %v7645
      %7647 = vmatmul.bf16.gmra.mxu0 %v7236
      %v7648 = vpop.f32.mrf.mxu0
      %v7649 = vadd.f32 0.0, %v7648
      %v7650 = vpop.f32.mrf.mxu0
      %7651 = vmatmul.bf16.gmra.mxu0 %v7237
      %v7652 = vpop.f32.mrf.mxu0
      %v7653 = vadd.f32 0.0, %v7652
      %v7654 = vpop.f32.mrf.mxu0
      %v7655 = vadd.f32 0.0, %v7654
      %7656 = vmatmul.bf16.gmra.mxu0 %v7238
      %v7657 = vpop.f32.mrf.mxu0
      %v7658 = vadd.f32 0.0, %v7657
      %v7659 = vpop.f32.mrf.mxu0
      %7660 = vmatmul.bf16.gmra.mxu0 %v7239
      %v7661 = vpop.f32.mrf.mxu0
      %v7662 = vadd.f32 0.0, %v7661
      %v7663 = vpop.f32.mrf.mxu0
      %v7664 = vadd.f32 0.0, %v7663
      %7665 = vmatmul.bf16.gmra.mxu0 %v7240
      %v7666 = vpop.f32.mrf.mxu0
      %v7667 = vadd.f32 0.0, %v7666
      %v7668 = vpop.f32.mrf.mxu0
      %7669 = vmatmul.bf16.gmra.mxu0 %v7241
      %v7670 = vpop.f32.mrf.mxu0
      %v7671 = vadd.f32 0.0, %v7670
      %v7672 = vpop.f32.mrf.mxu0
      %v7673 = vadd.f32 0.0, %v7672
      %7674 = vmatmul.bf16.gmra.mxu0 %v7242
      %v7675 = vpop.f32.mrf.mxu0
      %v7676 = vadd.f32 0.0, %v7675
      %v7677 = vpop.f32.mrf.mxu0
      %7678 = vmatmul.bf16.gmra.mxu0 %v7243
      %v7679 = vpop.f32.mrf.mxu0
      %v7680 = vadd.f32 0.0, %v7679
      %v7681 = vpop.f32.mrf.mxu0
      %v7682 = vadd.f32 0.0, %v7681
      %7683 = vmatmul.bf16.gmra.mxu0 %v7244
      %v7684 = vpop.f32.mrf.mxu0
      %v7685 = vadd.f32 0.0, %v7684
      %v7686 = vpop.f32.mrf.mxu0
      %7687 = vmatmul.bf16.gmra.mxu0 %v7245
      %v7688 = vpop.f32.mrf.mxu0
      %v7689 = vadd.f32 0.0, %v7688
      %v7690 = vpop.f32.mrf.mxu0
      %v7691 = vadd.f32 0.0, %v7690
      %7692 = vmatmul.bf16.gmra.mxu0 %v7246
      %v7693 = vpop.f32.mrf.mxu0
      %v7694 = vadd.f32 0.0, %v7693
      %v7695 = vpop.f32.mrf.mxu0
      %7696 = vdwg.mxu0
      %7697 = vmatpush.bf16.msra.mxu0 %v7382
      %7698 = vmatpush.bf16.msra.mxu0 %v7379
      %7699 = vmatpush.bf16.msra.mxu0 %v7376
      %7700 = vmatpush.bf16.msra.mxu0 %v7373
      %7701 = vmatpush.bf16.msra.mxu0 %v7370
      %7702 = vmatpush.bf16.msra.mxu0 %v7367
      %7703 = vmatpush.bf16.msra.mxu0 %v7364
      %7704 = vmatpush.bf16.msra.mxu0 %v7361
      %7705 = vmatmul.bf16.gmra.mxu0 %v7215
      %v7706 = vpop.f32.mrf.mxu0
      %v7707 = vadd.f32 0.0, %v7706
      %v7708 = vpop.f32.mrf.mxu0
      %v7709 = vadd.f32 0.0, %v7708
      %7710 = vmatmul.bf16.gmra.mxu0 %v7216
      %v7711 = vpop.f32.mrf.mxu0
      %v7712 = vadd.f32 0.0, %v7711
      %v7713 = vpop.f32.mrf.mxu0
      %7714 = vmatmul.bf16.gmra.mxu0 %v7217
      %v7715 = vpop.f32.mrf.mxu0
      %v7716 = vadd.f32 0.0, %v7715
      %v7717 = vpop.f32.mrf.mxu0
      %v7718 = vadd.f32 0.0, %v7717
      %7719 = vmatmul.bf16.gmra.mxu0 %v7218
      %v7720 = vpop.f32.mrf.mxu0
      %v7721 = vadd.f32 0.0, %v7720
      %v7722 = vpop.f32.mrf.mxu0
      %7723 = vmatmul.bf16.gmra.mxu0 %v7219
      %v7724 = vpop.f32.mrf.mxu0
      %v7725 = vadd.f32 0.0, %v7724
      %v7726 = vpop.f32.mrf.mxu0
      %v7727 = vadd.f32 0.0, %v7726
      %7728 = vmatmul.bf16.gmra.mxu0 %v7220
      %v7729 = vpop.f32.mrf.mxu0
      %v7730 = vadd.f32 0.0, %v7729
      %v7731 = vpop.f32.mrf.mxu0
      %7732 = vmatmul.bf16.gmra.mxu0 %v7221
      %v7733 = vpop.f32.mrf.mxu0
      %v7734 = vadd.f32 0.0, %v7733
      %v7735 = vpop.f32.mrf.mxu0
      %v7736 = vadd.f32 0.0, %v7735
      %7737 = vmatmul.bf16.gmra.mxu0 %v7222
      %v7738 = vpop.f32.mrf.mxu0
      %v7739 = vadd.f32 0.0, %v7738
      %v7740 = vpop.f32.mrf.mxu0
      %7741 = vmatmul.bf16.gmra.mxu0 %v7223
      %v7742 = vpop.f32.mrf.mxu0
      %v7743 = vadd.f32 0.0, %v7742
      %v7744 = vpop.f32.mrf.mxu0
      %v7745 = vadd.f32 0.0, %v7744
      %7746 = vmatmul.bf16.gmra.mxu0 %v7224
      %v7747 = vpop.f32.mrf.mxu0
      %v7748 = vadd.f32 0.0, %v7747
      %v7749 = vpop.f32.mrf.mxu0
      %7750 = vmatmul.bf16.gmra.mxu0 %v7225
      %v7751 = vpop.f32.mrf.mxu0
      %v7752 = vadd.f32 0.0, %v7751
      %v7753 = vpop.f32.mrf.mxu0
      %v7754 = vadd.f32 0.0, %v7753
      %7755 = vmatmul.bf16.gmra.mxu0 %v7226
      %v7756 = vpop.f32.mrf.mxu0
      %v7757 = vadd.f32 0.0, %v7756
      %v7758 = vpop.f32.mrf.mxu0
      %7759 = vmatmul.bf16.gmra.mxu0 %v7227
      %v7760 = vpop.f32.mrf.mxu0
      %v7761 = vadd.f32 0.0, %v7760
      %v7762 = vpop.f32.mrf.mxu0
      %v7763 = vadd.f32 0.0, %v7762
      %7764 = vmatmul.bf16.gmra.mxu0 %v7228
      %v7765 = vpop.f32.mrf.mxu0
      %v7766 = vadd.f32 0.0, %v7765
      %v7767 = vpop.f32.mrf.mxu0
      %7768 = vmatmul.bf16.gmra.mxu0 %v7229
      %v7769 = vpop.f32.mrf.mxu0
      %v7770 = vadd.f32 0.0, %v7769
      %v7771 = vpop.f32.mrf.mxu0
      %v7772 = vadd.f32 0.0, %v7771
      %7773 = vmatmul.bf16.gmra.mxu0 %v7230
      %v7774 = vpop.f32.mrf.mxu0
      %v7775 = vadd.f32 0.0, %v7774
      %v7776 = vpop.f32.mrf.mxu0
      %7777 = vmatmul.bf16.gmra.mxu0 %v7231
      %v7778 = vpop.f32.mrf.mxu0
      %v7779 = vadd.f32 0.0, %v7778
      %v7780 = vpop.f32.mrf.mxu0
      %v7781 = vadd.f32 0.0, %v7780
      %7782 = vmatmul.bf16.gmra.mxu0 %v7232
      %v7783 = vpop.f32.mrf.mxu0
      %v7784 = vadd.f32 0.0, %v7783
      %v7785 = vpop.f32.mrf.mxu0
      %7786 = vmatmul.bf16.gmra.mxu0 %v7233
      %v7787 = vpop.f32.mrf.mxu0
      %v7788 = vadd.f32 0.0, %v7787
      %v7789 = vpop.f32.mrf.mxu0
      %v7790 = vadd.f32 0.0, %v7789
      %7791 = vmatmul.bf16.gmra.mxu0 %v7234
      %v7792 = vpop.f32.mrf.mxu0
      %v7793 = vadd.f32 0.0, %v7792
      %v7794 = vpop.f32.mrf.mxu0
      %7795 = vmatmul.bf16.gmra.mxu0 %v7235
      %v7796 = vpop.f32.mrf.mxu0
      %v7797 = vadd.f32 0.0, %v7796
      %v7798 = vpop.f32.mrf.mxu0
      %v7799 = vadd.f32 0.0, %v7798
      %7800 = vmatmul.bf16.gmra.mxu0 %v7236
      %v7801 = vpop.f32.mrf.mxu0
      %v7802 = vadd.f32 0.0, %v7801
      %v7803 = vpop.f32.mrf.mxu0
      %7804 = vmatmul.bf16.gmra.mxu0 %v7237
      %v7805 = vpop.f32.mrf.mxu0
      %v7806 = vadd.f32 0.0, %v7805
      %v7807 = vpop.f32.mrf.mxu0
      %v7808 = vadd.f32 0.0, %v7807
      %7809 = vmatmul.bf16.gmra.mxu0 %v7238
      %v7810 = vpop.f32.mrf.mxu0
      %v7811 = vadd.f32 0.0, %v7810
      %v7812 = vpop.f32.mrf.mxu0
      %7813 = vmatmul.bf16.gmra.mxu0 %v7239
      %v7814 = vpop.f32.mrf.mxu0
      %v7815 = vadd.f32 0.0, %v7814
      %v7816 = vpop.f32.mrf.mxu0
      %v7817 = vadd.f32 0.0, %v7816
      %7818 = vmatmul.bf16.gmra.mxu0 %v7240
      %v7819 = vpop.f32.mrf.mxu0
      %v7820 = vadd.f32 0.0, %v7819
      %v7821 = vpop.f32.mrf.mxu0
      %7822 = vmatmul.bf16.gmra.mxu0 %v7241
      %v7823 = vpop.f32.mrf.mxu0
      %v7824 = vadd.f32 0.0, %v7823
      %v7825 = vpop.f32.mrf.mxu0
      %v7826 = vadd.f32 0.0, %v7825
      %7827 = vmatmul.bf16.gmra.mxu0 %v7242
      %v7828 = vpop.f32.mrf.mxu0
      %v7829 = vadd.f32 0.0, %v7828
      %v7830 = vpop.f32.mrf.mxu0
      %7831 = vmatmul.bf16.gmra.mxu0 %v7243
      %v7832 = vpop.f32.mrf.mxu0
      %v7833 = vadd.f32 0.0, %v7832
      %v7834 = vpop.f32.mrf.mxu0
      %v7835 = vadd.f32 0.0, %v7834
      %7836 = vmatmul.bf16.gmra.mxu0 %v7244
      %v7837 = vpop.f32.mrf.mxu0
      %v7838 = vadd.f32 0.0, %v7837
      %v7839 = vpop.f32.mrf.mxu0
      %7840 = vmatmul.bf16.gmra.mxu0 %v7245
      %v7841 = vpop.f32.mrf.mxu0
      %v7842 = vadd.f32 0.0, %v7841
      %v7843 = vpop.f32.mrf.mxu0
      %v7844 = vadd.f32 0.0, %v7843
      %7845 = vmatmul.bf16.gmra.mxu0 %v7246
      %v7846 = vpop.f32.mrf.mxu0
      %v7847 = vadd.f32 0.0, %v7846
      %v7848 = vpop.f32.mrf.mxu0
      %7849 = vdwg.mxu0
      %v7850 = vld [vmem:[#allocation4] sm:$0xff]
      %v7851 = vld [vmem:[#allocation4 + $0x8] sm:$0xff]
      %v7852 = vld [vmem:[#allocation4 + $0x10] sm:$0xff]
      %v7853 = vld [vmem:[#allocation4 + $0x18] sm:$0xff]
      %v7854 = vld [vmem:[#allocation4 + $0x20] sm:$0xff]
      %v7855 = vld [vmem:[#allocation4 + $0x28] sm:$0xff]
      %v7856 = vld [vmem:[#allocation4 + $0x30] sm:$0xff]
      %v7857 = vld [vmem:[#allocation4 + $0x38] sm:$0xff]
      %v7858 = vld [vmem:[#allocation4 + $0x40] sm:$0xff]
      %v7859 = vld [vmem:[#allocation4 + $0x48] sm:$0xff]
      %v7860 = vld [vmem:[#allocation4 + $0x50] sm:$0xff]
      %v7861 = vld [vmem:[#allocation4 + $0x58] sm:$0xff]
      %v7862 = vld [vmem:[#allocation4 + $0x60] sm:$0xff]
      %v7863 = vld [vmem:[#allocation4 + $0x68] sm:$0xff]
      %v7864 = vld [vmem:[#allocation4 + $0x70] sm:$0xff]
      %v7865 = vld [vmem:[#allocation4 + $0x78] sm:$0xff]
      %v7866 = vld [vmem:[#allocation4 + $0x80] sm:$0xff]
      %v7867 = vld [vmem:[#allocation4 + $0x88] sm:$0xff]
      %v7868 = vld [vmem:[#allocation4 + $0x90] sm:$0xff]
      %v7869 = vld [vmem:[#allocation4 + $0x98] sm:$0xff]
      %v7870 = vld [vmem:[#allocation4 + $0xa0] sm:$0xff]
      %v7871 = vld [vmem:[#allocation4 + $0xa8] sm:$0xff]
      %v7872 = vld [vmem:[#allocation4 + $0xb0] sm:$0xff]
      %v7873 = vld [vmem:[#allocation4 + $0xb8] sm:$0xff]
      %v7874 = vld [vmem:[#allocation4 + $0xc0] sm:$0xff]
      %v7875 = vld [vmem:[#allocation4 + $0xc8] sm:$0xff]
      %v7876 = vld [vmem:[#allocation4 + $0xd0] sm:$0xff]
      %v7877 = vld [vmem:[#allocation4 + $0xd8] sm:$0xff]
      %v7878 = vld [vmem:[#allocation4 + $0xe0] sm:$0xff]
      %v7879 = vld [vmem:[#allocation4 + $0xe8] sm:$0xff]
      %v7880 = vld [vmem:[#allocation4 + $0xf0] sm:$0xff]
      %v7881 = vld [vmem:[#allocation4 + $0xf8] sm:$0xff]
      %v7930 = vrot.slane %v7554, 1
      %v7931 = vrot.slane %v7556, 1
      %v7932 = vsel %vm1830, %v7930, %v7931
      %v7933 = vrot.slane %v7559, 1
      %v7934 = vsel %vm1830, %v7931, %v7933
      %v7935 = vrot.slane %v7563, 1
      %v7936 = vrot.slane %v7565, 1
      %v7937 = vsel %vm1830, %v7935, %v7936
      %v7938 = vrot.slane %v7568, 1
      %v7939 = vsel %vm1830, %v7936, %v7938
      %v7940 = vrot.slane %v7572, 1
      %v7941 = vrot.slane %v7574, 1
      %v7942 = vsel %vm1830, %v7940, %v7941
      %v7943 = vrot.slane %v7577, 1
      %v7944 = vsel %vm1830, %v7941, %v7943
      %v7945 = vrot.slane %v7581, 1
      %v7946 = vrot.slane %v7583, 1
      %v7947 = vsel %vm1830, %v7945, %v7946
      %v7948 = vrot.slane %v7586, 1
      %v7949 = vsel %vm1830, %v7946, %v7948
      %v7950 = vrot.slane %v7590, 1
      %v7951 = vrot.slane %v7592, 1
      %v7952 = vsel %vm1830, %v7950, %v7951
      %v7953 = vrot.slane %v7595, 1
      %v7954 = vsel %vm1830, %v7951, %v7953
      %v7955 = vrot.slane %v7599, 1
      %v7956 = vrot.slane %v7601, 1
      %v7957 = vsel %vm1830, %v7955, %v7956
      %v7958 = vrot.slane %v7604, 1
      %v7959 = vsel %vm1830, %v7956, %v7958
      %v7960 = vrot.slane %v7608, 1
      %v7961 = vrot.slane %v7610, 1
      %v7962 = vsel %vm1830, %v7960, %v7961
      %v7963 = vrot.slane %v7613, 1
      %v7964 = vsel %vm1830, %v7961, %v7963
      %v7965 = vrot.slane %v7617, 1
      %v7966 = vrot.slane %v7619, 1
      %v7967 = vsel %vm1830, %v7965, %v7966
      %v7968 = vrot.slane %v7622, 1
      %v7969 = vsel %vm1830, %v7966, %v7968
      %v7970 = vrot.slane %v7626, 1
      %v7971 = vrot.slane %v7628, 1
      %v7972 = vsel %vm1830, %v7970, %v7971
      %v7973 = vrot.slane %v7631, 1
      %v7974 = vsel %vm1830, %v7971, %v7973
      %v7975 = vrot.slane %v7635, 1
      %v7976 = vrot.slane %v7637, 1
      %v7977 = vsel %vm1830, %v7975, %v7976
      %v7978 = vrot.slane %v7640, 1
      %v7979 = vsel %vm1830, %v7976, %v7978
      %v7980 = vrot.slane %v7644, 1
      %v7981 = vrot.slane %v7646, 1
      %v7982 = vsel %vm1830, %v7980, %v7981
      %v7983 = vrot.slane %v7649, 1
      %v7984 = vsel %vm1830, %v7981, %v7983
      %v7985 = vrot.slane %v7653, 1
      %v7986 = vrot.slane %v7655, 1
      %v7987 = vsel %vm1830, %v7985, %v7986
      %v7988 = vrot.slane %v7658, 1
      %v7989 = vsel %vm1830, %v7986, %v7988
      %v7990 = vrot.slane %v7662, 1
      %v7991 = vrot.slane %v7664, 1
      %v7992 = vsel %vm1830, %v7990, %v7991
      %v7993 = vrot.slane %v7667, 1
      %v7994 = vsel %vm1830, %v7991, %v7993
      %v7995 = vrot.slane %v7671, 1
      %v7996 = vrot.slane %v7673, 1
      %v7997 = vsel %vm1830, %v7995, %v7996
      %v7998 = vrot.slane %v7676, 1
      %v7999 = vsel %vm1830, %v7996, %v7998
      %v8000 = vrot.slane %v7680, 1
      %v8001 = vrot.slane %v7682, 1
      %v8002 = vsel %vm1830, %v8000, %v8001
      %v8003 = vrot.slane %v7685, 1
      %v8004 = vsel %vm1830, %v8001, %v8003
      %v8005 = vrot.slane %v7689, 1
      %v8006 = vrot.slane %v7691, 1
      %v8007 = vsel %vm1830, %v8005, %v8006
      %v8008 = vrot.slane %v7694, 1
      %v8009 = vsel %vm1830, %v8006, %v8008
      %v8042 = vadd.f32 %v7417, %v7932
      %v8043 = vadd.f32 %v7419, %v7934
      %v8044 = vadd.f32 %v7425, %v7937
      %v8045 = vadd.f32 %v7427, %v7939
      %v8046 = vadd.f32 %v7433, %v7942
      %v8047 = vadd.f32 %v7435, %v7944
      %v8048 = vadd.f32 %v7441, %v7947
      %v8049 = vadd.f32 %v7443, %v7949
      %v8050 = vadd.f32 %v7449, %v7952
      %v8051 = vadd.f32 %v7451, %v7954
      %v8052 = vadd.f32 %v7457, %v7957
      %v8053 = vadd.f32 %v7459, %v7959
      %v8054 = vadd.f32 %v7465, %v7962
      %v8055 = vadd.f32 %v7467, %v7964
      %v8056 = vadd.f32 %v7473, %v7967
      %v8057 = vadd.f32 %v7475, %v7969
      %v8058 = vadd.f32 %v7481, %v7972
      %v8059 = vadd.f32 %v7483, %v7974
      %v8060 = vadd.f32 %v7489, %v7977
      %v8061 = vadd.f32 %v7491, %v7979
      %v8062 = vadd.f32 %v7497, %v7982
      %v8063 = vadd.f32 %v7499, %v7984
      %v8064 = vadd.f32 %v7505, %v7987
      %v8065 = vadd.f32 %v7507, %v7989
      %v8066 = vadd.f32 %v7513, %v7992
      %v8067 = vadd.f32 %v7515, %v7994
      %v8068 = vadd.f32 %v7521, %v7997
      %v8069 = vadd.f32 %v7523, %v7999
      %v8070 = vadd.f32 %v7529, %v8002
      %v8071 = vadd.f32 %v7531, %v8004
      %v8072 = vadd.f32 %v7537, %v8007
      %v8073 = vadd.f32 %v7539, %v8009
      %v8122 = vrot.slane %v7707, 2
      %v8123 = vrot.slane %v7709, 2
      %v8124 = vsel %vm2023, %v8122, %v8123
      %v8125 = vrot.slane %v7712, 2
      %v8126 = vsel %vm2023, %v8123, %v8125
      %v8127 = vrot.slane %v7716, 2
      %v8128 = vrot.slane %v7718, 2
      %v8129 = vsel %vm2023, %v8127, %v8128
      %v8130 = vrot.slane %v7721, 2
      %v8131 = vsel %vm2023, %v8128, %v8130
      %v8132 = vrot.slane %v7725, 2
      %v8133 = vrot.slane %v7727, 2
      %v8134 = vsel %vm2023, %v8132, %v8133
      %v8135 = vrot.slane %v7730, 2
      %v8136 = vsel %vm2023, %v8133, %v8135
      %v8137 = vrot.slane %v7734, 2
      %v8138 = vrot.slane %v7736, 2
      %v8139 = vsel %vm2023, %v8137, %v8138
      %v8140 = vrot.slane %v7739, 2
      %v8141 = vsel %vm2023, %v8138, %v8140
      %v8142 = vrot.slane %v7743, 2
      %v8143 = vrot.slane %v7745, 2
      %v8144 = vsel %vm2023, %v8142, %v8143
      %v8145 = vrot.slane %v7748, 2
      %v8146 = vsel %vm2023, %v8143, %v8145
      %v8147 = vrot.slane %v7752, 2
      %v8148 = vrot.slane %v7754, 2
      %v8149 = vsel %vm2023, %v8147, %v8148
      %v8150 = vrot.slane %v7757, 2
      %v8151 = vsel %vm2023, %v8148, %v8150
      %v8152 = vrot.slane %v7761, 2
      %v8153 = vrot.slane %v7763, 2
      %v8154 = vsel %vm2023, %v8152, %v8153
      %v8155 = vrot.slane %v7766, 2
      %v8156 = vsel %vm2023, %v8153, %v8155
      %v8157 = vrot.slane %v7770, 2
      %v8158 = vrot.slane %v7772, 2
      %v8159 = vsel %vm2023, %v8157, %v8158
      %v8160 = vrot.slane %v7775, 2
      %v8161 = vsel %vm2023, %v8158, %v8160
      %v8162 = vrot.slane %v7779, 2
      %v8163 = vrot.slane %v7781, 2
      %v8164 = vsel %vm2023, %v8162, %v8163
      %v8165 = vrot.slane %v7784, 2
      %v8166 = vsel %vm2023, %v8163, %v8165
      %v8167 = vrot.slane %v7788, 2
      %v8168 = vrot.slane %v7790, 2
      %v8169 = vsel %vm2023, %v8167, %v8168
      %v8170 = vrot.slane %v7793, 2
      %v8171 = vsel %vm2023, %v8168, %v8170
      %v8172 = vrot.slane %v7797, 2
      %v8173 = vrot.slane %v7799, 2
      %v8174 = vsel %vm2023, %v8172, %v8173
      %v8175 = vrot.slane %v7802, 2
      %v8176 = vsel %vm2023, %v8173, %v8175
      %v8177 = vrot.slane %v7806, 2
      %v8178 = vrot.slane %v7808, 2
      %v8179 = vsel %vm2023, %v8177, %v8178
      %v8180 = vrot.slane %v7811, 2
      %v8181 = vsel %vm2023, %v8178, %v8180
      %v8182 = vrot.slane %v7815, 2
      %v8183 = vrot.slane %v7817, 2
      %v8184 = vsel %vm2023, %v8182, %v8183
      %v8185 = vrot.slane %v7820, 2
      %v8186 = vsel %vm2023, %v8183, %v8185
      %v8187 = vrot.slane %v7824, 2
      %v8188 = vrot.slane %v7826, 2
      %v8189 = vsel %vm2023, %v8187, %v8188
      %v8190 = vrot.slane %v7829, 2
      %v8191 = vsel %vm2023, %v8188, %v8190
      %v8192 = vrot.slane %v7833, 2
      %v8193 = vrot.slane %v7835, 2
      %v8194 = vsel %vm2023, %v8192, %v8193
      %v8195 = vrot.slane %v7838, 2
      %v8196 = vsel %vm2023, %v8193, %v8195
      %v8197 = vrot.slane %v7842, 2
      %v8198 = vrot.slane %v7844, 2
      %v8199 = vsel %vm2023, %v8197, %v8198
      %v8200 = vrot.slane %v7847, 2
      %v8201 = vsel %vm2023, %v8198, %v8200
      %v8234 = vadd.f32 %v8042, %v8124
      %v8235 = vadd.f32 %v8043, %v8126
      %v8236 = vadd.f32 %v8044, %v8129
      %v8237 = vadd.f32 %v8045, %v8131
      %v8238 = vadd.f32 %v8046, %v8134
      %v8239 = vadd.f32 %v8047, %v8136
      %v8240 = vadd.f32 %v8048, %v8139
      %v8241 = vadd.f32 %v8049, %v8141
      %v8242 = vadd.f32 %v8050, %v8144
      %v8243 = vadd.f32 %v8051, %v8146
      %v8244 = vadd.f32 %v8052, %v8149
      %v8245 = vadd.f32 %v8053, %v8151
      %v8246 = vadd.f32 %v8054, %v8154
      %v8247 = vadd.f32 %v8055, %v8156
      %v8248 = vadd.f32 %v8056, %v8159
      %v8249 = vadd.f32 %v8057, %v8161
      %v8250 = vadd.f32 %v8058, %v8164
      %v8251 = vadd.f32 %v8059, %v8166
      %v8252 = vadd.f32 %v8060, %v8169
      %v8253 = vadd.f32 %v8061, %v8171
      %v8254 = vadd.f32 %v8062, %v8174
      %v8255 = vadd.f32 %v8063, %v8176
      %v8256 = vadd.f32 %v8064, %v8179
      %v8257 = vadd.f32 %v8065, %v8181
      %v8258 = vadd.f32 %v8066, %v8184
      %v8259 = vadd.f32 %v8067, %v8186
      %v8260 = vadd.f32 %v8068, %v8189
      %v8261 = vadd.f32 %v8069, %v8191
      %v8262 = vadd.f32 %v8070, %v8194
      %v8263 = vadd.f32 %v8071, %v8196
      %v8264 = vadd.f32 %v8072, %v8199
      %v8265 = vadd.f32 %v8073, %v8201
      %v8266 = vadd.f32 %v7850, %v8234
      %v8267 = vadd.f32 %v7851, %v8235
      %v8268 = vadd.f32 %v7852, %v8236
      %v8269 = vadd.f32 %v7853, %v8237
      %v8270 = vadd.f32 %v7854, %v8238
      %v8271 = vadd.f32 %v7855, %v8239
      %v8272 = vadd.f32 %v7856, %v8240
      %v8273 = vadd.f32 %v7857, %v8241
      %v8274 = vadd.f32 %v7858, %v8242
      %v8275 = vadd.f32 %v7859, %v8243
      %v8276 = vadd.f32 %v7860, %v8244
      %v8277 = vadd.f32 %v7861, %v8245
      %v8278 = vadd.f32 %v7862, %v8246
      %v8279 = vadd.f32 %v7863, %v8247
      %v8280 = vadd.f32 %v7864, %v8248
      %v8281 = vadd.f32 %v7865, %v8249
      %v8282 = vadd.f32 %v7866, %v8250
      %v8283 = vadd.f32 %v7867, %v8251
      %v8284 = vadd.f32 %v7868, %v8252
      %v8285 = vadd.f32 %v7869, %v8253
      %v8286 = vadd.f32 %v7870, %v8254
      %v8287 = vadd.f32 %v7871, %v8255
      %v8288 = vadd.f32 %v7872, %v8256
      %v8289 = vadd.f32 %v7873, %v8257
      %v8290 = vadd.f32 %v7874, %v8258
      %v8291 = vadd.f32 %v7875, %v8259
      %v8292 = vadd.f32 %v7876, %v8260
      %v8293 = vadd.f32 %v7877, %v8261
      %v8294 = vadd.f32 %v7878, %v8262
      %v8295 = vadd.f32 %v7879, %v8263
      %v8296 = vadd.f32 %v7880, %v8264
      %v8297 = vadd.f32 %v7881, %v8265
      %8298 = vst [vmem:[#allocation4] sm:$0xff] %v8266
      %8299 = vst [vmem:[#allocation4 + $0x8] sm:$0xff] %v8267
      %8300 = vst [vmem:[#allocation4 + $0x10] sm:$0xff] %v8268
      %8301 = vst [vmem:[#allocation4 + $0x18] sm:$0xff] %v8269
      %8302 = vst [vmem:[#allocation4 + $0x20] sm:$0xff] %v8270
      %8303 = vst [vmem:[#allocation4 + $0x28] sm:$0xff] %v8271
      %8304 = vst [vmem:[#allocation4 + $0x30] sm:$0xff] %v8272
      %8305 = vst [vmem:[#allocation4 + $0x38] sm:$0xff] %v8273
      %8306 = vst [vmem:[#allocation4 + $0x40] sm:$0xff] %v8274
      %8307 = vst [vmem:[#allocation4 + $0x48] sm:$0xff] %v8275
      %8308 = vst [vmem:[#allocation4 + $0x50] sm:$0xff] %v8276
      %8309 = vst [vmem:[#allocation4 + $0x58] sm:$0xff] %v8277
      %8310 = vst [vmem:[#allocation4 + $0x60] sm:$0xff] %v8278
      %8311 = vst [vmem:[#allocation4 + $0x68] sm:$0xff] %v8279
      %8312 = vst [vmem:[#allocation4 + $0x70] sm:$0xff] %v8280
      %8313 = vst [vmem:[#allocation4 + $0x78] sm:$0xff] %v8281
      %8314 = vst [vmem:[#allocation4 + $0x80] sm:$0xff] %v8282
      %8315 = vst [vmem:[#allocation4 + $0x88] sm:$0xff] %v8283
      %8316 = vst [vmem:[#allocation4 + $0x90] sm:$0xff] %v8284
      %8317 = vst [vmem:[#allocation4 + $0x98] sm:$0xff] %v8285
      %8318 = vst [vmem:[#allocation4 + $0xa0] sm:$0xff] %v8286
      %8319 = vst [vmem:[#allocation4 + $0xa8] sm:$0xff] %v8287
      %8320 = vst [vmem:[#allocation4 + $0xb0] sm:$0xff] %v8288
      %8321 = vst [vmem:[#allocation4 + $0xb8] sm:$0xff] %v8289
      %8322 = vst [vmem:[#allocation4 + $0xc0] sm:$0xff] %v8290
      %8323 = vst [vmem:[#allocation4 + $0xc8] sm:$0xff] %v8291
      %8324 = vst [vmem:[#allocation4 + $0xd0] sm:$0xff] %v8292
      %8325 = vst [vmem:[#allocation4 + $0xd8] sm:$0xff] %v8293
      %8326 = vst [vmem:[#allocation4 + $0xe0] sm:$0xff] %v8294
      %8327 = vst [vmem:[#allocation4 + $0xe8] sm:$0xff] %v8295
      %8328 = vst [vmem:[#allocation4 + $0xf0] sm:$0xff] %v8296
      %8329 = vst [vmem:[#allocation4 + $0xf8] sm:$0xff] %v8297
      %s8330 = scalar_lea.vmem [#allocation3], 32
      %v8331 = vld [vmem:[%s8330] sm:$0xf]
      %v8332 = vld [vmem:[%s8330 + $0x4] sm:$0xf]
      %v8333 = vld [vmem:[%s8330 + $0x8] sm:$0xf]
      %v8334 = vld [vmem:[%s8330 + $0xc] sm:$0xf]
      %v8335 = vld [vmem:[%s8330 + $0x10] sm:$0xf]
      %v8336 = vld [vmem:[%s8330 + $0x14] sm:$0xf]
      %v8337 = vld [vmem:[%s8330 + $0x18] sm:$0xf]
      %v8338 = vld [vmem:[%s8330 + $0x1c] sm:$0xf]
      %v8339 = vld [vmem:[%s8330 + $0x20] sm:$0xf]
      %v8340 = vld [vmem:[%s8330 + $0x24] sm:$0xf]
      %v8341 = vld [vmem:[%s8330 + $0x28] sm:$0xf]
      %v8342 = vld [vmem:[%s8330 + $0x2c] sm:$0xf]
      %v8343 = vld [vmem:[%s8330 + $0x30] sm:$0xf]
      %v8344 = vld [vmem:[%s8330 + $0x34] sm:$0xf]
      %v8345 = vld [vmem:[%s8330 + $0x38] sm:$0xf]
      %v8346 = vld [vmem:[%s8330 + $0x3c] sm:$0xf]
      %v8347 = vld [vmem:[%s8330 + $0x40] sm:$0xf]
      %v8348 = vld [vmem:[%s8330 + $0x44] sm:$0xf]
      %v8349 = vld [vmem:[%s8330 + $0x48] sm:$0xf]
      %v8350 = vld [vmem:[%s8330 + $0x4c] sm:$0xf]
      %v8351 = vld [vmem:[%s8330 + $0x50] sm:$0xf]
      %v8352 = vld [vmem:[%s8330 + $0x54] sm:$0xf]
      %v8353 = vld [vmem:[%s8330 + $0x58] sm:$0xf]
      %v8354 = vld [vmem:[%s8330 + $0x5c] sm:$0xf]
      %v8355 = vld [vmem:[%s8330 + $0x60] sm:$0xf]
      %v8356 = vld [vmem:[%s8330 + $0x64] sm:$0xf]
      %v8357 = vld [vmem:[%s8330 + $0x68] sm:$0xf]
      %v8358 = vld [vmem:[%s8330 + $0x6c] sm:$0xf]
      %v8359 = vld [vmem:[%s8330 + $0x70] sm:$0xf]
      %v8360 = vld [vmem:[%s8330 + $0x74] sm:$0xf]
      %v8361 = vld [vmem:[%s8330 + $0x78] sm:$0xf]
      %v8362 = vld [vmem:[%s8330 + $0x7c] sm:$0xf]
      %v8363 = vld [vmem:[%s8330 + $0x80] sm:$0xf]
      %v8364 = vld [vmem:[%s8330 + $0x84] sm:$0xf]
      %v8365 = vld [vmem:[%s8330 + $0x88] sm:$0xf]
      %v8366 = vld [vmem:[%s8330 + $0x8c] sm:$0xf]
      %v8367 = vld [vmem:[%s8330 + $0x90] sm:$0xf]
      %v8368 = vld [vmem:[%s8330 + $0x94] sm:$0xf]
      %v8369 = vld [vmem:[%s8330 + $0x98] sm:$0xf]
      %v8370 = vld [vmem:[%s8330 + $0x9c] sm:$0xf]
      %v8371 = vld [vmem:[%s8330 + $0xa0] sm:$0xf]
      %v8372 = vld [vmem:[%s8330 + $0xa4] sm:$0xf]
      %v8373 = vld [vmem:[%s8330 + $0xa8] sm:$0xf]
      %v8374 = vld [vmem:[%s8330 + $0xac] sm:$0xf]
      %v8375 = vld [vmem:[%s8330 + $0xb0] sm:$0xf]
      %v8376 = vld [vmem:[%s8330 + $0xb4] sm:$0xf]
      %v8377 = vld [vmem:[%s8330 + $0xb8] sm:$0xf]
      %v8378 = vld [vmem:[%s8330 + $0xbc] sm:$0xf]
      %v8379 = vld [vmem:[%s8330 + $0xc0] sm:$0xf]
      %v8380 = vld [vmem:[%s8330 + $0xc4] sm:$0xf]
      %v8381 = vld [vmem:[%s8330 + $0xc8] sm:$0xf]
      %v8382 = vld [vmem:[%s8330 + $0xcc] sm:$0xf]
      %v8383 = vld [vmem:[%s8330 + $0xd0] sm:$0xf]
      %v8384 = vld [vmem:[%s8330 + $0xd4] sm:$0xf]
      %v8385 = vld [vmem:[%s8330 + $0xd8] sm:$0xf]
      %v8386 = vld [vmem:[%s8330 + $0xdc] sm:$0xf]
      %v8387 = vld [vmem:[%s8330 + $0xe0] sm:$0xf]
      %v8388 = vld [vmem:[%s8330 + $0xe4] sm:$0xf]
      %v8389 = vld [vmem:[%s8330 + $0xe8] sm:$0xf]
      %v8390 = vld [vmem:[%s8330 + $0xec] sm:$0xf]
      %v8391 = vld [vmem:[%s8330 + $0xf0] sm:$0xf]
      %v8392 = vld [vmem:[%s8330 + $0xf4] sm:$0xf]
      %v8393 = vld [vmem:[%s8330 + $0xf8] sm:$0xf]
      %v8394 = vld [vmem:[%s8330 + $0xfc] sm:$0xf]
      %s8395 = scalar_lea.vmem %s2, 384
      %v8396 = vld [vmem:[%s8395] sm:$0xff]
      %v8397 = vld [vmem:[%s8395 + $0x8] sm:$0xf]
      %v8398 = vld [vmem:[%s8395 + $0xc] sm:$0xff]
      %v8399 = vld [vmem:[%s8395 + $0x14] sm:$0xf]
      %v8400 = vld [vmem:[%s8395 + $0x18] sm:$0xff]
      %v8401 = vld [vmem:[%s8395 + $0x20] sm:$0xf]
      %v8402 = vld [vmem:[%s8395 + $0x24] sm:$0xff]
      %v8403 = vld [vmem:[%s8395 + $0x2c] sm:$0xf]
      %v8404 = vld [vmem:[%s8395 + $0x30] sm:$0xff]
      %v8405 = vld [vmem:[%s8395 + $0x38] sm:$0xf]
      %v8406 = vld [vmem:[%s8395 + $0x3c] sm:$0xff]
      %v8407 = vld [vmem:[%s8395 + $0x44] sm:$0xf]
      %v8408 = vld [vmem:[%s8395 + $0x48] sm:$0xff]
      %v8409 = vld [vmem:[%s8395 + $0x50] sm:$0xf]
      %v8410 = vld [vmem:[%s8395 + $0x54] sm:$0xff]
      %v8411 = vld [vmem:[%s8395 + $0x5c] sm:$0xf]
      %v8412 = vld [vmem:[%s8395 + $0x60] sm:$0xff]
      %v8413 = vld [vmem:[%s8395 + $0x68] sm:$0xf]
      %v8414 = vld [vmem:[%s8395 + $0x6c] sm:$0xff]
      %v8415 = vld [vmem:[%s8395 + $0x74] sm:$0xf]
      %v8416 = vld [vmem:[%s8395 + $0x78] sm:$0xff]
      %v8417 = vld [vmem:[%s8395 + $0x80] sm:$0xf]
      %v8418 = vld [vmem:[%s8395 + $0x84] sm:$0xff]
      %v8419 = vld [vmem:[%s8395 + $0x8c] sm:$0xf]
      %v8420 = vld [vmem:[%s8395 + $0x90] sm:$0xff]
      %v8421 = vld [vmem:[%s8395 + $0x98] sm:$0xf]
      %v8422 = vld [vmem:[%s8395 + $0x9c] sm:$0xff]
      %v8423 = vld [vmem:[%s8395 + $0xa4] sm:$0xf]
      %v8424 = vld [vmem:[%s8395 + $0xa8] sm:$0xff]
      %v8425 = vld [vmem:[%s8395 + $0xb0] sm:$0xf]
      %v8426 = vld [vmem:[%s8395 + $0xb4] sm:$0xff]
      %v8427 = vld [vmem:[%s8395 + $0xbc] sm:$0xf]
      %v8492 = vunpack.c.l.b16 %v8331
      %v8493 = vunpack.c.l.b16 %v8332
      %v8494 = vunpack.c.l.b16 %v8333
      %v8495 = vunpack.c.l.b16 %v8334
      %v8496 = vunpack.c.l.b16 %v8335
      %v8497 = vunpack.c.l.b16 %v8336
      %v8498 = vunpack.c.l.b16 %v8337
      %v8499 = vunpack.c.l.b16 %v8338
      %v8500 = vunpack.c.l.b16 %v8339
      %v8501 = vunpack.c.l.b16 %v8340
      %v8502 = vunpack.c.l.b16 %v8341
      %v8503 = vunpack.c.l.b16 %v8342
      %v8504 = vunpack.c.l.b16 %v8343
      %v8505 = vunpack.c.l.b16 %v8344
      %v8506 = vunpack.c.l.b16 %v8345
      %v8507 = vunpack.c.l.b16 %v8346
      %v8508 = vunpack.c.l.b16 %v8347
      %v8509 = vunpack.c.l.b16 %v8348
      %v8510 = vunpack.c.l.b16 %v8349
      %v8511 = vunpack.c.l.b16 %v8350
      %v8512 = vunpack.c.l.b16 %v8351
      %v8513 = vunpack.c.l.b16 %v8352
      %v8514 = vunpack.c.l.b16 %v8353
      %v8515 = vunpack.c.l.b16 %v8354
      %v8516 = vunpack.c.l.b16 %v8355
      %v8517 = vunpack.c.l.b16 %v8356
      %v8518 = vunpack.c.l.b16 %v8357
      %v8519 = vunpack.c.l.b16 %v8358
      %v8520 = vunpack.c.l.b16 %v8359
      %v8521 = vunpack.c.l.b16 %v8360
      %v8522 = vunpack.c.l.b16 %v8361
      %v8523 = vunpack.c.l.b16 %v8362
      %v8524 = vunpack.c.l.b16 %v8363
      %v8525 = vunpack.c.l.b16 %v8364
      %v8526 = vunpack.c.l.b16 %v8365
      %v8527 = vunpack.c.l.b16 %v8366
      %v8528 = vunpack.c.l.b16 %v8367
      %v8529 = vunpack.c.l.b16 %v8368
      %v8530 = vunpack.c.l.b16 %v8369
      %v8531 = vunpack.c.l.b16 %v8370
      %v8532 = vunpack.c.l.b16 %v8371
      %v8533 = vunpack.c.l.b16 %v8372
      %v8534 = vunpack.c.l.b16 %v8373
      %v8535 = vunpack.c.l.b16 %v8374
      %v8536 = vunpack.c.l.b16 %v8375
      %v8537 = vunpack.c.l.b16 %v8376
      %v8538 = vunpack.c.l.b16 %v8377
      %v8539 = vunpack.c.l.b16 %v8378
      %v8540 = vunpack.c.l.b16 %v8379
      %v8541 = vunpack.c.l.b16 %v8380
      %v8542 = vunpack.c.l.b16 %v8381
      %v8543 = vunpack.c.l.b16 %v8382
      %v8544 = vunpack.c.l.b16 %v8383
      %v8545 = vunpack.c.l.b16 %v8384
      %v8546 = vunpack.c.l.b16 %v8385
      %v8547 = vunpack.c.l.b16 %v8386
      %v8548 = vunpack.c.l.b16 %v8387
      %v8549 = vunpack.c.l.b16 %v8388
      %v8550 = vunpack.c.l.b16 %v8389
      %v8551 = vunpack.c.l.b16 %v8390
      %v8552 = vunpack.c.l.b16 %v8391
      %v8553 = vunpack.c.l.b16 %v8392
      %v8554 = vunpack.c.l.b16 %v8393
      %v8555 = vunpack.c.l.b16 %v8394
      %v8556 = vpack.c.b16 %v8493, %v8492
      %v8557 = vpack.c.b16 %v8495, %v8494
      %v8558 = vpack.c.b16 %v8497, %v8496
      %v8559 = vpack.c.b16 %v8499, %v8498
      %v8560 = vpack.c.b16 %v8501, %v8500
      %v8561 = vpack.c.b16 %v8503, %v8502
      %v8562 = vpack.c.b16 %v8505, %v8504
      %v8563 = vpack.c.b16 %v8507, %v8506
      %v8564 = vpack.c.b16 %v8509, %v8508
      %v8565 = vpack.c.b16 %v8511, %v8510
      %v8566 = vpack.c.b16 %v8513, %v8512
      %v8567 = vpack.c.b16 %v8515, %v8514
      %v8568 = vpack.c.b16 %v8517, %v8516
      %v8569 = vpack.c.b16 %v8519, %v8518
      %v8570 = vpack.c.b16 %v8521, %v8520
      %v8571 = vpack.c.b16 %v8523, %v8522
      %v8572 = vpack.c.b16 %v8525, %v8524
      %v8573 = vpack.c.b16 %v8527, %v8526
      %v8574 = vpack.c.b16 %v8529, %v8528
      %v8575 = vpack.c.b16 %v8531, %v8530
      %v8576 = vpack.c.b16 %v8533, %v8532
      %v8577 = vpack.c.b16 %v8535, %v8534
      %v8578 = vpack.c.b16 %v8537, %v8536
      %v8579 = vpack.c.b16 %v8539, %v8538
      %v8580 = vpack.c.b16 %v8541, %v8540
      %v8581 = vpack.c.b16 %v8543, %v8542
      %v8582 = vpack.c.b16 %v8545, %v8544
      %v8583 = vpack.c.b16 %v8547, %v8546
      %v8584 = vpack.c.b16 %v8549, %v8548
      %v8585 = vpack.c.b16 %v8551, %v8550
      %v8586 = vpack.c.b16 %v8553, %v8552
      %v8587 = vpack.c.b16 %v8555, %v8554
      %v8652 = vunpack.c.l.b16 %v8396
      %v8653 = vunpack.c.h.b16 %v8396
      %v8654 = vunpack.c.l.b16 %v8397
      %v8655 = vunpack.c.l.b16 %v8398
      %v8656 = vunpack.c.h.b16 %v8398
      %v8657 = vunpack.c.l.b16 %v8399
      %v8658 = vunpack.c.l.b16 %v8400
      %v8659 = vunpack.c.h.b16 %v8400
      %v8660 = vunpack.c.l.b16 %v8401
      %v8661 = vunpack.c.l.b16 %v8402
      %v8662 = vunpack.c.h.b16 %v8402
      %v8663 = vunpack.c.l.b16 %v8403
      %v8664 = vunpack.c.l.b16 %v8404
      %v8665 = vunpack.c.h.b16 %v8404
      %v8666 = vunpack.c.l.b16 %v8405
      %v8667 = vunpack.c.l.b16 %v8406
      %v8668 = vunpack.c.h.b16 %v8406
      %v8669 = vunpack.c.l.b16 %v8407
      %v8670 = vunpack.c.l.b16 %v8408
      %v8671 = vunpack.c.h.b16 %v8408
      %v8672 = vunpack.c.l.b16 %v8409
      %v8673 = vunpack.c.l.b16 %v8410
      %v8674 = vunpack.c.h.b16 %v8410
      %v8675 = vunpack.c.l.b16 %v8411
      %v8676 = vunpack.c.l.b16 %v8412
      %v8677 = vunpack.c.h.b16 %v8412
      %v8678 = vunpack.c.l.b16 %v8413
      %v8679 = vunpack.c.l.b16 %v8414
      %v8680 = vunpack.c.h.b16 %v8414
      %v8681 = vunpack.c.l.b16 %v8415
      %v8682 = vunpack.c.l.b16 %v8416
      %v8683 = vunpack.c.h.b16 %v8416
      %v8684 = vunpack.c.l.b16 %v8417
      %v8685 = vunpack.c.l.b16 %v8418
      %v8686 = vunpack.c.h.b16 %v8418
      %v8687 = vunpack.c.l.b16 %v8419
      %v8688 = vunpack.c.l.b16 %v8420
      %v8689 = vunpack.c.h.b16 %v8420
      %v8690 = vunpack.c.l.b16 %v8421
      %v8691 = vunpack.c.l.b16 %v8422
      %v8692 = vunpack.c.h.b16 %v8422
      %v8693 = vunpack.c.l.b16 %v8423
      %v8694 = vunpack.c.l.b16 %v8424
      %v8695 = vunpack.c.h.b16 %v8424
      %v8696 = vunpack.c.l.b16 %v8425
      %v8697 = vunpack.c.l.b16 %v8426
      %v8698 = vunpack.c.h.b16 %v8426
      %v8699 = vunpack.c.l.b16 %v8427
      %v8700 = vpack.c.b16 %v8655, %v8652
      %v8701 = vpack.c.b16 %v8656, %v8653
      %v8702 = vpack.c.b16 %v8657, %v8654
      %v8703 = vpack.c.b16 %v8661, %v8658
      %v8704 = vpack.c.b16 %v8662, %v8659
      %v8705 = vpack.c.b16 %v8663, %v8660
      %v8706 = vpack.c.b16 %v8667, %v8664
      %v8707 = vpack.c.b16 %v8668, %v8665
      %v8708 = vpack.c.b16 %v8669, %v8666
      %v8709 = vpack.c.b16 %v8673, %v8670
      %v8710 = vpack.c.b16 %v8674, %v8671
      %v8711 = vpack.c.b16 %v8675, %v8672
      %v8712 = vpack.c.b16 %v8679, %v8676
      %v8713 = vpack.c.b16 %v8680, %v8677
      %v8714 = vpack.c.b16 %v8681, %v8678
      %v8715 = vpack.c.b16 %v8685, %v8682
      %v8716 = vpack.c.b16 %v8686, %v8683
      %v8717 = vpack.c.b16 %v8687, %v8684
      %v8718 = vpack.c.b16 %v8691, %v8688
      %v8719 = vpack.c.b16 %v8692, %v8689
      %v8720 = vpack.c.b16 %v8693, %v8690
      %v8721 = vpack.c.b16 %v8697, %v8694
      %v8722 = vpack.c.b16 %v8698, %v8695
      %v8723 = vpack.c.b16 %v8699, %v8696
      %8748 = vmatpush.bf16.msra.mxu0 %v8721
      %8749 = vmatpush.bf16.msra.mxu0 %v8718
      %8750 = vmatpush.bf16.msra.mxu0 %v8715
      %8751 = vmatpush.bf16.msra.mxu0 %v8712
      %8752 = vmatpush.bf16.msra.mxu0 %v8709
      %8753 = vmatpush.bf16.msra.mxu0 %v8706
      %8754 = vmatpush.bf16.msra.mxu0 %v8703
      %8755 = vmatpush.bf16.msra.mxu0 %v8700
      %8756 = vmatmul.bf16.gmra.mxu0 %v8556
      %v8757 = vpop.f32.mrf.mxu0
      %v8758 = vadd.f32 0.0, %v8757
      %v8759 = vpop.f32.mrf.mxu0
      %v8760 = vadd.f32 0.0, %v8759
      %8761 = vmatmul.bf16.gmra.mxu0 %v8557
      %v8762 = vpop.f32.mrf.mxu0
      %v8763 = vpop.f32.mrf.mxu0
      %8764 = vmatmul.bf16.gmra.mxu0 %v8558
      %v8765 = vpop.f32.mrf.mxu0
      %v8766 = vadd.f32 0.0, %v8765
      %v8767 = vpop.f32.mrf.mxu0
      %v8768 = vadd.f32 0.0, %v8767
      %8769 = vmatmul.bf16.gmra.mxu0 %v8559
      %v8770 = vpop.f32.mrf.mxu0
      %v8771 = vpop.f32.mrf.mxu0
      %8772 = vmatmul.bf16.gmra.mxu0 %v8560
      %v8773 = vpop.f32.mrf.mxu0
      %v8774 = vadd.f32 0.0, %v8773
      %v8775 = vpop.f32.mrf.mxu0
      %v8776 = vadd.f32 0.0, %v8775
      %8777 = vmatmul.bf16.gmra.mxu0 %v8561
      %v8778 = vpop.f32.mrf.mxu0
      %v8779 = vpop.f32.mrf.mxu0
      %8780 = vmatmul.bf16.gmra.mxu0 %v8562
      %v8781 = vpop.f32.mrf.mxu0
      %v8782 = vadd.f32 0.0, %v8781
      %v8783 = vpop.f32.mrf.mxu0
      %v8784 = vadd.f32 0.0, %v8783
      %8785 = vmatmul.bf16.gmra.mxu0 %v8563
      %v8786 = vpop.f32.mrf.mxu0
      %v8787 = vpop.f32.mrf.mxu0
      %8788 = vmatmul.bf16.gmra.mxu0 %v8564
      %v8789 = vpop.f32.mrf.mxu0
      %v8790 = vadd.f32 0.0, %v8789
      %v8791 = vpop.f32.mrf.mxu0
      %v8792 = vadd.f32 0.0, %v8791
      %8793 = vmatmul.bf16.gmra.mxu0 %v8565
      %v8794 = vpop.f32.mrf.mxu0
      %v8795 = vpop.f32.mrf.mxu0
      %8796 = vmatmul.bf16.gmra.mxu0 %v8566
      %v8797 = vpop.f32.mrf.mxu0
      %v8798 = vadd.f32 0.0, %v8797
      %v8799 = vpop.f32.mrf.mxu0
      %v8800 = vadd.f32 0.0, %v8799
      %8801 = vmatmul.bf16.gmra.mxu0 %v8567
      %v8802 = vpop.f32.mrf.mxu0
      %v8803 = vpop.f32.mrf.mxu0
      %8804 = vmatmul.bf16.gmra.mxu0 %v8568
      %v8805 = vpop.f32.mrf.mxu0
      %v8806 = vadd.f32 0.0, %v8805
      %v8807 = vpop.f32.mrf.mxu0
      %v8808 = vadd.f32 0.0, %v8807
      %8809 = vmatmul.bf16.gmra.mxu0 %v8569
      %v8810 = vpop.f32.mrf.mxu0
      %v8811 = vpop.f32.mrf.mxu0
      %8812 = vmatmul.bf16.gmra.mxu0 %v8570
      %v8813 = vpop.f32.mrf.mxu0
      %v8814 = vadd.f32 0.0, %v8813
      %v8815 = vpop.f32.mrf.mxu0
      %v8816 = vadd.f32 0.0, %v8815
      %8817 = vmatmul.bf16.gmra.mxu0 %v8571
      %v8818 = vpop.f32.mrf.mxu0
      %v8819 = vpop.f32.mrf.mxu0
      %8820 = vmatmul.bf16.gmra.mxu0 %v8572
      %v8821 = vpop.f32.mrf.mxu0
      %v8822 = vadd.f32 0.0, %v8821
      %v8823 = vpop.f32.mrf.mxu0
      %v8824 = vadd.f32 0.0, %v8823
      %8825 = vmatmul.bf16.gmra.mxu0 %v8573
      %v8826 = vpop.f32.mrf.mxu0
      %v8827 = vpop.f32.mrf.mxu0
      %8828 = vmatmul.bf16.gmra.mxu0 %v8574
      %v8829 = vpop.f32.mrf.mxu0
      %v8830 = vadd.f32 0.0, %v8829
      %v8831 = vpop.f32.mrf.mxu0
      %v8832 = vadd.f32 0.0, %v8831
      %8833 = vmatmul.bf16.gmra.mxu0 %v8575
      %v8834 = vpop.f32.mrf.mxu0
      %v8835 = vpop.f32.mrf.mxu0
      %8836 = vmatmul.bf16.gmra.mxu0 %v8576
      %v8837 = vpop.f32.mrf.mxu0
      %v8838 = vadd.f32 0.0, %v8837
      %v8839 = vpop.f32.mrf.mxu0
      %v8840 = vadd.f32 0.0, %v8839
      %8841 = vmatmul.bf16.gmra.mxu0 %v8577
      %v8842 = vpop.f32.mrf.mxu0
      %v8843 = vpop.f32.mrf.mxu0
      %8844 = vmatmul.bf16.gmra.mxu0 %v8578
      %v8845 = vpop.f32.mrf.mxu0
      %v8846 = vadd.f32 0.0, %v8845
      %v8847 = vpop.f32.mrf.mxu0
      %v8848 = vadd.f32 0.0, %v8847
      %8849 = vmatmul.bf16.gmra.mxu0 %v8579
      %v8850 = vpop.f32.mrf.mxu0
      %v8851 = vpop.f32.mrf.mxu0
      %8852 = vmatmul.bf16.gmra.mxu0 %v8580
      %v8853 = vpop.f32.mrf.mxu0
      %v8854 = vadd.f32 0.0, %v8853
      %v8855 = vpop.f32.mrf.mxu0
      %v8856 = vadd.f32 0.0, %v8855
      %8857 = vmatmul.bf16.gmra.mxu0 %v8581
      %v8858 = vpop.f32.mrf.mxu0
      %v8859 = vpop.f32.mrf.mxu0
      %8860 = vmatmul.bf16.gmra.mxu0 %v8582
      %v8861 = vpop.f32.mrf.mxu0
      %v8862 = vadd.f32 0.0, %v8861
      %v8863 = vpop.f32.mrf.mxu0
      %v8864 = vadd.f32 0.0, %v8863
      %8865 = vmatmul.bf16.gmra.mxu0 %v8583
      %v8866 = vpop.f32.mrf.mxu0
      %v8867 = vpop.f32.mrf.mxu0
      %8868 = vmatmul.bf16.gmra.mxu0 %v8584
      %v8869 = vpop.f32.mrf.mxu0
      %v8870 = vadd.f32 0.0, %v8869
      %v8871 = vpop.f32.mrf.mxu0
      %v8872 = vadd.f32 0.0, %v8871
      %8873 = vmatmul.bf16.gmra.mxu0 %v8585
      %v8874 = vpop.f32.mrf.mxu0
      %v8875 = vpop.f32.mrf.mxu0
      %8876 = vmatmul.bf16.gmra.mxu0 %v8586
      %v8877 = vpop.f32.mrf.mxu0
      %v8878 = vadd.f32 0.0, %v8877
      %v8879 = vpop.f32.mrf.mxu0
      %v8880 = vadd.f32 0.0, %v8879
      %8881 = vmatmul.bf16.gmra.mxu0 %v8587
      %v8882 = vpop.f32.mrf.mxu0
      %v8883 = vpop.f32.mrf.mxu0
      %8884 = vdwg.mxu0
      %8885 = vmatpush.bf16.msra.mxu0 %v8722
      %8886 = vmatpush.bf16.msra.mxu0 %v8719
      %8887 = vmatpush.bf16.msra.mxu0 %v8716
      %8888 = vmatpush.bf16.msra.mxu0 %v8713
      %8889 = vmatpush.bf16.msra.mxu0 %v8710
      %8890 = vmatpush.bf16.msra.mxu0 %v8707
      %8891 = vmatpush.bf16.msra.mxu0 %v8704
      %8892 = vmatpush.bf16.msra.mxu0 %v8701
      %8893 = vmatmul.bf16.gmra.mxu0 %v8556
      %v8894 = vpop.f32.mrf.mxu0
      %v8895 = vadd.f32 0.0, %v8894
      %v8896 = vpop.f32.mrf.mxu0
      %v8897 = vadd.f32 0.0, %v8896
      %8898 = vmatmul.bf16.gmra.mxu0 %v8557
      %v8899 = vpop.f32.mrf.mxu0
      %v8900 = vadd.f32 0.0, %v8899
      %v8901 = vpop.f32.mrf.mxu0
      %8902 = vmatmul.bf16.gmra.mxu0 %v8558
      %v8903 = vpop.f32.mrf.mxu0
      %v8904 = vadd.f32 0.0, %v8903
      %v8905 = vpop.f32.mrf.mxu0
      %v8906 = vadd.f32 0.0, %v8905
      %8907 = vmatmul.bf16.gmra.mxu0 %v8559
      %v8908 = vpop.f32.mrf.mxu0
      %v8909 = vadd.f32 0.0, %v8908
      %v8910 = vpop.f32.mrf.mxu0
      %8911 = vmatmul.bf16.gmra.mxu0 %v8560
      %v8912 = vpop.f32.mrf.mxu0
      %v8913 = vadd.f32 0.0, %v8912
      %v8914 = vpop.f32.mrf.mxu0
      %v8915 = vadd.f32 0.0, %v8914
      %8916 = vmatmul.bf16.gmra.mxu0 %v8561
      %v8917 = vpop.f32.mrf.mxu0
      %v8918 = vadd.f32 0.0, %v8917
      %v8919 = vpop.f32.mrf.mxu0
      %8920 = vmatmul.bf16.gmra.mxu0 %v8562
      %v8921 = vpop.f32.mrf.mxu0
      %v8922 = vadd.f32 0.0, %v8921
      %v8923 = vpop.f32.mrf.mxu0
      %v8924 = vadd.f32 0.0, %v8923
      %8925 = vmatmul.bf16.gmra.mxu0 %v8563
      %v8926 = vpop.f32.mrf.mxu0
      %v8927 = vadd.f32 0.0, %v8926
      %v8928 = vpop.f32.mrf.mxu0
      %8929 = vmatmul.bf16.gmra.mxu0 %v8564
      %v8930 = vpop.f32.mrf.mxu0
      %v8931 = vadd.f32 0.0, %v8930
      %v8932 = vpop.f32.mrf.mxu0
      %v8933 = vadd.f32 0.0, %v8932
      %8934 = vmatmul.bf16.gmra.mxu0 %v8565
      %v8935 = vpop.f32.mrf.mxu0
      %v8936 = vadd.f32 0.0, %v8935
      %v8937 = vpop.f32.mrf.mxu0
      %8938 = vmatmul.bf16.gmra.mxu0 %v8566
      %v8939 = vpop.f32.mrf.mxu0
      %v8940 = vadd.f32 0.0, %v8939
      %v8941 = vpop.f32.mrf.mxu0
      %v8942 = vadd.f32 0.0, %v8941
      %8943 = vmatmul.bf16.gmra.mxu0 %v8567
      %v8944 = vpop.f32.mrf.mxu0
      %v8945 = vadd.f32 0.0, %v8944
      %v8946 = vpop.f32.mrf.mxu0
      %8947 = vmatmul.bf16.gmra.mxu0 %v8568
      %v8948 = vpop.f32.mrf.mxu0
      %v8949 = vadd.f32 0.0, %v8948
      %v8950 = vpop.f32.mrf.mxu0
      %v8951 = vadd.f32 0.0, %v8950
      %8952 = vmatmul.bf16.gmra.mxu0 %v8569
      %v8953 = vpop.f32.mrf.mxu0
      %v8954 = vadd.f32 0.0, %v8953
      %v8955 = vpop.f32.mrf.mxu0
      %8956 = vmatmul.bf16.gmra.mxu0 %v8570
      %v8957 = vpop.f32.mrf.mxu0
      %v8958 = vadd.f32 0.0, %v8957
      %v8959 = vpop.f32.mrf.mxu0
      %v8960 = vadd.f32 0.0, %v8959
      %8961 = vmatmul.bf16.gmra.mxu0 %v8571
      %v8962 = vpop.f32.mrf.mxu0
      %v8963 = vadd.f32 0.0, %v8962
      %v8964 = vpop.f32.mrf.mxu0
      %8965 = vmatmul.bf16.gmra.mxu0 %v8572
      %v8966 = vpop.f32.mrf.mxu0
      %v8967 = vadd.f32 0.0, %v8966
      %v8968 = vpop.f32.mrf.mxu0
      %v8969 = vadd.f32 0.0, %v8968
      %8970 = vmatmul.bf16.gmra.mxu0 %v8573
      %v8971 = vpop.f32.mrf.mxu0
      %v8972 = vadd.f32 0.0, %v8971
      %v8973 = vpop.f32.mrf.mxu0
      %8974 = vmatmul.bf16.gmra.mxu0 %v8574
      %v8975 = vpop.f32.mrf.mxu0
      %v8976 = vadd.f32 0.0, %v8975
      %v8977 = vpop.f32.mrf.mxu0
      %v8978 = vadd.f32 0.0, %v8977
      %8979 = vmatmul.bf16.gmra.mxu0 %v8575
      %v8980 = vpop.f32.mrf.mxu0
      %v8981 = vadd.f32 0.0, %v8980
      %v8982 = vpop.f32.mrf.mxu0
      %8983 = vmatmul.bf16.gmra.mxu0 %v8576
      %v8984 = vpop.f32.mrf.mxu0
      %v8985 = vadd.f32 0.0, %v8984
      %v8986 = vpop.f32.mrf.mxu0
      %v8987 = vadd.f32 0.0, %v8986
      %8988 = vmatmul.bf16.gmra.mxu0 %v8577
      %v8989 = vpop.f32.mrf.mxu0
      %v8990 = vadd.f32 0.0, %v8989
      %v8991 = vpop.f32.mrf.mxu0
      %8992 = vmatmul.bf16.gmra.mxu0 %v8578
      %v8993 = vpop.f32.mrf.mxu0
      %v8994 = vadd.f32 0.0, %v8993
      %v8995 = vpop.f32.mrf.mxu0
      %v8996 = vadd.f32 0.0, %v8995
      %8997 = vmatmul.bf16.gmra.mxu0 %v8579
      %v8998 = vpop.f32.mrf.mxu0
      %v8999 = vadd.f32 0.0, %v8998
      %v9000 = vpop.f32.mrf.mxu0
      %9001 = vmatmul.bf16.gmra.mxu0 %v8580
      %v9002 = vpop.f32.mrf.mxu0
      %v9003 = vadd.f32 0.0, %v9002
      %v9004 = vpop.f32.mrf.mxu0
      %v9005 = vadd.f32 0.0, %v9004
      %9006 = vmatmul.bf16.gmra.mxu0 %v8581
      %v9007 = vpop.f32.mrf.mxu0
      %v9008 = vadd.f32 0.0, %v9007
      %v9009 = vpop.f32.mrf.mxu0
      %9010 = vmatmul.bf16.gmra.mxu0 %v8582
      %v9011 = vpop.f32.mrf.mxu0
      %v9012 = vadd.f32 0.0, %v9011
      %v9013 = vpop.f32.mrf.mxu0
      %v9014 = vadd.f32 0.0, %v9013
      %9015 = vmatmul.bf16.gmra.mxu0 %v8583
      %v9016 = vpop.f32.mrf.mxu0
      %v9017 = vadd.f32 0.0, %v9016
      %v9018 = vpop.f32.mrf.mxu0
      %9019 = vmatmul.bf16.gmra.mxu0 %v8584
      %v9020 = vpop.f32.mrf.mxu0
      %v9021 = vadd.f32 0.0, %v9020
      %v9022 = vpop.f32.mrf.mxu0
      %v9023 = vadd.f32 0.0, %v9022
      %9024 = vmatmul.bf16.gmra.mxu0 %v8585
      %v9025 = vpop.f32.mrf.mxu0
      %v9026 = vadd.f32 0.0, %v9025
      %v9027 = vpop.f32.mrf.mxu0
      %9028 = vmatmul.bf16.gmra.mxu0 %v8586
      %v9029 = vpop.f32.mrf.mxu0
      %v9030 = vadd.f32 0.0, %v9029
      %v9031 = vpop.f32.mrf.mxu0
      %v9032 = vadd.f32 0.0, %v9031
      %9033 = vmatmul.bf16.gmra.mxu0 %v8587
      %v9034 = vpop.f32.mrf.mxu0
      %v9035 = vadd.f32 0.0, %v9034
      %v9036 = vpop.f32.mrf.mxu0
      %9037 = vdwg.mxu0
      %9038 = vmatpush.bf16.msra.mxu0 %v8723
      %9039 = vmatpush.bf16.msra.mxu0 %v8720
      %9040 = vmatpush.bf16.msra.mxu0 %v8717
      %9041 = vmatpush.bf16.msra.mxu0 %v8714
      %9042 = vmatpush.bf16.msra.mxu0 %v8711
      %9043 = vmatpush.bf16.msra.mxu0 %v8708
      %9044 = vmatpush.bf16.msra.mxu0 %v8705
      %9045 = vmatpush.bf16.msra.mxu0 %v8702
      %9046 = vmatmul.bf16.gmra.mxu0 %v8556
      %v9047 = vpop.f32.mrf.mxu0
      %v9048 = vadd.f32 0.0, %v9047
      %v9049 = vpop.f32.mrf.mxu0
      %v9050 = vadd.f32 0.0, %v9049
      %9051 = vmatmul.bf16.gmra.mxu0 %v8557
      %v9052 = vpop.f32.mrf.mxu0
      %v9053 = vadd.f32 0.0, %v9052
      %v9054 = vpop.f32.mrf.mxu0
      %9055 = vmatmul.bf16.gmra.mxu0 %v8558
      %v9056 = vpop.f32.mrf.mxu0
      %v9057 = vadd.f32 0.0, %v9056
      %v9058 = vpop.f32.mrf.mxu0
      %v9059 = vadd.f32 0.0, %v9058
      %9060 = vmatmul.bf16.gmra.mxu0 %v8559
      %v9061 = vpop.f32.mrf.mxu0
      %v9062 = vadd.f32 0.0, %v9061
      %v9063 = vpop.f32.mrf.mxu0
      %9064 = vmatmul.bf16.gmra.mxu0 %v8560
      %v9065 = vpop.f32.mrf.mxu0
      %v9066 = vadd.f32 0.0, %v9065
      %v9067 = vpop.f32.mrf.mxu0
      %v9068 = vadd.f32 0.0, %v9067
      %9069 = vmatmul.bf16.gmra.mxu0 %v8561
      %v9070 = vpop.f32.mrf.mxu0
      %v9071 = vadd.f32 0.0, %v9070
      %v9072 = vpop.f32.mrf.mxu0
      %9073 = vmatmul.bf16.gmra.mxu0 %v8562
      %v9074 = vpop.f32.mrf.mxu0
      %v9075 = vadd.f32 0.0, %v9074
      %v9076 = vpop.f32.mrf.mxu0
      %v9077 = vadd.f32 0.0, %v9076
      %9078 = vmatmul.bf16.gmra.mxu0 %v8563
      %v9079 = vpop.f32.mrf.mxu0
      %v9080 = vadd.f32 0.0, %v9079
      %v9081 = vpop.f32.mrf.mxu0
      %9082 = vmatmul.bf16.gmra.mxu0 %v8564
      %v9083 = vpop.f32.mrf.mxu0
      %v9084 = vadd.f32 0.0, %v9083
      %v9085 = vpop.f32.mrf.mxu0
      %v9086 = vadd.f32 0.0, %v9085
      %9087 = vmatmul.bf16.gmra.mxu0 %v8565
      %v9088 = vpop.f32.mrf.mxu0
      %v9089 = vadd.f32 0.0, %v9088
      %v9090 = vpop.f32.mrf.mxu0
      %9091 = vmatmul.bf16.gmra.mxu0 %v8566
      %v9092 = vpop.f32.mrf.mxu0
      %v9093 = vadd.f32 0.0, %v9092
      %v9094 = vpop.f32.mrf.mxu0
      %v9095 = vadd.f32 0.0, %v9094
      %9096 = vmatmul.bf16.gmra.mxu0 %v8567
      %v9097 = vpop.f32.mrf.mxu0
      %v9098 = vadd.f32 0.0, %v9097
      %v9099 = vpop.f32.mrf.mxu0
      %9100 = vmatmul.bf16.gmra.mxu0 %v8568
      %v9101 = vpop.f32.mrf.mxu0
      %v9102 = vadd.f32 0.0, %v9101
      %v9103 = vpop.f32.mrf.mxu0
      %v9104 = vadd.f32 0.0, %v9103
      %9105 = vmatmul.bf16.gmra.mxu0 %v8569
      %v9106 = vpop.f32.mrf.mxu0
      %v9107 = vadd.f32 0.0, %v9106
      %v9108 = vpop.f32.mrf.mxu0
      %9109 = vmatmul.bf16.gmra.mxu0 %v8570
      %v9110 = vpop.f32.mrf.mxu0
      %v9111 = vadd.f32 0.0, %v9110
      %v9112 = vpop.f32.mrf.mxu0
      %v9113 = vadd.f32 0.0, %v9112
      %9114 = vmatmul.bf16.gmra.mxu0 %v8571
      %v9115 = vpop.f32.mrf.mxu0
      %v9116 = vadd.f32 0.0, %v9115
      %v9117 = vpop.f32.mrf.mxu0
      %9118 = vmatmul.bf16.gmra.mxu0 %v8572
      %v9119 = vpop.f32.mrf.mxu0
      %v9120 = vadd.f32 0.0, %v9119
      %v9121 = vpop.f32.mrf.mxu0
      %v9122 = vadd.f32 0.0, %v9121
      %9123 = vmatmul.bf16.gmra.mxu0 %v8573
      %v9124 = vpop.f32.mrf.mxu0
      %v9125 = vadd.f32 0.0, %v9124
      %v9126 = vpop.f32.mrf.mxu0
      %9127 = vmatmul.bf16.gmra.mxu0 %v8574
      %v9128 = vpop.f32.mrf.mxu0
      %v9129 = vadd.f32 0.0, %v9128
      %v9130 = vpop.f32.mrf.mxu0
      %v9131 = vadd.f32 0.0, %v9130
      %9132 = vmatmul.bf16.gmra.mxu0 %v8575
      %v9133 = vpop.f32.mrf.mxu0
      %v9134 = vadd.f32 0.0, %v9133
      %v9135 = vpop.f32.mrf.mxu0
      %9136 = vmatmul.bf16.gmra.mxu0 %v8576
      %v9137 = vpop.f32.mrf.mxu0
      %v9138 = vadd.f32 0.0, %v9137
      %v9139 = vpop.f32.mrf.mxu0
      %v9140 = vadd.f32 0.0, %v9139
      %9141 = vmatmul.bf16.gmra.mxu0 %v8577
      %v9142 = vpop.f32.mrf.mxu0
      %v9143 = vadd.f32 0.0, %v9142
      %v9144 = vpop.f32.mrf.mxu0
      %9145 = vmatmul.bf16.gmra.mxu0 %v8578
      %v9146 = vpop.f32.mrf.mxu0
      %v9147 = vadd.f32 0.0, %v9146
      %v9148 = vpop.f32.mrf.mxu0
      %v9149 = vadd.f32 0.0, %v9148
      %9150 = vmatmul.bf16.gmra.mxu0 %v8579
      %v9151 = vpop.f32.mrf.mxu0
      %v9152 = vadd.f32 0.0, %v9151
      %v9153 = vpop.f32.mrf.mxu0
      %9154 = vmatmul.bf16.gmra.mxu0 %v8580
      %v9155 = vpop.f32.mrf.mxu0
      %v9156 = vadd.f32 0.0, %v9155
      %v9157 = vpop.f32.mrf.mxu0
      %v9158 = vadd.f32 0.0, %v9157
      %9159 = vmatmul.bf16.gmra.mxu0 %v8581
      %v9160 = vpop.f32.mrf.mxu0
      %v9161 = vadd.f32 0.0, %v9160
      %v9162 = vpop.f32.mrf.mxu0
      %9163 = vmatmul.bf16.gmra.mxu0 %v8582
      %v9164 = vpop.f32.mrf.mxu0
      %v9165 = vadd.f32 0.0, %v9164
      %v9166 = vpop.f32.mrf.mxu0
      %v9167 = vadd.f32 0.0, %v9166
      %9168 = vmatmul.bf16.gmra.mxu0 %v8583
      %v9169 = vpop.f32.mrf.mxu0
      %v9170 = vadd.f32 0.0, %v9169
      %v9171 = vpop.f32.mrf.mxu0
      %9172 = vmatmul.bf16.gmra.mxu0 %v8584
      %v9173 = vpop.f32.mrf.mxu0
      %v9174 = vadd.f32 0.0, %v9173
      %v9175 = vpop.f32.mrf.mxu0
      %v9176 = vadd.f32 0.0, %v9175
      %9177 = vmatmul.bf16.gmra.mxu0 %v8585
      %v9178 = vpop.f32.mrf.mxu0
      %v9179 = vadd.f32 0.0, %v9178
      %v9180 = vpop.f32.mrf.mxu0
      %9181 = vmatmul.bf16.gmra.mxu0 %v8586
      %v9182 = vpop.f32.mrf.mxu0
      %v9183 = vadd.f32 0.0, %v9182
      %v9184 = vpop.f32.mrf.mxu0
      %v9185 = vadd.f32 0.0, %v9184
      %9186 = vmatmul.bf16.gmra.mxu0 %v8587
      %v9187 = vpop.f32.mrf.mxu0
      %v9188 = vadd.f32 0.0, %v9187
      %v9189 = vpop.f32.mrf.mxu0
      %9190 = vdwg.mxu0
      %v9191 = vld [vmem:[#allocation4] sm:$0xff]
      %v9192 = vld [vmem:[#allocation4 + $0x8] sm:$0xff]
      %v9193 = vld [vmem:[#allocation4 + $0x10] sm:$0xff]
      %v9194 = vld [vmem:[#allocation4 + $0x18] sm:$0xff]
      %v9195 = vld [vmem:[#allocation4 + $0x20] sm:$0xff]
      %v9196 = vld [vmem:[#allocation4 + $0x28] sm:$0xff]
      %v9197 = vld [vmem:[#allocation4 + $0x30] sm:$0xff]
      %v9198 = vld [vmem:[#allocation4 + $0x38] sm:$0xff]
      %v9199 = vld [vmem:[#allocation4 + $0x40] sm:$0xff]
      %v9200 = vld [vmem:[#allocation4 + $0x48] sm:$0xff]
      %v9201 = vld [vmem:[#allocation4 + $0x50] sm:$0xff]
      %v9202 = vld [vmem:[#allocation4 + $0x58] sm:$0xff]
      %v9203 = vld [vmem:[#allocation4 + $0x60] sm:$0xff]
      %v9204 = vld [vmem:[#allocation4 + $0x68] sm:$0xff]
      %v9205 = vld [vmem:[#allocation4 + $0x70] sm:$0xff]
      %v9206 = vld [vmem:[#allocation4 + $0x78] sm:$0xff]
      %v9207 = vld [vmem:[#allocation4 + $0x80] sm:$0xff]
      %v9208 = vld [vmem:[#allocation4 + $0x88] sm:$0xff]
      %v9209 = vld [vmem:[#allocation4 + $0x90] sm:$0xff]
      %v9210 = vld [vmem:[#allocation4 + $0x98] sm:$0xff]
      %v9211 = vld [vmem:[#allocation4 + $0xa0] sm:$0xff]
      %v9212 = vld [vmem:[#allocation4 + $0xa8] sm:$0xff]
      %v9213 = vld [vmem:[#allocation4 + $0xb0] sm:$0xff]
      %v9214 = vld [vmem:[#allocation4 + $0xb8] sm:$0xff]
      %v9215 = vld [vmem:[#allocation4 + $0xc0] sm:$0xff]
      %v9216 = vld [vmem:[#allocation4 + $0xc8] sm:$0xff]
      %v9217 = vld [vmem:[#allocation4 + $0xd0] sm:$0xff]
      %v9218 = vld [vmem:[#allocation4 + $0xd8] sm:$0xff]
      %v9219 = vld [vmem:[#allocation4 + $0xe0] sm:$0xff]
      %v9220 = vld [vmem:[#allocation4 + $0xe8] sm:$0xff]
      %v9221 = vld [vmem:[#allocation4 + $0xf0] sm:$0xff]
      %v9222 = vld [vmem:[#allocation4 + $0xf8] sm:$0xff]
      %v9271 = vrot.slane %v8895, 1
      %v9272 = vrot.slane %v8897, 1
      %v9273 = vsel %vm1830, %v9271, %v9272
      %v9274 = vrot.slane %v8900, 1
      %v9275 = vsel %vm1830, %v9272, %v9274
      %v9276 = vrot.slane %v8904, 1
      %v9277 = vrot.slane %v8906, 1
      %v9278 = vsel %vm1830, %v9276, %v9277
      %v9279 = vrot.slane %v8909, 1
      %v9280 = vsel %vm1830, %v9277, %v9279
      %v9281 = vrot.slane %v8913, 1
      %v9282 = vrot.slane %v8915, 1
      %v9283 = vsel %vm1830, %v9281, %v9282
      %v9284 = vrot.slane %v8918, 1
      %v9285 = vsel %vm1830, %v9282, %v9284
      %v9286 = vrot.slane %v8922, 1
      %v9287 = vrot.slane %v8924, 1
      %v9288 = vsel %vm1830, %v9286, %v9287
      %v9289 = vrot.slane %v8927, 1
      %v9290 = vsel %vm1830, %v9287, %v9289
      %v9291 = vrot.slane %v8931, 1
      %v9292 = vrot.slane %v8933, 1
      %v9293 = vsel %vm1830, %v9291, %v9292
      %v9294 = vrot.slane %v8936, 1
      %v9295 = vsel %vm1830, %v9292, %v9294
      %v9296 = vrot.slane %v8940, 1
      %v9297 = vrot.slane %v8942, 1
      %v9298 = vsel %vm1830, %v9296, %v9297
      %v9299 = vrot.slane %v8945, 1
      %v9300 = vsel %vm1830, %v9297, %v9299
      %v9301 = vrot.slane %v8949, 1
      %v9302 = vrot.slane %v8951, 1
      %v9303 = vsel %vm1830, %v9301, %v9302
      %v9304 = vrot.slane %v8954, 1
      %v9305 = vsel %vm1830, %v9302, %v9304
      %v9306 = vrot.slane %v8958, 1
      %v9307 = vrot.slane %v8960, 1
      %v9308 = vsel %vm1830, %v9306, %v9307
      %v9309 = vrot.slane %v8963, 1
      %v9310 = vsel %vm1830, %v9307, %v9309
      %v9311 = vrot.slane %v8967, 1
      %v9312 = vrot.slane %v8969, 1
      %v9313 = vsel %vm1830, %v9311, %v9312
      %v9314 = vrot.slane %v8972, 1
      %v9315 = vsel %vm1830, %v9312, %v9314
      %v9316 = vrot.slane %v8976, 1
      %v9317 = vrot.slane %v8978, 1
      %v9318 = vsel %vm1830, %v9316, %v9317
      %v9319 = vrot.slane %v8981, 1
      %v9320 = vsel %vm1830, %v9317, %v9319
      %v9321 = vrot.slane %v8985, 1
      %v9322 = vrot.slane %v8987, 1
      %v9323 = vsel %vm1830, %v9321, %v9322
      %v9324 = vrot.slane %v8990, 1
      %v9325 = vsel %vm1830, %v9322, %v9324
      %v9326 = vrot.slane %v8994, 1
      %v9327 = vrot.slane %v8996, 1
      %v9328 = vsel %vm1830, %v9326, %v9327
      %v9329 = vrot.slane %v8999, 1
      %v9330 = vsel %vm1830, %v9327, %v9329
      %v9331 = vrot.slane %v9003, 1
      %v9332 = vrot.slane %v9005, 1
      %v9333 = vsel %vm1830, %v9331, %v9332
      %v9334 = vrot.slane %v9008, 1
      %v9335 = vsel %vm1830, %v9332, %v9334
      %v9336 = vrot.slane %v9012, 1
      %v9337 = vrot.slane %v9014, 1
      %v9338 = vsel %vm1830, %v9336, %v9337
      %v9339 = vrot.slane %v9017, 1
      %v9340 = vsel %vm1830, %v9337, %v9339
      %v9341 = vrot.slane %v9021, 1
      %v9342 = vrot.slane %v9023, 1
      %v9343 = vsel %vm1830, %v9341, %v9342
      %v9344 = vrot.slane %v9026, 1
      %v9345 = vsel %vm1830, %v9342, %v9344
      %v9346 = vrot.slane %v9030, 1
      %v9347 = vrot.slane %v9032, 1
      %v9348 = vsel %vm1830, %v9346, %v9347
      %v9349 = vrot.slane %v9035, 1
      %v9350 = vsel %vm1830, %v9347, %v9349
      %v9383 = vadd.f32 %v8758, %v9273
      %v9384 = vadd.f32 %v8760, %v9275
      %v9385 = vadd.f32 %v8766, %v9278
      %v9386 = vadd.f32 %v8768, %v9280
      %v9387 = vadd.f32 %v8774, %v9283
      %v9388 = vadd.f32 %v8776, %v9285
      %v9389 = vadd.f32 %v8782, %v9288
      %v9390 = vadd.f32 %v8784, %v9290
      %v9391 = vadd.f32 %v8790, %v9293
      %v9392 = vadd.f32 %v8792, %v9295
      %v9393 = vadd.f32 %v8798, %v9298
      %v9394 = vadd.f32 %v8800, %v9300
      %v9395 = vadd.f32 %v8806, %v9303
      %v9396 = vadd.f32 %v8808, %v9305
      %v9397 = vadd.f32 %v8814, %v9308
      %v9398 = vadd.f32 %v8816, %v9310
      %v9399 = vadd.f32 %v8822, %v9313
      %v9400 = vadd.f32 %v8824, %v9315
      %v9401 = vadd.f32 %v8830, %v9318
      %v9402 = vadd.f32 %v8832, %v9320
      %v9403 = vadd.f32 %v8838, %v9323
      %v9404 = vadd.f32 %v8840, %v9325
      %v9405 = vadd.f32 %v8846, %v9328
      %v9406 = vadd.f32 %v8848, %v9330
      %v9407 = vadd.f32 %v8854, %v9333
      %v9408 = vadd.f32 %v8856, %v9335
      %v9409 = vadd.f32 %v8862, %v9338
      %v9410 = vadd.f32 %v8864, %v9340
      %v9411 = vadd.f32 %v8870, %v9343
      %v9412 = vadd.f32 %v8872, %v9345
      %v9413 = vadd.f32 %v8878, %v9348
      %v9414 = vadd.f32 %v8880, %v9350
      %v9463 = vrot.slane %v9048, 2
      %v9464 = vrot.slane %v9050, 2
      %v9465 = vsel %vm2023, %v9463, %v9464
      %v9466 = vrot.slane %v9053, 2
      %v9467 = vsel %vm2023, %v9464, %v9466
      %v9468 = vrot.slane %v9057, 2
      %v9469 = vrot.slane %v9059, 2
      %v9470 = vsel %vm2023, %v9468, %v9469
      %v9471 = vrot.slane %v9062, 2
      %v9472 = vsel %vm2023, %v9469, %v9471
      %v9473 = vrot.slane %v9066, 2
      %v9474 = vrot.slane %v9068, 2
      %v9475 = vsel %vm2023, %v9473, %v9474
      %v9476 = vrot.slane %v9071, 2
      %v9477 = vsel %vm2023, %v9474, %v9476
      %v9478 = vrot.slane %v9075, 2
      %v9479 = vrot.slane %v9077, 2
      %v9480 = vsel %vm2023, %v9478, %v9479
      %v9481 = vrot.slane %v9080, 2
      %v9482 = vsel %vm2023, %v9479, %v9481
      %v9483 = vrot.slane %v9084, 2
      %v9484 = vrot.slane %v9086, 2
      %v9485 = vsel %vm2023, %v9483, %v9484
      %v9486 = vrot.slane %v9089, 2
      %v9487 = vsel %vm2023, %v9484, %v9486
      %v9488 = vrot.slane %v9093, 2
      %v9489 = vrot.slane %v9095, 2
      %v9490 = vsel %vm2023, %v9488, %v9489
      %v9491 = vrot.slane %v9098, 2
      %v9492 = vsel %vm2023, %v9489, %v9491
      %v9493 = vrot.slane %v9102, 2
      %v9494 = vrot.slane %v9104, 2
      %v9495 = vsel %vm2023, %v9493, %v9494
      %v9496 = vrot.slane %v9107, 2
      %v9497 = vsel %vm2023, %v9494, %v9496
      %v9498 = vrot.slane %v9111, 2
      %v9499 = vrot.slane %v9113, 2
      %v9500 = vsel %vm2023, %v9498, %v9499
      %v9501 = vrot.slane %v9116, 2
      %v9502 = vsel %vm2023, %v9499, %v9501
      %v9503 = vrot.slane %v9120, 2
      %v9504 = vrot.slane %v9122, 2
      %v9505 = vsel %vm2023, %v9503, %v9504
      %v9506 = vrot.slane %v9125, 2
      %v9507 = vsel %vm2023, %v9504, %v9506
      %v9508 = vrot.slane %v9129, 2
      %v9509 = vrot.slane %v9131, 2
      %v9510 = vsel %vm2023, %v9508, %v9509
      %v9511 = vrot.slane %v9134, 2
      %v9512 = vsel %vm2023, %v9509, %v9511
      %v9513 = vrot.slane %v9138, 2
      %v9514 = vrot.slane %v9140, 2
      %v9515 = vsel %vm2023, %v9513, %v9514
      %v9516 = vrot.slane %v9143, 2
      %v9517 = vsel %vm2023, %v9514, %v9516
      %v9518 = vrot.slane %v9147, 2
      %v9519 = vrot.slane %v9149, 2
      %v9520 = vsel %vm2023, %v9518, %v9519
      %v9521 = vrot.slane %v9152, 2
      %v9522 = vsel %vm2023, %v9519, %v9521
      %v9523 = vrot.slane %v9156, 2
      %v9524 = vrot.slane %v9158, 2
      %v9525 = vsel %vm2023, %v9523, %v9524
      %v9526 = vrot.slane %v9161, 2
      %v9527 = vsel %vm2023, %v9524, %v9526
      %v9528 = vrot.slane %v9165, 2
      %v9529 = vrot.slane %v9167, 2
      %v9530 = vsel %vm2023, %v9528, %v9529
      %v9531 = vrot.slane %v9170, 2
      %v9532 = vsel %vm2023, %v9529, %v9531
      %v9533 = vrot.slane %v9174, 2
      %v9534 = vrot.slane %v9176, 2
      %v9535 = vsel %vm2023, %v9533, %v9534
      %v9536 = vrot.slane %v9179, 2
      %v9537 = vsel %vm2023, %v9534, %v9536
      %v9538 = vrot.slane %v9183, 2
      %v9539 = vrot.slane %v9185, 2
      %v9540 = vsel %vm2023, %v9538, %v9539
      %v9541 = vrot.slane %v9188, 2
      %v9542 = vsel %vm2023, %v9539, %v9541
      %v9575 = vadd.f32 %v9383, %v9465
      %v9576 = vadd.f32 %v9384, %v9467
      %v9577 = vadd.f32 %v9385, %v9470
      %v9578 = vadd.f32 %v9386, %v9472
      %v9579 = vadd.f32 %v9387, %v9475
      %v9580 = vadd.f32 %v9388, %v9477
      %v9581 = vadd.f32 %v9389, %v9480
      %v9582 = vadd.f32 %v9390, %v9482
      %v9583 = vadd.f32 %v9391, %v9485
      %v9584 = vadd.f32 %v9392, %v9487
      %v9585 = vadd.f32 %v9393, %v9490
      %v9586 = vadd.f32 %v9394, %v9492
      %v9587 = vadd.f32 %v9395, %v9495
      %v9588 = vadd.f32 %v9396, %v9497
      %v9589 = vadd.f32 %v9397, %v9500
      %v9590 = vadd.f32 %v9398, %v9502
      %v9591 = vadd.f32 %v9399, %v9505
      %v9592 = vadd.f32 %v9400, %v9507
      %v9593 = vadd.f32 %v9401, %v9510
      %v9594 = vadd.f32 %v9402, %v9512
      %v9595 = vadd.f32 %v9403, %v9515
      %v9596 = vadd.f32 %v9404, %v9517
      %v9597 = vadd.f32 %v9405, %v9520
      %v9598 = vadd.f32 %v9406, %v9522
      %v9599 = vadd.f32 %v9407, %v9525
      %v9600 = vadd.f32 %v9408, %v9527
      %v9601 = vadd.f32 %v9409, %v9530
      %v9602 = vadd.f32 %v9410, %v9532
      %v9603 = vadd.f32 %v9411, %v9535
      %v9604 = vadd.f32 %v9412, %v9537
      %v9605 = vadd.f32 %v9413, %v9540
      %v9606 = vadd.f32 %v9414, %v9542
      %v9607 = vadd.f32 %v9191, %v9575
      %v9608 = vadd.f32 %v9192, %v9576
      %v9609 = vadd.f32 %v9193, %v9577
      %v9610 = vadd.f32 %v9194, %v9578
      %v9611 = vadd.f32 %v9195, %v9579
      %v9612 = vadd.f32 %v9196, %v9580
      %v9613 = vadd.f32 %v9197, %v9581
      %v9614 = vadd.f32 %v9198, %v9582
      %v9615 = vadd.f32 %v9199, %v9583
      %v9616 = vadd.f32 %v9200, %v9584
      %v9617 = vadd.f32 %v9201, %v9585
      %v9618 = vadd.f32 %v9202, %v9586
      %v9619 = vadd.f32 %v9203, %v9587
      %v9620 = vadd.f32 %v9204, %v9588
      %v9621 = vadd.f32 %v9205, %v9589
      %v9622 = vadd.f32 %v9206, %v9590
      %v9623 = vadd.f32 %v9207, %v9591
      %v9624 = vadd.f32 %v9208, %v9592
      %v9625 = vadd.f32 %v9209, %v9593
      %v9626 = vadd.f32 %v9210, %v9594
      %v9627 = vadd.f32 %v9211, %v9595
      %v9628 = vadd.f32 %v9212, %v9596
      %v9629 = vadd.f32 %v9213, %v9597
      %v9630 = vadd.f32 %v9214, %v9598
      %v9631 = vadd.f32 %v9215, %v9599
      %v9632 = vadd.f32 %v9216, %v9600
      %v9633 = vadd.f32 %v9217, %v9601
      %v9634 = vadd.f32 %v9218, %v9602
      %v9635 = vadd.f32 %v9219, %v9603
      %v9636 = vadd.f32 %v9220, %v9604
      %v9637 = vadd.f32 %v9221, %v9605
      %v9638 = vadd.f32 %v9222, %v9606
      %9639 = vst [vmem:[#allocation4] sm:$0xff] %v9607
      %9640 = vst [vmem:[#allocation4 + $0x8] sm:$0xff] %v9608
      %9641 = vst [vmem:[#allocation4 + $0x10] sm:$0xff] %v9609
      %9642 = vst [vmem:[#allocation4 + $0x18] sm:$0xff] %v9610
      %9643 = vst [vmem:[#allocation4 + $0x20] sm:$0xff] %v9611
      %9644 = vst [vmem:[#allocation4 + $0x28] sm:$0xff] %v9612
      %9645 = vst [vmem:[#allocation4 + $0x30] sm:$0xff] %v9613
      %9646 = vst [vmem:[#allocation4 + $0x38] sm:$0xff] %v9614
      %9647 = vst [vmem:[#allocation4 + $0x40] sm:$0xff] %v9615
      %9648 = vst [vmem:[#allocation4 + $0x48] sm:$0xff] %v9616
      %9649 = vst [vmem:[#allocation4 + $0x50] sm:$0xff] %v9617
      %9650 = vst [vmem:[#allocation4 + $0x58] sm:$0xff] %v9618
      %9651 = vst [vmem:[#allocation4 + $0x60] sm:$0xff] %v9619
      %9652 = vst [vmem:[#allocation4 + $0x68] sm:$0xff] %v9620
      %9653 = vst [vmem:[#allocation4 + $0x70] sm:$0xff] %v9621
      %9654 = vst [vmem:[#allocation4 + $0x78] sm:$0xff] %v9622
      %9655 = vst [vmem:[#allocation4 + $0x80] sm:$0xff] %v9623
      %9656 = vst [vmem:[#allocation4 + $0x88] sm:$0xff] %v9624
      %9657 = vst [vmem:[#allocation4 + $0x90] sm:$0xff] %v9625
      %9658 = vst [vmem:[#allocation4 + $0x98] sm:$0xff] %v9626
      %9659 = vst [vmem:[#allocation4 + $0xa0] sm:$0xff] %v9627
      %9660 = vst [vmem:[#allocation4 + $0xa8] sm:$0xff] %v9628
      %9661 = vst [vmem:[#allocation4 + $0xb0] sm:$0xff] %v9629
      %9662 = vst [vmem:[#allocation4 + $0xb8] sm:$0xff] %v9630
      %9663 = vst [vmem:[#allocation4 + $0xc0] sm:$0xff] %v9631
      %9664 = vst [vmem:[#allocation4 + $0xc8] sm:$0xff] %v9632
      %9665 = vst [vmem:[#allocation4 + $0xd0] sm:$0xff] %v9633
      %9666 = vst [vmem:[#allocation4 + $0xd8] sm:$0xff] %v9634
      %9667 = vst [vmem:[#allocation4 + $0xe0] sm:$0xff] %v9635
      %9668 = vst [vmem:[#allocation4 + $0xe8] sm:$0xff] %v9636
      %9669 = vst [vmem:[#allocation4 + $0xf0] sm:$0xff] %v9637
      %9670 = vst [vmem:[#allocation4 + $0xf8] sm:$0xff] %v9638
      %v9671 = vld [vmem:[#allocation4] sm:$0xff]
      %v9672 = vld [vmem:[#allocation4 + $0x8] sm:$0xff]
      %v9673 = vld [vmem:[#allocation4 + $0x10] sm:$0xff]
      %v9674 = vld [vmem:[#allocation4 + $0x18] sm:$0xff]
      %v9675 = vld [vmem:[#allocation4 + $0x20] sm:$0xff]
      %v9676 = vld [vmem:[#allocation4 + $0x28] sm:$0xff]
      %v9677 = vld [vmem:[#allocation4 + $0x30] sm:$0xff]
      %v9678 = vld [vmem:[#allocation4 + $0x38] sm:$0xff]
      %v9679 = vld [vmem:[#allocation4 + $0x40] sm:$0xff]
      %v9680 = vld [vmem:[#allocation4 + $0x48] sm:$0xff]
      %v9681 = vld [vmem:[#allocation4 + $0x50] sm:$0xff]
      %v9682 = vld [vmem:[#allocation4 + $0x58] sm:$0xff]
      %v9683 = vld [vmem:[#allocation4 + $0x60] sm:$0xff]
      %v9684 = vld [vmem:[#allocation4 + $0x68] sm:$0xff]
      %v9685 = vld [vmem:[#allocation4 + $0x70] sm:$0xff]
      %v9686 = vld [vmem:[#allocation4 + $0x78] sm:$0xff]
      %v9687 = vld [vmem:[#allocation4 + $0x80] sm:$0xff]
      %v9688 = vld [vmem:[#allocation4 + $0x88] sm:$0xff]
      %v9689 = vld [vmem:[#allocation4 + $0x90] sm:$0xff]
      %v9690 = vld [vmem:[#allocation4 + $0x98] sm:$0xff]
      %v9691 = vld [vmem:[#allocation4 + $0xa0] sm:$0xff]
      %v9692 = vld [vmem:[#allocation4 + $0xa8] sm:$0xff]
      %v9693 = vld [vmem:[#allocation4 + $0xb0] sm:$0xff]
      %v9694 = vld [vmem:[#allocation4 + $0xb8] sm:$0xff]
      %v9695 = vld [vmem:[#allocation4 + $0xc0] sm:$0xff]
      %v9696 = vld [vmem:[#allocation4 + $0xc8] sm:$0xff]
      %v9697 = vld [vmem:[#allocation4 + $0xd0] sm:$0xff]
      %v9698 = vld [vmem:[#allocation4 + $0xd8] sm:$0xff]
      %v9699 = vld [vmem:[#allocation4 + $0xe0] sm:$0xff]
      %v9700 = vld [vmem:[#allocation4 + $0xe8] sm:$0xff]
      %v9701 = vld [vmem:[#allocation4 + $0xf0] sm:$0xff]
      %v9702 = vld [vmem:[#allocation4 + $0xf8] sm:$0xff]
      %v9703 = vld [vmem:[%s5] sm:$0x1]
      %v9704 = vld [vmem:[%s6] sm:$0x1]
      %v9706 = vperm.slane %v9703, 0
      %v9708 = vmul.f32 %v9671, %v9706
      %v9709 = vmul.f32 %v9672, %v9706
      %v9710 = vmul.f32 %v9673, %v9706
      %v9711 = vmul.f32 %v9674, %v9706
      %v9712 = vmul.f32 %v9675, %v9706
      %v9713 = vmul.f32 %v9676, %v9706
      %v9714 = vmul.f32 %v9677, %v9706
      %v9715 = vmul.f32 %v9678, %v9706
      %v9716 = vmul.f32 %v9679, %v9706
      %v9717 = vmul.f32 %v9680, %v9706
      %v9718 = vmul.f32 %v9681, %v9706
      %v9719 = vmul.f32 %v9682, %v9706
      %v9720 = vmul.f32 %v9683, %v9706
      %v9721 = vmul.f32 %v9684, %v9706
      %v9722 = vmul.f32 %v9685, %v9706
      %v9723 = vmul.f32 %v9686, %v9706
      %v9724 = vmul.f32 %v9687, %v9706
      %v9725 = vmul.f32 %v9688, %v9706
      %v9726 = vmul.f32 %v9689, %v9706
      %v9727 = vmul.f32 %v9690, %v9706
      %v9728 = vmul.f32 %v9691, %v9706
      %v9729 = vmul.f32 %v9692, %v9706
      %v9730 = vmul.f32 %v9693, %v9706
      %v9731 = vmul.f32 %v9694, %v9706
      %v9732 = vmul.f32 %v9695, %v9706
      %v9733 = vmul.f32 %v9696, %v9706
      %v9734 = vmul.f32 %v9697, %v9706
      %v9735 = vmul.f32 %v9698, %v9706
      %v9736 = vmul.f32 %v9699, %v9706
      %v9737 = vmul.f32 %v9700, %v9706
      %v9738 = vmul.f32 %v9701, %v9706
      %v9739 = vmul.f32 %v9702, %v9706
      %v9741 = vperm.slane %v9704, 0
      %v9743 = vadd.f32 %v9708, %v9741
      %v9744 = vadd.f32 %v9709, %v9741
      %v9745 = vadd.f32 %v9710, %v9741
      %v9746 = vadd.f32 %v9711, %v9741
      %v9747 = vadd.f32 %v9712, %v9741
      %v9748 = vadd.f32 %v9713, %v9741
      %v9749 = vadd.f32 %v9714, %v9741
      %v9750 = vadd.f32 %v9715, %v9741
      %v9751 = vadd.f32 %v9716, %v9741
      %v9752 = vadd.f32 %v9717, %v9741
      %v9753 = vadd.f32 %v9718, %v9741
      %v9754 = vadd.f32 %v9719, %v9741
      %v9755 = vadd.f32 %v9720, %v9741
      %v9756 = vadd.f32 %v9721, %v9741
      %v9757 = vadd.f32 %v9722, %v9741
      %v9758 = vadd.f32 %v9723, %v9741
      %v9759 = vadd.f32 %v9724, %v9741
      %v9760 = vadd.f32 %v9725, %v9741
      %v9761 = vadd.f32 %v9726, %v9741
      %v9762 = vadd.f32 %v9727, %v9741
      %v9763 = vadd.f32 %v9728, %v9741
      %v9764 = vadd.f32 %v9729, %v9741
      %v9765 = vadd.f32 %v9730, %v9741
      %v9766 = vadd.f32 %v9731, %v9741
      %v9767 = vadd.f32 %v9732, %v9741
      %v9768 = vadd.f32 %v9733, %v9741
      %v9769 = vadd.f32 %v9734, %v9741
      %v9770 = vadd.f32 %v9735, %v9741
      %v9771 = vadd.f32 %v9736, %v9741
      %v9772 = vadd.f32 %v9737, %v9741
      %v9773 = vadd.f32 %v9738, %v9741
      %v9774 = vadd.f32 %v9739, %v9741
      %v9775 = vunpack.c.l.bf16 %v280
      %v9776 = vunpack.c.l.bf16 %v281
      %v9777 = vunpack.c.l.bf16 %v282
      %v9778 = vunpack.c.l.bf16 %v283
      %v9779 = vunpack.c.l.bf16 %v284
      %v9780 = vunpack.c.l.bf16 %v285
      %v9781 = vunpack.c.l.bf16 %v286
      %v9782 = vunpack.c.l.bf16 %v287
      %v9783 = vunpack.c.l.bf16 %v288
      %v9784 = vunpack.c.l.bf16 %v289
      %v9785 = vunpack.c.l.bf16 %v290
      %v9786 = vunpack.c.l.bf16 %v291
      %v9787 = vunpack.c.l.bf16 %v292
      %v9788 = vunpack.c.l.bf16 %v293
      %v9789 = vunpack.c.l.bf16 %v294
      %v9790 = vunpack.c.l.bf16 %v295
      %v9791 = vunpack.c.l.bf16 %v296
      %v9792 = vunpack.c.l.bf16 %v297
      %v9793 = vunpack.c.l.bf16 %v298
      %v9794 = vunpack.c.l.bf16 %v299
      %v9795 = vunpack.c.l.bf16 %v300
      %v9796 = vunpack.c.l.bf16 %v301
      %v9797 = vunpack.c.l.bf16 %v302
      %v9798 = vunpack.c.l.bf16 %v303
      %v9799 = vunpack.c.l.bf16 %v304
      %v9800 = vunpack.c.l.bf16 %v305
      %v9801 = vunpack.c.l.bf16 %v306
      %v9802 = vunpack.c.l.bf16 %v307
      %v9803 = vunpack.c.l.bf16 %v308
      %v9804 = vunpack.c.l.bf16 %v309
      %v9805 = vunpack.c.l.bf16 %v310
      %v9806 = vunpack.c.l.bf16 %v311
      %v9807 = vadd.f32 %v9743, %v9775
      %v9808 = vadd.f32 %v9744, %v9776
      %v9809 = vadd.f32 %v9745, %v9777
      %v9810 = vadd.f32 %v9746, %v9778
      %v9811 = vadd.f32 %v9747, %v9779
      %v9812 = vadd.f32 %v9748, %v9780
      %v9813 = vadd.f32 %v9749, %v9781
      %v9814 = vadd.f32 %v9750, %v9782
      %v9815 = vadd.f32 %v9751, %v9783
      %v9816 = vadd.f32 %v9752, %v9784
      %v9817 = vadd.f32 %v9753, %v9785
      %v9818 = vadd.f32 %v9754, %v9786
      %v9819 = vadd.f32 %v9755, %v9787
      %v9820 = vadd.f32 %v9756, %v9788
      %v9821 = vadd.f32 %v9757, %v9789
      %v9822 = vadd.f32 %v9758, %v9790
      %v9823 = vadd.f32 %v9759, %v9791
      %v9824 = vadd.f32 %v9760, %v9792
      %v9825 = vadd.f32 %v9761, %v9793
      %v9826 = vadd.f32 %v9762, %v9794
      %v9827 = vadd.f32 %v9763, %v9795
      %v9828 = vadd.f32 %v9764, %v9796
      %v9829 = vadd.f32 %v9765, %v9797
      %v9830 = vadd.f32 %v9766, %v9798
      %v9831 = vadd.f32 %v9767, %v9799
      %v9832 = vadd.f32 %v9768, %v9800
      %v9833 = vadd.f32 %v9769, %v9801
      %v9834 = vadd.f32 %v9770, %v9802
      %v9835 = vadd.f32 %v9771, %v9803
      %v9836 = vadd.f32 %v9772, %v9804
      %v9837 = vadd.f32 %v9773, %v9805
      %v9838 = vadd.f32 %v9774, %v9806
      %v9839 = vmax.f32 %v9807, 0.0
      %v9840 = vmax.f32 %v9808, 0.0
      %v9841 = vmax.f32 %v9809, 0.0
      %v9842 = vmax.f32 %v9810, 0.0
      %v9843 = vmax.f32 %v9811, 0.0
      %v9844 = vmax.f32 %v9812, 0.0
      %v9845 = vmax.f32 %v9813, 0.0
      %v9846 = vmax.f32 %v9814, 0.0
      %v9847 = vmax.f32 %v9815, 0.0
      %v9848 = vmax.f32 %v9816, 0.0
      %v9849 = vmax.f32 %v9817, 0.0
      %v9850 = vmax.f32 %v9818, 0.0
      %v9851 = vmax.f32 %v9819, 0.0
      %v9852 = vmax.f32 %v9820, 0.0
      %v9853 = vmax.f32 %v9821, 0.0
      %v9854 = vmax.f32 %v9822, 0.0
      %v9855 = vmax.f32 %v9823, 0.0
      %v9856 = vmax.f32 %v9824, 0.0
      %v9857 = vmax.f32 %v9825, 0.0
      %v9858 = vmax.f32 %v9826, 0.0
      %v9859 = vmax.f32 %v9827, 0.0
      %v9860 = vmax.f32 %v9828, 0.0
      %v9861 = vmax.f32 %v9829, 0.0
      %v9862 = vmax.f32 %v9830, 0.0
      %v9863 = vmax.f32 %v9831, 0.0
      %v9864 = vmax.f32 %v9832, 0.0
      %v9865 = vmax.f32 %v9833, 0.0
      %v9866 = vmax.f32 %v9834, 0.0
      %v9867 = vmax.f32 %v9835, 0.0
      %v9868 = vmax.f32 %v9836, 0.0
      %v9869 = vmax.f32 %v9837, 0.0
      %v9870 = vmax.f32 %v9838, 0.0
      %v9871 = vpack.c.bf16 %v9839, %v9839
      %v9872 = vpack.c.bf16 %v9840, %v9840
      %v9873 = vpack.c.bf16 %v9841, %v9841
      %v9874 = vpack.c.bf16 %v9842, %v9842
      %v9875 = vpack.c.bf16 %v9843, %v9843
      %v9876 = vpack.c.bf16 %v9844, %v9844
      %v9877 = vpack.c.bf16 %v9845, %v9845
      %v9878 = vpack.c.bf16 %v9846, %v9846
      %v9879 = vpack.c.bf16 %v9847, %v9847
      %v9880 = vpack.c.bf16 %v9848, %v9848
      %v9881 = vpack.c.bf16 %v9849, %v9849
      %v9882 = vpack.c.bf16 %v9850, %v9850
      %v9883 = vpack.c.bf16 %v9851, %v9851
      %v9884 = vpack.c.bf16 %v9852, %v9852
      %v9885 = vpack.c.bf16 %v9853, %v9853
      %v9886 = vpack.c.bf16 %v9854, %v9854
      %v9887 = vpack.c.bf16 %v9855, %v9855
      %v9888 = vpack.c.bf16 %v9856, %v9856
      %v9889 = vpack.c.bf16 %v9857, %v9857
      %v9890 = vpack.c.bf16 %v9858, %v9858
      %v9891 = vpack.c.bf16 %v9859, %v9859
      %v9892 = vpack.c.bf16 %v9860, %v9860
      %v9893 = vpack.c.bf16 %v9861, %v9861
      %v9894 = vpack.c.bf16 %v9862, %v9862
      %v9895 = vpack.c.bf16 %v9863, %v9863
      %v9896 = vpack.c.bf16 %v9864, %v9864
      %v9897 = vpack.c.bf16 %v9865, %v9865
      %v9898 = vpack.c.bf16 %v9866, %v9866
      %v9899 = vpack.c.bf16 %v9867, %v9867
      %v9900 = vpack.c.bf16 %v9868, %v9868
      %v9901 = vpack.c.bf16 %v9869, %v9869
      %v9902 = vpack.c.bf16 %v9870, %v9870
      %9903 = vst [vmem:[%s278] sm:$0xf] %v9871
      %9904 = vst [vmem:[%s278 + $0x4] sm:$0xf] %v9872
      %9905 = vst [vmem:[%s278 + $0x8] sm:$0xf] %v9873
      %9906 = vst [vmem:[%s278 + $0xc] sm:$0xf] %v9874
      %9907 = vst [vmem:[%s278 + $0x10] sm:$0xf] %v9875
      %9908 = vst [vmem:[%s278 + $0x14] sm:$0xf] %v9876
      %9909 = vst [vmem:[%s278 + $0x18] sm:$0xf] %v9877
      %9910 = vst [vmem:[%s278 + $0x1c] sm:$0xf] %v9878
      %9911 = vst [vmem:[%s278 + $0x20] sm:$0xf] %v9879
      %9912 = vst [vmem:[%s278 + $0x24] sm:$0xf] %v9880
      %9913 = vst [vmem:[%s278 + $0x28] sm:$0xf] %v9881
      %9914 = vst [vmem:[%s278 + $0x2c] sm:$0xf] %v9882
      %9915 = vst [vmem:[%s278 + $0x30] sm:$0xf] %v9883
      %9916 = vst [vmem:[%s278 + $0x34] sm:$0xf] %v9884
      %9917 = vst [vmem:[%s278 + $0x38] sm:$0xf] %v9885
      %9918 = vst [vmem:[%s278 + $0x3c] sm:$0xf] %v9886
      %9919 = vst [vmem:[%s278 + $0x40] sm:$0xf] %v9887
      %9920 = vst [vmem:[%s278 + $0x44] sm:$0xf] %v9888
      %9921 = vst [vmem:[%s278 + $0x48] sm:$0xf] %v9889
      %9922 = vst [vmem:[%s278 + $0x4c] sm:$0xf] %v9890
      %9923 = vst [vmem:[%s278 + $0x50] sm:$0xf] %v9891
      %9924 = vst [vmem:[%s278 + $0x54] sm:$0xf] %v9892
      %9925 = vst [vmem:[%s278 + $0x58] sm:$0xf] %v9893
      %9926 = vst [vmem:[%s278 + $0x5c] sm:$0xf] %v9894
      %9927 = vst [vmem:[%s278 + $0x60] sm:$0xf] %v9895
      %9928 = vst [vmem:[%s278 + $0x64] sm:$0xf] %v9896
      %9929 = vst [vmem:[%s278 + $0x68] sm:$0xf] %v9897
      %9930 = vst [vmem:[%s278 + $0x6c] sm:$0xf] %v9898
      %9931 = vst [vmem:[%s278 + $0x70] sm:$0xf] %v9899
      %9932 = vst [vmem:[%s278 + $0x74] sm:$0xf] %v9900
      %9933 = vst [vmem:[%s278 + $0x78] sm:$0xf] %v9901
      %9934 = vst [vmem:[%s278 + $0x7c] sm:$0xf] %v9902
      %p9935 = scmp.lt.s32.totalorder %s18, 1
      %s9936 = scalar_select %p9935, %s18, 1
      %s9937 = smul.addr %s9936, 32
      %s9938 = smul.addr %s9937, 4
      %s9939 = scalar_lea.vmem %s7, %s9938
      // Predicated region
      $region49: #{basic_block_forward.1} parent=47 // pred_check
        %p9940 = pneg %p188
      $region50: #{basic_block_forward.1} parent=47 // pred_check_branch
        %9942 = sbr.rel (%p9940) target = $region52
      $region51: #{basic_block_forward.1} parent=47 // pred_region
        _
      $region52: #{basic_block_forward.1} parent=47 // pred_fallthru
        _
    $region48: #{basic_block_forward.1} parent=5 // pred_fallthru
      _
    %p9943 = scmp.le.s32.totalorder 2, %s13
    // Predicated region
    $region53: #{basic_block_forward.1} parent=5 // pred_check
      %p9944 = pneg %p9943
    $region54: #{basic_block_forward.1} parent=5 // pred_check_branch
      %9946 = sbr.rel (%p9944) target = $region56
    $region55: #{basic_block_forward.1} parent=5 // pred_region
      %s9947 = ssub.s32 %s13, 2
      // Predicated region
      $region57: #{basic_block_forward.1} parent=55 // pred_check
        %p9948 = pneg %p194
      $region58: #{basic_block_forward.1} parent=55 // pred_check_branch
        %9950 = sbr.rel (%p9948) target = $region60
      $region59: #{basic_block_forward.1} parent=55 // pred_region
        %p9951 = scmp.lt.s32.totalorder %s19, 1
        %s9952 = scalar_select %p9951, %s19, 1
        %s9953 = smul.addr %s9952, 32
        %s9954 = smul.addr %s9953, 4
        %s9955 = scalar_lea.vmem %s7, %s9954
      $region60: #{basic_block_forward.1} parent=55 // pred_fallthru
        _
    $region56: #{basic_block_forward.1} parent=5 // pred_fallthru
      _
  $region6: #{basic_block_forward.1} parent=0 // loop_footer
    %s17 = sadd.s32 1, %s13
  $region7: #{basic_block_forward.1} parent=0 // loop_footer_branch
    %12 = sbr.rel target = $region3
  $region8: #{basic_block_forward.1} parent=0 // loop_exit
    _

</llo_original>
